<compile_context>
chip_gen: v5e
topology: v5e:2x2
jax: 0.10.0
libtpu: 0.0.40
codegen_flags: <defaults>
</compile_context>

<pallas_src>
import functools
import math

import jax
import jax.numpy as jnp
from jax import lax
from jax.experimental import pallas as pl
from jax.experimental.pallas import tpu as pltpu


def _full_spec(shape):
    nd = len(shape)
    return pl.BlockSpec(shape, lambda i, _nd=nd: (0,) * _nd)


# ---------------------------------------------------------------------------
# Fused kernel: NUM_LAYER x (TransformerConv + ReLU)  ->  mean-pool  ->  Linear
# ---------------------------------------------------------------------------
def _fused_gnn_kernel(*refs, num_layers, heads, c):
    hc = heads * c
    x_ref, adj_ref, pool_ref = refs[0], refs[1], refs[2]
    layer_refs = refs[3:3 + 2 * num_layers]               # (w_all, b_all) per layer
    lin_w_ref, lin_b_ref, out_ref, h_acc_ref = refs[3 + 2 * num_layers:]

    # Edge mask: int8 adj -> f32 once; derive multiplicative mask and additive -inf
    # bias ONCE, reused by every layer/head (hoisted out of the unrolled loops).
    adjf = adj_ref[...].astype(jnp.float32)                 # [N, N]
    maskf = (adjf > 0.0).astype(jnp.float32)                # 1 on edges, 0 elsewhere
    neg_bias = (1.0 - maskf) * jnp.float32(-1e30)           # 0 on edges, -1e30 off
    scale = jnp.float32(1.0 / math.sqrt(c))

    h = x_ref[...]                                          # stays resident in VMEM/vregs
    for li in range(num_layers):                            # static unroll (weights differ)
        w_ref = layer_refs[2 * li]                          # [F_in, 4*hc]  (lane-dense 128)
        b_ref = layer_refs[2 * li + 1]                      # [1, 4*hc]
        proj = jnp.dot(h, w_ref[...],
                       preferred_element_type=jnp.float32) + b_ref[...]
        q = proj[:, 0 * hc:1 * hc] * scale                  # fold 1/sqrt(c) once per layer
        k = proj[:, 1 * hc:2 * hc]
        v = proj[:, 2 * hc:3 * hc]
        skip = proj[:, 3 * hc:4 * hc]

        for hh in range(heads):                             # static unroll over heads
            qh = q[:, hh * c:(hh + 1) * c]
            kh = k[:, hh * c:(hh + 1) * c]
            vh = v[:, hh * c:(hh + 1) * c]
            # q @ k^T without an explicit transpose (MXU contracts RHS last dim).
            s = lax.dot_general(qh, kh, (((1,), (1,)), ((), ())),
                                preferred_element_type=jnp.float32) + neg_bias
            m = jnp.max(s, axis=-1, keepdims=True)
            p = jnp.exp(s - m) * maskf                      # zero non-edges / empty rows
            denom = jnp.sum(p, axis=-1, keepdims=True)
            inv = pl.reciprocal(jnp.where(denom > 0.0, denom, 1.0), approx=True)
            attn = p * inv                                  # nodes w/o in-edges -> zero row
            # Write head output straight into its slice of the VMEM accumulator.
            h_acc_ref[:, hh * c:(hh + 1) * c] = jnp.dot(
                attn, vh, preferred_element_type=jnp.float32)

        # concat(heads) + lin_skip term, then Identity-norm + ReLU
        h = jnp.maximum(h_acc_ref[...] + skip, 0.0)

    # global_mean_pool (normalized assignment matmul) + F.dropout(identity) + Linear
    pooled = jnp.dot(pool_ref[...], h, preferred_element_type=jnp.float32)
    out_ref[...] = jnp.dot(pooled, lin_w_ref[...],
                           preferred_element_type=jnp.float32) + lin_b_ref[...]


def customized_gnn_forward(x, adj, pool_mat, layer_params, lin_w, lin_b, heads, c):
    n = x.shape[0]
    g = pool_mat.shape[0]
    hc = heads * c
    num_layers = len(layer_params)
    num_class = lin_w.shape[1]

    flat = []
    for p in layer_params:
        flat += [p['w_all'], p['b_all']]
    args = (x, adj, pool_mat, *flat, lin_w, lin_b)

    kernel = functools.partial(_fused_gnn_kernel,
                               num_layers=num_layers, heads=heads, c=c)
    return pl.pallas_call(
        kernel,
        out_shape=jax.ShapeDtypeStruct((g, num_class), jnp.float32),
        grid=(1,),
        in_specs=[_full_spec(a.shape) for a in args],
        out_specs=_full_spec((g, num_class)),
        scratch_shapes=[pltpu.VMEM((n, hc), jnp.float32)],   # head-output accumulator
        compiler_params=pltpu.CompilerParams(
            dimension_semantics=("arbitrary",)),
    )(*args)


# ---------------------------------------------------------------------------
# Pure-JAX reference for correctness check
# ---------------------------------------------------------------------------
def _reference_forward(x, adj_i8, pool_mat, layer_params, lin_w, lin_b, heads, c):
    hc = heads * c
    adjf = (adj_i8 > 0).astype(jnp.float32)
    h = x
    for p in layer_params:
        proj = h @ p['w_all'] + p['b_all']
        q = proj[:, 0 * hc:1 * hc]
        k = proj[:, 1 * hc:2 * hc]
        v = proj[:, 2 * hc:3 * hc]
        skip = proj[:, 3 * hc:4 * hc]
        outs = []
        for hh in range(heads):
            qh = q[:, hh * c:(hh + 1) * c]
            kh = k[:, hh * c:(hh + 1) * c]
            vh = v[:, hh * c:(hh + 1) * c]
            s = (qh @ kh.T) / math.sqrt(c)
            s = jnp.where(adjf > 0.0, s, -1e30)
            m = jnp.max(s, axis=-1, keepdims=True)
            pe = jnp.exp(s - m) * adjf
            den = jnp.sum(pe, axis=-1, keepdims=True)
            attn = pe / jnp.where(den > 0.0, den, 1.0)
            outs.append(attn @ vh)
        h = jnp.maximum(jnp.concatenate(outs, axis=-1) + skip, 0.0)
    return (pool_mat @ h) @ lin_w + lin_b


# ---------------------------------------------------------------------------
# Deterministic parameter init (PyTorch-Linear-style uniform bounds)
# ---------------------------------------------------------------------------
def _linear_init(key, fan_in, fan_out):
    kw, kb = jax.random.split(key)
    bound = 1.0 / math.sqrt(fan_in)
    w = jax.random.uniform(kw, (fan_in, fan_out), jnp.float32, -bound, bound)
    b = jax.random.uniform(kb, (1, fan_out), jnp.float32, -bound, bound)
    return w, b


if __name__ == "__main__":
    IN_CH, HIDDEN, HEADS, NUM_LAYER, NUM_CLASS = 16, 32, 4, 3, 4
    C = HIDDEN // HEADS                                   # out_channels per head
    N_PER_G, G = 16, 8
    N = N_PER_G * G                                       # 128 nodes -> lane-aligned adj

    key = jax.random.PRNGKey(0)
    key, kx = jax.random.split(key)
    x = jax.random.normal(kx, (N, IN_CH), jnp.float32)

    # Deterministic edges: directed ring + chords (both directions) inside each graph.
    src_list, dst_list = [], []
    for g in range(G):
        base = g * N_PER_G
        for i in range(N_PER_G):
            for d in (1, 3, 5):
                s_, t_ = base + i, base + (i + d) % N_PER_G
                src_list += [s_, t_]
                dst_list += [t_, s_]
    edge_index = jnp.array([src_list, dst_list], dtype=jnp.int32)   # [2, E]
    batch = jnp.repeat(jnp.arange(G, dtype=jnp.int32), N_PER_G)     # [N]

    # Dense adjacency mask adj[dst, src] as int8 (glue: scatter in plain JAX).
    adj = jnp.zeros((N, N), jnp.int8).at[edge_index[1], edge_index[0]].set(1)

    # global_mean_pool as a normalized [G, N] assignment matrix.
    onehot = (batch[None, :] == jnp.arange(G, dtype=jnp.int32)[:, None]).astype(jnp.float32)
    pool_mat = onehot / jnp.maximum(onehot.sum(axis=1, keepdims=True), 1.0)

    # TransformerConv parameters per layer: lin_query/key/value/skip, fused into one
    # [F_in, 4*heads*C] weight and one [1, 4*heads*C] bias (lane-dense 128-wide matmul).
    layer_params = []
    for layer_idx in range(NUM_LAYER):
        fin = IN_CH if layer_idx == 0 else HIDDEN
        key, k1, k2, k3, k4 = jax.random.split(key, 5)
        wq, bq = _linear_init(k1, fin, HEADS * C)
        wk, bk = _linear_init(k2, fin, HEADS * C)
        wv, bv = _linear_init(k3, fin, HEADS * C)
        ws, bs = _linear_init(k4, fin, HEADS * C)
        layer_params.append(dict(
            w_all=jnp.concatenate([wq, wk, wv, ws], axis=1),
            b_all=jnp.concatenate([bq, bk, bv, bs], axis=1)))

    key, kl = jax.random.split(key)
    lin_w, lin_b = _linear_init(kl, HIDDEN, NUM_CLASS)

    out = customized_gnn_forward(x, adj, pool_mat, layer_params, lin_w, lin_b, HEADS, C)
    out = jax.block_until_ready(out)

    ref = _reference_forward(x, adj, pool_mat, layer_params, lin_w, lin_b, HEADS, C)
    assert out.shape == (G, NUM_CLASS)
    # Tolerance accounts for the EUP approximate reciprocal in the kernel's softmax
    # denominator; the reference uses an exact divide.
    assert jnp.allclose(out, ref, rtol=2e-2, atol=2e-2), (out, ref)
    print("KERNEL_OK")
</pallas_src>

<mosaic_0001>
module attributes {stable_mosaic.version = 11 : i64} {
  func.func @_fused_gnn_kernel(%arg0: i32, %arg1: memref<128x16xf32, #tpu.memory_space<vmem>>, %arg2: memref<128x128xi8, #tpu.memory_space<vmem>>, %arg3: memref<8x128xf32, #tpu.memory_space<vmem>>, %arg4: memref<16x128xf32, #tpu.memory_space<vmem>>, %arg5: memref<1x128xf32, #tpu.memory_space<vmem>>, %arg6: memref<32x128xf32, #tpu.memory_space<vmem>>, %arg7: memref<1x128xf32, #tpu.memory_space<vmem>>, %arg8: memref<32x128xf32, #tpu.memory_space<vmem>>, %arg9: memref<1x128xf32, #tpu.memory_space<vmem>>, %arg10: memref<32x4xf32, #tpu.memory_space<vmem>>, %arg11: memref<1x4xf32, #tpu.memory_space<vmem>>, %arg12: memref<8x4xf32, #tpu.memory_space<vmem>>, %arg13: memref<128x32xf32, #tpu.memory_space<vmem>>) attributes {dimension_semantics = [#tpu.dimension_semantics<arbitrary>], iteration_bounds = array<i64: 1>, scalar_prefetch = 0 : i64, scratch_operands = 1 : i64, tpu.core_type = #tpu.core_type<tc>, window_params = [{pipeline_mode = #tpu.pipeline_mode<synchronous>, transform_indices = @transform_0, window_bounds = array<i64: 128, 16>}, {pipeline_mode = #tpu.pipeline_mode<synchronous>, transform_indices = @transform_1, window_bounds = array<i64: 128, 128>}, {pipeline_mode = #tpu.pipeline_mode<synchronous>, transform_indices = @transform_2, window_bounds = array<i64: 8, 128>}, {pipeline_mode = #tpu.pipeline_mode<synchronous>, transform_indices = @transform_3, window_bounds = array<i64: 16, 128>}, {pipeline_mode = #tpu.pipeline_mode<synchronous>, transform_indices = @transform_4, window_bounds = array<i64: 1, 128>}, {pipeline_mode = #tpu.pipeline_mode<synchronous>, transform_indices = @transform_5, window_bounds = array<i64: 32, 128>}, {pipeline_mode = #tpu.pipeline_mode<synchronous>, transform_indices = @transform_6, window_bounds = array<i64: 1, 128>}, {pipeline_mode = #tpu.pipeline_mode<synchronous>, transform_indices = @transform_7, window_bounds = array<i64: 32, 128>}, {pipeline_mode = #tpu.pipeline_mode<synchronous>, transform_indices = @transform_8, window_bounds = array<i64: 1, 128>}, {pipeline_mode = #tpu.pipeline_mode<synchronous>, transform_indices = @transform_9, window_bounds = array<i64: 32, 4>}, {pipeline_mode = #tpu.pipeline_mode<synchronous>, transform_indices = @transform_10, window_bounds = array<i64: 1, 4>}, {pipeline_mode = #tpu.pipeline_mode<synchronous>, transform_indices = @transform_11, window_bounds = array<i64: 8, 4>}]} {
    %c0 = arith.constant 0 : index
    %c0_0 = arith.constant 0 : index
    %0 = vector.load %arg2[%c0, %c0_0] : memref<128x128xi8, #tpu.memory_space<vmem>>, vector<128x128xi8>
    %1 = arith.sitofp %0 : vector<128x128xi8> to vector<128x128xf32>
    %cst = arith.constant 0.000000e+00 : f32
    %2 = vector.broadcast %cst : f32 to vector<128x128xf32>
    %3 = arith.cmpf ogt, %1, %2 : vector<128x128xf32>
    %4 = arith.extui %3 : vector<128x128xi1> to vector<128x128xi32>
    %5 = arith.sitofp %4 : vector<128x128xi32> to vector<128x128xf32>
    %cst_1 = arith.constant 1.000000e+00 : f32
    %6 = vector.broadcast %cst_1 : f32 to vector<128x128xf32>
    %7 = arith.subf %6, %5 : vector<128x128xf32>
    %cst_2 = arith.constant -1.000000e+30 : f32
    %8 = vector.broadcast %cst_2 : f32 to vector<128x128xf32>
    %9 = arith.mulf %7, %8 : vector<128x128xf32>
    %c0_3 = arith.constant 0 : index
    %c0_4 = arith.constant 0 : index
    %10 = vector.load %arg1[%c0_3, %c0_4] : memref<128x16xf32, #tpu.memory_space<vmem>>, vector<128x16xf32>
    %c0_5 = arith.constant 0 : index
    %c0_6 = arith.constant 0 : index
    %11 = vector.load %arg4[%c0_5, %c0_6] : memref<16x128xf32, #tpu.memory_space<vmem>>, vector<16x128xf32>
    %cst_7 = arith.constant dense<0.000000e+00> : vector<128x128xf32>
    %12 = tpu.matmul %10, %11, %cst_7 {dimension_numbers = #tpu.dot_dimension_numbers<[1], [0], [0], [1], [0, 0, 1, 1], [], []>} : vector<128x16xf32>, vector<16x128xf32>, vector<128x128xf32> -> vector<128x128xf32>
    %c0_8 = arith.constant 0 : index
    %c0_9 = arith.constant 0 : index
    %13 = vector.load %arg5[%c0_8, %c0_9] : memref<1x128xf32, #tpu.memory_space<vmem>>, vector<1x128xf32>
    %14 = vector.broadcast %13 : vector<1x128xf32> to vector<128x128xf32>
    %15 = arith.addf %12, %14 : vector<128x128xf32>
    %16 = vector.extract_strided_slice %15 {offsets = [0, 0], sizes = [128, 32], strides = [1, 1]} : vector<128x128xf32> to vector<128x32xf32>
    %cst_10 = arith.constant 0.353553385 : f32
    %17 = vector.broadcast %cst_10 : f32 to vector<128x32xf32>
    %18 = arith.mulf %16, %17 : vector<128x32xf32>
    %19 = vector.extract_strided_slice %15 {offsets = [0, 32], sizes = [128, 32], strides = [1, 1]} : vector<128x128xf32> to vector<128x32xf32>
    %20 = vector.extract_strided_slice %15 {offsets = [0, 64], sizes = [128, 32], strides = [1, 1]} : vector<128x128xf32> to vector<128x32xf32>
    %21 = vector.extract_strided_slice %15 {offsets = [0, 96], sizes = [128, 32], strides = [1, 1]} : vector<128x128xf32> to vector<128x32xf32>
    %22 = vector.extract_strided_slice %18 {offsets = [0, 0], sizes = [128, 8], strides = [1, 1]} : vector<128x32xf32> to vector<128x8xf32>
    %23 = vector.extract_strided_slice %19 {offsets = [0, 0], sizes = [128, 8], strides = [1, 1]} : vector<128x32xf32> to vector<128x8xf32>
    %24 = vector.extract_strided_slice %20 {offsets = [0, 0], sizes = [128, 8], strides = [1, 1]} : vector<128x32xf32> to vector<128x8xf32>
    %cst_11 = arith.constant dense<0.000000e+00> : vector<128x128xf32>
    %25 = tpu.matmul %22, %23, %cst_11 {dimension_numbers = #tpu.dot_dimension_numbers<[1], [1], [0], [0], [0, 0, 1, 0], [], []>} : vector<128x8xf32>, vector<128x8xf32>, vector<128x128xf32> -> vector<128x128xf32>
    %26 = arith.addf %25, %9 : vector<128x128xf32>
    %cst_12 = arith.constant dense<0xFF800000> : vector<128xf32>
    %27 = vector.multi_reduction <maximumf>, %26, %cst_12 [1] : vector<128x128xf32> to vector<128xf32>
    %28 = vector.shape_cast %27 : vector<128xf32> to vector<128x1xf32>
    %29 = vector.broadcast %28 : vector<128x1xf32> to vector<128x128xf32>
    %30 = arith.subf %26, %29 : vector<128x128xf32>
    %31 = math.exp %30 : vector<128x128xf32>
    %32 = arith.mulf %31, %5 : vector<128x128xf32>
    %cst_13 = arith.constant dense<0.000000e+00> : vector<128xf32>
    %33 = vector.multi_reduction <add>, %32, %cst_13 [1] : vector<128x128xf32> to vector<128xf32>
    %34 = vector.shape_cast %33 : vector<128xf32> to vector<128x1xf32>
    %cst_14 = arith.constant 0.000000e+00 : f32
    %35 = vector.broadcast %cst_14 : f32 to vector<128x1xf32>
    %36 = arith.cmpf ogt, %34, %35 : vector<128x1xf32>
    %cst_15 = arith.constant 1.000000e+00 : f32
    %37 = vector.broadcast %cst_15 : f32 to vector<128x1xf32>
    %38 = arith.select %36, %34, %37 : vector<128x1xi1>, vector<128x1xf32>
    %39 = tpu.reciprocal %38 {approx = true} : vector<128x1xf32> -> vector<128x1xf32>
    %40 = vector.broadcast %39 : vector<128x1xf32> to vector<128x128xf32>
    %41 = arith.mulf %32, %40 : vector<128x128xf32>
    %cst_16 = arith.constant dense<0.000000e+00> : vector<128x8xf32>
    %42 = tpu.matmul %41, %24, %cst_16 {dimension_numbers = #tpu.dot_dimension_numbers<[1], [0], [0], [1], [0, 0, 1, 1], [], []>} : vector<128x128xf32>, vector<128x8xf32>, vector<128x8xf32> -> vector<128x8xf32>
    %c0_17 = arith.constant 0 : index
    %c0_18 = arith.constant 0 : index
    %43 = vector.load %arg13[%c0_17, %c0_18] : memref<128x32xf32, #tpu.memory_space<vmem>>, vector<128x8xf32>
    tpu.vector_store %arg13[%c0_17, %c0_18], %42 {strides = array<i32>} : memref<128x32xf32, #tpu.memory_space<vmem>>, vector<128x8xf32>,
    %44 = vector.extract_strided_slice %18 {offsets = [0, 8], sizes = [128, 8], strides = [1, 1]} : vector<128x32xf32> to vector<128x8xf32>
    %45 = vector.extract_strided_slice %19 {offsets = [0, 8], sizes = [128, 8], strides = [1, 1]} : vector<128x32xf32> to vector<128x8xf32>
    %46 = vector.extract_strided_slice %20 {offsets = [0, 8], sizes = [128, 8], strides = [1, 1]} : vector<128x32xf32> to vector<128x8xf32>
    %cst_19 = arith.constant dense<0.000000e+00> : vector<128x128xf32>
    %47 = tpu.matmul %44, %45, %cst_19 {dimension_numbers = #tpu.dot_dimension_numbers<[1], [1], [0], [0], [0, 0, 1, 0], [], []>} : vector<128x8xf32>, vector<128x8xf32>, vector<128x128xf32> -> vector<128x128xf32>
    %48 = arith.addf %47, %9 : vector<128x128xf32>
    %cst_20 = arith.constant dense<0xFF800000> : vector<128xf32>
    %49 = vector.multi_reduction <maximumf>, %48, %cst_20 [1] : vector<128x128xf32> to vector<128xf32>
    %50 = vector.shape_cast %49 : vector<128xf32> to vector<128x1xf32>
    %51 = vector.broadcast %50 : vector<128x1xf32> to vector<128x128xf32>
    %52 = arith.subf %48, %51 : vector<128x128xf32>
    %53 = math.exp %52 : vector<128x128xf32>
    %54 = arith.mulf %53, %5 : vector<128x128xf32>
    %cst_21 = arith.constant dense<0.000000e+00> : vector<128xf32>
    %55 = vector.multi_reduction <add>, %54, %cst_21 [1] : vector<128x128xf32> to vector<128xf32>
    %56 = vector.shape_cast %55 : vector<128xf32> to vector<128x1xf32>
    %cst_22 = arith.constant 0.000000e+00 : f32
    %57 = vector.broadcast %cst_22 : f32 to vector<128x1xf32>
    %58 = arith.cmpf ogt, %56, %57 : vector<128x1xf32>
    %cst_23 = arith.constant 1.000000e+00 : f32
    %59 = vector.broadcast %cst_23 : f32 to vector<128x1xf32>
    %60 = arith.select %58, %56, %59 : vector<128x1xi1>, vector<128x1xf32>
    %61 = tpu.reciprocal %60 {approx = true} : vector<128x1xf32> -> vector<128x1xf32>
    %62 = vector.broadcast %61 : vector<128x1xf32> to vector<128x128xf32>
    %63 = arith.mulf %54, %62 : vector<128x128xf32>
    %cst_24 = arith.constant dense<0.000000e+00> : vector<128x8xf32>
    %64 = tpu.matmul %63, %46, %cst_24 {dimension_numbers = #tpu.dot_dimension_numbers<[1], [0], [0], [1], [0, 0, 1, 1], [], []>} : vector<128x128xf32>, vector<128x8xf32>, vector<128x8xf32> -> vector<128x8xf32>
    %c0_25 = arith.constant 0 : index
    %c8 = arith.constant 8 : index
    %65 = vector.load %arg13[%c0_25, %c8] : memref<128x32xf32, #tpu.memory_space<vmem>>, vector<128x8xf32>
    tpu.vector_store %arg13[%c0_25, %c8], %64 {strides = array<i32>} : memref<128x32xf32, #tpu.memory_space<vmem>>, vector<128x8xf32>,
    %66 = vector.extract_strided_slice %18 {offsets = [0, 16], sizes = [128, 8], strides = [1, 1]} : vector<128x32xf32> to vector<128x8xf32>
    %67 = vector.extract_strided_slice %19 {offsets = [0, 16], sizes = [128, 8], strides = [1, 1]} : vector<128x32xf32> to vector<128x8xf32>
    %68 = vector.extract_strided_slice %20 {offsets = [0, 16], sizes = [128, 8], strides = [1, 1]} : vector<128x32xf32> to vector<128x8xf32>
    %cst_26 = arith.constant dense<0.000000e+00> : vector<128x128xf32>
    %69 = tpu.matmul %66, %67, %cst_26 {dimension_numbers = #tpu.dot_dimension_numbers<[1], [1], [0], [0], [0, 0, 1, 0], [], []>} : vector<128x8xf32>, vector<128x8xf32>, vector<128x128xf32> -> vector<128x128xf32>
    %70 = arith.addf %69, %9 : vector<128x128xf32>
    %cst_27 = arith.constant dense<0xFF800000> : vector<128xf32>
    %71 = vector.multi_reduction <maximumf>, %70, %cst_27 [1] : vector<128x128xf32> to vector<128xf32>
    %72 = vector.shape_cast %71 : vector<128xf32> to vector<128x1xf32>
    %73 = vector.broadcast %72 : vector<128x1xf32> to vector<128x128xf32>
    %74 = arith.subf %70, %73 : vector<128x128xf32>
    %75 = math.exp %74 : vector<128x128xf32>
    %76 = arith.mulf %75, %5 : vector<128x128xf32>
    %cst_28 = arith.constant dense<0.000000e+00> : vector<128xf32>
    %77 = vector.multi_reduction <add>, %76, %cst_28 [1] : vector<128x128xf32> to vector<128xf32>
    %78 = vector.shape_cast %77 : vector<128xf32> to vector<128x1xf32>
    %cst_29 = arith.constant 0.000000e+00 : f32
    %79 = vector.broadcast %cst_29 : f32 to vector<128x1xf32>
    %80 = arith.cmpf ogt, %78, %79 : vector<128x1xf32>
    %cst_30 = arith.constant 1.000000e+00 : f32
    %81 = vector.broadcast %cst_30 : f32 to vector<128x1xf32>
    %82 = arith.select %80, %78, %81 : vector<128x1xi1>, vector<128x1xf32>
    %83 = tpu.reciprocal %82 {approx = true} : vector<128x1xf32> -> vector<128x1xf32>
    %84 = vector.broadcast %83 : vector<128x1xf32> to vector<128x128xf32>
    %85 = arith.mulf %76, %84 : vector<128x128xf32>
    %cst_31 = arith.constant dense<0.000000e+00> : vector<128x8xf32>
    %86 = tpu.matmul %85, %68, %cst_31 {dimension_numbers = #tpu.dot_dimension_numbers<[1], [0], [0], [1], [0, 0, 1, 1], [], []>} : vector<128x128xf32>, vector<128x8xf32>, vector<128x8xf32> -> vector<128x8xf32>
    %c0_32 = arith.constant 0 : index
    %c16 = arith.constant 16 : index
    %87 = vector.load %arg13[%c0_32, %c16] : memref<128x32xf32, #tpu.memory_space<vmem>>, vector<128x8xf32>
    tpu.vector_store %arg13[%c0_32, %c16], %86 {strides = array<i32>} : memref<128x32xf32, #tpu.memory_space<vmem>>, vector<128x8xf32>,
    %88 = vector.extract_strided_slice %18 {offsets = [0, 24], sizes = [128, 8], strides = [1, 1]} : vector<128x32xf32> to vector<128x8xf32>
    %89 = vector.extract_strided_slice %19 {offsets = [0, 24], sizes = [128, 8], strides = [1, 1]} : vector<128x32xf32> to vector<128x8xf32>
    %90 = vector.extract_strided_slice %20 {offsets = [0, 24], sizes = [128, 8], strides = [1, 1]} : vector<128x32xf32> to vector<128x8xf32>
    %cst_33 = arith.constant dense<0.000000e+00> : vector<128x128xf32>
    %91 = tpu.matmul %88, %89, %cst_33 {dimension_numbers = #tpu.dot_dimension_numbers<[1], [1], [0], [0], [0, 0, 1, 0], [], []>} : vector<128x8xf32>, vector<128x8xf32>, vector<128x128xf32> -> vector<128x128xf32>
    %92 = arith.addf %91, %9 : vector<128x128xf32>
    %cst_34 = arith.constant dense<0xFF800000> : vector<128xf32>
    %93 = vector.multi_reduction <maximumf>, %92, %cst_34 [1] : vector<128x128xf32> to vector<128xf32>
    %94 = vector.shape_cast %93 : vector<128xf32> to vector<128x1xf32>
    %95 = vector.broadcast %94 : vector<128x1xf32> to vector<128x128xf32>
    %96 = arith.subf %92, %95 : vector<128x128xf32>
    %97 = math.exp %96 : vector<128x128xf32>
    %98 = arith.mulf %97, %5 : vector<128x128xf32>
    %cst_35 = arith.constant dense<0.000000e+00> : vector<128xf32>
    %99 = vector.multi_reduction <add>, %98, %cst_35 [1] : vector<128x128xf32> to vector<128xf32>
    %100 = vector.shape_cast %99 : vector<128xf32> to vector<128x1xf32>
    %cst_36 = arith.constant 0.000000e+00 : f32
    %101 = vector.broadcast %cst_36 : f32 to vector<128x1xf32>
    %102 = arith.cmpf ogt, %100, %101 : vector<128x1xf32>
    %cst_37 = arith.constant 1.000000e+00 : f32
    %103 = vector.broadcast %cst_37 : f32 to vector<128x1xf32>
    %104 = arith.select %102, %100, %103 : vector<128x1xi1>, vector<128x1xf32>
    %105 = tpu.reciprocal %104 {approx = true} : vector<128x1xf32> -> vector<128x1xf32>
    %106 = vector.broadcast %105 : vector<128x1xf32> to vector<128x128xf32>
    %107 = arith.mulf %98, %106 : vector<128x128xf32>
    %cst_38 = arith.constant dense<0.000000e+00> : vector<128x8xf32>
    %108 = tpu.matmul %107, %90, %cst_38 {dimension_numbers = #tpu.dot_dimension_numbers<[1], [0], [0], [1], [0, 0, 1, 1], [], []>} : vector<128x128xf32>, vector<128x8xf32>, vector<128x8xf32> -> vector<128x8xf32>
    %c0_39 = arith.constant 0 : index
    %c24 = arith.constant 24 : index
    %109 = vector.load %arg13[%c0_39, %c24] : memref<128x32xf32, #tpu.memory_space<vmem>>, vector<128x8xf32>
    tpu.vector_store %arg13[%c0_39, %c24], %108 {strides = array<i32>} : memref<128x32xf32, #tpu.memory_space<vmem>>, vector<128x8xf32>,
    %c0_40 = arith.constant 0 : index
    %c0_41 = arith.constant 0 : index
    %110 = vector.load %arg13[%c0_40, %c0_41] : memref<128x32xf32, #tpu.memory_space<vmem>>, vector<128x32xf32>
    %111 = arith.addf %110, %21 : vector<128x32xf32>
    %cst_42 = arith.constant 0.000000e+00 : f32
    %112 = vector.broadcast %cst_42 : f32 to vector<128x32xf32>
    %113 = arith.maximumf %111, %112 : vector<128x32xf32>
    %c0_43 = arith.constant 0 : index
    %c0_44 = arith.constant 0 : index
    %114 = vector.load %arg6[%c0_43, %c0_44] : memref<32x128xf32, #tpu.memory_space<vmem>>, vector<32x128xf32>
    %cst_45 = arith.constant dense<0.000000e+00> : vector<128x128xf32>
    %115 = tpu.matmul %113, %114, %cst_45 {dimension_numbers = #tpu.dot_dimension_numbers<[1], [0], [0], [1], [0, 0, 1, 1], [], []>} : vector<128x32xf32>, vector<32x128xf32>, vector<128x128xf32> -> vector<128x128xf32>
    %c0_46 = arith.constant 0 : index
    %c0_47 = arith.constant 0 : index
    %116 = vector.load %arg7[%c0_46, %c0_47] : memref<1x128xf32, #tpu.memory_space<vmem>>, vector<1x128xf32>
    %117 = vector.broadcast %116 : vector<1x128xf32> to vector<128x128xf32>
    %118 = arith.addf %115, %117 : vector<128x128xf32>
    %119 = vector.extract_strided_slice %118 {offsets = [0, 0], sizes = [128, 32], strides = [1, 1]} : vector<128x128xf32> to vector<128x32xf32>
    %cst_48 = arith.constant 0.353553385 : f32
    %120 = vector.broadcast %cst_48 : f32 to vector<128x32xf32>
    %121 = arith.mulf %119, %120 : vector<128x32xf32>
    %122 = vector.extract_strided_slice %118 {offsets = [0, 32], sizes = [128, 32], strides = [1, 1]} : vector<128x128xf32> to vector<128x32xf32>
    %123 = vector.extract_strided_slice %118 {offsets = [0, 64], sizes = [128, 32], strides = [1, 1]} : vector<128x128xf32> to vector<128x32xf32>
    %124 = vector.extract_strided_slice %118 {offsets = [0, 96], sizes = [128, 32], strides = [1, 1]} : vector<128x128xf32> to vector<128x32xf32>
    %125 = vector.extract_strided_slice %121 {offsets = [0, 0], sizes = [128, 8], strides = [1, 1]} : vector<128x32xf32> to vector<128x8xf32>
    %126 = vector.extract_strided_slice %122 {offsets = [0, 0], sizes = [128, 8], strides = [1, 1]} : vector<128x32xf32> to vector<128x8xf32>
    %127 = vector.extract_strided_slice %123 {offsets = [0, 0], sizes = [128, 8], strides = [1, 1]} : vector<128x32xf32> to vector<128x8xf32>
    %cst_49 = arith.constant dense<0.000000e+00> : vector<128x128xf32>
    %128 = tpu.matmul %125, %126, %cst_49 {dimension_numbers = #tpu.dot_dimension_numbers<[1], [1], [0], [0], [0, 0, 1, 0], [], []>} : vector<128x8xf32>, vector<128x8xf32>, vector<128x128xf32> -> vector<128x128xf32>
    %129 = arith.addf %128, %9 : vector<128x128xf32>
    %cst_50 = arith.constant dense<0xFF800000> : vector<128xf32>
    %130 = vector.multi_reduction <maximumf>, %129, %cst_50 [1] : vector<128x128xf32> to vector<128xf32>
    %131 = vector.shape_cast %130 : vector<128xf32> to vector<128x1xf32>
    %132 = vector.broadcast %131 : vector<128x1xf32> to vector<128x128xf32>
    %133 = arith.subf %129, %132 : vector<128x128xf32>
    %134 = math.exp %133 : vector<128x128xf32>
    %135 = arith.mulf %134, %5 : vector<128x128xf32>
    %cst_51 = arith.constant dense<0.000000e+00> : vector<128xf32>
    %136 = vector.multi_reduction <add>, %135, %cst_51 [1] : vector<128x128xf32> to vector<128xf32>
    %137 = vector.shape_cast %136 : vector<128xf32> to vector<128x1xf32>
    %cst_52 = arith.constant 0.000000e+00 : f32
    %138 = vector.broadcast %cst_52 : f32 to vector<128x1xf32>
    %139 = arith.cmpf ogt, %137, %138 : vector<128x1xf32>
    %cst_53 = arith.constant 1.000000e+00 : f32
    %140 = vector.broadcast %cst_53 : f32 to vector<128x1xf32>
    %141 = arith.select %139, %137, %140 : vector<128x1xi1>, vector<128x1xf32>
    %142 = tpu.reciprocal %141 {approx = true} : vector<128x1xf32> -> vector<128x1xf32>
    %143 = vector.broadcast %142 : vector<128x1xf32> to vector<128x128xf32>
    %144 = arith.mulf %135, %143 : vector<128x128xf32>
    %cst_54 = arith.constant dense<0.000000e+00> : vector<128x8xf32>
    %145 = tpu.matmul %144, %127, %cst_54 {dimension_numbers = #tpu.dot_dimension_numbers<[1], [0], [0], [1], [0, 0, 1, 1], [], []>} : vector<128x128xf32>, vector<128x8xf32>, vector<128x8xf32> -> vector<128x8xf32>
    %c0_55 = arith.constant 0 : index
    %c0_56 = arith.constant 0 : index
    %146 = vector.load %arg13[%c0_55, %c0_56] : memref<128x32xf32, #tpu.memory_space<vmem>>, vector<128x8xf32>
    tpu.vector_store %arg13[%c0_55, %c0_56], %145 {strides = array<i32>} : memref<128x32xf32, #tpu.memory_space<vmem>>, vector<128x8xf32>,
    %147 = vector.extract_strided_slice %121 {offsets = [0, 8], sizes = [128, 8], strides = [1, 1]} : vector<128x32xf32> to vector<128x8xf32>
    %148 = vector.extract_strided_slice %122 {offsets = [0, 8], sizes = [128, 8], strides = [1, 1]} : vector<128x32xf32> to vector<128x8xf32>
    %149 = vector.extract_strided_slice %123 {offsets = [0, 8], sizes = [128, 8], strides = [1, 1]} : vector<128x32xf32> to vector<128x8xf32>
    %cst_57 = arith.constant dense<0.000000e+00> : vector<128x128xf32>
    %150 = tpu.matmul %147, %148, %cst_57 {dimension_numbers = #tpu.dot_dimension_numbers<[1], [1], [0], [0], [0, 0, 1, 0], [], []>} : vector<128x8xf32>, vector<128x8xf32>, vector<128x128xf32> -> vector<128x128xf32>
    %151 = arith.addf %150, %9 : vector<128x128xf32>
    %cst_58 = arith.constant dense<0xFF800000> : vector<128xf32>
    %152 = vector.multi_reduction <maximumf>, %151, %cst_58 [1] : vector<128x128xf32> to vector<128xf32>
    %153 = vector.shape_cast %152 : vector<128xf32> to vector<128x1xf32>
    %154 = vector.broadcast %153 : vector<128x1xf32> to vector<128x128xf32>
    %155 = arith.subf %151, %154 : vector<128x128xf32>
    %156 = math.exp %155 : vector<128x128xf32>
    %157 = arith.mulf %156, %5 : vector<128x128xf32>
    %cst_59 = arith.constant dense<0.000000e+00> : vector<128xf32>
    %158 = vector.multi_reduction <add>, %157, %cst_59 [1] : vector<128x128xf32> to vector<128xf32>
    %159 = vector.shape_cast %158 : vector<128xf32> to vector<128x1xf32>
    %cst_60 = arith.constant 0.000000e+00 : f32
    %160 = vector.broadcast %cst_60 : f32 to vector<128x1xf32>
    %161 = arith.cmpf ogt, %159, %160 : vector<128x1xf32>
    %cst_61 = arith.constant 1.000000e+00 : f32
    %162 = vector.broadcast %cst_61 : f32 to vector<128x1xf32>
    %163 = arith.select %161, %159, %162 : vector<128x1xi1>, vector<128x1xf32>
    %164 = tpu.reciprocal %163 {approx = true} : vector<128x1xf32> -> vector<128x1xf32>
    %165 = vector.broadcast %164 : vector<128x1xf32> to vector<128x128xf32>
    %166 = arith.mulf %157, %165 : vector<128x128xf32>
    %cst_62 = arith.constant dense<0.000000e+00> : vector<128x8xf32>
    %167 = tpu.matmul %166, %149, %cst_62 {dimension_numbers = #tpu.dot_dimension_numbers<[1], [0], [0], [1], [0, 0, 1, 1], [], []>} : vector<128x128xf32>, vector<128x8xf32>, vector<128x8xf32> -> vector<128x8xf32>
    %c0_63 = arith.constant 0 : index
    %c8_64 = arith.constant 8 : index
    %168 = vector.load %arg13[%c0_63, %c8_64] : memref<128x32xf32, #tpu.memory_space<vmem>>, vector<128x8xf32>
    tpu.vector_store %arg13[%c0_63, %c8_64], %167 {strides = array<i32>} : memref<128x32xf32, #tpu.memory_space<vmem>>, vector<128x8xf32>,
    %169 = vector.extract_strided_slice %121 {offsets = [0, 16], sizes = [128, 8], strides = [1, 1]} : vector<128x32xf32> to vector<128x8xf32>
    %170 = vector.extract_strided_slice %122 {offsets = [0, 16], sizes = [128, 8], strides = [1, 1]} : vector<128x32xf32> to vector<128x8xf32>
    %171 = vector.extract_strided_slice %123 {offsets = [0, 16], sizes = [128, 8], strides = [1, 1]} : vector<128x32xf32> to vector<128x8xf32>
    %cst_65 = arith.constant dense<0.000000e+00> : vector<128x128xf32>
    %172 = tpu.matmul %169, %170, %cst_65 {dimension_numbers = #tpu.dot_dimension_numbers<[1], [1], [0], [0], [0, 0, 1, 0], [], []>} : vector<128x8xf32>, vector<128x8xf32>, vector<128x128xf32> -> vector<128x128xf32>
    %173 = arith.addf %172, %9 : vector<128x128xf32>
    %cst_66 = arith.constant dense<0xFF800000> : vector<128xf32>
    %174 = vector.multi_reduction <maximumf>, %173, %cst_66 [1] : vector<128x128xf32> to vector<128xf32>
    %175 = vector.shape_cast %174 : vector<128xf32> to vector<128x1xf32>
    %176 = vector.broadcast %175 : vector<128x1xf32> to vector<128x128xf32>
    %177 = arith.subf %173, %176 : vector<128x128xf32>
    %178 = math.exp %177 : vector<128x128xf32>
    %179 = arith.mulf %178, %5 : vector<128x128xf32>
    %cst_67 = arith.constant dense<0.000000e+00> : vector<128xf32>
    %180 = vector.multi_reduction <add>, %179, %cst_67 [1] : vector<128x128xf32> to vector<128xf32>
    %181 = vector.shape_cast %180 : vector<128xf32> to vector<128x1xf32>
    %cst_68 = arith.constant 0.000000e+00 : f32
    %182 = vector.broadcast %cst_68 : f32 to vector<128x1xf32>
    %183 = arith.cmpf ogt, %181, %182 : vector<128x1xf32>
    %cst_69 = arith.constant 1.000000e+00 : f32
    %184 = vector.broadcast %cst_69 : f32 to vector<128x1xf32>
    %185 = arith.select %183, %181, %184 : vector<128x1xi1>, vector<128x1xf32>
    %186 = tpu.reciprocal %185 {approx = true} : vector<128x1xf32> -> vector<128x1xf32>
    %187 = vector.broadcast %186 : vector<128x1xf32> to vector<128x128xf32>
    %188 = arith.mulf %179, %187 : vector<128x128xf32>
    %cst_70 = arith.constant dense<0.000000e+00> : vector<128x8xf32>
    %189 = tpu.matmul %188, %171, %cst_70 {dimension_numbers = #tpu.dot_dimension_numbers<[1], [0], [0], [1], [0, 0, 1, 1], [], []>} : vector<128x128xf32>, vector<128x8xf32>, vector<128x8xf32> -> vector<128x8xf32>
    %c0_71 = arith.constant 0 : index
    %c16_72 = arith.constant 16 : index
    %190 = vector.load %arg13[%c0_71, %c16_72] : memref<128x32xf32, #tpu.memory_space<vmem>>, vector<128x8xf32>
    tpu.vector_store %arg13[%c0_71, %c16_72], %189 {strides = array<i32>} : memref<128x32xf32, #tpu.memory_space<vmem>>, vector<128x8xf32>,
    %191 = vector.extract_strided_slice %121 {offsets = [0, 24], sizes = [128, 8], strides = [1, 1]} : vector<128x32xf32> to vector<128x8xf32>
    %192 = vector.extract_strided_slice %122 {offsets = [0, 24], sizes = [128, 8], strides = [1, 1]} : vector<128x32xf32> to vector<128x8xf32>
    %193 = vector.extract_strided_slice %123 {offsets = [0, 24], sizes = [128, 8], strides = [1, 1]} : vector<128x32xf32> to vector<128x8xf32>
    %cst_73 = arith.constant dense<0.000000e+00> : vector<128x128xf32>
    %194 = tpu.matmul %191, %192, %cst_73 {dimension_numbers = #tpu.dot_dimension_numbers<[1], [1], [0], [0], [0, 0, 1, 0], [], []>} : vector<128x8xf32>, vector<128x8xf32>, vector<128x128xf32> -> vector<128x128xf32>
    %195 = arith.addf %194, %9 : vector<128x128xf32>
    %cst_74 = arith.constant dense<0xFF800000> : vector<128xf32>
    %196 = vector.multi_reduction <maximumf>, %195, %cst_74 [1] : vector<128x128xf32> to vector<128xf32>
    %197 = vector.shape_cast %196 : vector<128xf32> to vector<128x1xf32>
    %198 = vector.broadcast %197 : vector<128x1xf32> to vector<128x128xf32>
    %199 = arith.subf %195, %198 : vector<128x128xf32>
    %200 = math.exp %199 : vector<128x128xf32>
    %201 = arith.mulf %200, %5 : vector<128x128xf32>
    %cst_75 = arith.constant dense<0.000000e+00> : vector<128xf32>
    %202 = vector.multi_reduction <add>, %201, %cst_75 [1] : vector<128x128xf32> to vector<128xf32>
    %203 = vector.shape_cast %202 : vector<128xf32> to vector<128x1xf32>
    %cst_76 = arith.constant 0.000000e+00 : f32
    %204 = vector.broadcast %cst_76 : f32 to vector<128x1xf32>
    %205 = arith.cmpf ogt, %203, %204 : vector<128x1xf32>
    %cst_77 = arith.constant 1.000000e+00 : f32
    %206 = vector.broadcast %cst_77 : f32 to vector<128x1xf32>
    %207 = arith.select %205, %203, %206 : vector<128x1xi1>, vector<128x1xf32>
    %208 = tpu.reciprocal %207 {approx = true} : vector<128x1xf32> -> vector<128x1xf32>
    %209 = vector.broadcast %208 : vector<128x1xf32> to vector<128x128xf32>
    %210 = arith.mulf %201, %209 : vector<128x128xf32>
    %cst_78 = arith.constant dense<0.000000e+00> : vector<128x8xf32>
    %211 = tpu.matmul %210, %193, %cst_78 {dimension_numbers = #tpu.dot_dimension_numbers<[1], [0], [0], [1], [0, 0, 1, 1], [], []>} : vector<128x128xf32>, vector<128x8xf32>, vector<128x8xf32> -> vector<128x8xf32>
    %c0_79 = arith.constant 0 : index
    %c24_80 = arith.constant 24 : index
    %212 = vector.load %arg13[%c0_79, %c24_80] : memref<128x32xf32, #tpu.memory_space<vmem>>, vector<128x8xf32>
    tpu.vector_store %arg13[%c0_79, %c24_80], %211 {strides = array<i32>} : memref<128x32xf32, #tpu.memory_space<vmem>>, vector<128x8xf32>,
    %c0_81 = arith.constant 0 : index
    %c0_82 = arith.constant 0 : index
    %213 = vector.load %arg13[%c0_81, %c0_82] : memref<128x32xf32, #tpu.memory_space<vmem>>, vector<128x32xf32>
    %214 = arith.addf %213, %124 : vector<128x32xf32>
    %cst_83 = arith.constant 0.000000e+00 : f32
    %215 = vector.broadcast %cst_83 : f32 to vector<128x32xf32>
    %216 = arith.maximumf %214, %215 : vector<128x32xf32>
    %c0_84 = arith.constant 0 : index
    %c0_85 = arith.constant 0 : index
    %217 = vector.load %arg8[%c0_84, %c0_85] : memref<32x128xf32, #tpu.memory_space<vmem>>, vector<32x128xf32>
    %cst_86 = arith.constant dense<0.000000e+00> : vector<128x128xf32>
    %218 = tpu.matmul %216, %217, %cst_86 {dimension_numbers = #tpu.dot_dimension_numbers<[1], [0], [0], [1], [0, 0, 1, 1], [], []>} : vector<128x32xf32>, vector<32x128xf32>, vector<128x128xf32> -> vector<128x128xf32>
    %c0_87 = arith.constant 0 : index
    %c0_88 = arith.constant 0 : index
    %219 = vector.load %arg9[%c0_87, %c0_88] : memref<1x128xf32, #tpu.memory_space<vmem>>, vector<1x128xf32>
    %220 = vector.broadcast %219 : vector<1x128xf32> to vector<128x128xf32>
    %221 = arith.addf %218, %220 : vector<128x128xf32>
    %222 = vector.extract_strided_slice %221 {offsets = [0, 0], sizes = [128, 32], strides = [1, 1]} : vector<128x128xf32> to vector<128x32xf32>
    %cst_89 = arith.constant 0.353553385 : f32
    %223 = vector.broadcast %cst_89 : f32 to vector<128x32xf32>
    %224 = arith.mulf %222, %223 : vector<128x32xf32>
    %225 = vector.extract_strided_slice %221 {offsets = [0, 32], sizes = [128, 32], strides = [1, 1]} : vector<128x128xf32> to vector<128x32xf32>
    %226 = vector.extract_strided_slice %221 {offsets = [0, 64], sizes = [128, 32], strides = [1, 1]} : vector<128x128xf32> to vector<128x32xf32>
    %227 = vector.extract_strided_slice %221 {offsets = [0, 96], sizes = [128, 32], strides = [1, 1]} : vector<128x128xf32> to vector<128x32xf32>
    %228 = vector.extract_strided_slice %224 {offsets = [0, 0], sizes = [128, 8], strides = [1, 1]} : vector<128x32xf32> to vector<128x8xf32>
    %229 = vector.extract_strided_slice %225 {offsets = [0, 0], sizes = [128, 8], strides = [1, 1]} : vector<128x32xf32> to vector<128x8xf32>
    %230 = vector.extract_strided_slice %226 {offsets = [0, 0], sizes = [128, 8], strides = [1, 1]} : vector<128x32xf32> to vector<128x8xf32>
    %cst_90 = arith.constant dense<0.000000e+00> : vector<128x128xf32>
    %231 = tpu.matmul %228, %229, %cst_90 {dimension_numbers = #tpu.dot_dimension_numbers<[1], [1], [0], [0], [0, 0, 1, 0], [], []>} : vector<128x8xf32>, vector<128x8xf32>, vector<128x128xf32> -> vector<128x128xf32>
    %232 = arith.addf %231, %9 : vector<128x128xf32>
    %cst_91 = arith.constant dense<0xFF800000> : vector<128xf32>
    %233 = vector.multi_reduction <maximumf>, %232, %cst_91 [1] : vector<128x128xf32> to vector<128xf32>
    %234 = vector.shape_cast %233 : vector<128xf32> to vector<128x1xf32>
    %235 = vector.broadcast %234 : vector<128x1xf32> to vector<128x128xf32>
    %236 = arith.subf %232, %235 : vector<128x128xf32>
    %237 = math.exp %236 : vector<128x128xf32>
    %238 = arith.mulf %237, %5 : vector<128x128xf32>
    %cst_92 = arith.constant dense<0.000000e+00> : vector<128xf32>
    %239 = vector.multi_reduction <add>, %238, %cst_92 [1] : vector<128x128xf32> to vector<128xf32>
    %240 = vector.shape_cast %239 : vector<128xf32> to vector<128x1xf32>
    %cst_93 = arith.constant 0.000000e+00 : f32
    %241 = vector.broadcast %cst_93 : f32 to vector<128x1xf32>
    %242 = arith.cmpf ogt, %240, %241 : vector<128x1xf32>
    %cst_94 = arith.constant 1.000000e+00 : f32
    %243 = vector.broadcast %cst_94 : f32 to vector<128x1xf32>
    %244 = arith.select %242, %240, %243 : vector<128x1xi1>, vector<128x1xf32>
    %245 = tpu.reciprocal %244 {approx = true} : vector<128x1xf32> -> vector<128x1xf32>
    %246 = vector.broadcast %245 : vector<128x1xf32> to vector<128x128xf32>
    %247 = arith.mulf %238, %246 : vector<128x128xf32>
    %cst_95 = arith.constant dense<0.000000e+00> : vector<128x8xf32>
    %248 = tpu.matmul %247, %230, %cst_95 {dimension_numbers = #tpu.dot_dimension_numbers<[1], [0], [0], [1], [0, 0, 1, 1], [], []>} : vector<128x128xf32>, vector<128x8xf32>, vector<128x8xf32> -> vector<128x8xf32>
    %c0_96 = arith.constant 0 : index
    %c0_97 = arith.constant 0 : index
    %249 = vector.load %arg13[%c0_96, %c0_97] : memref<128x32xf32, #tpu.memory_space<vmem>>, vector<128x8xf32>
    tpu.vector_store %arg13[%c0_96, %c0_97], %248 {strides = array<i32>} : memref<128x32xf32, #tpu.memory_space<vmem>>, vector<128x8xf32>,
    %250 = vector.extract_strided_slice %224 {offsets = [0, 8], sizes = [128, 8], strides = [1, 1]} : vector<128x32xf32> to vector<128x8xf32>
    %251 = vector.extract_strided_slice %225 {offsets = [0, 8], sizes = [128, 8], strides = [1, 1]} : vector<128x32xf32> to vector<128x8xf32>
    %252 = vector.extract_strided_slice %226 {offsets = [0, 8], sizes = [128, 8], strides = [1, 1]} : vector<128x32xf32> to vector<128x8xf32>
    %cst_98 = arith.constant dense<0.000000e+00> : vector<128x128xf32>
    %253 = tpu.matmul %250, %251, %cst_98 {dimension_numbers = #tpu.dot_dimension_numbers<[1], [1], [0], [0], [0, 0, 1, 0], [], []>} : vector<128x8xf32>, vector<128x8xf32>, vector<128x128xf32> -> vector<128x128xf32>
    %254 = arith.addf %253, %9 : vector<128x128xf32>
    %cst_99 = arith.constant dense<0xFF800000> : vector<128xf32>
    %255 = vector.multi_reduction <maximumf>, %254, %cst_99 [1] : vector<128x128xf32> to vector<128xf32>
    %256 = vector.shape_cast %255 : vector<128xf32> to vector<128x1xf32>
    %257 = vector.broadcast %256 : vector<128x1xf32> to vector<128x128xf32>
    %258 = arith.subf %254, %257 : vector<128x128xf32>
    %259 = math.exp %258 : vector<128x128xf32>
    %260 = arith.mulf %259, %5 : vector<128x128xf32>
    %cst_100 = arith.constant dense<0.000000e+00> : vector<128xf32>
    %261 = vector.multi_reduction <add>, %260, %cst_100 [1] : vector<128x128xf32> to vector<128xf32>
    %262 = vector.shape_cast %261 : vector<128xf32> to vector<128x1xf32>
    %cst_101 = arith.constant 0.000000e+00 : f32
    %263 = vector.broadcast %cst_101 : f32 to vector<128x1xf32>
    %264 = arith.cmpf ogt, %262, %263 : vector<128x1xf32>
    %cst_102 = arith.constant 1.000000e+00 : f32
    %265 = vector.broadcast %cst_102 : f32 to vector<128x1xf32>
    %266 = arith.select %264, %262, %265 : vector<128x1xi1>, vector<128x1xf32>
    %267 = tpu.reciprocal %266 {approx = true} : vector<128x1xf32> -> vector<128x1xf32>
    %268 = vector.broadcast %267 : vector<128x1xf32> to vector<128x128xf32>
    %269 = arith.mulf %260, %268 : vector<128x128xf32>
    %cst_103 = arith.constant dense<0.000000e+00> : vector<128x8xf32>
    %270 = tpu.matmul %269, %252, %cst_103 {dimension_numbers = #tpu.dot_dimension_numbers<[1], [0], [0], [1], [0, 0, 1, 1], [], []>} : vector<128x128xf32>, vector<128x8xf32>, vector<128x8xf32> -> vector<128x8xf32>
    %c0_104 = arith.constant 0 : index
    %c8_105 = arith.constant 8 : index
    %271 = vector.load %arg13[%c0_104, %c8_105] : memref<128x32xf32, #tpu.memory_space<vmem>>, vector<128x8xf32>
    tpu.vector_store %arg13[%c0_104, %c8_105], %270 {strides = array<i32>} : memref<128x32xf32, #tpu.memory_space<vmem>>, vector<128x8xf32>,
    %272 = vector.extract_strided_slice %224 {offsets = [0, 16], sizes = [128, 8], strides = [1, 1]} : vector<128x32xf32> to vector<128x8xf32>
    %273 = vector.extract_strided_slice %225 {offsets = [0, 16], sizes = [128, 8], strides = [1, 1]} : vector<128x32xf32> to vector<128x8xf32>
    %274 = vector.extract_strided_slice %226 {offsets = [0, 16], sizes = [128, 8], strides = [1, 1]} : vector<128x32xf32> to vector<128x8xf32>
    %cst_106 = arith.constant dense<0.000000e+00> : vector<128x128xf32>
    %275 = tpu.matmul %272, %273, %cst_106 {dimension_numbers = #tpu.dot_dimension_numbers<[1], [1], [0], [0], [0, 0, 1, 0], [], []>} : vector<128x8xf32>, vector<128x8xf32>, vector<128x128xf32> -> vector<128x128xf32>
    %276 = arith.addf %275, %9 : vector<128x128xf32>
    %cst_107 = arith.constant dense<0xFF800000> : vector<128xf32>
    %277 = vector.multi_reduction <maximumf>, %276, %cst_107 [1] : vector<128x128xf32> to vector<128xf32>
    %278 = vector.shape_cast %277 : vector<128xf32> to vector<128x1xf32>
    %279 = vector.broadcast %278 : vector<128x1xf32> to vector<128x128xf32>
    %280 = arith.subf %276, %279 : vector<128x128xf32>
    %281 = math.exp %280 : vector<128x128xf32>
    %282 = arith.mulf %281, %5 : vector<128x128xf32>
    %cst_108 = arith.constant dense<0.000000e+00> : vector<128xf32>
    %283 = vector.multi_reduction <add>, %282, %cst_108 [1] : vector<128x128xf32> to vector<128xf32>
    %284 = vector.shape_cast %283 : vector<128xf32> to vector<128x1xf32>
    %cst_109 = arith.constant 0.000000e+00 : f32
    %285 = vector.broadcast %cst_109 : f32 to vector<128x1xf32>
    %286 = arith.cmpf ogt, %284, %285 : vector<128x1xf32>
    %cst_110 = arith.constant 1.000000e+00 : f32
    %287 = vector.broadcast %cst_110 : f32 to vector<128x1xf32>
    %288 = arith.select %286, %284, %287 : vector<128x1xi1>, vector<128x1xf32>
    %289 = tpu.reciprocal %288 {approx = true} : vector<128x1xf32> -> vector<128x1xf32>
    %290 = vector.broadcast %289 : vector<128x1xf32> to vector<128x128xf32>
    %291 = arith.mulf %282, %290 : vector<128x128xf32>
    %cst_111 = arith.constant dense<0.000000e+00> : vector<128x8xf32>
    %292 = tpu.matmul %291, %274, %cst_111 {dimension_numbers = #tpu.dot_dimension_numbers<[1], [0], [0], [1], [0, 0, 1, 1], [], []>} : vector<128x128xf32>, vector<128x8xf32>, vector<128x8xf32> -> vector<128x8xf32>
    %c0_112 = arith.constant 0 : index
    %c16_113 = arith.constant 16 : index
    %293 = vector.load %arg13[%c0_112, %c16_113] : memref<128x32xf32, #tpu.memory_space<vmem>>, vector<128x8xf32>
    tpu.vector_store %arg13[%c0_112, %c16_113], %292 {strides = array<i32>} : memref<128x32xf32, #tpu.memory_space<vmem>>, vector<128x8xf32>,
    %294 = vector.extract_strided_slice %224 {offsets = [0, 24], sizes = [128, 8], strides = [1, 1]} : vector<128x32xf32> to vector<128x8xf32>
    %295 = vector.extract_strided_slice %225 {offsets = [0, 24], sizes = [128, 8], strides = [1, 1]} : vector<128x32xf32> to vector<128x8xf32>
    %296 = vector.extract_strided_slice %226 {offsets = [0, 24], sizes = [128, 8], strides = [1, 1]} : vector<128x32xf32> to vector<128x8xf32>
    %cst_114 = arith.constant dense<0.000000e+00> : vector<128x128xf32>
    %297 = tpu.matmul %294, %295, %cst_114 {dimension_numbers = #tpu.dot_dimension_numbers<[1], [1], [0], [0], [0, 0, 1, 0], [], []>} : vector<128x8xf32>, vector<128x8xf32>, vector<128x128xf32> -> vector<128x128xf32>
    %298 = arith.addf %297, %9 : vector<128x128xf32>
    %cst_115 = arith.constant dense<0xFF800000> : vector<128xf32>
    %299 = vector.multi_reduction <maximumf>, %298, %cst_115 [1] : vector<128x128xf32> to vector<128xf32>
    %300 = vector.shape_cast %299 : vector<128xf32> to vector<128x1xf32>
    %301 = vector.broadcast %300 : vector<128x1xf32> to vector<128x128xf32>
    %302 = arith.subf %298, %301 : vector<128x128xf32>
    %303 = math.exp %302 : vector<128x128xf32>
    %304 = arith.mulf %303, %5 : vector<128x128xf32>
    %cst_116 = arith.constant dense<0.000000e+00> : vector<128xf32>
    %305 = vector.multi_reduction <add>, %304, %cst_116 [1] : vector<128x128xf32> to vector<128xf32>
    %306 = vector.shape_cast %305 : vector<128xf32> to vector<128x1xf32>
    %cst_117 = arith.constant 0.000000e+00 : f32
    %307 = vector.broadcast %cst_117 : f32 to vector<128x1xf32>
    %308 = arith.cmpf ogt, %306, %307 : vector<128x1xf32>
    %cst_118 = arith.constant 1.000000e+00 : f32
    %309 = vector.broadcast %cst_118 : f32 to vector<128x1xf32>
    %310 = arith.select %308, %306, %309 : vector<128x1xi1>, vector<128x1xf32>
    %311 = tpu.reciprocal %310 {approx = true} : vector<128x1xf32> -> vector<128x1xf32>
    %312 = vector.broadcast %311 : vector<128x1xf32> to vector<128x128xf32>
    %313 = arith.mulf %304, %312 : vector<128x128xf32>
    %cst_119 = arith.constant dense<0.000000e+00> : vector<128x8xf32>
    %314 = tpu.matmul %313, %296, %cst_119 {dimension_numbers = #tpu.dot_dimension_numbers<[1], [0], [0], [1], [0, 0, 1, 1], [], []>} : vector<128x128xf32>, vector<128x8xf32>, vector<128x8xf32> -> vector<128x8xf32>
    %c0_120 = arith.constant 0 : index
    %c24_121 = arith.constant 24 : index
    %315 = vector.load %arg13[%c0_120, %c24_121] : memref<128x32xf32, #tpu.memory_space<vmem>>, vector<128x8xf32>
    tpu.vector_store %arg13[%c0_120, %c24_121], %314 {strides = array<i32>} : memref<128x32xf32, #tpu.memory_space<vmem>>, vector<128x8xf32>,
    %c0_122 = arith.constant 0 : index
    %c0_123 = arith.constant 0 : index
    %316 = vector.load %arg13[%c0_122, %c0_123] : memref<128x32xf32, #tpu.memory_space<vmem>>, vector<128x32xf32>
    %317 = arith.addf %316, %227 : vector<128x32xf32>
    %cst_124 = arith.constant 0.000000e+00 : f32
    %318 = vector.broadcast %cst_124 : f32 to vector<128x32xf32>
    %319 = arith.maximumf %317, %318 : vector<128x32xf32>
    %c0_125 = arith.constant 0 : index
    %c0_126 = arith.constant 0 : index
    %320 = vector.load %arg3[%c0_125, %c0_126] : memref<8x128xf32, #tpu.memory_space<vmem>>, vector<8x128xf32>
    %cst_127 = arith.constant dense<0.000000e+00> : vector<8x32xf32>
    %321 = tpu.matmul %320, %319, %cst_127 {dimension_numbers = #tpu.dot_dimension_numbers<[1], [0], [0], [1], [0, 0, 1, 1], [], []>} : vector<8x128xf32>, vector<128x32xf32>, vector<8x32xf32> -> vector<8x32xf32>
    %c0_128 = arith.constant 0 : index
    %c0_129 = arith.constant 0 : index
    %322 = vector.load %arg10[%c0_128, %c0_129] : memref<32x4xf32, #tpu.memory_space<vmem>>, vector<32x4xf32>
    %cst_130 = arith.constant dense<0.000000e+00> : vector<8x4xf32>
    %323 = tpu.matmul %321, %322, %cst_130 {dimension_numbers = #tpu.dot_dimension_numbers<[1], [0], [0], [1], [0, 0, 1, 1], [], []>} : vector<8x32xf32>, vector<32x4xf32>, vector<8x4xf32> -> vector<8x4xf32>
    %c0_131 = arith.constant 0 : index
    %c0_132 = arith.constant 0 : index
    %324 = vector.load %arg11[%c0_131, %c0_132] : memref<1x4xf32, #tpu.memory_space<vmem>>, vector<1x4xf32>
    %325 = vector.broadcast %324 : vector<1x4xf32> to vector<8x4xf32>
    %326 = arith.addf %323, %325 : vector<8x4xf32>
    %c0_133 = arith.constant 0 : index
    %c0_134 = arith.constant 0 : index
    %327 = vector.load %arg12[%c0_133, %c0_134] : memref<8x4xf32, #tpu.memory_space<vmem>>, vector<8x4xf32>
    tpu.vector_store %arg12[%c0_133, %c0_134], %326 {strides = array<i32>} : memref<8x4xf32, #tpu.memory_space<vmem>>, vector<8x4xf32>,
    return
  }
  func.func @transform_0(%arg0: i32) -> (i32, i32) {
    %c0_i32 = arith.constant 0 : i32
    %c0_i32_0 = arith.constant 0 : i32
    %c0_i32_1 = arith.constant 0 : i32
    return %c0_i32, %c0_i32_0 : i32, i32
  }
  func.func @transform_1(%arg0: i32) -> (i32, i32) {
    %c0_i32 = arith.constant 0 : i32
    %c0_i32_0 = arith.constant 0 : i32
    %c0_i32_1 = arith.constant 0 : i32
    return %c0_i32, %c0_i32_0 : i32, i32
  }
  func.func @transform_2(%arg0: i32) -> (i32, i32) {
    %c0_i32 = arith.constant 0 : i32
    %c0_i32_0 = arith.constant 0 : i32
    %c0_i32_1 = arith.constant 0 : i32
    return %c0_i32, %c0_i32_0 : i32, i32
  }
  func.func @transform_3(%arg0: i32) -> (i32, i32) {
    %c0_i32 = arith.constant 0 : i32
    %c0_i32_0 = arith.constant 0 : i32
    %c0_i32_1 = arith.constant 0 : i32
    return %c0_i32, %c0_i32_0 : i32, i32
  }
  func.func @transform_4(%arg0: i32) -> (i32, i32) {
    %c0_i32 = arith.constant 0 : i32
    %c0_i32_0 = arith.constant 0 : i32
    %c0_i32_1 = arith.constant 0 : i32
    return %c0_i32, %c0_i32_0 : i32, i32
  }
  func.func @transform_5(%arg0: i32) -> (i32, i32) {
    %c0_i32 = arith.constant 0 : i32
    %c0_i32_0 = arith.constant 0 : i32
    %c0_i32_1 = arith.constant 0 : i32
    return %c0_i32, %c0_i32_0 : i32, i32
  }
  func.func @transform_6(%arg0: i32) -> (i32, i32) {
    %c0_i32 = arith.constant 0 : i32
    %c0_i32_0 = arith.constant 0 : i32
    %c0_i32_1 = arith.constant 0 : i32
    return %c0_i32, %c0_i32_0 : i32, i32
  }
  func.func @transform_7(%arg0: i32) -> (i32, i32) {
    %c0_i32 = arith.constant 0 : i32
    %c0_i32_0 = arith.constant 0 : i32
    %c0_i32_1 = arith.constant 0 : i32
    return %c0_i32, %c0_i32_0 : i32, i32
  }
  func.func @transform_8(%arg0: i32) -> (i32, i32) {
    %c0_i32 = arith.constant 0 : i32
    %c0_i32_0 = arith.constant 0 : i32
    %c0_i32_1 = arith.constant 0 : i32
    return %c0_i32, %c0_i32_0 : i32, i32
  }
  func.func @transform_9(%arg0: i32) -> (i32, i32) {
    %c0_i32 = arith.constant 0 : i32
    %c0_i32_0 = arith.constant 0 : i32
    %c0_i32_1 = arith.constant 0 : i32
    return %c0_i32, %c0_i32_0 : i32, i32
  }
  func.func @transform_10(%arg0: i32) -> (i32, i32) {
    %c0_i32 = arith.constant 0 : i32
    %c0_i32_0 = arith.constant 0 : i32
    %c0_i32_1 = arith.constant 0 : i32
    return %c0_i32, %c0_i32_0 : i32, i32
  }
  func.func @transform_11(%arg0: i32) -> (i32, i32) {
    %c0_i32 = arith.constant 0 : i32
    %c0_i32_0 = arith.constant 0 : i32
    %c0_i32_1 = arith.constant 0 : i32
    return %c0_i32, %c0_i32_0 : i32, i32
  }
}

</mosaic_0001>

<llo_original>
// kernel: tpu_custom_call.1
$region0: #{tpu_custom_call.1}
  #allocation0 [shape = 'u32[]', space=smem, size = 0x4, offset = 0x4, fixed_abs, tag = 'smem constant byte address 0x4 - core index']
  #allocation1 [shape = 'u32[72,128]{1,0:T(1,128)}', space=vmem, size = 0x9000, scoped, tag = 'internal scratch']
  #allocation2 [shape = 'f32[128,32]{1,0:T(8,128)}', space=vmem, size = 0x10000, scoped, tag = 'scratch operand']
  %s0 = inlined_call_operand.vmem [shape: f32[128,16], index: 0, kind: input, shape index: {}]
  %s1 = inlined_call_operand.vmem [shape: s8[128,128], index: 1, kind: input, shape index: {}]
  %s2 = inlined_call_operand.vmem [shape: f32[8,128], index: 2, kind: input, shape index: {}]
  %s3 = inlined_call_operand.vmem [shape: f32[16,128], index: 3, kind: input, shape index: {}]
  %s4 = inlined_call_operand.vmem [shape: f32[1,128], index: 4, kind: input, shape index: {}]
  %s5 = inlined_call_operand.vmem [shape: f32[32,128], index: 5, kind: input, shape index: {}]
  %s6 = inlined_call_operand.vmem [shape: f32[1,128], index: 6, kind: input, shape index: {}]
  %s7 = inlined_call_operand.vmem [shape: f32[32,128], index: 7, kind: input, shape index: {}]
  %s8 = inlined_call_operand.vmem [shape: f32[1,128], index: 8, kind: input, shape index: {}]
  %s9 = inlined_call_operand.vmem [shape: f32[32,4], index: 9, kind: input, shape index: {}]
  %s10 = inlined_call_operand.vmem [shape: f32[1,4], index: 10, kind: input, shape index: {}]
  %s11 = inlined_call_operand.vmem [shape: f32[8,4], index: 11, kind: output, shape index: {}]
  %s12 = sld [smem:[#allocation0]]
  $region54: #{tpu_custom_call.1} parent=0
    _
  %s14 = ssub.s32 1, %s12
  %s15 = scalar_select 0, %s14, %s12
  // Predicated region
  $region2: #{tpu_custom_call.1} parent=0 // pred_check
    _
  $region3: #{tpu_custom_call.1} parent=0 // pred_check_branch
    %17 = sbr.rel (0) target = $region5
  $region4: #{tpu_custom_call.1} parent=0 // pred_region
    _
  $region5: #{tpu_custom_call.1} parent=0 // pred_fallthru
    _
  // Predicated region
  $region6: #{tpu_custom_call.1} parent=0 // pred_check
    _
  $region7: #{tpu_custom_call.1} parent=0 // pred_check_branch
    %19 = sbr.rel (0) target = $region9
  $region8: #{tpu_custom_call.1} parent=0 // pred_region
    _
  $region9: #{tpu_custom_call.1} parent=0 // pred_fallthru
    _
  // Predicated region
  $region10: #{tpu_custom_call.1} parent=0 // pred_check
    _
  $region11: #{tpu_custom_call.1} parent=0 // pred_check_branch
    %21 = sbr.rel (0) target = $region13
  $region12: #{tpu_custom_call.1} parent=0 // pred_region
    _
  $region13: #{tpu_custom_call.1} parent=0 // pred_fallthru
    _
  // Predicated region
  $region14: #{tpu_custom_call.1} parent=0 // pred_check
    _
  $region15: #{tpu_custom_call.1} parent=0 // pred_check_branch
    %23 = sbr.rel (0) target = $region17
  $region16: #{tpu_custom_call.1} parent=0 // pred_region
    _
  $region17: #{tpu_custom_call.1} parent=0 // pred_fallthru
    _
  // Predicated region
  $region18: #{tpu_custom_call.1} parent=0 // pred_check
    _
  $region19: #{tpu_custom_call.1} parent=0 // pred_check_branch
    %25 = sbr.rel (0) target = $region21
  $region20: #{tpu_custom_call.1} parent=0 // pred_region
    _
  $region21: #{tpu_custom_call.1} parent=0 // pred_fallthru
    _
  // Predicated region
  $region22: #{tpu_custom_call.1} parent=0 // pred_check
    _
  $region23: #{tpu_custom_call.1} parent=0 // pred_check_branch
    %27 = sbr.rel (0) target = $region25
  $region24: #{tpu_custom_call.1} parent=0 // pred_region
    _
  $region25: #{tpu_custom_call.1} parent=0 // pred_fallthru
    _
  // Predicated region
  $region26: #{tpu_custom_call.1} parent=0 // pred_check
    _
  $region27: #{tpu_custom_call.1} parent=0 // pred_check_branch
    %29 = sbr.rel (0) target = $region29
  $region28: #{tpu_custom_call.1} parent=0 // pred_region
    _
  $region29: #{tpu_custom_call.1} parent=0 // pred_fallthru
    _
  // Predicated region
  $region30: #{tpu_custom_call.1} parent=0 // pred_check
    _
  $region31: #{tpu_custom_call.1} parent=0 // pred_check_branch
    %31 = sbr.rel (0) target = $region33
  $region32: #{tpu_custom_call.1} parent=0 // pred_region
    _
  $region33: #{tpu_custom_call.1} parent=0 // pred_fallthru
    _
  // Predicated region
  $region34: #{tpu_custom_call.1} parent=0 // pred_check
    _
  $region35: #{tpu_custom_call.1} parent=0 // pred_check_branch
    %33 = sbr.rel (0) target = $region37
  $region36: #{tpu_custom_call.1} parent=0 // pred_region
    _
  $region37: #{tpu_custom_call.1} parent=0 // pred_fallthru
    _
  // Predicated region
  $region38: #{tpu_custom_call.1} parent=0 // pred_check
    _
  $region39: #{tpu_custom_call.1} parent=0 // pred_check_branch
    %35 = sbr.rel (0) target = $region41
  $region40: #{tpu_custom_call.1} parent=0 // pred_region
    _
  $region41: #{tpu_custom_call.1} parent=0 // pred_fallthru
    _
  // Predicated region
  $region42: #{tpu_custom_call.1} parent=0 // pred_check
    _
  $region43: #{tpu_custom_call.1} parent=0 // pred_check_branch
    %37 = sbr.rel (0) target = $region45
  $region44: #{tpu_custom_call.1} parent=0 // pred_region
    _
  $region45: #{tpu_custom_call.1} parent=0 // pred_fallthru
    _
  %v38 = vld [vmem:[%s1] sm:$0xff]
  %v39 = vld [vmem:[%s1 + $0x8] sm:$0xff]
  %v40 = vld [vmem:[%s1 + $0x10] sm:$0xff]
  %v41 = vld [vmem:[%s1 + $0x18] sm:$0xff]
  %v42 = vunpack.c.0.s8 %v38
  %v43 = vunpack.c.1.s8 %v38
  %v44 = vunpack.c.2.s8 %v38
  %v45 = vunpack.c.3.s8 %v38
  %v46 = vunpack.c.0.s8 %v39
  %v47 = vunpack.c.1.s8 %v39
  %v48 = vunpack.c.2.s8 %v39
  %v49 = vunpack.c.3.s8 %v39
  %v50 = vunpack.c.0.s8 %v40
  %v51 = vunpack.c.1.s8 %v40
  %v52 = vunpack.c.2.s8 %v40
  %v53 = vunpack.c.3.s8 %v40
  %v54 = vunpack.c.0.s8 %v41
  %v55 = vunpack.c.1.s8 %v41
  %v56 = vunpack.c.2.s8 %v41
  %v57 = vunpack.c.3.s8 %v41
  %v58 = vcvt.s32.f32 %v42
  %v59 = vcvt.s32.f32 %v43
  %v60 = vcvt.s32.f32 %v44
  %v61 = vcvt.s32.f32 %v45
  %v62 = vcvt.s32.f32 %v46
  %v63 = vcvt.s32.f32 %v47
  %v64 = vcvt.s32.f32 %v48
  %v65 = vcvt.s32.f32 %v49
  %v66 = vcvt.s32.f32 %v50
  %v67 = vcvt.s32.f32 %v51
  %v68 = vcvt.s32.f32 %v52
  %v69 = vcvt.s32.f32 %v53
  %v70 = vcvt.s32.f32 %v54
  %v71 = vcvt.s32.f32 %v55
  %v72 = vcvt.s32.f32 %v56
  %v73 = vcvt.s32.f32 %v57
  %vm74 = vcmp.gt.f32.partialorder %v58, 0.0
  %vm75 = vcmp.gt.f32.partialorder %v59, 0.0
  %vm76 = vcmp.gt.f32.partialorder %v60, 0.0
  %vm77 = vcmp.gt.f32.partialorder %v61, 0.0
  %vm78 = vcmp.gt.f32.partialorder %v62, 0.0
  %vm79 = vcmp.gt.f32.partialorder %v63, 0.0
  %vm80 = vcmp.gt.f32.partialorder %v64, 0.0
  %vm81 = vcmp.gt.f32.partialorder %v65, 0.0
  %vm82 = vcmp.gt.f32.partialorder %v66, 0.0
  %vm83 = vcmp.gt.f32.partialorder %v67, 0.0
  %vm84 = vcmp.gt.f32.partialorder %v68, 0.0
  %vm85 = vcmp.gt.f32.partialorder %v69, 0.0
  %vm86 = vcmp.gt.f32.partialorder %v70, 0.0
  %vm87 = vcmp.gt.f32.partialorder %v71, 0.0
  %vm88 = vcmp.gt.f32.partialorder %v72, 0.0
  %vm89 = vcmp.gt.f32.partialorder %v73, 0.0
  %v90 = vsel %vm74, 1, 0
  %v91 = vsel %vm75, 1, 0
  %v92 = vsel %vm76, 1, 0
  %v93 = vsel %vm77, 1, 0
  %v94 = vsel %vm78, 1, 0
  %v95 = vsel %vm79, 1, 0
  %v96 = vsel %vm80, 1, 0
  %v97 = vsel %vm81, 1, 0
  %v98 = vsel %vm82, 1, 0
  %v99 = vsel %vm83, 1, 0
  %v100 = vsel %vm84, 1, 0
  %v101 = vsel %vm85, 1, 0
  %v102 = vsel %vm86, 1, 0
  %v103 = vsel %vm87, 1, 0
  %v104 = vsel %vm88, 1, 0
  %v105 = vsel %vm89, 1, 0
  %v106 = vcvt.s32.f32 %v90
  %v107 = vcvt.s32.f32 %v91
  %v108 = vcvt.s32.f32 %v92
  %v109 = vcvt.s32.f32 %v93
  %v110 = vcvt.s32.f32 %v94
  %v111 = vcvt.s32.f32 %v95
  %v112 = vcvt.s32.f32 %v96
  %v113 = vcvt.s32.f32 %v97
  %v114 = vcvt.s32.f32 %v98
  %v115 = vcvt.s32.f32 %v99
  %v116 = vcvt.s32.f32 %v100
  %v117 = vcvt.s32.f32 %v101
  %v118 = vcvt.s32.f32 %v102
  %v119 = vcvt.s32.f32 %v103
  %v120 = vcvt.s32.f32 %v104
  %v121 = vcvt.s32.f32 %v105
  %v122 = vsub.f32 1.0, %v106
  %v123 = vsub.f32 1.0, %v107
  %v124 = vsub.f32 1.0, %v108
  %v125 = vsub.f32 1.0, %v109
  %v126 = vsub.f32 1.0, %v110
  %v127 = vsub.f32 1.0, %v111
  %v128 = vsub.f32 1.0, %v112
  %v129 = vsub.f32 1.0, %v113
  %v130 = vsub.f32 1.0, %v114
  %v131 = vsub.f32 1.0, %v115
  %v132 = vsub.f32 1.0, %v116
  %v133 = vsub.f32 1.0, %v117
  %v134 = vsub.f32 1.0, %v118
  %v135 = vsub.f32 1.0, %v119
  %v136 = vsub.f32 1.0, %v120
  %v137 = vsub.f32 1.0, %v121
  %v138 = vmul.f32 %v122, -1e+30
  %v139 = vmul.f32 %v123, -1e+30
  %v140 = vmul.f32 %v124, -1e+30
  %v141 = vmul.f32 %v125, -1e+30
  %v142 = vmul.f32 %v126, -1e+30
  %v143 = vmul.f32 %v127, -1e+30
  %v144 = vmul.f32 %v128, -1e+30
  %v145 = vmul.f32 %v129, -1e+30
  %v146 = vmul.f32 %v130, -1e+30
  %v147 = vmul.f32 %v131, -1e+30
  %v148 = vmul.f32 %v132, -1e+30
  %v149 = vmul.f32 %v133, -1e+30
  %v150 = vmul.f32 %v134, -1e+30
  %v151 = vmul.f32 %v135, -1e+30
  %v152 = vmul.f32 %v136, -1e+30
  %v153 = vmul.f32 %v137, -1e+30
  %v154 = vld [vmem:[%s0] sm:$0xff]
  %v155 = vld [vmem:[%s0 + $0x8] sm:$0xff]
  %v156 = vld [vmem:[%s0 + $0x10] sm:$0xff]
  %v157 = vld [vmem:[%s0 + $0x18] sm:$0xff]
  %v158 = vld [vmem:[%s0 + $0x20] sm:$0xff]
  %v159 = vld [vmem:[%s0 + $0x28] sm:$0xff]
  %v160 = vld [vmem:[%s0 + $0x30] sm:$0xff]
  %v161 = vld [vmem:[%s0 + $0x38] sm:$0xff]
  %v162 = vld [vmem:[%s0 + $0x40] sm:$0xff]
  %v163 = vld [vmem:[%s0 + $0x48] sm:$0xff]
  %v164 = vld [vmem:[%s0 + $0x50] sm:$0xff]
  %v165 = vld [vmem:[%s0 + $0x58] sm:$0xff]
  %v166 = vld [vmem:[%s0 + $0x60] sm:$0xff]
  %v167 = vld [vmem:[%s0 + $0x68] sm:$0xff]
  %v168 = vld [vmem:[%s0 + $0x70] sm:$0xff]
  %v169 = vld [vmem:[%s0 + $0x78] sm:$0xff]
  %v170 = vld [vmem:[%s3] sm:$0xff]
  %v171 = vld [vmem:[%s3 + $0x8] sm:$0xff]
  %v172 = vld [vmem:[%s4] sm:$0x1]
  %v174 = vperm.slane %v172, 0
  %vm176 = vcmask 130048
  %v178 = vsel %vm176, %v154, 0
  %v181 = vsel %vm176, %v155, 0
  %v184 = vsel %vm176, %v156, 0
  %v187 = vsel %vm176, %v157, 0
  %v190 = vsel %vm176, %v158, 0
  %v193 = vsel %vm176, %v159, 0
  %v196 = vsel %vm176, %v160, 0
  %v199 = vsel %vm176, %v161, 0
  %v202 = vsel %vm176, %v162, 0
  %v205 = vsel %vm176, %v163, 0
  %v208 = vsel %vm176, %v164, 0
  %v211 = vsel %vm176, %v165, 0
  %v214 = vsel %vm176, %v166, 0
  %v217 = vsel %vm176, %v167, 0
  %v220 = vsel %vm176, %v168, 0
  %v223 = vsel %vm176, %v169, 0
  %225 = vmatpush.msra.mxu0 0.0
  %226 = vmatpush.msra.mxu0 0.0
  %227 = vmatpush.msra.mxu0 0.0
  %228 = vmatpush.msra.mxu0 0.0
  %229 = vmatpush.msra.mxu0 0.0
  %230 = vmatpush.msra.mxu0 0.0
  %231 = vmatpush.msra.mxu0 0.0
  %232 = vmatpush.msra.mxu0 0.0
  %233 = vmatpush.msra.mxu0 0.0
  %234 = vmatpush.msra.mxu0 0.0
  %235 = vmatpush.msra.mxu0 0.0
  %236 = vmatpush.msra.mxu0 0.0
  %237 = vmatpush.msra.mxu0 0.0
  %238 = vmatpush.msra.mxu0 0.0
  %239 = vmatpush.msra.mxu0 %v171
  %240 = vmatpush.msra.mxu0 %v170
  %241 = vmatmul.f32.gmra.mxu0 %v178
  %v242 = vpop.f32.mrf.mxu0
  %v243 = vadd.f32 %v174, %v242
  %244 = vmatmul.f32.gmra.mxu0 %v181
  %v245 = vpop.f32.mrf.mxu0
  %v246 = vadd.f32 %v174, %v245
  %247 = vmatmul.f32.gmra.mxu0 %v184
  %v248 = vpop.f32.mrf.mxu0
  %v249 = vadd.f32 %v174, %v248
  %250 = vmatmul.f32.gmra.mxu0 %v187
  %v251 = vpop.f32.mrf.mxu0
  %v252 = vadd.f32 %v174, %v251
  %253 = vmatmul.f32.gmra.mxu0 %v190
  %v254 = vpop.f32.mrf.mxu0
  %v255 = vadd.f32 %v174, %v254
  %256 = vmatmul.f32.gmra.mxu0 %v193
  %v257 = vpop.f32.mrf.mxu0
  %v258 = vadd.f32 %v174, %v257
  %259 = vmatmul.f32.gmra.mxu0 %v196
  %v260 = vpop.f32.mrf.mxu0
  %v261 = vadd.f32 %v174, %v260
  %262 = vmatmul.f32.gmra.mxu0 %v199
  %v263 = vpop.f32.mrf.mxu0
  %v264 = vadd.f32 %v174, %v263
  %265 = vmatmul.f32.gmra.mxu0 %v202
  %v266 = vpop.f32.mrf.mxu0
  %v267 = vadd.f32 %v174, %v266
  %268 = vmatmul.f32.gmra.mxu0 %v205
  %v269 = vpop.f32.mrf.mxu0
  %v270 = vadd.f32 %v174, %v269
  %271 = vmatmul.f32.gmra.mxu0 %v208
  %v272 = vpop.f32.mrf.mxu0
  %v273 = vadd.f32 %v174, %v272
  %274 = vmatmul.f32.gmra.mxu0 %v211
  %v275 = vpop.f32.mrf.mxu0
  %v276 = vadd.f32 %v174, %v275
  %277 = vmatmul.f32.gmra.mxu0 %v214
  %v278 = vpop.f32.mrf.mxu0
  %v279 = vadd.f32 %v174, %v278
  %280 = vmatmul.f32.gmra.mxu0 %v217
  %v281 = vpop.f32.mrf.mxu0
  %v282 = vadd.f32 %v174, %v281
  %283 = vmatmul.f32.gmra.mxu0 %v220
  %v284 = vpop.f32.mrf.mxu0
  %v285 = vadd.f32 %v174, %v284
  %286 = vmatmul.f32.gmra.mxu0 %v223
  %v287 = vpop.f32.mrf.mxu0
  %v288 = vadd.f32 %v174, %v287
  %289 = vdwg.mxu0
  %v290 = vmul.f32 %v243, 0.35355338
  %v291 = vmul.f32 %v246, 0.35355338
  %v292 = vmul.f32 %v249, 0.35355338
  %v293 = vmul.f32 %v252, 0.35355338
  %v294 = vmul.f32 %v255, 0.35355338
  %v295 = vmul.f32 %v258, 0.35355338
  %v296 = vmul.f32 %v261, 0.35355338
  %v297 = vmul.f32 %v264, 0.35355338
  %v298 = vmul.f32 %v267, 0.35355338
  %v299 = vmul.f32 %v270, 0.35355338
  %v300 = vmul.f32 %v273, 0.35355338
  %v301 = vmul.f32 %v276, 0.35355338
  %v302 = vmul.f32 %v279, 0.35355338
  %v303 = vmul.f32 %v282, 0.35355338
  %v304 = vmul.f32 %v285, 0.35355338
  %v305 = vmul.f32 %v288, 0.35355338
  %322 = vrot.lane.b32.xlu0 %v243, 96
  %v323 = vpop.permute.xlu0 %322
  %324 = vrot.lane.b32.xlu0 %v246, 96
  %v325 = vpop.permute.xlu0 %324
  %326 = vrot.lane.b32.xlu0 %v249, 96
  %v327 = vpop.permute.xlu0 %326
  %328 = vrot.lane.b32.xlu0 %v252, 96
  %v329 = vpop.permute.xlu0 %328
  %330 = vrot.lane.b32.xlu0 %v255, 96
  %v331 = vpop.permute.xlu0 %330
  %332 = vrot.lane.b32.xlu0 %v258, 96
  %v333 = vpop.permute.xlu0 %332
  %334 = vrot.lane.b32.xlu0 %v261, 96
  %v335 = vpop.permute.xlu0 %334
  %336 = vrot.lane.b32.xlu0 %v264, 96
  %v337 = vpop.permute.xlu0 %336
  %338 = vrot.lane.b32.xlu0 %v267, 96
  %v339 = vpop.permute.xlu0 %338
  %340 = vrot.lane.b32.xlu0 %v270, 96
  %v341 = vpop.permute.xlu0 %340
  %342 = vrot.lane.b32.xlu0 %v273, 96
  %v343 = vpop.permute.xlu0 %342
  %344 = vrot.lane.b32.xlu0 %v276, 96
  %v345 = vpop.permute.xlu0 %344
  %346 = vrot.lane.b32.xlu0 %v279, 96
  %v347 = vpop.permute.xlu0 %346
  %348 = vrot.lane.b32.xlu0 %v282, 96
  %v349 = vpop.permute.xlu0 %348
  %350 = vrot.lane.b32.xlu0 %v285, 96
  %v351 = vpop.permute.xlu0 %350
  %352 = vrot.lane.b32.xlu0 %v288, 96
  %v353 = vpop.permute.xlu0 %352
  %vm354 = vcmask 64512
  %v356 = vsel %vm354, %v290, 0
  %v359 = vsel %vm354, %v291, 0
  %v362 = vsel %vm354, %v292, 0
  %v365 = vsel %vm354, %v293, 0
  %v368 = vsel %vm354, %v294, 0
  %v371 = vsel %vm354, %v295, 0
  %v374 = vsel %vm354, %v296, 0
  %v377 = vsel %vm354, %v297, 0
  %v380 = vsel %vm354, %v298, 0
  %v383 = vsel %vm354, %v299, 0
  %v386 = vsel %vm354, %v300, 0
  %v389 = vsel %vm354, %v301, 0
  %v392 = vsel %vm354, %v302, 0
  %v395 = vsel %vm354, %v303, 0
  %v398 = vsel %vm354, %v304, 0
  %v401 = vsel %vm354, %v305, 0
  %v403 = vsel %vm354, %v323, 0
  %v405 = vsel %vm354, %v325, 0
  %v407 = vsel %vm354, %v327, 0
  %v409 = vsel %vm354, %v329, 0
  %v411 = vsel %vm354, %v331, 0
  %v413 = vsel %vm354, %v333, 0
  %v415 = vsel %vm354, %v335, 0
  %v417 = vsel %vm354, %v337, 0
  %v419 = vsel %vm354, %v339, 0
  %v421 = vsel %vm354, %v341, 0
  %v423 = vsel %vm354, %v343, 0
  %v425 = vsel %vm354, %v345, 0
  %v427 = vsel %vm354, %v347, 0
  %v429 = vsel %vm354, %v349, 0
  %v431 = vsel %vm354, %v351, 0
  %v433 = vsel %vm354, %v353, 0
  %435 = vmatpush.xpose.msra.mxu0 %v433
  %436 = vmatpush.xpose.msra.mxu0 %v431
  %437 = vmatpush.xpose.msra.mxu0 %v429
  %438 = vmatpush.xpose.msra.mxu0 %v427
  %439 = vmatpush.xpose.msra.mxu0 %v425
  %440 = vmatpush.xpose.msra.mxu0 %v423
  %441 = vmatpush.xpose.msra.mxu0 %v421
  %442 = vmatpush.xpose.msra.mxu0 %v419
  %443 = vmatpush.xpose.msra.mxu0 %v417
  %444 = vmatpush.xpose.msra.mxu0 %v415
  %445 = vmatpush.xpose.msra.mxu0 %v413
  %446 = vmatpush.xpose.msra.mxu0 %v411
  %447 = vmatpush.xpose.msra.mxu0 %v409
  %448 = vmatpush.xpose.msra.mxu0 %v407
  %449 = vmatpush.xpose.msra.mxu0 %v405
  %450 = vmatpush.xpose.msra.mxu0 %v403
  %451 = vmatmul.f32.gmra.mxu0 %v356
  %v452 = vpop.f32.mrf.mxu0
  %v453 = vadd.f32 %v138, %v452
  %454 = vmatmul.f32.gmra.mxu0 %v359
  %v455 = vpop.f32.mrf.mxu0
  %v456 = vadd.f32 %v139, %v455
  %457 = vmatmul.f32.gmra.mxu0 %v362
  %v458 = vpop.f32.mrf.mxu0
  %v459 = vadd.f32 %v140, %v458
  %460 = vmatmul.f32.gmra.mxu0 %v365
  %v461 = vpop.f32.mrf.mxu0
  %v462 = vadd.f32 %v141, %v461
  %463 = vmatmul.f32.gmra.mxu0 %v368
  %v464 = vpop.f32.mrf.mxu0
  %v465 = vadd.f32 %v142, %v464
  %466 = vmatmul.f32.gmra.mxu0 %v371
  %v467 = vpop.f32.mrf.mxu0
  %v468 = vadd.f32 %v143, %v467
  %469 = vmatmul.f32.gmra.mxu0 %v374
  %v470 = vpop.f32.mrf.mxu0
  %v471 = vadd.f32 %v144, %v470
  %472 = vmatmul.f32.gmra.mxu0 %v377
  %v473 = vpop.f32.mrf.mxu0
  %v474 = vadd.f32 %v145, %v473
  %475 = vmatmul.f32.gmra.mxu0 %v380
  %v476 = vpop.f32.mrf.mxu0
  %v477 = vadd.f32 %v146, %v476
  %478 = vmatmul.f32.gmra.mxu0 %v383
  %v479 = vpop.f32.mrf.mxu0
  %v480 = vadd.f32 %v147, %v479
  %481 = vmatmul.f32.gmra.mxu0 %v386
  %v482 = vpop.f32.mrf.mxu0
  %v483 = vadd.f32 %v148, %v482
  %484 = vmatmul.f32.gmra.mxu0 %v389
  %v485 = vpop.f32.mrf.mxu0
  %v486 = vadd.f32 %v149, %v485
  %487 = vmatmul.f32.gmra.mxu0 %v392
  %v488 = vpop.f32.mrf.mxu0
  %v489 = vadd.f32 %v150, %v488
  %490 = vmatmul.f32.gmra.mxu0 %v395
  %v491 = vpop.f32.mrf.mxu0
  %v492 = vadd.f32 %v151, %v491
  %493 = vmatmul.f32.gmra.mxu0 %v398
  %v494 = vpop.f32.mrf.mxu0
  %v495 = vadd.f32 %v152, %v494
  %496 = vmatmul.f32.gmra.mxu0 %v401
  %v497 = vpop.f32.mrf.mxu0
  %v498 = vadd.f32 %v153, %v497
  %499 = vdwg.mxu0
  %500 = vmax.xlane.f32.xlu0 %v453
  %v501 = vpop.xlane.xlu0 %500
  %502 = vmax.xlane.f32.xlu0 %v456
  %v503 = vpop.xlane.xlu0 %502
  %504 = vmax.xlane.f32.xlu0 %v459
  %v505 = vpop.xlane.xlu0 %504
  %506 = vmax.xlane.f32.xlu0 %v462
  %v507 = vpop.xlane.xlu0 %506
  %508 = vmax.xlane.f32.xlu0 %v465
  %v509 = vpop.xlane.xlu0 %508
  %510 = vmax.xlane.f32.xlu0 %v468
  %v511 = vpop.xlane.xlu0 %510
  %512 = vmax.xlane.f32.xlu0 %v471
  %v513 = vpop.xlane.xlu0 %512
  %514 = vmax.xlane.f32.xlu0 %v474
  %v515 = vpop.xlane.xlu0 %514
  %516 = vmax.xlane.f32.xlu0 %v477
  %v517 = vpop.xlane.xlu0 %516
  %518 = vmax.xlane.f32.xlu0 %v480
  %v519 = vpop.xlane.xlu0 %518
  %520 = vmax.xlane.f32.xlu0 %v483
  %v521 = vpop.xlane.xlu0 %520
  %522 = vmax.xlane.f32.xlu0 %v486
  %v523 = vpop.xlane.xlu0 %522
  %524 = vmax.xlane.f32.xlu0 %v489
  %v525 = vpop.xlane.xlu0 %524
  %526 = vmax.xlane.f32.xlu0 %v492
  %v527 = vpop.xlane.xlu0 %526
  %528 = vmax.xlane.f32.xlu0 %v495
  %v529 = vpop.xlane.xlu0 %528
  %530 = vmax.xlane.f32.xlu0 %v498
  %v531 = vpop.xlane.xlu0 %530
  %v532 = vsub.f32 %v453, %v501
  %v533 = vsub.f32 %v456, %v503
  %v534 = vsub.f32 %v459, %v505
  %v535 = vsub.f32 %v462, %v507
  %v536 = vsub.f32 %v465, %v509
  %v537 = vsub.f32 %v468, %v511
  %v538 = vsub.f32 %v471, %v513
  %v539 = vsub.f32 %v474, %v515
  %v540 = vsub.f32 %v477, %v517
  %v541 = vsub.f32 %v480, %v519
  %v542 = vsub.f32 %v483, %v521
  %v543 = vsub.f32 %v486, %v523
  %v544 = vsub.f32 %v489, %v525
  %v545 = vsub.f32 %v492, %v527
  %v546 = vsub.f32 %v495, %v529
  %v547 = vsub.f32 %v498, %v531
  %v548 = vmul.f32 %v532, 1.442695
  %v549 = vpow.pop %v548
  %v550 = vmul.f32 %v533, 1.442695
  %v551 = vpow.pop %v550
  %v552 = vmul.f32 %v534, 1.442695
  %v553 = vpow.pop %v552
  %v554 = vmul.f32 %v535, 1.442695
  %v555 = vpow.pop %v554
  %v556 = vmul.f32 %v536, 1.442695
  %v557 = vpow.pop %v556
  %v558 = vmul.f32 %v537, 1.442695
  %v559 = vpow.pop %v558
  %v560 = vmul.f32 %v538, 1.442695
  %v561 = vpow.pop %v560
  %v562 = vmul.f32 %v539, 1.442695
  %v563 = vpow.pop %v562
  %v564 = vmul.f32 %v540, 1.442695
  %v565 = vpow.pop %v564
  %v566 = vmul.f32 %v541, 1.442695
  %v567 = vpow.pop %v566
  %v568 = vmul.f32 %v542, 1.442695
  %v569 = vpow.pop %v568
  %v570 = vmul.f32 %v543, 1.442695
  %v571 = vpow.pop %v570
  %v572 = vmul.f32 %v544, 1.442695
  %v573 = vpow.pop %v572
  %v574 = vmul.f32 %v545, 1.442695
  %v575 = vpow.pop %v574
  %v576 = vmul.f32 %v546, 1.442695
  %v577 = vpow.pop %v576
  %v578 = vmul.f32 %v547, 1.442695
  %v579 = vpow.pop %v578
  %v580 = vmul.f32 %v549, %v106
  %v581 = vmul.f32 %v551, %v107
  %v582 = vmul.f32 %v553, %v108
  %v583 = vmul.f32 %v555, %v109
  %v584 = vmul.f32 %v557, %v110
  %v585 = vmul.f32 %v559, %v111
  %v586 = vmul.f32 %v561, %v112
  %v587 = vmul.f32 %v563, %v113
  %v588 = vmul.f32 %v565, %v114
  %v589 = vmul.f32 %v567, %v115
  %v590 = vmul.f32 %v569, %v116
  %v591 = vmul.f32 %v571, %v117
  %v592 = vmul.f32 %v573, %v118
  %v593 = vmul.f32 %v575, %v119
  %v594 = vmul.f32 %v577, %v120
  %v595 = vmul.f32 %v579, %v121
  %596 = vadd.xlane.f32.xlu0 %v580
  %v597 = vpop.xlane.xlu0 %596
  %598 = vadd.xlane.f32.xlu0 %v581
  %v599 = vpop.xlane.xlu0 %598
  %600 = vadd.xlane.f32.xlu0 %v582
  %v601 = vpop.xlane.xlu0 %600
  %602 = vadd.xlane.f32.xlu0 %v583
  %v603 = vpop.xlane.xlu0 %602
  %604 = vadd.xlane.f32.xlu0 %v584
  %v605 = vpop.xlane.xlu0 %604
  %606 = vadd.xlane.f32.xlu0 %v585
  %v607 = vpop.xlane.xlu0 %606
  %608 = vadd.xlane.f32.xlu0 %v586
  %v609 = vpop.xlane.xlu0 %608
  %610 = vadd.xlane.f32.xlu0 %v587
  %v611 = vpop.xlane.xlu0 %610
  %612 = vadd.xlane.f32.xlu0 %v588
  %v613 = vpop.xlane.xlu0 %612
  %614 = vadd.xlane.f32.xlu0 %v589
  %v615 = vpop.xlane.xlu0 %614
  %616 = vadd.xlane.f32.xlu0 %v590
  %v617 = vpop.xlane.xlu0 %616
  %618 = vadd.xlane.f32.xlu0 %v591
  %v619 = vpop.xlane.xlu0 %618
  %620 = vadd.xlane.f32.xlu0 %v592
  %v621 = vpop.xlane.xlu0 %620
  %622 = vadd.xlane.f32.xlu0 %v593
  %v623 = vpop.xlane.xlu0 %622
  %624 = vadd.xlane.f32.xlu0 %v594
  %v625 = vpop.xlane.xlu0 %624
  %626 = vadd.xlane.f32.xlu0 %v595
  %v627 = vpop.xlane.xlu0 %626
  %vm628 = vcmp.gt.f32.partialorder %v597, 0.0
  %vm629 = vcmp.gt.f32.partialorder %v599, 0.0
  %vm630 = vcmp.gt.f32.partialorder %v601, 0.0
  %vm631 = vcmp.gt.f32.partialorder %v603, 0.0
  %vm632 = vcmp.gt.f32.partialorder %v605, 0.0
  %vm633 = vcmp.gt.f32.partialorder %v607, 0.0
  %vm634 = vcmp.gt.f32.partialorder %v609, 0.0
  %vm635 = vcmp.gt.f32.partialorder %v611, 0.0
  %vm636 = vcmp.gt.f32.partialorder %v613, 0.0
  %vm637 = vcmp.gt.f32.partialorder %v615, 0.0
  %vm638 = vcmp.gt.f32.partialorder %v617, 0.0
  %vm639 = vcmp.gt.f32.partialorder %v619, 0.0
  %vm640 = vcmp.gt.f32.partialorder %v621, 0.0
  %vm641 = vcmp.gt.f32.partialorder %v623, 0.0
  %vm642 = vcmp.gt.f32.partialorder %v625, 0.0
  %vm643 = vcmp.gt.f32.partialorder %v627, 0.0
  %v644 = vsel %vm628, %v597, 1.0
  %v645 = vsel %vm629, %v599, 1.0
  %v646 = vsel %vm630, %v601, 1.0
  %v647 = vsel %vm631, %v603, 1.0
  %v648 = vsel %vm632, %v605, 1.0
  %v649 = vsel %vm633, %v607, 1.0
  %v650 = vsel %vm634, %v609, 1.0
  %v651 = vsel %vm635, %v611, 1.0
  %v652 = vsel %vm636, %v613, 1.0
  %v653 = vsel %vm637, %v615, 1.0
  %v654 = vsel %vm638, %v617, 1.0
  %v655 = vsel %vm639, %v619, 1.0
  %v656 = vsel %vm640, %v621, 1.0
  %v657 = vsel %vm641, %v623, 1.0
  %v658 = vsel %vm642, %v625, 1.0
  %v659 = vsel %vm643, %v627, 1.0
  %v660 = vrcp.pop %v644
  %v661 = vrcp.pop %v645
  %v662 = vrcp.pop %v646
  %v663 = vrcp.pop %v647
  %v664 = vrcp.pop %v648
  %v665 = vrcp.pop %v649
  %v666 = vrcp.pop %v650
  %v667 = vrcp.pop %v651
  %v668 = vrcp.pop %v652
  %v669 = vrcp.pop %v653
  %v670 = vrcp.pop %v654
  %v671 = vrcp.pop %v655
  %v672 = vrcp.pop %v656
  %v673 = vrcp.pop %v657
  %v674 = vrcp.pop %v658
  %v675 = vrcp.pop %v659
  %v676 = vmul.f32 %v580, %v660
  %v677 = vmul.f32 %v581, %v661
  %v678 = vmul.f32 %v582, %v662
  %v679 = vmul.f32 %v583, %v663
  %v680 = vmul.f32 %v584, %v664
  %v681 = vmul.f32 %v585, %v665
  %v682 = vmul.f32 %v586, %v666
  %v683 = vmul.f32 %v587, %v667
  %v684 = vmul.f32 %v588, %v668
  %v685 = vmul.f32 %v589, %v669
  %v686 = vmul.f32 %v590, %v670
  %v687 = vmul.f32 %v591, %v671
  %v688 = vmul.f32 %v592, %v672
  %v689 = vmul.f32 %v593, %v673
  %v690 = vmul.f32 %v594, %v674
  %v691 = vmul.f32 %v595, %v675
  %692 = vrot.lane.b32.xlu0 %v243, 64
  %v693 = vpop.permute.xlu0 %692
  %694 = vrot.lane.b32.xlu0 %v246, 64
  %v695 = vpop.permute.xlu0 %694
  %696 = vrot.lane.b32.xlu0 %v249, 64
  %v697 = vpop.permute.xlu0 %696
  %698 = vrot.lane.b32.xlu0 %v252, 64
  %v699 = vpop.permute.xlu0 %698
  %700 = vrot.lane.b32.xlu0 %v255, 64
  %v701 = vpop.permute.xlu0 %700
  %702 = vrot.lane.b32.xlu0 %v258, 64
  %v703 = vpop.permute.xlu0 %702
  %704 = vrot.lane.b32.xlu0 %v261, 64
  %v705 = vpop.permute.xlu0 %704
  %706 = vrot.lane.b32.xlu0 %v264, 64
  %v707 = vpop.permute.xlu0 %706
  %708 = vrot.lane.b32.xlu0 %v267, 64
  %v709 = vpop.permute.xlu0 %708
  %710 = vrot.lane.b32.xlu0 %v270, 64
  %v711 = vpop.permute.xlu0 %710
  %712 = vrot.lane.b32.xlu0 %v273, 64
  %v713 = vpop.permute.xlu0 %712
  %714 = vrot.lane.b32.xlu0 %v276, 64
  %v715 = vpop.permute.xlu0 %714
  %716 = vrot.lane.b32.xlu0 %v279, 64
  %v717 = vpop.permute.xlu0 %716
  %718 = vrot.lane.b32.xlu0 %v282, 64
  %v719 = vpop.permute.xlu0 %718
  %720 = vrot.lane.b32.xlu0 %v285, 64
  %v721 = vpop.permute.xlu0 %720
  %722 = vrot.lane.b32.xlu0 %v288, 64
  %v723 = vpop.permute.xlu0 %722
  %740 = vmatpush.msra.mxu0 %v723
  %741 = vmatpush.msra.mxu0 %v721
  %742 = vmatpush.msra.mxu0 %v719
  %743 = vmatpush.msra.mxu0 %v717
  %744 = vmatpush.msra.mxu0 %v715
  %745 = vmatpush.msra.mxu0 %v713
  %746 = vmatpush.msra.mxu0 %v711
  %747 = vmatpush.msra.mxu0 %v709
  %748 = vmatpush.msra.mxu0 %v707
  %749 = vmatpush.msra.mxu0 %v705
  %750 = vmatpush.msra.mxu0 %v703
  %751 = vmatpush.msra.mxu0 %v701
  %752 = vmatpush.msra.mxu0 %v699
  %753 = vmatpush.msra.mxu0 %v697
  %754 = vmatpush.msra.mxu0 %v695
  %755 = vmatpush.msra.mxu0 %v693
  %756 = vmatmul.f32.gmra.mxu0 %v676
  %v757 = vpop.f32.mrf.mxu0
  %v758 = vadd.f32 0.0, %v757
  %759 = vmatmul.f32.gmra.mxu0 %v677
  %v760 = vpop.f32.mrf.mxu0
  %v761 = vadd.f32 0.0, %v760
  %762 = vmatmul.f32.gmra.mxu0 %v678
  %v763 = vpop.f32.mrf.mxu0
  %v764 = vadd.f32 0.0, %v763
  %765 = vmatmul.f32.gmra.mxu0 %v679
  %v766 = vpop.f32.mrf.mxu0
  %v767 = vadd.f32 0.0, %v766
  %768 = vmatmul.f32.gmra.mxu0 %v680
  %v769 = vpop.f32.mrf.mxu0
  %v770 = vadd.f32 0.0, %v769
  %771 = vmatmul.f32.gmra.mxu0 %v681
  %v772 = vpop.f32.mrf.mxu0
  %v773 = vadd.f32 0.0, %v772
  %774 = vmatmul.f32.gmra.mxu0 %v682
  %v775 = vpop.f32.mrf.mxu0
  %v776 = vadd.f32 0.0, %v775
  %777 = vmatmul.f32.gmra.mxu0 %v683
  %v778 = vpop.f32.mrf.mxu0
  %v779 = vadd.f32 0.0, %v778
  %780 = vmatmul.f32.gmra.mxu0 %v684
  %v781 = vpop.f32.mrf.mxu0
  %v782 = vadd.f32 0.0, %v781
  %783 = vmatmul.f32.gmra.mxu0 %v685
  %v784 = vpop.f32.mrf.mxu0
  %v785 = vadd.f32 0.0, %v784
  %786 = vmatmul.f32.gmra.mxu0 %v686
  %v787 = vpop.f32.mrf.mxu0
  %v788 = vadd.f32 0.0, %v787
  %789 = vmatmul.f32.gmra.mxu0 %v687
  %v790 = vpop.f32.mrf.mxu0
  %v791 = vadd.f32 0.0, %v790
  %792 = vmatmul.f32.gmra.mxu0 %v688
  %v793 = vpop.f32.mrf.mxu0
  %v794 = vadd.f32 0.0, %v793
  %795 = vmatmul.f32.gmra.mxu0 %v689
  %v796 = vpop.f32.mrf.mxu0
  %v797 = vadd.f32 0.0, %v796
  %798 = vmatmul.f32.gmra.mxu0 %v690
  %v799 = vpop.f32.mrf.mxu0
  %v800 = vadd.f32 0.0, %v799
  %801 = vmatmul.f32.gmra.mxu0 %v691
  %v802 = vpop.f32.mrf.mxu0
  %v803 = vadd.f32 0.0, %v802
  %804 = vdwg.mxu0
  %805 = vst.msk [vmem:[#allocation2] sm:$0xff] %vm354, %v758
  %806 = vst.msk [vmem:[#allocation2 + $0x8] sm:$0xff] %vm354, %v761
  %807 = vst.msk [vmem:[#allocation2 + $0x10] sm:$0xff] %vm354, %v764
  %808 = vst.msk [vmem:[#allocation2 + $0x18] sm:$0xff] %vm354, %v767
  %809 = vst.msk [vmem:[#allocation2 + $0x20] sm:$0xff] %vm354, %v770
  %810 = vst.msk [vmem:[#allocation2 + $0x28] sm:$0xff] %vm354, %v773
  %811 = vst.msk [vmem:[#allocation2 + $0x30] sm:$0xff] %vm354, %v776
  %812 = vst.msk [vmem:[#allocation2 + $0x38] sm:$0xff] %vm354, %v779
  %813 = vst.msk [vmem:[#allocation2 + $0x40] sm:$0xff] %vm354, %v782
  %814 = vst.msk [vmem:[#allocation2 + $0x48] sm:$0xff] %vm354, %v785
  %815 = vst.msk [vmem:[#allocation2 + $0x50] sm:$0xff] %vm354, %v788
  %816 = vst.msk [vmem:[#allocation2 + $0x58] sm:$0xff] %vm354, %v791
  %817 = vst.msk [vmem:[#allocation2 + $0x60] sm:$0xff] %vm354, %v794
  %818 = vst.msk [vmem:[#allocation2 + $0x68] sm:$0xff] %vm354, %v797
  %819 = vst.msk [vmem:[#allocation2 + $0x70] sm:$0xff] %vm354, %v800
  %820 = vst.msk [vmem:[#allocation2 + $0x78] sm:$0xff] %vm354, %v803
  %821 = vrot.lane.b32.xlu0 %v290, 120
  %v822 = vpop.permute.xlu0 %821
  %823 = vrot.lane.b32.xlu0 %v291, 120
  %v824 = vpop.permute.xlu0 %823
  %825 = vrot.lane.b32.xlu0 %v292, 120
  %v826 = vpop.permute.xlu0 %825
  %827 = vrot.lane.b32.xlu0 %v293, 120
  %v828 = vpop.permute.xlu0 %827
  %829 = vrot.lane.b32.xlu0 %v294, 120
  %v830 = vpop.permute.xlu0 %829
  %831 = vrot.lane.b32.xlu0 %v295, 120
  %v832 = vpop.permute.xlu0 %831
  %833 = vrot.lane.b32.xlu0 %v296, 120
  %v834 = vpop.permute.xlu0 %833
  %835 = vrot.lane.b32.xlu0 %v297, 120
  %v836 = vpop.permute.xlu0 %835
  %837 = vrot.lane.b32.xlu0 %v298, 120
  %v838 = vpop.permute.xlu0 %837
  %839 = vrot.lane.b32.xlu0 %v299, 120
  %v840 = vpop.permute.xlu0 %839
  %841 = vrot.lane.b32.xlu0 %v300, 120
  %v842 = vpop.permute.xlu0 %841
  %843 = vrot.lane.b32.xlu0 %v301, 120
  %v844 = vpop.permute.xlu0 %843
  %845 = vrot.lane.b32.xlu0 %v302, 120
  %v846 = vpop.permute.xlu0 %845
  %847 = vrot.lane.b32.xlu0 %v303, 120
  %v848 = vpop.permute.xlu0 %847
  %849 = vrot.lane.b32.xlu0 %v304, 120
  %v850 = vpop.permute.xlu0 %849
  %851 = vrot.lane.b32.xlu0 %v305, 120
  %v852 = vpop.permute.xlu0 %851
  %853 = vrot.lane.b32.xlu0 %v243, 88
  %v854 = vpop.permute.xlu0 %853
  %855 = vrot.lane.b32.xlu0 %v246, 88
  %v856 = vpop.permute.xlu0 %855
  %857 = vrot.lane.b32.xlu0 %v249, 88
  %v858 = vpop.permute.xlu0 %857
  %859 = vrot.lane.b32.xlu0 %v252, 88
  %v860 = vpop.permute.xlu0 %859
  %861 = vrot.lane.b32.xlu0 %v255, 88
  %v862 = vpop.permute.xlu0 %861
  %863 = vrot.lane.b32.xlu0 %v258, 88
  %v864 = vpop.permute.xlu0 %863
  %865 = vrot.lane.b32.xlu0 %v261, 88
  %v866 = vpop.permute.xlu0 %865
  %867 = vrot.lane.b32.xlu0 %v264, 88
  %v868 = vpop.permute.xlu0 %867
  %869 = vrot.lane.b32.xlu0 %v267, 88
  %v870 = vpop.permute.xlu0 %869
  %871 = vrot.lane.b32.xlu0 %v270, 88
  %v872 = vpop.permute.xlu0 %871
  %873 = vrot.lane.b32.xlu0 %v273, 88
  %v874 = vpop.permute.xlu0 %873
  %875 = vrot.lane.b32.xlu0 %v276, 88
  %v876 = vpop.permute.xlu0 %875
  %877 = vrot.lane.b32.xlu0 %v279, 88
  %v878 = vpop.permute.xlu0 %877
  %879 = vrot.lane.b32.xlu0 %v282, 88
  %v880 = vpop.permute.xlu0 %879
  %881 = vrot.lane.b32.xlu0 %v285, 88
  %v882 = vpop.permute.xlu0 %881
  %883 = vrot.lane.b32.xlu0 %v288, 88
  %v884 = vpop.permute.xlu0 %883
  %v885 = vsel %vm354, %v822, 0
  %v887 = vsel %vm354, %v824, 0
  %v889 = vsel %vm354, %v826, 0
  %v891 = vsel %vm354, %v828, 0
  %v893 = vsel %vm354, %v830, 0
  %v895 = vsel %vm354, %v832, 0
  %v897 = vsel %vm354, %v834, 0
  %v899 = vsel %vm354, %v836, 0
  %v901 = vsel %vm354, %v838, 0
  %v903 = vsel %vm354, %v840, 0
  %v905 = vsel %vm354, %v842, 0
  %v907 = vsel %vm354, %v844, 0
  %v909 = vsel %vm354, %v846, 0
  %v911 = vsel %vm354, %v848, 0
  %v913 = vsel %vm354, %v850, 0
  %v915 = vsel %vm354, %v852, 0
  %v917 = vsel %vm354, %v854, 0
  %v919 = vsel %vm354, %v856, 0
  %v921 = vsel %vm354, %v858, 0
  %v923 = vsel %vm354, %v860, 0
  %v925 = vsel %vm354, %v862, 0
  %v927 = vsel %vm354, %v864, 0
  %v929 = vsel %vm354, %v866, 0
  %v931 = vsel %vm354, %v868, 0
  %v933 = vsel %vm354, %v870, 0
  %v935 = vsel %vm354, %v872, 0
  %v937 = vsel %vm354, %v874, 0
  %v939 = vsel %vm354, %v876, 0
  %v941 = vsel %vm354, %v878, 0
  %v943 = vsel %vm354, %v880, 0
  %v945 = vsel %vm354, %v882, 0
  %v947 = vsel %vm354, %v884, 0
  %949 = vmatpush.xpose.msra.mxu0 %v947
  %950 = vmatpush.xpose.msra.mxu0 %v945
  %951 = vmatpush.xpose.msra.mxu0 %v943
  %952 = vmatpush.xpose.msra.mxu0 %v941
  %953 = vmatpush.xpose.msra.mxu0 %v939
  %954 = vmatpush.xpose.msra.mxu0 %v937
  %955 = vmatpush.xpose.msra.mxu0 %v935
  %956 = vmatpush.xpose.msra.mxu0 %v933
  %957 = vmatpush.xpose.msra.mxu0 %v931
  %958 = vmatpush.xpose.msra.mxu0 %v929
  %959 = vmatpush.xpose.msra.mxu0 %v927
  %960 = vmatpush.xpose.msra.mxu0 %v925
  %961 = vmatpush.xpose.msra.mxu0 %v923
  %962 = vmatpush.xpose.msra.mxu0 %v921
  %963 = vmatpush.xpose.msra.mxu0 %v919
  %964 = vmatpush.xpose.msra.mxu0 %v917
  %965 = vmatmul.f32.gmra.mxu0 %v885
  %v966 = vpop.f32.mrf.mxu0
  %v967 = vadd.f32 %v138, %v966
  %968 = vmatmul.f32.gmra.mxu0 %v887
  %v969 = vpop.f32.mrf.mxu0
  %v970 = vadd.f32 %v139, %v969
  %971 = vmatmul.f32.gmra.mxu0 %v889
  %v972 = vpop.f32.mrf.mxu0
  %v973 = vadd.f32 %v140, %v972
  %974 = vmatmul.f32.gmra.mxu0 %v891
  %v975 = vpop.f32.mrf.mxu0
  %v976 = vadd.f32 %v141, %v975
  %977 = vmatmul.f32.gmra.mxu0 %v893
  %v978 = vpop.f32.mrf.mxu0
  %v979 = vadd.f32 %v142, %v978
  %980 = vmatmul.f32.gmra.mxu0 %v895
  %v981 = vpop.f32.mrf.mxu0
  %v982 = vadd.f32 %v143, %v981
  %983 = vmatmul.f32.gmra.mxu0 %v897
  %v984 = vpop.f32.mrf.mxu0
  %v985 = vadd.f32 %v144, %v984
  %986 = vmatmul.f32.gmra.mxu0 %v899
  %v987 = vpop.f32.mrf.mxu0
  %v988 = vadd.f32 %v145, %v987
  %989 = vmatmul.f32.gmra.mxu0 %v901
  %v990 = vpop.f32.mrf.mxu0
  %v991 = vadd.f32 %v146, %v990
  %992 = vmatmul.f32.gmra.mxu0 %v903
  %v993 = vpop.f32.mrf.mxu0
  %v994 = vadd.f32 %v147, %v993
  %995 = vmatmul.f32.gmra.mxu0 %v905
  %v996 = vpop.f32.mrf.mxu0
  %v997 = vadd.f32 %v148, %v996
  %998 = vmatmul.f32.gmra.mxu0 %v907
  %v999 = vpop.f32.mrf.mxu0
  %v1000 = vadd.f32 %v149, %v999
  %1001 = vmatmul.f32.gmra.mxu0 %v909
  %v1002 = vpop.f32.mrf.mxu0
  %v1003 = vadd.f32 %v150, %v1002
  %1004 = vmatmul.f32.gmra.mxu0 %v911
  %v1005 = vpop.f32.mrf.mxu0
  %v1006 = vadd.f32 %v151, %v1005
  %1007 = vmatmul.f32.gmra.mxu0 %v913
  %v1008 = vpop.f32.mrf.mxu0
  %v1009 = vadd.f32 %v152, %v1008
  %1010 = vmatmul.f32.gmra.mxu0 %v915
  %v1011 = vpop.f32.mrf.mxu0
  %v1012 = vadd.f32 %v153, %v1011
  %1013 = vdwg.mxu0
  %1014 = vmax.xlane.f32.xlu0 %v967
  %v1015 = vpop.xlane.xlu0 %1014
  %1016 = vmax.xlane.f32.xlu0 %v970
  %v1017 = vpop.xlane.xlu0 %1016
  %1018 = vmax.xlane.f32.xlu0 %v973
  %v1019 = vpop.xlane.xlu0 %1018
  %1020 = vmax.xlane.f32.xlu0 %v976
  %v1021 = vpop.xlane.xlu0 %1020
  %1022 = vmax.xlane.f32.xlu0 %v979
  %v1023 = vpop.xlane.xlu0 %1022
  %1024 = vmax.xlane.f32.xlu0 %v982
  %v1025 = vpop.xlane.xlu0 %1024
  %1026 = vmax.xlane.f32.xlu0 %v985
  %v1027 = vpop.xlane.xlu0 %1026
  %1028 = vmax.xlane.f32.xlu0 %v988
  %v1029 = vpop.xlane.xlu0 %1028
  %1030 = vmax.xlane.f32.xlu0 %v991
  %v1031 = vpop.xlane.xlu0 %1030
  %1032 = vmax.xlane.f32.xlu0 %v994
  %v1033 = vpop.xlane.xlu0 %1032
  %1034 = vmax.xlane.f32.xlu0 %v997
  %v1035 = vpop.xlane.xlu0 %1034
  %1036 = vmax.xlane.f32.xlu0 %v1000
  %v1037 = vpop.xlane.xlu0 %1036
  %1038 = vmax.xlane.f32.xlu0 %v1003
  %v1039 = vpop.xlane.xlu0 %1038
  %1040 = vmax.xlane.f32.xlu0 %v1006
  %v1041 = vpop.xlane.xlu0 %1040
  %1042 = vmax.xlane.f32.xlu0 %v1009
  %v1043 = vpop.xlane.xlu0 %1042
  %1044 = vmax.xlane.f32.xlu0 %v1012
  %v1045 = vpop.xlane.xlu0 %1044
  %v1046 = vsub.f32 %v967, %v1015
  %v1047 = vsub.f32 %v970, %v1017
  %v1048 = vsub.f32 %v973, %v1019
  %v1049 = vsub.f32 %v976, %v1021
  %v1050 = vsub.f32 %v979, %v1023
  %v1051 = vsub.f32 %v982, %v1025
  %v1052 = vsub.f32 %v985, %v1027
  %v1053 = vsub.f32 %v988, %v1029
  %v1054 = vsub.f32 %v991, %v1031
  %v1055 = vsub.f32 %v994, %v1033
  %v1056 = vsub.f32 %v997, %v1035
  %v1057 = vsub.f32 %v1000, %v1037
  %v1058 = vsub.f32 %v1003, %v1039
  %v1059 = vsub.f32 %v1006, %v1041
  %v1060 = vsub.f32 %v1009, %v1043
  %v1061 = vsub.f32 %v1012, %v1045
  %v1062 = vmul.f32 %v1046, 1.442695
  %v1063 = vpow.pop %v1062
  %v1064 = vmul.f32 %v1047, 1.442695
  %v1065 = vpow.pop %v1064
  %v1066 = vmul.f32 %v1048, 1.442695
  %v1067 = vpow.pop %v1066
  %v1068 = vmul.f32 %v1049, 1.442695
  %v1069 = vpow.pop %v1068
  %v1070 = vmul.f32 %v1050, 1.442695
  %v1071 = vpow.pop %v1070
  %v1072 = vmul.f32 %v1051, 1.442695
  %v1073 = vpow.pop %v1072
  %v1074 = vmul.f32 %v1052, 1.442695
  %v1075 = vpow.pop %v1074
  %v1076 = vmul.f32 %v1053, 1.442695
  %v1077 = vpow.pop %v1076
  %v1078 = vmul.f32 %v1054, 1.442695
  %v1079 = vpow.pop %v1078
  %v1080 = vmul.f32 %v1055, 1.442695
  %v1081 = vpow.pop %v1080
  %v1082 = vmul.f32 %v1056, 1.442695
  %v1083 = vpow.pop %v1082
  %v1084 = vmul.f32 %v1057, 1.442695
  %v1085 = vpow.pop %v1084
  %v1086 = vmul.f32 %v1058, 1.442695
  %v1087 = vpow.pop %v1086
  %v1088 = vmul.f32 %v1059, 1.442695
  %v1089 = vpow.pop %v1088
  %v1090 = vmul.f32 %v1060, 1.442695
  %v1091 = vpow.pop %v1090
  %v1092 = vmul.f32 %v1061, 1.442695
  %v1093 = vpow.pop %v1092
  %v1094 = vmul.f32 %v1063, %v106
  %v1095 = vmul.f32 %v1065, %v107
  %v1096 = vmul.f32 %v1067, %v108
  %v1097 = vmul.f32 %v1069, %v109
  %v1098 = vmul.f32 %v1071, %v110
  %v1099 = vmul.f32 %v1073, %v111
  %v1100 = vmul.f32 %v1075, %v112
  %v1101 = vmul.f32 %v1077, %v113
  %v1102 = vmul.f32 %v1079, %v114
  %v1103 = vmul.f32 %v1081, %v115
  %v1104 = vmul.f32 %v1083, %v116
  %v1105 = vmul.f32 %v1085, %v117
  %v1106 = vmul.f32 %v1087, %v118
  %v1107 = vmul.f32 %v1089, %v119
  %v1108 = vmul.f32 %v1091, %v120
  %v1109 = vmul.f32 %v1093, %v121
  %1110 = vadd.xlane.f32.xlu0 %v1094
  %v1111 = vpop.xlane.xlu0 %1110
  %1112 = vadd.xlane.f32.xlu0 %v1095
  %v1113 = vpop.xlane.xlu0 %1112
  %1114 = vadd.xlane.f32.xlu0 %v1096
  %v1115 = vpop.xlane.xlu0 %1114
  %1116 = vadd.xlane.f32.xlu0 %v1097
  %v1117 = vpop.xlane.xlu0 %1116
  %1118 = vadd.xlane.f32.xlu0 %v1098
  %v1119 = vpop.xlane.xlu0 %1118
  %1120 = vadd.xlane.f32.xlu0 %v1099
  %v1121 = vpop.xlane.xlu0 %1120
  %1122 = vadd.xlane.f32.xlu0 %v1100
  %v1123 = vpop.xlane.xlu0 %1122
  %1124 = vadd.xlane.f32.xlu0 %v1101
  %v1125 = vpop.xlane.xlu0 %1124
  %1126 = vadd.xlane.f32.xlu0 %v1102
  %v1127 = vpop.xlane.xlu0 %1126
  %1128 = vadd.xlane.f32.xlu0 %v1103
  %v1129 = vpop.xlane.xlu0 %1128
  %1130 = vadd.xlane.f32.xlu0 %v1104
  %v1131 = vpop.xlane.xlu0 %1130
  %1132 = vadd.xlane.f32.xlu0 %v1105
  %v1133 = vpop.xlane.xlu0 %1132
  %1134 = vadd.xlane.f32.xlu0 %v1106
  %v1135 = vpop.xlane.xlu0 %1134
  %1136 = vadd.xlane.f32.xlu0 %v1107
  %v1137 = vpop.xlane.xlu0 %1136
  %1138 = vadd.xlane.f32.xlu0 %v1108
  %v1139 = vpop.xlane.xlu0 %1138
  %1140 = vadd.xlane.f32.xlu0 %v1109
  %v1141 = vpop.xlane.xlu0 %1140
  %vm1142 = vcmp.gt.f32.partialorder %v1111, 0.0
  %vm1143 = vcmp.gt.f32.partialorder %v1113, 0.0
  %vm1144 = vcmp.gt.f32.partialorder %v1115, 0.0
  %vm1145 = vcmp.gt.f32.partialorder %v1117, 0.0
  %vm1146 = vcmp.gt.f32.partialorder %v1119, 0.0
  %vm1147 = vcmp.gt.f32.partialorder %v1121, 0.0
  %vm1148 = vcmp.gt.f32.partialorder %v1123, 0.0
  %vm1149 = vcmp.gt.f32.partialorder %v1125, 0.0
  %vm1150 = vcmp.gt.f32.partialorder %v1127, 0.0
  %vm1151 = vcmp.gt.f32.partialorder %v1129, 0.0
  %vm1152 = vcmp.gt.f32.partialorder %v1131, 0.0
  %vm1153 = vcmp.gt.f32.partialorder %v1133, 0.0
  %vm1154 = vcmp.gt.f32.partialorder %v1135, 0.0
  %vm1155 = vcmp.gt.f32.partialorder %v1137, 0.0
  %vm1156 = vcmp.gt.f32.partialorder %v1139, 0.0
  %vm1157 = vcmp.gt.f32.partialorder %v1141, 0.0
  %v1158 = vsel %vm1142, %v1111, 1.0
  %v1159 = vsel %vm1143, %v1113, 1.0
  %v1160 = vsel %vm1144, %v1115, 1.0
  %v1161 = vsel %vm1145, %v1117, 1.0
  %v1162 = vsel %vm1146, %v1119, 1.0
  %v1163 = vsel %vm1147, %v1121, 1.0
  %v1164 = vsel %vm1148, %v1123, 1.0
  %v1165 = vsel %vm1149, %v1125, 1.0
  %v1166 = vsel %vm1150, %v1127, 1.0
  %v1167 = vsel %vm1151, %v1129, 1.0
  %v1168 = vsel %vm1152, %v1131, 1.0
  %v1169 = vsel %vm1153, %v1133, 1.0
  %v1170 = vsel %vm1154, %v1135, 1.0
  %v1171 = vsel %vm1155, %v1137, 1.0
  %v1172 = vsel %vm1156, %v1139, 1.0
  %v1173 = vsel %vm1157, %v1141, 1.0
  %v1174 = vrcp.pop %v1158
  %v1175 = vrcp.pop %v1159
  %v1176 = vrcp.pop %v1160
  %v1177 = vrcp.pop %v1161
  %v1178 = vrcp.pop %v1162
  %v1179 = vrcp.pop %v1163
  %v1180 = vrcp.pop %v1164
  %v1181 = vrcp.pop %v1165
  %v1182 = vrcp.pop %v1166
  %v1183 = vrcp.pop %v1167
  %v1184 = vrcp.pop %v1168
  %v1185 = vrcp.pop %v1169
  %v1186 = vrcp.pop %v1170
  %v1187 = vrcp.pop %v1171
  %v1188 = vrcp.pop %v1172
  %v1189 = vrcp.pop %v1173
  %v1190 = vmul.f32 %v1094, %v1174
  %v1191 = vmul.f32 %v1095, %v1175
  %v1192 = vmul.f32 %v1096, %v1176
  %v1193 = vmul.f32 %v1097, %v1177
  %v1194 = vmul.f32 %v1098, %v1178
  %v1195 = vmul.f32 %v1099, %v1179
  %v1196 = vmul.f32 %v1100, %v1180
  %v1197 = vmul.f32 %v1101, %v1181
  %v1198 = vmul.f32 %v1102, %v1182
  %v1199 = vmul.f32 %v1103, %v1183
  %v1200 = vmul.f32 %v1104, %v1184
  %v1201 = vmul.f32 %v1105, %v1185
  %v1202 = vmul.f32 %v1106, %v1186
  %v1203 = vmul.f32 %v1107, %v1187
  %v1204 = vmul.f32 %v1108, %v1188
  %v1205 = vmul.f32 %v1109, %v1189
  %1206 = vrot.lane.b32.xlu0 %v243, 56
  %v1207 = vpop.permute.xlu0 %1206
  %1208 = vrot.lane.b32.xlu0 %v246, 56
  %v1209 = vpop.permute.xlu0 %1208
  %1210 = vrot.lane.b32.xlu0 %v249, 56
  %v1211 = vpop.permute.xlu0 %1210
  %1212 = vrot.lane.b32.xlu0 %v252, 56
  %v1213 = vpop.permute.xlu0 %1212
  %1214 = vrot.lane.b32.xlu0 %v255, 56
  %v1215 = vpop.permute.xlu0 %1214
  %1216 = vrot.lane.b32.xlu0 %v258, 56
  %v1217 = vpop.permute.xlu0 %1216
  %1218 = vrot.lane.b32.xlu0 %v261, 56
  %v1219 = vpop.permute.xlu0 %1218
  %1220 = vrot.lane.b32.xlu0 %v264, 56
  %v1221 = vpop.permute.xlu0 %1220
  %1222 = vrot.lane.b32.xlu0 %v267, 56
  %v1223 = vpop.permute.xlu0 %1222
  %1224 = vrot.lane.b32.xlu0 %v270, 56
  %v1225 = vpop.permute.xlu0 %1224
  %1226 = vrot.lane.b32.xlu0 %v273, 56
  %v1227 = vpop.permute.xlu0 %1226
  %1228 = vrot.lane.b32.xlu0 %v276, 56
  %v1229 = vpop.permute.xlu0 %1228
  %1230 = vrot.lane.b32.xlu0 %v279, 56
  %v1231 = vpop.permute.xlu0 %1230
  %1232 = vrot.lane.b32.xlu0 %v282, 56
  %v1233 = vpop.permute.xlu0 %1232
  %1234 = vrot.lane.b32.xlu0 %v285, 56
  %v1235 = vpop.permute.xlu0 %1234
  %1236 = vrot.lane.b32.xlu0 %v288, 56
  %v1237 = vpop.permute.xlu0 %1236
  %1254 = vmatpush.msra.mxu0 %v1237
  %1255 = vmatpush.msra.mxu0 %v1235
  %1256 = vmatpush.msra.mxu0 %v1233
  %1257 = vmatpush.msra.mxu0 %v1231
  %1258 = vmatpush.msra.mxu0 %v1229
  %1259 = vmatpush.msra.mxu0 %v1227
  %1260 = vmatpush.msra.mxu0 %v1225
  %1261 = vmatpush.msra.mxu0 %v1223
  %1262 = vmatpush.msra.mxu0 %v1221
  %1263 = vmatpush.msra.mxu0 %v1219
  %1264 = vmatpush.msra.mxu0 %v1217
  %1265 = vmatpush.msra.mxu0 %v1215
  %1266 = vmatpush.msra.mxu0 %v1213
  %1267 = vmatpush.msra.mxu0 %v1211
  %1268 = vmatpush.msra.mxu0 %v1209
  %1269 = vmatpush.msra.mxu0 %v1207
  %1270 = vmatmul.f32.gmra.mxu0 %v1190
  %v1271 = vpop.f32.mrf.mxu0
  %v1272 = vadd.f32 0.0, %v1271
  %1273 = vmatmul.f32.gmra.mxu0 %v1191
  %v1274 = vpop.f32.mrf.mxu0
  %v1275 = vadd.f32 0.0, %v1274
  %1276 = vmatmul.f32.gmra.mxu0 %v1192
  %v1277 = vpop.f32.mrf.mxu0
  %v1278 = vadd.f32 0.0, %v1277
  %1279 = vmatmul.f32.gmra.mxu0 %v1193
  %v1280 = vpop.f32.mrf.mxu0
  %v1281 = vadd.f32 0.0, %v1280
  %1282 = vmatmul.f32.gmra.mxu0 %v1194
  %v1283 = vpop.f32.mrf.mxu0
  %v1284 = vadd.f32 0.0, %v1283
  %1285 = vmatmul.f32.gmra.mxu0 %v1195
  %v1286 = vpop.f32.mrf.mxu0
  %v1287 = vadd.f32 0.0, %v1286
  %1288 = vmatmul.f32.gmra.mxu0 %v1196
  %v1289 = vpop.f32.mrf.mxu0
  %v1290 = vadd.f32 0.0, %v1289
  %1291 = vmatmul.f32.gmra.mxu0 %v1197
  %v1292 = vpop.f32.mrf.mxu0
  %v1293 = vadd.f32 0.0, %v1292
  %1294 = vmatmul.f32.gmra.mxu0 %v1198
  %v1295 = vpop.f32.mrf.mxu0
  %v1296 = vadd.f32 0.0, %v1295
  %1297 = vmatmul.f32.gmra.mxu0 %v1199
  %v1298 = vpop.f32.mrf.mxu0
  %v1299 = vadd.f32 0.0, %v1298
  %1300 = vmatmul.f32.gmra.mxu0 %v1200
  %v1301 = vpop.f32.mrf.mxu0
  %v1302 = vadd.f32 0.0, %v1301
  %1303 = vmatmul.f32.gmra.mxu0 %v1201
  %v1304 = vpop.f32.mrf.mxu0
  %v1305 = vadd.f32 0.0, %v1304
  %1306 = vmatmul.f32.gmra.mxu0 %v1202
  %v1307 = vpop.f32.mrf.mxu0
  %v1308 = vadd.f32 0.0, %v1307
  %1309 = vmatmul.f32.gmra.mxu0 %v1203
  %v1310 = vpop.f32.mrf.mxu0
  %v1311 = vadd.f32 0.0, %v1310
  %1312 = vmatmul.f32.gmra.mxu0 %v1204
  %v1313 = vpop.f32.mrf.mxu0
  %v1314 = vadd.f32 0.0, %v1313
  %1315 = vmatmul.f32.gmra.mxu0 %v1205
  %v1316 = vpop.f32.mrf.mxu0
  %v1317 = vadd.f32 0.0, %v1316
  %1318 = vdwg.mxu0
  %1335 = vrot.lane.b32.xlu0 %v1272, 8
  %v1336 = vpop.permute.xlu0 %1335
  %1337 = vrot.lane.b32.xlu0 %v1275, 8
  %v1338 = vpop.permute.xlu0 %1337
  %1339 = vrot.lane.b32.xlu0 %v1278, 8
  %v1340 = vpop.permute.xlu0 %1339
  %1341 = vrot.lane.b32.xlu0 %v1281, 8
  %v1342 = vpop.permute.xlu0 %1341
  %1343 = vrot.lane.b32.xlu0 %v1284, 8
  %v1344 = vpop.permute.xlu0 %1343
  %1345 = vrot.lane.b32.xlu0 %v1287, 8
  %v1346 = vpop.permute.xlu0 %1345
  %1347 = vrot.lane.b32.xlu0 %v1290, 8
  %v1348 = vpop.permute.xlu0 %1347
  %1349 = vrot.lane.b32.xlu0 %v1293, 8
  %v1350 = vpop.permute.xlu0 %1349
  %1351 = vrot.lane.b32.xlu0 %v1296, 8
  %v1352 = vpop.permute.xlu0 %1351
  %1353 = vrot.lane.b32.xlu0 %v1299, 8
  %v1354 = vpop.permute.xlu0 %1353
  %1355 = vrot.lane.b32.xlu0 %v1302, 8
  %v1356 = vpop.permute.xlu0 %1355
  %1357 = vrot.lane.b32.xlu0 %v1305, 8
  %v1358 = vpop.permute.xlu0 %1357
  %1359 = vrot.lane.b32.xlu0 %v1308, 8
  %v1360 = vpop.permute.xlu0 %1359
  %1361 = vrot.lane.b32.xlu0 %v1311, 8
  %v1362 = vpop.permute.xlu0 %1361
  %1363 = vrot.lane.b32.xlu0 %v1314, 8
  %v1364 = vpop.permute.xlu0 %1363
  %1365 = vrot.lane.b32.xlu0 %v1317, 8
  %v1366 = vpop.permute.xlu0 %1365
  %vm1383 = vcmask 130112
  %1384 = vst.msk [vmem:[#allocation2] sm:$0xff] %vm1383, %v1336
  %1385 = vst.msk [vmem:[#allocation2 + $0x8] sm:$0xff] %vm1383, %v1338
  %1386 = vst.msk [vmem:[#allocation2 + $0x10] sm:$0xff] %vm1383, %v1340
  %1387 = vst.msk [vmem:[#allocation2 + $0x18] sm:$0xff] %vm1383, %v1342
  %1388 = vst.msk [vmem:[#allocation2 + $0x20] sm:$0xff] %vm1383, %v1344
  %1389 = vst.msk [vmem:[#allocation2 + $0x28] sm:$0xff] %vm1383, %v1346
  %1390 = vst.msk [vmem:[#allocation2 + $0x30] sm:$0xff] %vm1383, %v1348
  %1391 = vst.msk [vmem:[#allocation2 + $0x38] sm:$0xff] %vm1383, %v1350
  %1392 = vst.msk [vmem:[#allocation2 + $0x40] sm:$0xff] %vm1383, %v1352
  %1393 = vst.msk [vmem:[#allocation2 + $0x48] sm:$0xff] %vm1383, %v1354
  %1394 = vst.msk [vmem:[#allocation2 + $0x50] sm:$0xff] %vm1383, %v1356
  %1395 = vst.msk [vmem:[#allocation2 + $0x58] sm:$0xff] %vm1383, %v1358
  %1396 = vst.msk [vmem:[#allocation2 + $0x60] sm:$0xff] %vm1383, %v1360
  %1397 = vst.msk [vmem:[#allocation2 + $0x68] sm:$0xff] %vm1383, %v1362
  %1398 = vst.msk [vmem:[#allocation2 + $0x70] sm:$0xff] %vm1383, %v1364
  %1399 = vst.msk [vmem:[#allocation2 + $0x78] sm:$0xff] %vm1383, %v1366
  %1400 = vrot.lane.b32.xlu0 %v290, 112
  %v1401 = vpop.permute.xlu0 %1400
  %1402 = vrot.lane.b32.xlu0 %v291, 112
  %v1403 = vpop.permute.xlu0 %1402
  %1404 = vrot.lane.b32.xlu0 %v292, 112
  %v1405 = vpop.permute.xlu0 %1404
  %1406 = vrot.lane.b32.xlu0 %v293, 112
  %v1407 = vpop.permute.xlu0 %1406
  %1408 = vrot.lane.b32.xlu0 %v294, 112
  %v1409 = vpop.permute.xlu0 %1408
  %1410 = vrot.lane.b32.xlu0 %v295, 112
  %v1411 = vpop.permute.xlu0 %1410
  %1412 = vrot.lane.b32.xlu0 %v296, 112
  %v1413 = vpop.permute.xlu0 %1412
  %1414 = vrot.lane.b32.xlu0 %v297, 112
  %v1415 = vpop.permute.xlu0 %1414
  %1416 = vrot.lane.b32.xlu0 %v298, 112
  %v1417 = vpop.permute.xlu0 %1416
  %1418 = vrot.lane.b32.xlu0 %v299, 112
  %v1419 = vpop.permute.xlu0 %1418
  %1420 = vrot.lane.b32.xlu0 %v300, 112
  %v1421 = vpop.permute.xlu0 %1420
  %1422 = vrot.lane.b32.xlu0 %v301, 112
  %v1423 = vpop.permute.xlu0 %1422
  %1424 = vrot.lane.b32.xlu0 %v302, 112
  %v1425 = vpop.permute.xlu0 %1424
  %1426 = vrot.lane.b32.xlu0 %v303, 112
  %v1427 = vpop.permute.xlu0 %1426
  %1428 = vrot.lane.b32.xlu0 %v304, 112
  %v1429 = vpop.permute.xlu0 %1428
  %1430 = vrot.lane.b32.xlu0 %v305, 112
  %v1431 = vpop.permute.xlu0 %1430
  %1432 = vrot.lane.b32.xlu0 %v243, 80
  %v1433 = vpop.permute.xlu0 %1432
  %1434 = vrot.lane.b32.xlu0 %v246, 80
  %v1435 = vpop.permute.xlu0 %1434
  %1436 = vrot.lane.b32.xlu0 %v249, 80
  %v1437 = vpop.permute.xlu0 %1436
  %1438 = vrot.lane.b32.xlu0 %v252, 80
  %v1439 = vpop.permute.xlu0 %1438
  %1440 = vrot.lane.b32.xlu0 %v255, 80
  %v1441 = vpop.permute.xlu0 %1440
  %1442 = vrot.lane.b32.xlu0 %v258, 80
  %v1443 = vpop.permute.xlu0 %1442
  %1444 = vrot.lane.b32.xlu0 %v261, 80
  %v1445 = vpop.permute.xlu0 %1444
  %1446 = vrot.lane.b32.xlu0 %v264, 80
  %v1447 = vpop.permute.xlu0 %1446
  %1448 = vrot.lane.b32.xlu0 %v267, 80
  %v1449 = vpop.permute.xlu0 %1448
  %1450 = vrot.lane.b32.xlu0 %v270, 80
  %v1451 = vpop.permute.xlu0 %1450
  %1452 = vrot.lane.b32.xlu0 %v273, 80
  %v1453 = vpop.permute.xlu0 %1452
  %1454 = vrot.lane.b32.xlu0 %v276, 80
  %v1455 = vpop.permute.xlu0 %1454
  %1456 = vrot.lane.b32.xlu0 %v279, 80
  %v1457 = vpop.permute.xlu0 %1456
  %1458 = vrot.lane.b32.xlu0 %v282, 80
  %v1459 = vpop.permute.xlu0 %1458
  %1460 = vrot.lane.b32.xlu0 %v285, 80
  %v1461 = vpop.permute.xlu0 %1460
  %1462 = vrot.lane.b32.xlu0 %v288, 80
  %v1463 = vpop.permute.xlu0 %1462
  %v1464 = vsel %vm354, %v1401, 0
  %v1466 = vsel %vm354, %v1403, 0
  %v1468 = vsel %vm354, %v1405, 0
  %v1470 = vsel %vm354, %v1407, 0
  %v1472 = vsel %vm354, %v1409, 0
  %v1474 = vsel %vm354, %v1411, 0
  %v1476 = vsel %vm354, %v1413, 0
  %v1478 = vsel %vm354, %v1415, 0
  %v1480 = vsel %vm354, %v1417, 0
  %v1482 = vsel %vm354, %v1419, 0
  %v1484 = vsel %vm354, %v1421, 0
  %v1486 = vsel %vm354, %v1423, 0
  %v1488 = vsel %vm354, %v1425, 0
  %v1490 = vsel %vm354, %v1427, 0
  %v1492 = vsel %vm354, %v1429, 0
  %v1494 = vsel %vm354, %v1431, 0
  %v1496 = vsel %vm354, %v1433, 0
  %v1498 = vsel %vm354, %v1435, 0
  %v1500 = vsel %vm354, %v1437, 0
  %v1502 = vsel %vm354, %v1439, 0
  %v1504 = vsel %vm354, %v1441, 0
  %v1506 = vsel %vm354, %v1443, 0
  %v1508 = vsel %vm354, %v1445, 0
  %v1510 = vsel %vm354, %v1447, 0
  %v1512 = vsel %vm354, %v1449, 0
  %v1514 = vsel %vm354, %v1451, 0
  %v1516 = vsel %vm354, %v1453, 0
  %v1518 = vsel %vm354, %v1455, 0
  %v1520 = vsel %vm354, %v1457, 0
  %v1522 = vsel %vm354, %v1459, 0
  %v1524 = vsel %vm354, %v1461, 0
  %v1526 = vsel %vm354, %v1463, 0
  %1528 = vmatpush.xpose.msra.mxu0 %v1526
  %1529 = vmatpush.xpose.msra.mxu0 %v1524
  %1530 = vmatpush.xpose.msra.mxu0 %v1522
  %1531 = vmatpush.xpose.msra.mxu0 %v1520
  %1532 = vmatpush.xpose.msra.mxu0 %v1518
  %1533 = vmatpush.xpose.msra.mxu0 %v1516
  %1534 = vmatpush.xpose.msra.mxu0 %v1514
  %1535 = vmatpush.xpose.msra.mxu0 %v1512
  %1536 = vmatpush.xpose.msra.mxu0 %v1510
  %1537 = vmatpush.xpose.msra.mxu0 %v1508
  %1538 = vmatpush.xpose.msra.mxu0 %v1506
  %1539 = vmatpush.xpose.msra.mxu0 %v1504
  %1540 = vmatpush.xpose.msra.mxu0 %v1502
  %1541 = vmatpush.xpose.msra.mxu0 %v1500
  %1542 = vmatpush.xpose.msra.mxu0 %v1498
  %1543 = vmatpush.xpose.msra.mxu0 %v1496
  %1544 = vmatmul.f32.gmra.mxu0 %v1464
  %v1545 = vpop.f32.mrf.mxu0
  %v1546 = vadd.f32 %v138, %v1545
  %1547 = vmatmul.f32.gmra.mxu0 %v1466
  %v1548 = vpop.f32.mrf.mxu0
  %v1549 = vadd.f32 %v139, %v1548
  %1550 = vmatmul.f32.gmra.mxu0 %v1468
  %v1551 = vpop.f32.mrf.mxu0
  %v1552 = vadd.f32 %v140, %v1551
  %1553 = vmatmul.f32.gmra.mxu0 %v1470
  %v1554 = vpop.f32.mrf.mxu0
  %v1555 = vadd.f32 %v141, %v1554
  %1556 = vmatmul.f32.gmra.mxu0 %v1472
  %v1557 = vpop.f32.mrf.mxu0
  %v1558 = vadd.f32 %v142, %v1557
  %1559 = vmatmul.f32.gmra.mxu0 %v1474
  %v1560 = vpop.f32.mrf.mxu0
  %v1561 = vadd.f32 %v143, %v1560
  %1562 = vmatmul.f32.gmra.mxu0 %v1476
  %v1563 = vpop.f32.mrf.mxu0
  %v1564 = vadd.f32 %v144, %v1563
  %1565 = vmatmul.f32.gmra.mxu0 %v1478
  %v1566 = vpop.f32.mrf.mxu0
  %v1567 = vadd.f32 %v145, %v1566
  %1568 = vmatmul.f32.gmra.mxu0 %v1480
  %v1569 = vpop.f32.mrf.mxu0
  %v1570 = vadd.f32 %v146, %v1569
  %1571 = vmatmul.f32.gmra.mxu0 %v1482
  %v1572 = vpop.f32.mrf.mxu0
  %v1573 = vadd.f32 %v147, %v1572
  %1574 = vmatmul.f32.gmra.mxu0 %v1484
  %v1575 = vpop.f32.mrf.mxu0
  %v1576 = vadd.f32 %v148, %v1575
  %1577 = vmatmul.f32.gmra.mxu0 %v1486
  %v1578 = vpop.f32.mrf.mxu0
  %v1579 = vadd.f32 %v149, %v1578
  %1580 = vmatmul.f32.gmra.mxu0 %v1488
  %v1581 = vpop.f32.mrf.mxu0
  %v1582 = vadd.f32 %v150, %v1581
  %1583 = vmatmul.f32.gmra.mxu0 %v1490
  %v1584 = vpop.f32.mrf.mxu0
  %v1585 = vadd.f32 %v151, %v1584
  %1586 = vmatmul.f32.gmra.mxu0 %v1492
  %v1587 = vpop.f32.mrf.mxu0
  %v1588 = vadd.f32 %v152, %v1587
  %1589 = vmatmul.f32.gmra.mxu0 %v1494
  %v1590 = vpop.f32.mrf.mxu0
  %v1591 = vadd.f32 %v153, %v1590
  %1592 = vdwg.mxu0
  %1593 = vmax.xlane.f32.xlu0 %v1546
  %v1594 = vpop.xlane.xlu0 %1593
  %1595 = vmax.xlane.f32.xlu0 %v1549
  %v1596 = vpop.xlane.xlu0 %1595
  %1597 = vmax.xlane.f32.xlu0 %v1552
  %v1598 = vpop.xlane.xlu0 %1597
  %1599 = vmax.xlane.f32.xlu0 %v1555
  %v1600 = vpop.xlane.xlu0 %1599
  %1601 = vmax.xlane.f32.xlu0 %v1558
  %v1602 = vpop.xlane.xlu0 %1601
  %1603 = vmax.xlane.f32.xlu0 %v1561
  %v1604 = vpop.xlane.xlu0 %1603
  %1605 = vmax.xlane.f32.xlu0 %v1564
  %v1606 = vpop.xlane.xlu0 %1605
  %1607 = vmax.xlane.f32.xlu0 %v1567
  %v1608 = vpop.xlane.xlu0 %1607
  %1609 = vmax.xlane.f32.xlu0 %v1570
  %v1610 = vpop.xlane.xlu0 %1609
  %1611 = vmax.xlane.f32.xlu0 %v1573
  %v1612 = vpop.xlane.xlu0 %1611
  %1613 = vmax.xlane.f32.xlu0 %v1576
  %v1614 = vpop.xlane.xlu0 %1613
  %1615 = vmax.xlane.f32.xlu0 %v1579
  %v1616 = vpop.xlane.xlu0 %1615
  %1617 = vmax.xlane.f32.xlu0 %v1582
  %v1618 = vpop.xlane.xlu0 %1617
  %1619 = vmax.xlane.f32.xlu0 %v1585
  %v1620 = vpop.xlane.xlu0 %1619
  %1621 = vmax.xlane.f32.xlu0 %v1588
  %v1622 = vpop.xlane.xlu0 %1621
  %1623 = vmax.xlane.f32.xlu0 %v1591
  %v1624 = vpop.xlane.xlu0 %1623
  %v1625 = vsub.f32 %v1546, %v1594
  %v1626 = vsub.f32 %v1549, %v1596
  %v1627 = vsub.f32 %v1552, %v1598
  %v1628 = vsub.f32 %v1555, %v1600
  %v1629 = vsub.f32 %v1558, %v1602
  %v1630 = vsub.f32 %v1561, %v1604
  %v1631 = vsub.f32 %v1564, %v1606
  %v1632 = vsub.f32 %v1567, %v1608
  %v1633 = vsub.f32 %v1570, %v1610
  %v1634 = vsub.f32 %v1573, %v1612
  %v1635 = vsub.f32 %v1576, %v1614
  %v1636 = vsub.f32 %v1579, %v1616
  %v1637 = vsub.f32 %v1582, %v1618
  %v1638 = vsub.f32 %v1585, %v1620
  %v1639 = vsub.f32 %v1588, %v1622
  %v1640 = vsub.f32 %v1591, %v1624
  %v1641 = vmul.f32 %v1625, 1.442695
  %v1642 = vpow.pop %v1641
  %v1643 = vmul.f32 %v1626, 1.442695
  %v1644 = vpow.pop %v1643
  %v1645 = vmul.f32 %v1627, 1.442695
  %v1646 = vpow.pop %v1645
  %v1647 = vmul.f32 %v1628, 1.442695
  %v1648 = vpow.pop %v1647
  %v1649 = vmul.f32 %v1629, 1.442695
  %v1650 = vpow.pop %v1649
  %v1651 = vmul.f32 %v1630, 1.442695
  %v1652 = vpow.pop %v1651
  %v1653 = vmul.f32 %v1631, 1.442695
  %v1654 = vpow.pop %v1653
  %v1655 = vmul.f32 %v1632, 1.442695
  %v1656 = vpow.pop %v1655
  %v1657 = vmul.f32 %v1633, 1.442695
  %v1658 = vpow.pop %v1657
  %v1659 = vmul.f32 %v1634, 1.442695
  %v1660 = vpow.pop %v1659
  %v1661 = vmul.f32 %v1635, 1.442695
  %v1662 = vpow.pop %v1661
  %v1663 = vmul.f32 %v1636, 1.442695
  %v1664 = vpow.pop %v1663
  %v1665 = vmul.f32 %v1637, 1.442695
  %v1666 = vpow.pop %v1665
  %v1667 = vmul.f32 %v1638, 1.442695
  %v1668 = vpow.pop %v1667
  %v1669 = vmul.f32 %v1639, 1.442695
  %v1670 = vpow.pop %v1669
  %v1671 = vmul.f32 %v1640, 1.442695
  %v1672 = vpow.pop %v1671
  %v1673 = vmul.f32 %v1642, %v106
  %v1674 = vmul.f32 %v1644, %v107
  %v1675 = vmul.f32 %v1646, %v108
  %v1676 = vmul.f32 %v1648, %v109
  %v1677 = vmul.f32 %v1650, %v110
  %v1678 = vmul.f32 %v1652, %v111
  %v1679 = vmul.f32 %v1654, %v112
  %v1680 = vmul.f32 %v1656, %v113
  %v1681 = vmul.f32 %v1658, %v114
  %v1682 = vmul.f32 %v1660, %v115
  %v1683 = vmul.f32 %v1662, %v116
  %v1684 = vmul.f32 %v1664, %v117
  %v1685 = vmul.f32 %v1666, %v118
  %v1686 = vmul.f32 %v1668, %v119
  %v1687 = vmul.f32 %v1670, %v120
  %v1688 = vmul.f32 %v1672, %v121
  %1689 = vadd.xlane.f32.xlu0 %v1673
  %v1690 = vpop.xlane.xlu0 %1689
  %1691 = vadd.xlane.f32.xlu0 %v1674
  %v1692 = vpop.xlane.xlu0 %1691
  %1693 = vadd.xlane.f32.xlu0 %v1675
  %v1694 = vpop.xlane.xlu0 %1693
  %1695 = vadd.xlane.f32.xlu0 %v1676
  %v1696 = vpop.xlane.xlu0 %1695
  %1697 = vadd.xlane.f32.xlu0 %v1677
  %v1698 = vpop.xlane.xlu0 %1697
  %1699 = vadd.xlane.f32.xlu0 %v1678
  %v1700 = vpop.xlane.xlu0 %1699
  %1701 = vadd.xlane.f32.xlu0 %v1679
  %v1702 = vpop.xlane.xlu0 %1701
  %1703 = vadd.xlane.f32.xlu0 %v1680
  %v1704 = vpop.xlane.xlu0 %1703
  %1705 = vadd.xlane.f32.xlu0 %v1681
  %v1706 = vpop.xlane.xlu0 %1705
  %1707 = vadd.xlane.f32.xlu0 %v1682
  %v1708 = vpop.xlane.xlu0 %1707
  %1709 = vadd.xlane.f32.xlu0 %v1683
  %v1710 = vpop.xlane.xlu0 %1709
  %1711 = vadd.xlane.f32.xlu0 %v1684
  %v1712 = vpop.xlane.xlu0 %1711
  %1713 = vadd.xlane.f32.xlu0 %v1685
  %v1714 = vpop.xlane.xlu0 %1713
  %1715 = vadd.xlane.f32.xlu0 %v1686
  %v1716 = vpop.xlane.xlu0 %1715
  %1717 = vadd.xlane.f32.xlu0 %v1687
  %v1718 = vpop.xlane.xlu0 %1717
  %1719 = vadd.xlane.f32.xlu0 %v1688
  %v1720 = vpop.xlane.xlu0 %1719
  %vm1721 = vcmp.gt.f32.partialorder %v1690, 0.0
  %vm1722 = vcmp.gt.f32.partialorder %v1692, 0.0
  %vm1723 = vcmp.gt.f32.partialorder %v1694, 0.0
  %vm1724 = vcmp.gt.f32.partialorder %v1696, 0.0
  %vm1725 = vcmp.gt.f32.partialorder %v1698, 0.0
  %vm1726 = vcmp.gt.f32.partialorder %v1700, 0.0
  %vm1727 = vcmp.gt.f32.partialorder %v1702, 0.0
  %vm1728 = vcmp.gt.f32.partialorder %v1704, 0.0
  %vm1729 = vcmp.gt.f32.partialorder %v1706, 0.0
  %vm1730 = vcmp.gt.f32.partialorder %v1708, 0.0
  %vm1731 = vcmp.gt.f32.partialorder %v1710, 0.0
  %vm1732 = vcmp.gt.f32.partialorder %v1712, 0.0
  %vm1733 = vcmp.gt.f32.partialorder %v1714, 0.0
  %vm1734 = vcmp.gt.f32.partialorder %v1716, 0.0
  %vm1735 = vcmp.gt.f32.partialorder %v1718, 0.0
  %vm1736 = vcmp.gt.f32.partialorder %v1720, 0.0
  %v1737 = vsel %vm1721, %v1690, 1.0
  %v1738 = vsel %vm1722, %v1692, 1.0
  %v1739 = vsel %vm1723, %v1694, 1.0
  %v1740 = vsel %vm1724, %v1696, 1.0
  %v1741 = vsel %vm1725, %v1698, 1.0
  %v1742 = vsel %vm1726, %v1700, 1.0
  %v1743 = vsel %vm1727, %v1702, 1.0
  %v1744 = vsel %vm1728, %v1704, 1.0
  %v1745 = vsel %vm1729, %v1706, 1.0
  %v1746 = vsel %vm1730, %v1708, 1.0
  %v1747 = vsel %vm1731, %v1710, 1.0
  %v1748 = vsel %vm1732, %v1712, 1.0
  %v1749 = vsel %vm1733, %v1714, 1.0
  %v1750 = vsel %vm1734, %v1716, 1.0
  %v1751 = vsel %vm1735, %v1718, 1.0
  %v1752 = vsel %vm1736, %v1720, 1.0
  %v1753 = vrcp.pop %v1737
  %v1754 = vrcp.pop %v1738
  %v1755 = vrcp.pop %v1739
  %v1756 = vrcp.pop %v1740
  %v1757 = vrcp.pop %v1741
  %v1758 = vrcp.pop %v1742
  %v1759 = vrcp.pop %v1743
  %v1760 = vrcp.pop %v1744
  %v1761 = vrcp.pop %v1745
  %v1762 = vrcp.pop %v1746
  %v1763 = vrcp.pop %v1747
  %v1764 = vrcp.pop %v1748
  %v1765 = vrcp.pop %v1749
  %v1766 = vrcp.pop %v1750
  %v1767 = vrcp.pop %v1751
  %v1768 = vrcp.pop %v1752
  %v1769 = vmul.f32 %v1673, %v1753
  %v1770 = vmul.f32 %v1674, %v1754
  %v1771 = vmul.f32 %v1675, %v1755
  %v1772 = vmul.f32 %v1676, %v1756
  %v1773 = vmul.f32 %v1677, %v1757
  %v1774 = vmul.f32 %v1678, %v1758
  %v1775 = vmul.f32 %v1679, %v1759
  %v1776 = vmul.f32 %v1680, %v1760
  %v1777 = vmul.f32 %v1681, %v1761
  %v1778 = vmul.f32 %v1682, %v1762
  %v1779 = vmul.f32 %v1683, %v1763
  %v1780 = vmul.f32 %v1684, %v1764
  %v1781 = vmul.f32 %v1685, %v1765
  %v1782 = vmul.f32 %v1686, %v1766
  %v1783 = vmul.f32 %v1687, %v1767
  %v1784 = vmul.f32 %v1688, %v1768
  %1785 = vrot.lane.b32.xlu0 %v243, 48
  %v1786 = vpop.permute.xlu0 %1785
  %1787 = vrot.lane.b32.xlu0 %v246, 48
  %v1788 = vpop.permute.xlu0 %1787
  %1789 = vrot.lane.b32.xlu0 %v249, 48
  %v1790 = vpop.permute.xlu0 %1789
  %1791 = vrot.lane.b32.xlu0 %v252, 48
  %v1792 = vpop.permute.xlu0 %1791
  %1793 = vrot.lane.b32.xlu0 %v255, 48
  %v1794 = vpop.permute.xlu0 %1793
  %1795 = vrot.lane.b32.xlu0 %v258, 48
  %v1796 = vpop.permute.xlu0 %1795
  %1797 = vrot.lane.b32.xlu0 %v261, 48
  %v1798 = vpop.permute.xlu0 %1797
  %1799 = vrot.lane.b32.xlu0 %v264, 48
  %v1800 = vpop.permute.xlu0 %1799
  %1801 = vrot.lane.b32.xlu0 %v267, 48
  %v1802 = vpop.permute.xlu0 %1801
  %1803 = vrot.lane.b32.xlu0 %v270, 48
  %v1804 = vpop.permute.xlu0 %1803
  %1805 = vrot.lane.b32.xlu0 %v273, 48
  %v1806 = vpop.permute.xlu0 %1805
  %1807 = vrot.lane.b32.xlu0 %v276, 48
  %v1808 = vpop.permute.xlu0 %1807
  %1809 = vrot.lane.b32.xlu0 %v279, 48
  %v1810 = vpop.permute.xlu0 %1809
  %1811 = vrot.lane.b32.xlu0 %v282, 48
  %v1812 = vpop.permute.xlu0 %1811
  %1813 = vrot.lane.b32.xlu0 %v285, 48
  %v1814 = vpop.permute.xlu0 %1813
  %1815 = vrot.lane.b32.xlu0 %v288, 48
  %v1816 = vpop.permute.xlu0 %1815
  %1833 = vmatpush.msra.mxu0 %v1816
  %1834 = vmatpush.msra.mxu0 %v1814
  %1835 = vmatpush.msra.mxu0 %v1812
  %1836 = vmatpush.msra.mxu0 %v1810
  %1837 = vmatpush.msra.mxu0 %v1808
  %1838 = vmatpush.msra.mxu0 %v1806
  %1839 = vmatpush.msra.mxu0 %v1804
  %1840 = vmatpush.msra.mxu0 %v1802
  %1841 = vmatpush.msra.mxu0 %v1800
  %1842 = vmatpush.msra.mxu0 %v1798
  %1843 = vmatpush.msra.mxu0 %v1796
  %1844 = vmatpush.msra.mxu0 %v1794
  %1845 = vmatpush.msra.mxu0 %v1792
  %1846 = vmatpush.msra.mxu0 %v1790
  %1847 = vmatpush.msra.mxu0 %v1788
  %1848 = vmatpush.msra.mxu0 %v1786
  %1849 = vmatmul.f32.gmra.mxu0 %v1769
  %v1850 = vpop.f32.mrf.mxu0
  %v1851 = vadd.f32 0.0, %v1850
  %1852 = vmatmul.f32.gmra.mxu0 %v1770
  %v1853 = vpop.f32.mrf.mxu0
  %v1854 = vadd.f32 0.0, %v1853
  %1855 = vmatmul.f32.gmra.mxu0 %v1771
  %v1856 = vpop.f32.mrf.mxu0
  %v1857 = vadd.f32 0.0, %v1856
  %1858 = vmatmul.f32.gmra.mxu0 %v1772
  %v1859 = vpop.f32.mrf.mxu0
  %v1860 = vadd.f32 0.0, %v1859
  %1861 = vmatmul.f32.gmra.mxu0 %v1773
  %v1862 = vpop.f32.mrf.mxu0
  %v1863 = vadd.f32 0.0, %v1862
  %1864 = vmatmul.f32.gmra.mxu0 %v1774
  %v1865 = vpop.f32.mrf.mxu0
  %v1866 = vadd.f32 0.0, %v1865
  %1867 = vmatmul.f32.gmra.mxu0 %v1775
  %v1868 = vpop.f32.mrf.mxu0
  %v1869 = vadd.f32 0.0, %v1868
  %1870 = vmatmul.f32.gmra.mxu0 %v1776
  %v1871 = vpop.f32.mrf.mxu0
  %v1872 = vadd.f32 0.0, %v1871
  %1873 = vmatmul.f32.gmra.mxu0 %v1777
  %v1874 = vpop.f32.mrf.mxu0
  %v1875 = vadd.f32 0.0, %v1874
  %1876 = vmatmul.f32.gmra.mxu0 %v1778
  %v1877 = vpop.f32.mrf.mxu0
  %v1878 = vadd.f32 0.0, %v1877
  %1879 = vmatmul.f32.gmra.mxu0 %v1779
  %v1880 = vpop.f32.mrf.mxu0
  %v1881 = vadd.f32 0.0, %v1880
  %1882 = vmatmul.f32.gmra.mxu0 %v1780
  %v1883 = vpop.f32.mrf.mxu0
  %v1884 = vadd.f32 0.0, %v1883
  %1885 = vmatmul.f32.gmra.mxu0 %v1781
  %v1886 = vpop.f32.mrf.mxu0
  %v1887 = vadd.f32 0.0, %v1886
  %1888 = vmatmul.f32.gmra.mxu0 %v1782
  %v1889 = vpop.f32.mrf.mxu0
  %v1890 = vadd.f32 0.0, %v1889
  %1891 = vmatmul.f32.gmra.mxu0 %v1783
  %v1892 = vpop.f32.mrf.mxu0
  %v1893 = vadd.f32 0.0, %v1892
  %1894 = vmatmul.f32.gmra.mxu0 %v1784
  %v1895 = vpop.f32.mrf.mxu0
  %v1896 = vadd.f32 0.0, %v1895
  %1897 = vdwg.mxu0
  %1914 = vrot.lane.b32.xlu0 %v1851, 16
  %v1915 = vpop.permute.xlu0 %1914
  %1916 = vrot.lane.b32.xlu0 %v1854, 16
  %v1917 = vpop.permute.xlu0 %1916
  %1918 = vrot.lane.b32.xlu0 %v1857, 16
  %v1919 = vpop.permute.xlu0 %1918
  %1920 = vrot.lane.b32.xlu0 %v1860, 16
  %v1921 = vpop.permute.xlu0 %1920
  %1922 = vrot.lane.b32.xlu0 %v1863, 16
  %v1923 = vpop.permute.xlu0 %1922
  %1924 = vrot.lane.b32.xlu0 %v1866, 16
  %v1925 = vpop.permute.xlu0 %1924
  %1926 = vrot.lane.b32.xlu0 %v1869, 16
  %v1927 = vpop.permute.xlu0 %1926
  %1928 = vrot.lane.b32.xlu0 %v1872, 16
  %v1929 = vpop.permute.xlu0 %1928
  %1930 = vrot.lane.b32.xlu0 %v1875, 16
  %v1931 = vpop.permute.xlu0 %1930
  %1932 = vrot.lane.b32.xlu0 %v1878, 16
  %v1933 = vpop.permute.xlu0 %1932
  %1934 = vrot.lane.b32.xlu0 %v1881, 16
  %v1935 = vpop.permute.xlu0 %1934
  %1936 = vrot.lane.b32.xlu0 %v1884, 16
  %v1937 = vpop.permute.xlu0 %1936
  %1938 = vrot.lane.b32.xlu0 %v1887, 16
  %v1939 = vpop.permute.xlu0 %1938
  %1940 = vrot.lane.b32.xlu0 %v1890, 16
  %v1941 = vpop.permute.xlu0 %1940
  %1942 = vrot.lane.b32.xlu0 %v1893, 16
  %v1943 = vpop.permute.xlu0 %1942
  %1944 = vrot.lane.b32.xlu0 %v1896, 16
  %v1945 = vpop.permute.xlu0 %1944
  %vm1962 = vcmask 195712
  %1963 = vst.msk [vmem:[#allocation2] sm:$0xff] %vm1962, %v1915
  %1964 = vst.msk [vmem:[#allocation2 + $0x8] sm:$0xff] %vm1962, %v1917
  %1965 = vst.msk [vmem:[#allocation2 + $0x10] sm:$0xff] %vm1962, %v1919
  %1966 = vst.msk [vmem:[#allocation2 + $0x18] sm:$0xff] %vm1962, %v1921
  %1967 = vst.msk [vmem:[#allocation2 + $0x20] sm:$0xff] %vm1962, %v1923
  %1968 = vst.msk [vmem:[#allocation2 + $0x28] sm:$0xff] %vm1962, %v1925
  %1969 = vst.msk [vmem:[#allocation2 + $0x30] sm:$0xff] %vm1962, %v1927
  %1970 = vst.msk [vmem:[#allocation2 + $0x38] sm:$0xff] %vm1962, %v1929
  %1971 = vst.msk [vmem:[#allocation2 + $0x40] sm:$0xff] %vm1962, %v1931
  %1972 = vst.msk [vmem:[#allocation2 + $0x48] sm:$0xff] %vm1962, %v1933
  %1973 = vst.msk [vmem:[#allocation2 + $0x50] sm:$0xff] %vm1962, %v1935
  %1974 = vst.msk [vmem:[#allocation2 + $0x58] sm:$0xff] %vm1962, %v1937
  %1975 = vst.msk [vmem:[#allocation2 + $0x60] sm:$0xff] %vm1962, %v1939
  %1976 = vst.msk [vmem:[#allocation2 + $0x68] sm:$0xff] %vm1962, %v1941
  %1977 = vst.msk [vmem:[#allocation2 + $0x70] sm:$0xff] %vm1962, %v1943
  %1978 = vst.msk [vmem:[#allocation2 + $0x78] sm:$0xff] %vm1962, %v1945
  %1979 = vrot.lane.b32.xlu0 %v290, 104
  %v1980 = vpop.permute.xlu0 %1979
  %1981 = vrot.lane.b32.xlu0 %v291, 104
  %v1982 = vpop.permute.xlu0 %1981
  %1983 = vrot.lane.b32.xlu0 %v292, 104
  %v1984 = vpop.permute.xlu0 %1983
  %1985 = vrot.lane.b32.xlu0 %v293, 104
  %v1986 = vpop.permute.xlu0 %1985
  %1987 = vrot.lane.b32.xlu0 %v294, 104
  %v1988 = vpop.permute.xlu0 %1987
  %1989 = vrot.lane.b32.xlu0 %v295, 104
  %v1990 = vpop.permute.xlu0 %1989
  %1991 = vrot.lane.b32.xlu0 %v296, 104
  %v1992 = vpop.permute.xlu0 %1991
  %1993 = vrot.lane.b32.xlu0 %v297, 104
  %v1994 = vpop.permute.xlu0 %1993
  %1995 = vrot.lane.b32.xlu0 %v298, 104
  %v1996 = vpop.permute.xlu0 %1995
  %1997 = vrot.lane.b32.xlu0 %v299, 104
  %v1998 = vpop.permute.xlu0 %1997
  %1999 = vrot.lane.b32.xlu0 %v300, 104
  %v2000 = vpop.permute.xlu0 %1999
  %2001 = vrot.lane.b32.xlu0 %v301, 104
  %v2002 = vpop.permute.xlu0 %2001
  %2003 = vrot.lane.b32.xlu0 %v302, 104
  %v2004 = vpop.permute.xlu0 %2003
  %2005 = vrot.lane.b32.xlu0 %v303, 104
  %v2006 = vpop.permute.xlu0 %2005
  %2007 = vrot.lane.b32.xlu0 %v304, 104
  %v2008 = vpop.permute.xlu0 %2007
  %2009 = vrot.lane.b32.xlu0 %v305, 104
  %v2010 = vpop.permute.xlu0 %2009
  %2011 = vrot.lane.b32.xlu0 %v243, 72
  %v2012 = vpop.permute.xlu0 %2011
  %2013 = vrot.lane.b32.xlu0 %v246, 72
  %v2014 = vpop.permute.xlu0 %2013
  %2015 = vrot.lane.b32.xlu0 %v249, 72
  %v2016 = vpop.permute.xlu0 %2015
  %2017 = vrot.lane.b32.xlu0 %v252, 72
  %v2018 = vpop.permute.xlu0 %2017
  %2019 = vrot.lane.b32.xlu0 %v255, 72
  %v2020 = vpop.permute.xlu0 %2019
  %2021 = vrot.lane.b32.xlu0 %v258, 72
  %v2022 = vpop.permute.xlu0 %2021
  %2023 = vrot.lane.b32.xlu0 %v261, 72
  %v2024 = vpop.permute.xlu0 %2023
  %2025 = vrot.lane.b32.xlu0 %v264, 72
  %v2026 = vpop.permute.xlu0 %2025
  %2027 = vrot.lane.b32.xlu0 %v267, 72
  %v2028 = vpop.permute.xlu0 %2027
  %2029 = vrot.lane.b32.xlu0 %v270, 72
  %v2030 = vpop.permute.xlu0 %2029
  %2031 = vrot.lane.b32.xlu0 %v273, 72
  %v2032 = vpop.permute.xlu0 %2031
  %2033 = vrot.lane.b32.xlu0 %v276, 72
  %v2034 = vpop.permute.xlu0 %2033
  %2035 = vrot.lane.b32.xlu0 %v279, 72
  %v2036 = vpop.permute.xlu0 %2035
  %2037 = vrot.lane.b32.xlu0 %v282, 72
  %v2038 = vpop.permute.xlu0 %2037
  %2039 = vrot.lane.b32.xlu0 %v285, 72
  %v2040 = vpop.permute.xlu0 %2039
  %2041 = vrot.lane.b32.xlu0 %v288, 72
  %v2042 = vpop.permute.xlu0 %2041
  %v2043 = vsel %vm354, %v1980, 0
  %v2045 = vsel %vm354, %v1982, 0
  %v2047 = vsel %vm354, %v1984, 0
  %v2049 = vsel %vm354, %v1986, 0
  %v2051 = vsel %vm354, %v1988, 0
  %v2053 = vsel %vm354, %v1990, 0
  %v2055 = vsel %vm354, %v1992, 0
  %v2057 = vsel %vm354, %v1994, 0
  %v2059 = vsel %vm354, %v1996, 0
  %v2061 = vsel %vm354, %v1998, 0
  %v2063 = vsel %vm354, %v2000, 0
  %v2065 = vsel %vm354, %v2002, 0
  %v2067 = vsel %vm354, %v2004, 0
  %v2069 = vsel %vm354, %v2006, 0
  %v2071 = vsel %vm354, %v2008, 0
  %v2073 = vsel %vm354, %v2010, 0
  %v2075 = vsel %vm354, %v2012, 0
  %v2077 = vsel %vm354, %v2014, 0
  %v2079 = vsel %vm354, %v2016, 0
  %v2081 = vsel %vm354, %v2018, 0
  %v2083 = vsel %vm354, %v2020, 0
  %v2085 = vsel %vm354, %v2022, 0
  %v2087 = vsel %vm354, %v2024, 0
  %v2089 = vsel %vm354, %v2026, 0
  %v2091 = vsel %vm354, %v2028, 0
  %v2093 = vsel %vm354, %v2030, 0
  %v2095 = vsel %vm354, %v2032, 0
  %v2097 = vsel %vm354, %v2034, 0
  %v2099 = vsel %vm354, %v2036, 0
  %v2101 = vsel %vm354, %v2038, 0
  %v2103 = vsel %vm354, %v2040, 0
  %v2105 = vsel %vm354, %v2042, 0
  %2107 = vmatpush.xpose.msra.mxu0 %v2105
  %2108 = vmatpush.xpose.msra.mxu0 %v2103
  %2109 = vmatpush.xpose.msra.mxu0 %v2101
  %2110 = vmatpush.xpose.msra.mxu0 %v2099
  %2111 = vmatpush.xpose.msra.mxu0 %v2097
  %2112 = vmatpush.xpose.msra.mxu0 %v2095
  %2113 = vmatpush.xpose.msra.mxu0 %v2093
  %2114 = vmatpush.xpose.msra.mxu0 %v2091
  %2115 = vmatpush.xpose.msra.mxu0 %v2089
  %2116 = vmatpush.xpose.msra.mxu0 %v2087
  %2117 = vmatpush.xpose.msra.mxu0 %v2085
  %2118 = vmatpush.xpose.msra.mxu0 %v2083
  %2119 = vmatpush.xpose.msra.mxu0 %v2081
  %2120 = vmatpush.xpose.msra.mxu0 %v2079
  %2121 = vmatpush.xpose.msra.mxu0 %v2077
  %2122 = vmatpush.xpose.msra.mxu0 %v2075
  %2123 = vmatmul.f32.gmra.mxu0 %v2043
  %v2124 = vpop.f32.mrf.mxu0
  %v2125 = vadd.f32 %v138, %v2124
  %2126 = vmatmul.f32.gmra.mxu0 %v2045
  %v2127 = vpop.f32.mrf.mxu0
  %v2128 = vadd.f32 %v139, %v2127
  %2129 = vmatmul.f32.gmra.mxu0 %v2047
  %v2130 = vpop.f32.mrf.mxu0
  %v2131 = vadd.f32 %v140, %v2130
  %2132 = vmatmul.f32.gmra.mxu0 %v2049
  %v2133 = vpop.f32.mrf.mxu0
  %v2134 = vadd.f32 %v141, %v2133
  %2135 = vmatmul.f32.gmra.mxu0 %v2051
  %v2136 = vpop.f32.mrf.mxu0
  %v2137 = vadd.f32 %v142, %v2136
  %2138 = vmatmul.f32.gmra.mxu0 %v2053
  %v2139 = vpop.f32.mrf.mxu0
  %v2140 = vadd.f32 %v143, %v2139
  %2141 = vmatmul.f32.gmra.mxu0 %v2055
  %v2142 = vpop.f32.mrf.mxu0
  %v2143 = vadd.f32 %v144, %v2142
  %2144 = vmatmul.f32.gmra.mxu0 %v2057
  %v2145 = vpop.f32.mrf.mxu0
  %v2146 = vadd.f32 %v145, %v2145
  %2147 = vmatmul.f32.gmra.mxu0 %v2059
  %v2148 = vpop.f32.mrf.mxu0
  %v2149 = vadd.f32 %v146, %v2148
  %2150 = vmatmul.f32.gmra.mxu0 %v2061
  %v2151 = vpop.f32.mrf.mxu0
  %v2152 = vadd.f32 %v147, %v2151
  %2153 = vmatmul.f32.gmra.mxu0 %v2063
  %v2154 = vpop.f32.mrf.mxu0
  %v2155 = vadd.f32 %v148, %v2154
  %2156 = vmatmul.f32.gmra.mxu0 %v2065
  %v2157 = vpop.f32.mrf.mxu0
  %v2158 = vadd.f32 %v149, %v2157
  %2159 = vmatmul.f32.gmra.mxu0 %v2067
  %v2160 = vpop.f32.mrf.mxu0
  %v2161 = vadd.f32 %v150, %v2160
  %2162 = vmatmul.f32.gmra.mxu0 %v2069
  %v2163 = vpop.f32.mrf.mxu0
  %v2164 = vadd.f32 %v151, %v2163
  %2165 = vmatmul.f32.gmra.mxu0 %v2071
  %v2166 = vpop.f32.mrf.mxu0
  %v2167 = vadd.f32 %v152, %v2166
  %2168 = vmatmul.f32.gmra.mxu0 %v2073
  %v2169 = vpop.f32.mrf.mxu0
  %v2170 = vadd.f32 %v153, %v2169
  %2171 = vdwg.mxu0
  %2172 = vmax.xlane.f32.xlu0 %v2125
  %v2173 = vpop.xlane.xlu0 %2172
  %2174 = vmax.xlane.f32.xlu0 %v2128
  %v2175 = vpop.xlane.xlu0 %2174
  %2176 = vmax.xlane.f32.xlu0 %v2131
  %v2177 = vpop.xlane.xlu0 %2176
  %2178 = vmax.xlane.f32.xlu0 %v2134
  %v2179 = vpop.xlane.xlu0 %2178
  %2180 = vmax.xlane.f32.xlu0 %v2137
  %v2181 = vpop.xlane.xlu0 %2180
  %2182 = vmax.xlane.f32.xlu0 %v2140
  %v2183 = vpop.xlane.xlu0 %2182
  %2184 = vmax.xlane.f32.xlu0 %v2143
  %v2185 = vpop.xlane.xlu0 %2184
  %2186 = vmax.xlane.f32.xlu0 %v2146
  %v2187 = vpop.xlane.xlu0 %2186
  %2188 = vmax.xlane.f32.xlu0 %v2149
  %v2189 = vpop.xlane.xlu0 %2188
  %2190 = vmax.xlane.f32.xlu0 %v2152
  %v2191 = vpop.xlane.xlu0 %2190
  %2192 = vmax.xlane.f32.xlu0 %v2155
  %v2193 = vpop.xlane.xlu0 %2192
  %2194 = vmax.xlane.f32.xlu0 %v2158
  %v2195 = vpop.xlane.xlu0 %2194
  %2196 = vmax.xlane.f32.xlu0 %v2161
  %v2197 = vpop.xlane.xlu0 %2196
  %2198 = vmax.xlane.f32.xlu0 %v2164
  %v2199 = vpop.xlane.xlu0 %2198
  %2200 = vmax.xlane.f32.xlu0 %v2167
  %v2201 = vpop.xlane.xlu0 %2200
  %2202 = vmax.xlane.f32.xlu0 %v2170
  %v2203 = vpop.xlane.xlu0 %2202
  %v2204 = vsub.f32 %v2125, %v2173
  %v2205 = vsub.f32 %v2128, %v2175
  %v2206 = vsub.f32 %v2131, %v2177
  %v2207 = vsub.f32 %v2134, %v2179
  %v2208 = vsub.f32 %v2137, %v2181
  %v2209 = vsub.f32 %v2140, %v2183
  %v2210 = vsub.f32 %v2143, %v2185
  %v2211 = vsub.f32 %v2146, %v2187
  %v2212 = vsub.f32 %v2149, %v2189
  %v2213 = vsub.f32 %v2152, %v2191
  %v2214 = vsub.f32 %v2155, %v2193
  %v2215 = vsub.f32 %v2158, %v2195
  %v2216 = vsub.f32 %v2161, %v2197
  %v2217 = vsub.f32 %v2164, %v2199
  %v2218 = vsub.f32 %v2167, %v2201
  %v2219 = vsub.f32 %v2170, %v2203
  %v2220 = vmul.f32 %v2204, 1.442695
  %v2221 = vpow.pop %v2220
  %v2222 = vmul.f32 %v2205, 1.442695
  %v2223 = vpow.pop %v2222
  %v2224 = vmul.f32 %v2206, 1.442695
  %v2225 = vpow.pop %v2224
  %v2226 = vmul.f32 %v2207, 1.442695
  %v2227 = vpow.pop %v2226
  %v2228 = vmul.f32 %v2208, 1.442695
  %v2229 = vpow.pop %v2228
  %v2230 = vmul.f32 %v2209, 1.442695
  %v2231 = vpow.pop %v2230
  %v2232 = vmul.f32 %v2210, 1.442695
  %v2233 = vpow.pop %v2232
  %v2234 = vmul.f32 %v2211, 1.442695
  %v2235 = vpow.pop %v2234
  %v2236 = vmul.f32 %v2212, 1.442695
  %v2237 = vpow.pop %v2236
  %v2238 = vmul.f32 %v2213, 1.442695
  %v2239 = vpow.pop %v2238
  %v2240 = vmul.f32 %v2214, 1.442695
  %v2241 = vpow.pop %v2240
  %v2242 = vmul.f32 %v2215, 1.442695
  %v2243 = vpow.pop %v2242
  %v2244 = vmul.f32 %v2216, 1.442695
  %v2245 = vpow.pop %v2244
  %v2246 = vmul.f32 %v2217, 1.442695
  %v2247 = vpow.pop %v2246
  %v2248 = vmul.f32 %v2218, 1.442695
  %v2249 = vpow.pop %v2248
  %v2250 = vmul.f32 %v2219, 1.442695
  %v2251 = vpow.pop %v2250
  %v2252 = vmul.f32 %v2221, %v106
  %v2253 = vmul.f32 %v2223, %v107
  %v2254 = vmul.f32 %v2225, %v108
  %v2255 = vmul.f32 %v2227, %v109
  %v2256 = vmul.f32 %v2229, %v110
  %v2257 = vmul.f32 %v2231, %v111
  %v2258 = vmul.f32 %v2233, %v112
  %v2259 = vmul.f32 %v2235, %v113
  %v2260 = vmul.f32 %v2237, %v114
  %v2261 = vmul.f32 %v2239, %v115
  %v2262 = vmul.f32 %v2241, %v116
  %v2263 = vmul.f32 %v2243, %v117
  %v2264 = vmul.f32 %v2245, %v118
  %v2265 = vmul.f32 %v2247, %v119
  %v2266 = vmul.f32 %v2249, %v120
  %v2267 = vmul.f32 %v2251, %v121
  %2268 = vadd.xlane.f32.xlu0 %v2252
  %v2269 = vpop.xlane.xlu0 %2268
  %2270 = vadd.xlane.f32.xlu0 %v2253
  %v2271 = vpop.xlane.xlu0 %2270
  %2272 = vadd.xlane.f32.xlu0 %v2254
  %v2273 = vpop.xlane.xlu0 %2272
  %2274 = vadd.xlane.f32.xlu0 %v2255
  %v2275 = vpop.xlane.xlu0 %2274
  %2276 = vadd.xlane.f32.xlu0 %v2256
  %v2277 = vpop.xlane.xlu0 %2276
  %2278 = vadd.xlane.f32.xlu0 %v2257
  %v2279 = vpop.xlane.xlu0 %2278
  %2280 = vadd.xlane.f32.xlu0 %v2258
  %v2281 = vpop.xlane.xlu0 %2280
  %2282 = vadd.xlane.f32.xlu0 %v2259
  %v2283 = vpop.xlane.xlu0 %2282
  %2284 = vadd.xlane.f32.xlu0 %v2260
  %v2285 = vpop.xlane.xlu0 %2284
  %2286 = vadd.xlane.f32.xlu0 %v2261
  %v2287 = vpop.xlane.xlu0 %2286
  %2288 = vadd.xlane.f32.xlu0 %v2262
  %v2289 = vpop.xlane.xlu0 %2288
  %2290 = vadd.xlane.f32.xlu0 %v2263
  %v2291 = vpop.xlane.xlu0 %2290
  %2292 = vadd.xlane.f32.xlu0 %v2264
  %v2293 = vpop.xlane.xlu0 %2292
  %2294 = vadd.xlane.f32.xlu0 %v2265
  %v2295 = vpop.xlane.xlu0 %2294
  %2296 = vadd.xlane.f32.xlu0 %v2266
  %v2297 = vpop.xlane.xlu0 %2296
  %2298 = vadd.xlane.f32.xlu0 %v2267
  %v2299 = vpop.xlane.xlu0 %2298
  %vm2300 = vcmp.gt.f32.partialorder %v2269, 0.0
  %vm2301 = vcmp.gt.f32.partialorder %v2271, 0.0
  %vm2302 = vcmp.gt.f32.partialorder %v2273, 0.0
  %vm2303 = vcmp.gt.f32.partialorder %v2275, 0.0
  %vm2304 = vcmp.gt.f32.partialorder %v2277, 0.0
  %vm2305 = vcmp.gt.f32.partialorder %v2279, 0.0
  %vm2306 = vcmp.gt.f32.partialorder %v2281, 0.0
  %vm2307 = vcmp.gt.f32.partialorder %v2283, 0.0
  %vm2308 = vcmp.gt.f32.partialorder %v2285, 0.0
  %vm2309 = vcmp.gt.f32.partialorder %v2287, 0.0
  %vm2310 = vcmp.gt.f32.partialorder %v2289, 0.0
  %vm2311 = vcmp.gt.f32.partialorder %v2291, 0.0
  %vm2312 = vcmp.gt.f32.partialorder %v2293, 0.0
  %vm2313 = vcmp.gt.f32.partialorder %v2295, 0.0
  %vm2314 = vcmp.gt.f32.partialorder %v2297, 0.0
  %vm2315 = vcmp.gt.f32.partialorder %v2299, 0.0
  %v2316 = vsel %vm2300, %v2269, 1.0
  %v2317 = vsel %vm2301, %v2271, 1.0
  %v2318 = vsel %vm2302, %v2273, 1.0
  %v2319 = vsel %vm2303, %v2275, 1.0
  %v2320 = vsel %vm2304, %v2277, 1.0
  %v2321 = vsel %vm2305, %v2279, 1.0
  %v2322 = vsel %vm2306, %v2281, 1.0
  %v2323 = vsel %vm2307, %v2283, 1.0
  %v2324 = vsel %vm2308, %v2285, 1.0
  %v2325 = vsel %vm2309, %v2287, 1.0
  %v2326 = vsel %vm2310, %v2289, 1.0
  %v2327 = vsel %vm2311, %v2291, 1.0
  %v2328 = vsel %vm2312, %v2293, 1.0
  %v2329 = vsel %vm2313, %v2295, 1.0
  %v2330 = vsel %vm2314, %v2297, 1.0
  %v2331 = vsel %vm2315, %v2299, 1.0
  %v2332 = vrcp.pop %v2316
  %v2333 = vrcp.pop %v2317
  %v2334 = vrcp.pop %v2318
  %v2335 = vrcp.pop %v2319
  %v2336 = vrcp.pop %v2320
  %v2337 = vrcp.pop %v2321
  %v2338 = vrcp.pop %v2322
  %v2339 = vrcp.pop %v2323
  %v2340 = vrcp.pop %v2324
  %v2341 = vrcp.pop %v2325
  %v2342 = vrcp.pop %v2326
  %v2343 = vrcp.pop %v2327
  %v2344 = vrcp.pop %v2328
  %v2345 = vrcp.pop %v2329
  %v2346 = vrcp.pop %v2330
  %v2347 = vrcp.pop %v2331
  %v2348 = vmul.f32 %v2252, %v2332
  %v2349 = vmul.f32 %v2253, %v2333
  %v2350 = vmul.f32 %v2254, %v2334
  %v2351 = vmul.f32 %v2255, %v2335
  %v2352 = vmul.f32 %v2256, %v2336
  %v2353 = vmul.f32 %v2257, %v2337
  %v2354 = vmul.f32 %v2258, %v2338
  %v2355 = vmul.f32 %v2259, %v2339
  %v2356 = vmul.f32 %v2260, %v2340
  %v2357 = vmul.f32 %v2261, %v2341
  %v2358 = vmul.f32 %v2262, %v2342
  %v2359 = vmul.f32 %v2263, %v2343
  %v2360 = vmul.f32 %v2264, %v2344
  %v2361 = vmul.f32 %v2265, %v2345
  %v2362 = vmul.f32 %v2266, %v2346
  %v2363 = vmul.f32 %v2267, %v2347
  %2364 = vrot.lane.b32.xlu0 %v243, 40
  %v2365 = vpop.permute.xlu0 %2364
  %2366 = vrot.lane.b32.xlu0 %v246, 40
  %v2367 = vpop.permute.xlu0 %2366
  %2368 = vrot.lane.b32.xlu0 %v249, 40
  %v2369 = vpop.permute.xlu0 %2368
  %2370 = vrot.lane.b32.xlu0 %v252, 40
  %v2371 = vpop.permute.xlu0 %2370
  %2372 = vrot.lane.b32.xlu0 %v255, 40
  %v2373 = vpop.permute.xlu0 %2372
  %2374 = vrot.lane.b32.xlu0 %v258, 40
  %v2375 = vpop.permute.xlu0 %2374
  %2376 = vrot.lane.b32.xlu0 %v261, 40
  %v2377 = vpop.permute.xlu0 %2376
  %2378 = vrot.lane.b32.xlu0 %v264, 40
  %v2379 = vpop.permute.xlu0 %2378
  %2380 = vrot.lane.b32.xlu0 %v267, 40
  %v2381 = vpop.permute.xlu0 %2380
  %2382 = vrot.lane.b32.xlu0 %v270, 40
  %v2383 = vpop.permute.xlu0 %2382
  %2384 = vrot.lane.b32.xlu0 %v273, 40
  %v2385 = vpop.permute.xlu0 %2384
  %2386 = vrot.lane.b32.xlu0 %v276, 40
  %v2387 = vpop.permute.xlu0 %2386
  %2388 = vrot.lane.b32.xlu0 %v279, 40
  %v2389 = vpop.permute.xlu0 %2388
  %2390 = vrot.lane.b32.xlu0 %v282, 40
  %v2391 = vpop.permute.xlu0 %2390
  %2392 = vrot.lane.b32.xlu0 %v285, 40
  %v2393 = vpop.permute.xlu0 %2392
  %2394 = vrot.lane.b32.xlu0 %v288, 40
  %v2395 = vpop.permute.xlu0 %2394
  %2412 = vmatpush.msra.mxu0 %v2395
  %2413 = vmatpush.msra.mxu0 %v2393
  %2414 = vmatpush.msra.mxu0 %v2391
  %2415 = vmatpush.msra.mxu0 %v2389
  %2416 = vmatpush.msra.mxu0 %v2387
  %2417 = vmatpush.msra.mxu0 %v2385
  %2418 = vmatpush.msra.mxu0 %v2383
  %2419 = vmatpush.msra.mxu0 %v2381
  %2420 = vmatpush.msra.mxu0 %v2379
  %2421 = vmatpush.msra.mxu0 %v2377
  %2422 = vmatpush.msra.mxu0 %v2375
  %2423 = vmatpush.msra.mxu0 %v2373
  %2424 = vmatpush.msra.mxu0 %v2371
  %2425 = vmatpush.msra.mxu0 %v2369
  %2426 = vmatpush.msra.mxu0 %v2367
  %2427 = vmatpush.msra.mxu0 %v2365
  %2428 = vmatmul.f32.gmra.mxu0 %v2348
  %v2429 = vpop.f32.mrf.mxu0
  %v2430 = vadd.f32 0.0, %v2429
  %2431 = vmatmul.f32.gmra.mxu0 %v2349
  %v2432 = vpop.f32.mrf.mxu0
  %v2433 = vadd.f32 0.0, %v2432
  %2434 = vmatmul.f32.gmra.mxu0 %v2350
  %v2435 = vpop.f32.mrf.mxu0
  %v2436 = vadd.f32 0.0, %v2435
  %2437 = vmatmul.f32.gmra.mxu0 %v2351
  %v2438 = vpop.f32.mrf.mxu0
  %v2439 = vadd.f32 0.0, %v2438
  %2440 = vmatmul.f32.gmra.mxu0 %v2352
  %v2441 = vpop.f32.mrf.mxu0
  %v2442 = vadd.f32 0.0, %v2441
  %2443 = vmatmul.f32.gmra.mxu0 %v2353
  %v2444 = vpop.f32.mrf.mxu0
  %v2445 = vadd.f32 0.0, %v2444
  %2446 = vmatmul.f32.gmra.mxu0 %v2354
  %v2447 = vpop.f32.mrf.mxu0
  %v2448 = vadd.f32 0.0, %v2447
  %2449 = vmatmul.f32.gmra.mxu0 %v2355
  %v2450 = vpop.f32.mrf.mxu0
  %v2451 = vadd.f32 0.0, %v2450
  %2452 = vmatmul.f32.gmra.mxu0 %v2356
  %v2453 = vpop.f32.mrf.mxu0
  %v2454 = vadd.f32 0.0, %v2453
  %2455 = vmatmul.f32.gmra.mxu0 %v2357
  %v2456 = vpop.f32.mrf.mxu0
  %v2457 = vadd.f32 0.0, %v2456
  %2458 = vmatmul.f32.gmra.mxu0 %v2358
  %v2459 = vpop.f32.mrf.mxu0
  %v2460 = vadd.f32 0.0, %v2459
  %2461 = vmatmul.f32.gmra.mxu0 %v2359
  %v2462 = vpop.f32.mrf.mxu0
  %v2463 = vadd.f32 0.0, %v2462
  %2464 = vmatmul.f32.gmra.mxu0 %v2360
  %v2465 = vpop.f32.mrf.mxu0
  %v2466 = vadd.f32 0.0, %v2465
  %2467 = vmatmul.f32.gmra.mxu0 %v2361
  %v2468 = vpop.f32.mrf.mxu0
  %v2469 = vadd.f32 0.0, %v2468
  %2470 = vmatmul.f32.gmra.mxu0 %v2362
  %v2471 = vpop.f32.mrf.mxu0
  %v2472 = vadd.f32 0.0, %v2471
  %2473 = vmatmul.f32.gmra.mxu0 %v2363
  %v2474 = vpop.f32.mrf.mxu0
  %v2475 = vadd.f32 0.0, %v2474
  %2476 = vdwg.mxu0
  %2493 = vrot.lane.b32.xlu0 %v2430, 24
  %v2494 = vpop.permute.xlu0 %2493
  %2495 = vrot.lane.b32.xlu0 %v2433, 24
  %v2496 = vpop.permute.xlu0 %2495
  %2497 = vrot.lane.b32.xlu0 %v2436, 24
  %v2498 = vpop.permute.xlu0 %2497
  %2499 = vrot.lane.b32.xlu0 %v2439, 24
  %v2500 = vpop.permute.xlu0 %2499
  %2501 = vrot.lane.b32.xlu0 %v2442, 24
  %v2502 = vpop.permute.xlu0 %2501
  %2503 = vrot.lane.b32.xlu0 %v2445, 24
  %v2504 = vpop.permute.xlu0 %2503
  %2505 = vrot.lane.b32.xlu0 %v2448, 24
  %v2506 = vpop.permute.xlu0 %2505
  %2507 = vrot.lane.b32.xlu0 %v2451, 24
  %v2508 = vpop.permute.xlu0 %2507
  %2509 = vrot.lane.b32.xlu0 %v2454, 24
  %v2510 = vpop.permute.xlu0 %2509
  %2511 = vrot.lane.b32.xlu0 %v2457, 24
  %v2512 = vpop.permute.xlu0 %2511
  %2513 = vrot.lane.b32.xlu0 %v2460, 24
  %v2514 = vpop.permute.xlu0 %2513
  %2515 = vrot.lane.b32.xlu0 %v2463, 24
  %v2516 = vpop.permute.xlu0 %2515
  %2517 = vrot.lane.b32.xlu0 %v2466, 24
  %v2518 = vpop.permute.xlu0 %2517
  %2519 = vrot.lane.b32.xlu0 %v2469, 24
  %v2520 = vpop.permute.xlu0 %2519
  %2521 = vrot.lane.b32.xlu0 %v2472, 24
  %v2522 = vpop.permute.xlu0 %2521
  %2523 = vrot.lane.b32.xlu0 %v2475, 24
  %v2524 = vpop.permute.xlu0 %2523
  %vm2541 = vcmask 261312
  %2542 = vst.msk [vmem:[#allocation2] sm:$0xff] %vm2541, %v2494
  %2543 = vst.msk [vmem:[#allocation2 + $0x8] sm:$0xff] %vm2541, %v2496
  %2544 = vst.msk [vmem:[#allocation2 + $0x10] sm:$0xff] %vm2541, %v2498
  %2545 = vst.msk [vmem:[#allocation2 + $0x18] sm:$0xff] %vm2541, %v2500
  %2546 = vst.msk [vmem:[#allocation2 + $0x20] sm:$0xff] %vm2541, %v2502
  %2547 = vst.msk [vmem:[#allocation2 + $0x28] sm:$0xff] %vm2541, %v2504
  %2548 = vst.msk [vmem:[#allocation2 + $0x30] sm:$0xff] %vm2541, %v2506
  %2549 = vst.msk [vmem:[#allocation2 + $0x38] sm:$0xff] %vm2541, %v2508
  %2550 = vst.msk [vmem:[#allocation2 + $0x40] sm:$0xff] %vm2541, %v2510
  %2551 = vst.msk [vmem:[#allocation2 + $0x48] sm:$0xff] %vm2541, %v2512
  %2552 = vst.msk [vmem:[#allocation2 + $0x50] sm:$0xff] %vm2541, %v2514
  %2553 = vst.msk [vmem:[#allocation2 + $0x58] sm:$0xff] %vm2541, %v2516
  %2554 = vst.msk [vmem:[#allocation2 + $0x60] sm:$0xff] %vm2541, %v2518
  %2555 = vst.msk [vmem:[#allocation2 + $0x68] sm:$0xff] %vm2541, %v2520
  %2556 = vst.msk [vmem:[#allocation2 + $0x70] sm:$0xff] %vm2541, %v2522
  %2557 = vst.msk [vmem:[#allocation2 + $0x78] sm:$0xff] %vm2541, %v2524
  %v2558 = vld [vmem:[#allocation2] sm:$0xff]
  %v2559 = vld [vmem:[#allocation2 + $0x8] sm:$0xff]
  %v2560 = vld [vmem:[#allocation2 + $0x10] sm:$0xff]
  %v2561 = vld [vmem:[#allocation2 + $0x18] sm:$0xff]
  %v2562 = vld [vmem:[#allocation2 + $0x20] sm:$0xff]
  %v2563 = vld [vmem:[#allocation2 + $0x28] sm:$0xff]
  %v2564 = vld [vmem:[#allocation2 + $0x30] sm:$0xff]
  %v2565 = vld [vmem:[#allocation2 + $0x38] sm:$0xff]
  %v2566 = vld [vmem:[#allocation2 + $0x40] sm:$0xff]
  %v2567 = vld [vmem:[#allocation2 + $0x48] sm:$0xff]
  %v2568 = vld [vmem:[#allocation2 + $0x50] sm:$0xff]
  %v2569 = vld [vmem:[#allocation2 + $0x58] sm:$0xff]
  %v2570 = vld [vmem:[#allocation2 + $0x60] sm:$0xff]
  %v2571 = vld [vmem:[#allocation2 + $0x68] sm:$0xff]
  %v2572 = vld [vmem:[#allocation2 + $0x70] sm:$0xff]
  %v2573 = vld [vmem:[#allocation2 + $0x78] sm:$0xff]
  %2574 = vrot.lane.b32.xlu0 %v243, 32
  %v2575 = vpop.permute.xlu0 %2574
  %2576 = vrot.lane.b32.xlu0 %v246, 32
  %v2577 = vpop.permute.xlu0 %2576
  %2578 = vrot.lane.b32.xlu0 %v249, 32
  %v2579 = vpop.permute.xlu0 %2578
  %2580 = vrot.lane.b32.xlu0 %v252, 32
  %v2581 = vpop.permute.xlu0 %2580
  %2582 = vrot.lane.b32.xlu0 %v255, 32
  %v2583 = vpop.permute.xlu0 %2582
  %2584 = vrot.lane.b32.xlu0 %v258, 32
  %v2585 = vpop.permute.xlu0 %2584
  %2586 = vrot.lane.b32.xlu0 %v261, 32
  %v2587 = vpop.permute.xlu0 %2586
  %2588 = vrot.lane.b32.xlu0 %v264, 32
  %v2589 = vpop.permute.xlu0 %2588
  %2590 = vrot.lane.b32.xlu0 %v267, 32
  %v2591 = vpop.permute.xlu0 %2590
  %2592 = vrot.lane.b32.xlu0 %v270, 32
  %v2593 = vpop.permute.xlu0 %2592
  %2594 = vrot.lane.b32.xlu0 %v273, 32
  %v2595 = vpop.permute.xlu0 %2594
  %2596 = vrot.lane.b32.xlu0 %v276, 32
  %v2597 = vpop.permute.xlu0 %2596
  %2598 = vrot.lane.b32.xlu0 %v279, 32
  %v2599 = vpop.permute.xlu0 %2598
  %2600 = vrot.lane.b32.xlu0 %v282, 32
  %v2601 = vpop.permute.xlu0 %2600
  %2602 = vrot.lane.b32.xlu0 %v285, 32
  %v2603 = vpop.permute.xlu0 %2602
  %2604 = vrot.lane.b32.xlu0 %v288, 32
  %v2605 = vpop.permute.xlu0 %2604
  %v2622 = vadd.f32 %v2558, %v2575
  %v2623 = vadd.f32 %v2559, %v2577
  %v2624 = vadd.f32 %v2560, %v2579
  %v2625 = vadd.f32 %v2561, %v2581
  %v2626 = vadd.f32 %v2562, %v2583
  %v2627 = vadd.f32 %v2563, %v2585
  %v2628 = vadd.f32 %v2564, %v2587
  %v2629 = vadd.f32 %v2565, %v2589
  %v2630 = vadd.f32 %v2566, %v2591
  %v2631 = vadd.f32 %v2567, %v2593
  %v2632 = vadd.f32 %v2568, %v2595
  %v2633 = vadd.f32 %v2569, %v2597
  %v2634 = vadd.f32 %v2570, %v2599
  %v2635 = vadd.f32 %v2571, %v2601
  %v2636 = vadd.f32 %v2572, %v2603
  %v2637 = vadd.f32 %v2573, %v2605
  %v2638 = vmax.f32 %v2622, 0.0
  %v2639 = vmax.f32 %v2623, 0.0
  %v2640 = vmax.f32 %v2624, 0.0
  %v2641 = vmax.f32 %v2625, 0.0
  %v2642 = vmax.f32 %v2626, 0.0
  %v2643 = vmax.f32 %v2627, 0.0
  %v2644 = vmax.f32 %v2628, 0.0
  %v2645 = vmax.f32 %v2629, 0.0
  %v2646 = vmax.f32 %v2630, 0.0
  %v2647 = vmax.f32 %v2631, 0.0
  %v2648 = vmax.f32 %v2632, 0.0
  %v2649 = vmax.f32 %v2633, 0.0
  %v2650 = vmax.f32 %v2634, 0.0
  %v2651 = vmax.f32 %v2635, 0.0
  %v2652 = vmax.f32 %v2636, 0.0
  %v2653 = vmax.f32 %v2637, 0.0
  %v2654 = vld [vmem:[%s5] sm:$0xff]
  %v2655 = vld [vmem:[%s5 + $0x8] sm:$0xff]
  %v2656 = vld [vmem:[%s5 + $0x10] sm:$0xff]
  %v2657 = vld [vmem:[%s5 + $0x18] sm:$0xff]
  %v2658 = vld [vmem:[%s6] sm:$0x1]
  %v2660 = vperm.slane %v2658, 0
  %vm2662 = vcmask 261120
  %v2664 = vsel %vm2662, %v2638, 0
  %v2667 = vsel %vm2662, %v2639, 0
  %v2670 = vsel %vm2662, %v2640, 0
  %v2673 = vsel %vm2662, %v2641, 0
  %v2676 = vsel %vm2662, %v2642, 0
  %v2679 = vsel %vm2662, %v2643, 0
  %v2682 = vsel %vm2662, %v2644, 0
  %v2685 = vsel %vm2662, %v2645, 0
  %v2688 = vsel %vm2662, %v2646, 0
  %v2691 = vsel %vm2662, %v2647, 0
  %v2694 = vsel %vm2662, %v2648, 0
  %v2697 = vsel %vm2662, %v2649, 0
  %v2700 = vsel %vm2662, %v2650, 0
  %v2703 = vsel %vm2662, %v2651, 0
  %v2706 = vsel %vm2662, %v2652, 0
  %v2709 = vsel %vm2662, %v2653, 0
  %2711 = vmatpush.msra.mxu0 0.0
  %2712 = vmatpush.msra.mxu0 0.0
  %2713 = vmatpush.msra.mxu0 0.0
  %2714 = vmatpush.msra.mxu0 0.0
  %2715 = vmatpush.msra.mxu0 0.0
  %2716 = vmatpush.msra.mxu0 0.0
  %2717 = vmatpush.msra.mxu0 0.0
  %2718 = vmatpush.msra.mxu0 0.0
  %2719 = vmatpush.msra.mxu0 0.0
  %2720 = vmatpush.msra.mxu0 0.0
  %2721 = vmatpush.msra.mxu0 0.0
  %2722 = vmatpush.msra.mxu0 0.0
  %2723 = vmatpush.msra.mxu0 %v2657
  %2724 = vmatpush.msra.mxu0 %v2656
  %2725 = vmatpush.msra.mxu0 %v2655
  %2726 = vmatpush.msra.mxu0 %v2654
  %2727 = vmatmul.f32.gmra.mxu0 %v2664
  %v2728 = vpop.f32.mrf.mxu0
  %v2729 = vadd.f32 %v2660, %v2728
  %2730 = vmatmul.f32.gmra.mxu0 %v2667
  %v2731 = vpop.f32.mrf.mxu0
  %v2732 = vadd.f32 %v2660, %v2731
  %2733 = vmatmul.f32.gmra.mxu0 %v2670
  %v2734 = vpop.f32.mrf.mxu0
  %v2735 = vadd.f32 %v2660, %v2734
  %2736 = vmatmul.f32.gmra.mxu0 %v2673
  %v2737 = vpop.f32.mrf.mxu0
  %v2738 = vadd.f32 %v2660, %v2737
  %2739 = vmatmul.f32.gmra.mxu0 %v2676
  %v2740 = vpop.f32.mrf.mxu0
  %v2741 = vadd.f32 %v2660, %v2740
  %2742 = vmatmul.f32.gmra.mxu0 %v2679
  %v2743 = vpop.f32.mrf.mxu0
  %v2744 = vadd.f32 %v2660, %v2743
  %2745 = vmatmul.f32.gmra.mxu0 %v2682
  %v2746 = vpop.f32.mrf.mxu0
  %v2747 = vadd.f32 %v2660, %v2746
  %2748 = vmatmul.f32.gmra.mxu0 %v2685
  %v2749 = vpop.f32.mrf.mxu0
  %v2750 = vadd.f32 %v2660, %v2749
  %2751 = vmatmul.f32.gmra.mxu0 %v2688
  %v2752 = vpop.f32.mrf.mxu0
  %v2753 = vadd.f32 %v2660, %v2752
  %2754 = vmatmul.f32.gmra.mxu0 %v2691
  %v2755 = vpop.f32.mrf.mxu0
  %v2756 = vadd.f32 %v2660, %v2755
  %2757 = vmatmul.f32.gmra.mxu0 %v2694
  %v2758 = vpop.f32.mrf.mxu0
  %v2759 = vadd.f32 %v2660, %v2758
  %2760 = vmatmul.f32.gmra.mxu0 %v2697
  %v2761 = vpop.f32.mrf.mxu0
  %v2762 = vadd.f32 %v2660, %v2761
  %2763 = vmatmul.f32.gmra.mxu0 %v2700
  %v2764 = vpop.f32.mrf.mxu0
  %v2765 = vadd.f32 %v2660, %v2764
  %2766 = vmatmul.f32.gmra.mxu0 %v2703
  %v2767 = vpop.f32.mrf.mxu0
  %v2768 = vadd.f32 %v2660, %v2767
  %2769 = vmatmul.f32.gmra.mxu0 %v2706
  %v2770 = vpop.f32.mrf.mxu0
  %v2771 = vadd.f32 %v2660, %v2770
  %2772 = vmatmul.f32.gmra.mxu0 %v2709
  %v2773 = vpop.f32.mrf.mxu0
  %v2774 = vadd.f32 %v2660, %v2773
  %2775 = vdwg.mxu0
  %v2776 = vmul.f32 %v2729, 0.35355338
  %v2777 = vmul.f32 %v2732, 0.35355338
  %v2778 = vmul.f32 %v2735, 0.35355338
  %v2779 = vmul.f32 %v2738, 0.35355338
  %v2780 = vmul.f32 %v2741, 0.35355338
  %v2781 = vmul.f32 %v2744, 0.35355338
  %v2782 = vmul.f32 %v2747, 0.35355338
  %v2783 = vmul.f32 %v2750, 0.35355338
  %v2784 = vmul.f32 %v2753, 0.35355338
  %v2785 = vmul.f32 %v2756, 0.35355338
  %v2786 = vmul.f32 %v2759, 0.35355338
  %v2787 = vmul.f32 %v2762, 0.35355338
  %v2788 = vmul.f32 %v2765, 0.35355338
  %v2789 = vmul.f32 %v2768, 0.35355338
  %v2790 = vmul.f32 %v2771, 0.35355338
  %v2791 = vmul.f32 %v2774, 0.35355338
  %2808 = vrot.lane.b32.xlu0 %v2729, 96
  %v2809 = vpop.permute.xlu0 %2808
  %2810 = vrot.lane.b32.xlu0 %v2732, 96
  %v2811 = vpop.permute.xlu0 %2810
  %2812 = vrot.lane.b32.xlu0 %v2735, 96
  %v2813 = vpop.permute.xlu0 %2812
  %2814 = vrot.lane.b32.xlu0 %v2738, 96
  %v2815 = vpop.permute.xlu0 %2814
  %2816 = vrot.lane.b32.xlu0 %v2741, 96
  %v2817 = vpop.permute.xlu0 %2816
  %2818 = vrot.lane.b32.xlu0 %v2744, 96
  %v2819 = vpop.permute.xlu0 %2818
  %2820 = vrot.lane.b32.xlu0 %v2747, 96
  %v2821 = vpop.permute.xlu0 %2820
  %2822 = vrot.lane.b32.xlu0 %v2750, 96
  %v2823 = vpop.permute.xlu0 %2822
  %2824 = vrot.lane.b32.xlu0 %v2753, 96
  %v2825 = vpop.permute.xlu0 %2824
  %2826 = vrot.lane.b32.xlu0 %v2756, 96
  %v2827 = vpop.permute.xlu0 %2826
  %2828 = vrot.lane.b32.xlu0 %v2759, 96
  %v2829 = vpop.permute.xlu0 %2828
  %2830 = vrot.lane.b32.xlu0 %v2762, 96
  %v2831 = vpop.permute.xlu0 %2830
  %2832 = vrot.lane.b32.xlu0 %v2765, 96
  %v2833 = vpop.permute.xlu0 %2832
  %2834 = vrot.lane.b32.xlu0 %v2768, 96
  %v2835 = vpop.permute.xlu0 %2834
  %2836 = vrot.lane.b32.xlu0 %v2771, 96
  %v2837 = vpop.permute.xlu0 %2836
  %2838 = vrot.lane.b32.xlu0 %v2774, 96
  %v2839 = vpop.permute.xlu0 %2838
  %v2841 = vsel %vm354, %v2776, 0
  %v2844 = vsel %vm354, %v2777, 0
  %v2847 = vsel %vm354, %v2778, 0
  %v2850 = vsel %vm354, %v2779, 0
  %v2853 = vsel %vm354, %v2780, 0
  %v2856 = vsel %vm354, %v2781, 0
  %v2859 = vsel %vm354, %v2782, 0
  %v2862 = vsel %vm354, %v2783, 0
  %v2865 = vsel %vm354, %v2784, 0
  %v2868 = vsel %vm354, %v2785, 0
  %v2871 = vsel %vm354, %v2786, 0
  %v2874 = vsel %vm354, %v2787, 0
  %v2877 = vsel %vm354, %v2788, 0
  %v2880 = vsel %vm354, %v2789, 0
  %v2883 = vsel %vm354, %v2790, 0
  %v2886 = vsel %vm354, %v2791, 0
  %v2888 = vsel %vm354, %v2809, 0
  %v2890 = vsel %vm354, %v2811, 0
  %v2892 = vsel %vm354, %v2813, 0
  %v2894 = vsel %vm354, %v2815, 0
  %v2896 = vsel %vm354, %v2817, 0
  %v2898 = vsel %vm354, %v2819, 0
  %v2900 = vsel %vm354, %v2821, 0
  %v2902 = vsel %vm354, %v2823, 0
  %v2904 = vsel %vm354, %v2825, 0
  %v2906 = vsel %vm354, %v2827, 0
  %v2908 = vsel %vm354, %v2829, 0
  %v2910 = vsel %vm354, %v2831, 0
  %v2912 = vsel %vm354, %v2833, 0
  %v2914 = vsel %vm354, %v2835, 0
  %v2916 = vsel %vm354, %v2837, 0
  %v2918 = vsel %vm354, %v2839, 0
  %2920 = vmatpush.xpose.msra.mxu0 %v2918
  %2921 = vmatpush.xpose.msra.mxu0 %v2916
  %2922 = vmatpush.xpose.msra.mxu0 %v2914
  %2923 = vmatpush.xpose.msra.mxu0 %v2912
  %2924 = vmatpush.xpose.msra.mxu0 %v2910
  %2925 = vmatpush.xpose.msra.mxu0 %v2908
  %2926 = vmatpush.xpose.msra.mxu0 %v2906
  %2927 = vmatpush.xpose.msra.mxu0 %v2904
  %2928 = vmatpush.xpose.msra.mxu0 %v2902
  %2929 = vmatpush.xpose.msra.mxu0 %v2900
  %2930 = vmatpush.xpose.msra.mxu0 %v2898
  %2931 = vmatpush.xpose.msra.mxu0 %v2896
  %2932 = vmatpush.xpose.msra.mxu0 %v2894
  %2933 = vmatpush.xpose.msra.mxu0 %v2892
  %2934 = vmatpush.xpose.msra.mxu0 %v2890
  %2935 = vmatpush.xpose.msra.mxu0 %v2888
  %2936 = vmatmul.f32.gmra.mxu0 %v2841
  %v2937 = vpop.f32.mrf.mxu0
  %v2938 = vadd.f32 %v138, %v2937
  %2939 = vmatmul.f32.gmra.mxu0 %v2844
  %v2940 = vpop.f32.mrf.mxu0
  %v2941 = vadd.f32 %v139, %v2940
  %2942 = vmatmul.f32.gmra.mxu0 %v2847
  %v2943 = vpop.f32.mrf.mxu0
  %v2944 = vadd.f32 %v140, %v2943
  %2945 = vmatmul.f32.gmra.mxu0 %v2850
  %v2946 = vpop.f32.mrf.mxu0
  %v2947 = vadd.f32 %v141, %v2946
  %2948 = vmatmul.f32.gmra.mxu0 %v2853
  %v2949 = vpop.f32.mrf.mxu0
  %v2950 = vadd.f32 %v142, %v2949
  %2951 = vmatmul.f32.gmra.mxu0 %v2856
  %v2952 = vpop.f32.mrf.mxu0
  %v2953 = vadd.f32 %v143, %v2952
  %2954 = vmatmul.f32.gmra.mxu0 %v2859
  %v2955 = vpop.f32.mrf.mxu0
  %v2956 = vadd.f32 %v144, %v2955
  %2957 = vmatmul.f32.gmra.mxu0 %v2862
  %v2958 = vpop.f32.mrf.mxu0
  %v2959 = vadd.f32 %v145, %v2958
  %2960 = vmatmul.f32.gmra.mxu0 %v2865
  %v2961 = vpop.f32.mrf.mxu0
  %v2962 = vadd.f32 %v146, %v2961
  %2963 = vmatmul.f32.gmra.mxu0 %v2868
  %v2964 = vpop.f32.mrf.mxu0
  %v2965 = vadd.f32 %v147, %v2964
  %2966 = vmatmul.f32.gmra.mxu0 %v2871
  %v2967 = vpop.f32.mrf.mxu0
  %v2968 = vadd.f32 %v148, %v2967
  %2969 = vmatmul.f32.gmra.mxu0 %v2874
  %v2970 = vpop.f32.mrf.mxu0
  %v2971 = vadd.f32 %v149, %v2970
  %2972 = vmatmul.f32.gmra.mxu0 %v2877
  %v2973 = vpop.f32.mrf.mxu0
  %v2974 = vadd.f32 %v150, %v2973
  %2975 = vmatmul.f32.gmra.mxu0 %v2880
  %v2976 = vpop.f32.mrf.mxu0
  %v2977 = vadd.f32 %v151, %v2976
  %2978 = vmatmul.f32.gmra.mxu0 %v2883
  %v2979 = vpop.f32.mrf.mxu0
  %v2980 = vadd.f32 %v152, %v2979
  %2981 = vmatmul.f32.gmra.mxu0 %v2886
  %v2982 = vpop.f32.mrf.mxu0
  %v2983 = vadd.f32 %v153, %v2982
  %2984 = vdwg.mxu0
  %2985 = vmax.xlane.f32.xlu0 %v2938
  %v2986 = vpop.xlane.xlu0 %2985
  %2987 = vmax.xlane.f32.xlu0 %v2941
  %v2988 = vpop.xlane.xlu0 %2987
  %2989 = vmax.xlane.f32.xlu0 %v2944
  %v2990 = vpop.xlane.xlu0 %2989
  %2991 = vmax.xlane.f32.xlu0 %v2947
  %v2992 = vpop.xlane.xlu0 %2991
  %2993 = vmax.xlane.f32.xlu0 %v2950
  %v2994 = vpop.xlane.xlu0 %2993
  %2995 = vmax.xlane.f32.xlu0 %v2953
  %v2996 = vpop.xlane.xlu0 %2995
  %2997 = vmax.xlane.f32.xlu0 %v2956
  %v2998 = vpop.xlane.xlu0 %2997
  %2999 = vmax.xlane.f32.xlu0 %v2959
  %v3000 = vpop.xlane.xlu0 %2999
  %3001 = vmax.xlane.f32.xlu0 %v2962
  %v3002 = vpop.xlane.xlu0 %3001
  %3003 = vmax.xlane.f32.xlu0 %v2965
  %v3004 = vpop.xlane.xlu0 %3003
  %3005 = vmax.xlane.f32.xlu0 %v2968
  %v3006 = vpop.xlane.xlu0 %3005
  %3007 = vmax.xlane.f32.xlu0 %v2971
  %v3008 = vpop.xlane.xlu0 %3007
  %3009 = vmax.xlane.f32.xlu0 %v2974
  %v3010 = vpop.xlane.xlu0 %3009
  %3011 = vmax.xlane.f32.xlu0 %v2977
  %v3012 = vpop.xlane.xlu0 %3011
  %3013 = vmax.xlane.f32.xlu0 %v2980
  %v3014 = vpop.xlane.xlu0 %3013
  %3015 = vmax.xlane.f32.xlu0 %v2983
  %v3016 = vpop.xlane.xlu0 %3015
  %v3017 = vsub.f32 %v2938, %v2986
  %v3018 = vsub.f32 %v2941, %v2988
  %v3019 = vsub.f32 %v2944, %v2990
  %v3020 = vsub.f32 %v2947, %v2992
  %v3021 = vsub.f32 %v2950, %v2994
  %v3022 = vsub.f32 %v2953, %v2996
  %v3023 = vsub.f32 %v2956, %v2998
  %v3024 = vsub.f32 %v2959, %v3000
  %v3025 = vsub.f32 %v2962, %v3002
  %v3026 = vsub.f32 %v2965, %v3004
  %v3027 = vsub.f32 %v2968, %v3006
  %v3028 = vsub.f32 %v2971, %v3008
  %v3029 = vsub.f32 %v2974, %v3010
  %v3030 = vsub.f32 %v2977, %v3012
  %v3031 = vsub.f32 %v2980, %v3014
  %v3032 = vsub.f32 %v2983, %v3016
  %v3033 = vmul.f32 %v3017, 1.442695
  %v3034 = vpow.pop %v3033
  %v3035 = vmul.f32 %v3018, 1.442695
  %v3036 = vpow.pop %v3035
  %v3037 = vmul.f32 %v3019, 1.442695
  %v3038 = vpow.pop %v3037
  %v3039 = vmul.f32 %v3020, 1.442695
  %v3040 = vpow.pop %v3039
  %v3041 = vmul.f32 %v3021, 1.442695
  %v3042 = vpow.pop %v3041
  %v3043 = vmul.f32 %v3022, 1.442695
  %v3044 = vpow.pop %v3043
  %v3045 = vmul.f32 %v3023, 1.442695
  %v3046 = vpow.pop %v3045
  %v3047 = vmul.f32 %v3024, 1.442695
  %v3048 = vpow.pop %v3047
  %v3049 = vmul.f32 %v3025, 1.442695
  %v3050 = vpow.pop %v3049
  %v3051 = vmul.f32 %v3026, 1.442695
  %v3052 = vpow.pop %v3051
  %v3053 = vmul.f32 %v3027, 1.442695
  %v3054 = vpow.pop %v3053
  %v3055 = vmul.f32 %v3028, 1.442695
  %v3056 = vpow.pop %v3055
  %v3057 = vmul.f32 %v3029, 1.442695
  %v3058 = vpow.pop %v3057
  %v3059 = vmul.f32 %v3030, 1.442695
  %v3060 = vpow.pop %v3059
  %v3061 = vmul.f32 %v3031, 1.442695
  %v3062 = vpow.pop %v3061
  %v3063 = vmul.f32 %v3032, 1.442695
  %v3064 = vpow.pop %v3063
  %v3065 = vmul.f32 %v3034, %v106
  %v3066 = vmul.f32 %v3036, %v107
  %v3067 = vmul.f32 %v3038, %v108
  %v3068 = vmul.f32 %v3040, %v109
  %v3069 = vmul.f32 %v3042, %v110
  %v3070 = vmul.f32 %v3044, %v111
  %v3071 = vmul.f32 %v3046, %v112
  %v3072 = vmul.f32 %v3048, %v113
  %v3073 = vmul.f32 %v3050, %v114
  %v3074 = vmul.f32 %v3052, %v115
  %v3075 = vmul.f32 %v3054, %v116
  %v3076 = vmul.f32 %v3056, %v117
  %v3077 = vmul.f32 %v3058, %v118
  %v3078 = vmul.f32 %v3060, %v119
  %v3079 = vmul.f32 %v3062, %v120
  %v3080 = vmul.f32 %v3064, %v121
  %3081 = vadd.xlane.f32.xlu0 %v3065
  %v3082 = vpop.xlane.xlu0 %3081
  %3083 = vadd.xlane.f32.xlu0 %v3066
  %v3084 = vpop.xlane.xlu0 %3083
  %3085 = vadd.xlane.f32.xlu0 %v3067
  %v3086 = vpop.xlane.xlu0 %3085
  %3087 = vadd.xlane.f32.xlu0 %v3068
  %v3088 = vpop.xlane.xlu0 %3087
  %3089 = vadd.xlane.f32.xlu0 %v3069
  %v3090 = vpop.xlane.xlu0 %3089
  %3091 = vadd.xlane.f32.xlu0 %v3070
  %v3092 = vpop.xlane.xlu0 %3091
  %3093 = vadd.xlane.f32.xlu0 %v3071
  %v3094 = vpop.xlane.xlu0 %3093
  %3095 = vadd.xlane.f32.xlu0 %v3072
  %v3096 = vpop.xlane.xlu0 %3095
  %3097 = vadd.xlane.f32.xlu0 %v3073
  %v3098 = vpop.xlane.xlu0 %3097
  %3099 = vadd.xlane.f32.xlu0 %v3074
  %v3100 = vpop.xlane.xlu0 %3099
  %3101 = vadd.xlane.f32.xlu0 %v3075
  %v3102 = vpop.xlane.xlu0 %3101
  %3103 = vadd.xlane.f32.xlu0 %v3076
  %v3104 = vpop.xlane.xlu0 %3103
  %3105 = vadd.xlane.f32.xlu0 %v3077
  %v3106 = vpop.xlane.xlu0 %3105
  %3107 = vadd.xlane.f32.xlu0 %v3078
  %v3108 = vpop.xlane.xlu0 %3107
  %3109 = vadd.xlane.f32.xlu0 %v3079
  %v3110 = vpop.xlane.xlu0 %3109
  %3111 = vadd.xlane.f32.xlu0 %v3080
  %v3112 = vpop.xlane.xlu0 %3111
  %vm3113 = vcmp.gt.f32.partialorder %v3082, 0.0
  %vm3114 = vcmp.gt.f32.partialorder %v3084, 0.0
  %vm3115 = vcmp.gt.f32.partialorder %v3086, 0.0
  %vm3116 = vcmp.gt.f32.partialorder %v3088, 0.0
  %vm3117 = vcmp.gt.f32.partialorder %v3090, 0.0
  %vm3118 = vcmp.gt.f32.partialorder %v3092, 0.0
  %vm3119 = vcmp.gt.f32.partialorder %v3094, 0.0
  %vm3120 = vcmp.gt.f32.partialorder %v3096, 0.0
  %vm3121 = vcmp.gt.f32.partialorder %v3098, 0.0
  %vm3122 = vcmp.gt.f32.partialorder %v3100, 0.0
  %vm3123 = vcmp.gt.f32.partialorder %v3102, 0.0
  %vm3124 = vcmp.gt.f32.partialorder %v3104, 0.0
  %vm3125 = vcmp.gt.f32.partialorder %v3106, 0.0
  %vm3126 = vcmp.gt.f32.partialorder %v3108, 0.0
  %vm3127 = vcmp.gt.f32.partialorder %v3110, 0.0
  %vm3128 = vcmp.gt.f32.partialorder %v3112, 0.0
  %v3129 = vsel %vm3113, %v3082, 1.0
  %v3130 = vsel %vm3114, %v3084, 1.0
  %v3131 = vsel %vm3115, %v3086, 1.0
  %v3132 = vsel %vm3116, %v3088, 1.0
  %v3133 = vsel %vm3117, %v3090, 1.0
  %v3134 = vsel %vm3118, %v3092, 1.0
  %v3135 = vsel %vm3119, %v3094, 1.0
  %v3136 = vsel %vm3120, %v3096, 1.0
  %v3137 = vsel %vm3121, %v3098, 1.0
  %v3138 = vsel %vm3122, %v3100, 1.0
  %v3139 = vsel %vm3123, %v3102, 1.0
  %v3140 = vsel %vm3124, %v3104, 1.0
  %v3141 = vsel %vm3125, %v3106, 1.0
  %v3142 = vsel %vm3126, %v3108, 1.0
  %v3143 = vsel %vm3127, %v3110, 1.0
  %v3144 = vsel %vm3128, %v3112, 1.0
  %v3145 = vrcp.pop %v3129
  %v3146 = vrcp.pop %v3130
  %v3147 = vrcp.pop %v3131
  %v3148 = vrcp.pop %v3132
  %v3149 = vrcp.pop %v3133
  %v3150 = vrcp.pop %v3134
  %v3151 = vrcp.pop %v3135
  %v3152 = vrcp.pop %v3136
  %v3153 = vrcp.pop %v3137
  %v3154 = vrcp.pop %v3138
  %v3155 = vrcp.pop %v3139
  %v3156 = vrcp.pop %v3140
  %v3157 = vrcp.pop %v3141
  %v3158 = vrcp.pop %v3142
  %v3159 = vrcp.pop %v3143
  %v3160 = vrcp.pop %v3144
  %v3161 = vmul.f32 %v3065, %v3145
  %v3162 = vmul.f32 %v3066, %v3146
  %v3163 = vmul.f32 %v3067, %v3147
  %v3164 = vmul.f32 %v3068, %v3148
  %v3165 = vmul.f32 %v3069, %v3149
  %v3166 = vmul.f32 %v3070, %v3150
  %v3167 = vmul.f32 %v3071, %v3151
  %v3168 = vmul.f32 %v3072, %v3152
  %v3169 = vmul.f32 %v3073, %v3153
  %v3170 = vmul.f32 %v3074, %v3154
  %v3171 = vmul.f32 %v3075, %v3155
  %v3172 = vmul.f32 %v3076, %v3156
  %v3173 = vmul.f32 %v3077, %v3157
  %v3174 = vmul.f32 %v3078, %v3158
  %v3175 = vmul.f32 %v3079, %v3159
  %v3176 = vmul.f32 %v3080, %v3160
  %3177 = vrot.lane.b32.xlu0 %v2729, 64
  %v3178 = vpop.permute.xlu0 %3177
  %3179 = vrot.lane.b32.xlu0 %v2732, 64
  %v3180 = vpop.permute.xlu0 %3179
  %3181 = vrot.lane.b32.xlu0 %v2735, 64
  %v3182 = vpop.permute.xlu0 %3181
  %3183 = vrot.lane.b32.xlu0 %v2738, 64
  %v3184 = vpop.permute.xlu0 %3183
  %3185 = vrot.lane.b32.xlu0 %v2741, 64
  %v3186 = vpop.permute.xlu0 %3185
  %3187 = vrot.lane.b32.xlu0 %v2744, 64
  %v3188 = vpop.permute.xlu0 %3187
  %3189 = vrot.lane.b32.xlu0 %v2747, 64
  %v3190 = vpop.permute.xlu0 %3189
  %3191 = vrot.lane.b32.xlu0 %v2750, 64
  %v3192 = vpop.permute.xlu0 %3191
  %3193 = vrot.lane.b32.xlu0 %v2753, 64
  %v3194 = vpop.permute.xlu0 %3193
  %3195 = vrot.lane.b32.xlu0 %v2756, 64
  %v3196 = vpop.permute.xlu0 %3195
  %3197 = vrot.lane.b32.xlu0 %v2759, 64
  %v3198 = vpop.permute.xlu0 %3197
  %3199 = vrot.lane.b32.xlu0 %v2762, 64
  %v3200 = vpop.permute.xlu0 %3199
  %3201 = vrot.lane.b32.xlu0 %v2765, 64
  %v3202 = vpop.permute.xlu0 %3201
  %3203 = vrot.lane.b32.xlu0 %v2768, 64
  %v3204 = vpop.permute.xlu0 %3203
  %3205 = vrot.lane.b32.xlu0 %v2771, 64
  %v3206 = vpop.permute.xlu0 %3205
  %3207 = vrot.lane.b32.xlu0 %v2774, 64
  %v3208 = vpop.permute.xlu0 %3207
  %3225 = vmatpush.msra.mxu0 %v3208
  %3226 = vmatpush.msra.mxu0 %v3206
  %3227 = vmatpush.msra.mxu0 %v3204
  %3228 = vmatpush.msra.mxu0 %v3202
  %3229 = vmatpush.msra.mxu0 %v3200
  %3230 = vmatpush.msra.mxu0 %v3198
  %3231 = vmatpush.msra.mxu0 %v3196
  %3232 = vmatpush.msra.mxu0 %v3194
  %3233 = vmatpush.msra.mxu0 %v3192
  %3234 = vmatpush.msra.mxu0 %v3190
  %3235 = vmatpush.msra.mxu0 %v3188
  %3236 = vmatpush.msra.mxu0 %v3186
  %3237 = vmatpush.msra.mxu0 %v3184
  %3238 = vmatpush.msra.mxu0 %v3182
  %3239 = vmatpush.msra.mxu0 %v3180
  %3240 = vmatpush.msra.mxu0 %v3178
  %3241 = vmatmul.f32.gmra.mxu0 %v3161
  %v3242 = vpop.f32.mrf.mxu0
  %v3243 = vadd.f32 0.0, %v3242
  %3244 = vmatmul.f32.gmra.mxu0 %v3162
  %v3245 = vpop.f32.mrf.mxu0
  %v3246 = vadd.f32 0.0, %v3245
  %3247 = vmatmul.f32.gmra.mxu0 %v3163
  %v3248 = vpop.f32.mrf.mxu0
  %v3249 = vadd.f32 0.0, %v3248
  %3250 = vmatmul.f32.gmra.mxu0 %v3164
  %v3251 = vpop.f32.mrf.mxu0
  %v3252 = vadd.f32 0.0, %v3251
  %3253 = vmatmul.f32.gmra.mxu0 %v3165
  %v3254 = vpop.f32.mrf.mxu0
  %v3255 = vadd.f32 0.0, %v3254
  %3256 = vmatmul.f32.gmra.mxu0 %v3166
  %v3257 = vpop.f32.mrf.mxu0
  %v3258 = vadd.f32 0.0, %v3257
  %3259 = vmatmul.f32.gmra.mxu0 %v3167
  %v3260 = vpop.f32.mrf.mxu0
  %v3261 = vadd.f32 0.0, %v3260
  %3262 = vmatmul.f32.gmra.mxu0 %v3168
  %v3263 = vpop.f32.mrf.mxu0
  %v3264 = vadd.f32 0.0, %v3263
  %3265 = vmatmul.f32.gmra.mxu0 %v3169
  %v3266 = vpop.f32.mrf.mxu0
  %v3267 = vadd.f32 0.0, %v3266
  %3268 = vmatmul.f32.gmra.mxu0 %v3170
  %v3269 = vpop.f32.mrf.mxu0
  %v3270 = vadd.f32 0.0, %v3269
  %3271 = vmatmul.f32.gmra.mxu0 %v3171
  %v3272 = vpop.f32.mrf.mxu0
  %v3273 = vadd.f32 0.0, %v3272
  %3274 = vmatmul.f32.gmra.mxu0 %v3172
  %v3275 = vpop.f32.mrf.mxu0
  %v3276 = vadd.f32 0.0, %v3275
  %3277 = vmatmul.f32.gmra.mxu0 %v3173
  %v3278 = vpop.f32.mrf.mxu0
  %v3279 = vadd.f32 0.0, %v3278
  %3280 = vmatmul.f32.gmra.mxu0 %v3174
  %v3281 = vpop.f32.mrf.mxu0
  %v3282 = vadd.f32 0.0, %v3281
  %3283 = vmatmul.f32.gmra.mxu0 %v3175
  %v3284 = vpop.f32.mrf.mxu0
  %v3285 = vadd.f32 0.0, %v3284
  %3286 = vmatmul.f32.gmra.mxu0 %v3176
  %v3287 = vpop.f32.mrf.mxu0
  %v3288 = vadd.f32 0.0, %v3287
  %3289 = vdwg.mxu0
  %3290 = vst.msk [vmem:[#allocation2] sm:$0xff] %vm354, %v3243
  %3291 = vst.msk [vmem:[#allocation2 + $0x8] sm:$0xff] %vm354, %v3246
  %3292 = vst.msk [vmem:[#allocation2 + $0x10] sm:$0xff] %vm354, %v3249
  %3293 = vst.msk [vmem:[#allocation2 + $0x18] sm:$0xff] %vm354, %v3252
  %3294 = vst.msk [vmem:[#allocation2 + $0x20] sm:$0xff] %vm354, %v3255
  %3295 = vst.msk [vmem:[#allocation2 + $0x28] sm:$0xff] %vm354, %v3258
  %3296 = vst.msk [vmem:[#allocation2 + $0x30] sm:$0xff] %vm354, %v3261
  %3297 = vst.msk [vmem:[#allocation2 + $0x38] sm:$0xff] %vm354, %v3264
  %3298 = vst.msk [vmem:[#allocation2 + $0x40] sm:$0xff] %vm354, %v3267
  %3299 = vst.msk [vmem:[#allocation2 + $0x48] sm:$0xff] %vm354, %v3270
  %3300 = vst.msk [vmem:[#allocation2 + $0x50] sm:$0xff] %vm354, %v3273
  %3301 = vst.msk [vmem:[#allocation2 + $0x58] sm:$0xff] %vm354, %v3276
  %3302 = vst.msk [vmem:[#allocation2 + $0x60] sm:$0xff] %vm354, %v3279
  %3303 = vst.msk [vmem:[#allocation2 + $0x68] sm:$0xff] %vm354, %v3282
  %3304 = vst.msk [vmem:[#allocation2 + $0x70] sm:$0xff] %vm354, %v3285
  %3305 = vst.msk [vmem:[#allocation2 + $0x78] sm:$0xff] %vm354, %v3288
  %3306 = vrot.lane.b32.xlu0 %v2776, 120
  %v3307 = vpop.permute.xlu0 %3306
  %3308 = vrot.lane.b32.xlu0 %v2777, 120
  %v3309 = vpop.permute.xlu0 %3308
  %3310 = vrot.lane.b32.xlu0 %v2778, 120
  %v3311 = vpop.permute.xlu0 %3310
  %3312 = vrot.lane.b32.xlu0 %v2779, 120
  %v3313 = vpop.permute.xlu0 %3312
  %3314 = vrot.lane.b32.xlu0 %v2780, 120
  %v3315 = vpop.permute.xlu0 %3314
  %3316 = vrot.lane.b32.xlu0 %v2781, 120
  %v3317 = vpop.permute.xlu0 %3316
  %3318 = vrot.lane.b32.xlu0 %v2782, 120
  %v3319 = vpop.permute.xlu0 %3318
  %3320 = vrot.lane.b32.xlu0 %v2783, 120
  %v3321 = vpop.permute.xlu0 %3320
  %3322 = vrot.lane.b32.xlu0 %v2784, 120
  %v3323 = vpop.permute.xlu0 %3322
  %3324 = vrot.lane.b32.xlu0 %v2785, 120
  %v3325 = vpop.permute.xlu0 %3324
  %3326 = vrot.lane.b32.xlu0 %v2786, 120
  %v3327 = vpop.permute.xlu0 %3326
  %3328 = vrot.lane.b32.xlu0 %v2787, 120
  %v3329 = vpop.permute.xlu0 %3328
  %3330 = vrot.lane.b32.xlu0 %v2788, 120
  %v3331 = vpop.permute.xlu0 %3330
  %3332 = vrot.lane.b32.xlu0 %v2789, 120
  %v3333 = vpop.permute.xlu0 %3332
  %3334 = vrot.lane.b32.xlu0 %v2790, 120
  %v3335 = vpop.permute.xlu0 %3334
  %3336 = vrot.lane.b32.xlu0 %v2791, 120
  %v3337 = vpop.permute.xlu0 %3336
  %3338 = vrot.lane.b32.xlu0 %v2729, 88
  %v3339 = vpop.permute.xlu0 %3338
  %3340 = vrot.lane.b32.xlu0 %v2732, 88
  %v3341 = vpop.permute.xlu0 %3340
  %3342 = vrot.lane.b32.xlu0 %v2735, 88
  %v3343 = vpop.permute.xlu0 %3342
  %3344 = vrot.lane.b32.xlu0 %v2738, 88
  %v3345 = vpop.permute.xlu0 %3344
  %3346 = vrot.lane.b32.xlu0 %v2741, 88
  %v3347 = vpop.permute.xlu0 %3346
  %3348 = vrot.lane.b32.xlu0 %v2744, 88
  %v3349 = vpop.permute.xlu0 %3348
  %3350 = vrot.lane.b32.xlu0 %v2747, 88
  %v3351 = vpop.permute.xlu0 %3350
  %3352 = vrot.lane.b32.xlu0 %v2750, 88
  %v3353 = vpop.permute.xlu0 %3352
  %3354 = vrot.lane.b32.xlu0 %v2753, 88
  %v3355 = vpop.permute.xlu0 %3354
  %3356 = vrot.lane.b32.xlu0 %v2756, 88
  %v3357 = vpop.permute.xlu0 %3356
  %3358 = vrot.lane.b32.xlu0 %v2759, 88
  %v3359 = vpop.permute.xlu0 %3358
  %3360 = vrot.lane.b32.xlu0 %v2762, 88
  %v3361 = vpop.permute.xlu0 %3360
  %3362 = vrot.lane.b32.xlu0 %v2765, 88
  %v3363 = vpop.permute.xlu0 %3362
  %3364 = vrot.lane.b32.xlu0 %v2768, 88
  %v3365 = vpop.permute.xlu0 %3364
  %3366 = vrot.lane.b32.xlu0 %v2771, 88
  %v3367 = vpop.permute.xlu0 %3366
  %3368 = vrot.lane.b32.xlu0 %v2774, 88
  %v3369 = vpop.permute.xlu0 %3368
  %v3370 = vsel %vm354, %v3307, 0
  %v3372 = vsel %vm354, %v3309, 0
  %v3374 = vsel %vm354, %v3311, 0
  %v3376 = vsel %vm354, %v3313, 0
  %v3378 = vsel %vm354, %v3315, 0
  %v3380 = vsel %vm354, %v3317, 0
  %v3382 = vsel %vm354, %v3319, 0
  %v3384 = vsel %vm354, %v3321, 0
  %v3386 = vsel %vm354, %v3323, 0
  %v3388 = vsel %vm354, %v3325, 0
  %v3390 = vsel %vm354, %v3327, 0
  %v3392 = vsel %vm354, %v3329, 0
  %v3394 = vsel %vm354, %v3331, 0
  %v3396 = vsel %vm354, %v3333, 0
  %v3398 = vsel %vm354, %v3335, 0
  %v3400 = vsel %vm354, %v3337, 0
  %v3402 = vsel %vm354, %v3339, 0
  %v3404 = vsel %vm354, %v3341, 0
  %v3406 = vsel %vm354, %v3343, 0
  %v3408 = vsel %vm354, %v3345, 0
  %v3410 = vsel %vm354, %v3347, 0
  %v3412 = vsel %vm354, %v3349, 0
  %v3414 = vsel %vm354, %v3351, 0
  %v3416 = vsel %vm354, %v3353, 0
  %v3418 = vsel %vm354, %v3355, 0
  %v3420 = vsel %vm354, %v3357, 0
  %v3422 = vsel %vm354, %v3359, 0
  %v3424 = vsel %vm354, %v3361, 0
  %v3426 = vsel %vm354, %v3363, 0
  %v3428 = vsel %vm354, %v3365, 0
  %v3430 = vsel %vm354, %v3367, 0
  %v3432 = vsel %vm354, %v3369, 0
  %3434 = vmatpush.xpose.msra.mxu0 %v3432
  %3435 = vmatpush.xpose.msra.mxu0 %v3430
  %3436 = vmatpush.xpose.msra.mxu0 %v3428
  %3437 = vmatpush.xpose.msra.mxu0 %v3426
  %3438 = vmatpush.xpose.msra.mxu0 %v3424
  %3439 = vmatpush.xpose.msra.mxu0 %v3422
  %3440 = vmatpush.xpose.msra.mxu0 %v3420
  %3441 = vmatpush.xpose.msra.mxu0 %v3418
  %3442 = vmatpush.xpose.msra.mxu0 %v3416
  %3443 = vmatpush.xpose.msra.mxu0 %v3414
  %3444 = vmatpush.xpose.msra.mxu0 %v3412
  %3445 = vmatpush.xpose.msra.mxu0 %v3410
  %3446 = vmatpush.xpose.msra.mxu0 %v3408
  %3447 = vmatpush.xpose.msra.mxu0 %v3406
  %3448 = vmatpush.xpose.msra.mxu0 %v3404
  %3449 = vmatpush.xpose.msra.mxu0 %v3402
  %3450 = vmatmul.f32.gmra.mxu0 %v3370
  %v3451 = vpop.f32.mrf.mxu0
  %v3452 = vadd.f32 %v138, %v3451
  %3453 = vmatmul.f32.gmra.mxu0 %v3372
  %v3454 = vpop.f32.mrf.mxu0
  %v3455 = vadd.f32 %v139, %v3454
  %3456 = vmatmul.f32.gmra.mxu0 %v3374
  %v3457 = vpop.f32.mrf.mxu0
  %v3458 = vadd.f32 %v140, %v3457
  %3459 = vmatmul.f32.gmra.mxu0 %v3376
  %v3460 = vpop.f32.mrf.mxu0
  %v3461 = vadd.f32 %v141, %v3460
  %3462 = vmatmul.f32.gmra.mxu0 %v3378
  %v3463 = vpop.f32.mrf.mxu0
  %v3464 = vadd.f32 %v142, %v3463
  %3465 = vmatmul.f32.gmra.mxu0 %v3380
  %v3466 = vpop.f32.mrf.mxu0
  %v3467 = vadd.f32 %v143, %v3466
  %3468 = vmatmul.f32.gmra.mxu0 %v3382
  %v3469 = vpop.f32.mrf.mxu0
  %v3470 = vadd.f32 %v144, %v3469
  %3471 = vmatmul.f32.gmra.mxu0 %v3384
  %v3472 = vpop.f32.mrf.mxu0
  %v3473 = vadd.f32 %v145, %v3472
  %3474 = vmatmul.f32.gmra.mxu0 %v3386
  %v3475 = vpop.f32.mrf.mxu0
  %v3476 = vadd.f32 %v146, %v3475
  %3477 = vmatmul.f32.gmra.mxu0 %v3388
  %v3478 = vpop.f32.mrf.mxu0
  %v3479 = vadd.f32 %v147, %v3478
  %3480 = vmatmul.f32.gmra.mxu0 %v3390
  %v3481 = vpop.f32.mrf.mxu0
  %v3482 = vadd.f32 %v148, %v3481
  %3483 = vmatmul.f32.gmra.mxu0 %v3392
  %v3484 = vpop.f32.mrf.mxu0
  %v3485 = vadd.f32 %v149, %v3484
  %3486 = vmatmul.f32.gmra.mxu0 %v3394
  %v3487 = vpop.f32.mrf.mxu0
  %v3488 = vadd.f32 %v150, %v3487
  %3489 = vmatmul.f32.gmra.mxu0 %v3396
  %v3490 = vpop.f32.mrf.mxu0
  %v3491 = vadd.f32 %v151, %v3490
  %3492 = vmatmul.f32.gmra.mxu0 %v3398
  %v3493 = vpop.f32.mrf.mxu0
  %v3494 = vadd.f32 %v152, %v3493
  %3495 = vmatmul.f32.gmra.mxu0 %v3400
  %v3496 = vpop.f32.mrf.mxu0
  %v3497 = vadd.f32 %v153, %v3496
  %3498 = vdwg.mxu0
  %3499 = vmax.xlane.f32.xlu0 %v3452
  %v3500 = vpop.xlane.xlu0 %3499
  %3501 = vmax.xlane.f32.xlu0 %v3455
  %v3502 = vpop.xlane.xlu0 %3501
  %3503 = vmax.xlane.f32.xlu0 %v3458
  %v3504 = vpop.xlane.xlu0 %3503
  %3505 = vmax.xlane.f32.xlu0 %v3461
  %v3506 = vpop.xlane.xlu0 %3505
  %3507 = vmax.xlane.f32.xlu0 %v3464
  %v3508 = vpop.xlane.xlu0 %3507
  %3509 = vmax.xlane.f32.xlu0 %v3467
  %v3510 = vpop.xlane.xlu0 %3509
  %3511 = vmax.xlane.f32.xlu0 %v3470
  %v3512 = vpop.xlane.xlu0 %3511
  %3513 = vmax.xlane.f32.xlu0 %v3473
  %v3514 = vpop.xlane.xlu0 %3513
  %3515 = vmax.xlane.f32.xlu0 %v3476
  %v3516 = vpop.xlane.xlu0 %3515
  %3517 = vmax.xlane.f32.xlu0 %v3479
  %v3518 = vpop.xlane.xlu0 %3517
  %3519 = vmax.xlane.f32.xlu0 %v3482
  %v3520 = vpop.xlane.xlu0 %3519
  %3521 = vmax.xlane.f32.xlu0 %v3485
  %v3522 = vpop.xlane.xlu0 %3521
  %3523 = vmax.xlane.f32.xlu0 %v3488
  %v3524 = vpop.xlane.xlu0 %3523
  %3525 = vmax.xlane.f32.xlu0 %v3491
  %v3526 = vpop.xlane.xlu0 %3525
  %3527 = vmax.xlane.f32.xlu0 %v3494
  %v3528 = vpop.xlane.xlu0 %3527
  %3529 = vmax.xlane.f32.xlu0 %v3497
  %v3530 = vpop.xlane.xlu0 %3529
  %v3531 = vsub.f32 %v3452, %v3500
  %v3532 = vsub.f32 %v3455, %v3502
  %v3533 = vsub.f32 %v3458, %v3504
  %v3534 = vsub.f32 %v3461, %v3506
  %v3535 = vsub.f32 %v3464, %v3508
  %v3536 = vsub.f32 %v3467, %v3510
  %v3537 = vsub.f32 %v3470, %v3512
  %v3538 = vsub.f32 %v3473, %v3514
  %v3539 = vsub.f32 %v3476, %v3516
  %v3540 = vsub.f32 %v3479, %v3518
  %v3541 = vsub.f32 %v3482, %v3520
  %v3542 = vsub.f32 %v3485, %v3522
  %v3543 = vsub.f32 %v3488, %v3524
  %v3544 = vsub.f32 %v3491, %v3526
  %v3545 = vsub.f32 %v3494, %v3528
  %v3546 = vsub.f32 %v3497, %v3530
  %v3547 = vmul.f32 %v3531, 1.442695
  %v3548 = vpow.pop %v3547
  %v3549 = vmul.f32 %v3532, 1.442695
  %v3550 = vpow.pop %v3549
  %v3551 = vmul.f32 %v3533, 1.442695
  %v3552 = vpow.pop %v3551
  %v3553 = vmul.f32 %v3534, 1.442695
  %v3554 = vpow.pop %v3553
  %v3555 = vmul.f32 %v3535, 1.442695
  %v3556 = vpow.pop %v3555
  %v3557 = vmul.f32 %v3536, 1.442695
  %v3558 = vpow.pop %v3557
  %v3559 = vmul.f32 %v3537, 1.442695
  %v3560 = vpow.pop %v3559
  %v3561 = vmul.f32 %v3538, 1.442695
  %v3562 = vpow.pop %v3561
  %v3563 = vmul.f32 %v3539, 1.442695
  %v3564 = vpow.pop %v3563
  %v3565 = vmul.f32 %v3540, 1.442695
  %v3566 = vpow.pop %v3565
  %v3567 = vmul.f32 %v3541, 1.442695
  %v3568 = vpow.pop %v3567
  %v3569 = vmul.f32 %v3542, 1.442695
  %v3570 = vpow.pop %v3569
  %v3571 = vmul.f32 %v3543, 1.442695
  %v3572 = vpow.pop %v3571
  %v3573 = vmul.f32 %v3544, 1.442695
  %v3574 = vpow.pop %v3573
  %v3575 = vmul.f32 %v3545, 1.442695
  %v3576 = vpow.pop %v3575
  %v3577 = vmul.f32 %v3546, 1.442695
  %v3578 = vpow.pop %v3577
  %v3579 = vmul.f32 %v3548, %v106
  %v3580 = vmul.f32 %v3550, %v107
  %v3581 = vmul.f32 %v3552, %v108
  %v3582 = vmul.f32 %v3554, %v109
  %v3583 = vmul.f32 %v3556, %v110
  %v3584 = vmul.f32 %v3558, %v111
  %v3585 = vmul.f32 %v3560, %v112
  %v3586 = vmul.f32 %v3562, %v113
  %v3587 = vmul.f32 %v3564, %v114
  %v3588 = vmul.f32 %v3566, %v115
  %v3589 = vmul.f32 %v3568, %v116
  %v3590 = vmul.f32 %v3570, %v117
  %v3591 = vmul.f32 %v3572, %v118
  %v3592 = vmul.f32 %v3574, %v119
  %v3593 = vmul.f32 %v3576, %v120
  %v3594 = vmul.f32 %v3578, %v121
  %3595 = vadd.xlane.f32.xlu0 %v3579
  %v3596 = vpop.xlane.xlu0 %3595
  %3597 = vadd.xlane.f32.xlu0 %v3580
  %v3598 = vpop.xlane.xlu0 %3597
  %3599 = vadd.xlane.f32.xlu0 %v3581
  %v3600 = vpop.xlane.xlu0 %3599
  %3601 = vadd.xlane.f32.xlu0 %v3582
  %v3602 = vpop.xlane.xlu0 %3601
  %3603 = vadd.xlane.f32.xlu0 %v3583
  %v3604 = vpop.xlane.xlu0 %3603
  %3605 = vadd.xlane.f32.xlu0 %v3584
  %v3606 = vpop.xlane.xlu0 %3605
  %3607 = vadd.xlane.f32.xlu0 %v3585
  %v3608 = vpop.xlane.xlu0 %3607
  %3609 = vadd.xlane.f32.xlu0 %v3586
  %v3610 = vpop.xlane.xlu0 %3609
  %3611 = vadd.xlane.f32.xlu0 %v3587
  %v3612 = vpop.xlane.xlu0 %3611
  %3613 = vadd.xlane.f32.xlu0 %v3588
  %v3614 = vpop.xlane.xlu0 %3613
  %3615 = vadd.xlane.f32.xlu0 %v3589
  %v3616 = vpop.xlane.xlu0 %3615
  %3617 = vadd.xlane.f32.xlu0 %v3590
  %v3618 = vpop.xlane.xlu0 %3617
  %3619 = vadd.xlane.f32.xlu0 %v3591
  %v3620 = vpop.xlane.xlu0 %3619
  %3621 = vadd.xlane.f32.xlu0 %v3592
  %v3622 = vpop.xlane.xlu0 %3621
  %3623 = vadd.xlane.f32.xlu0 %v3593
  %v3624 = vpop.xlane.xlu0 %3623
  %3625 = vadd.xlane.f32.xlu0 %v3594
  %v3626 = vpop.xlane.xlu0 %3625
  %vm3627 = vcmp.gt.f32.partialorder %v3596, 0.0
  %vm3628 = vcmp.gt.f32.partialorder %v3598, 0.0
  %vm3629 = vcmp.gt.f32.partialorder %v3600, 0.0
  %vm3630 = vcmp.gt.f32.partialorder %v3602, 0.0
  %vm3631 = vcmp.gt.f32.partialorder %v3604, 0.0
  %vm3632 = vcmp.gt.f32.partialorder %v3606, 0.0
  %vm3633 = vcmp.gt.f32.partialorder %v3608, 0.0
  %vm3634 = vcmp.gt.f32.partialorder %v3610, 0.0
  %vm3635 = vcmp.gt.f32.partialorder %v3612, 0.0
  %vm3636 = vcmp.gt.f32.partialorder %v3614, 0.0
  %vm3637 = vcmp.gt.f32.partialorder %v3616, 0.0
  %vm3638 = vcmp.gt.f32.partialorder %v3618, 0.0
  %vm3639 = vcmp.gt.f32.partialorder %v3620, 0.0
  %vm3640 = vcmp.gt.f32.partialorder %v3622, 0.0
  %vm3641 = vcmp.gt.f32.partialorder %v3624, 0.0
  %vm3642 = vcmp.gt.f32.partialorder %v3626, 0.0
  %v3643 = vsel %vm3627, %v3596, 1.0
  %v3644 = vsel %vm3628, %v3598, 1.0
  %v3645 = vsel %vm3629, %v3600, 1.0
  %v3646 = vsel %vm3630, %v3602, 1.0
  %v3647 = vsel %vm3631, %v3604, 1.0
  %v3648 = vsel %vm3632, %v3606, 1.0
  %v3649 = vsel %vm3633, %v3608, 1.0
  %v3650 = vsel %vm3634, %v3610, 1.0
  %v3651 = vsel %vm3635, %v3612, 1.0
  %v3652 = vsel %vm3636, %v3614, 1.0
  %v3653 = vsel %vm3637, %v3616, 1.0
  %v3654 = vsel %vm3638, %v3618, 1.0
  %v3655 = vsel %vm3639, %v3620, 1.0
  %v3656 = vsel %vm3640, %v3622, 1.0
  %v3657 = vsel %vm3641, %v3624, 1.0
  %v3658 = vsel %vm3642, %v3626, 1.0
  %v3659 = vrcp.pop %v3643
  %v3660 = vrcp.pop %v3644
  %v3661 = vrcp.pop %v3645
  %v3662 = vrcp.pop %v3646
  %v3663 = vrcp.pop %v3647
  %v3664 = vrcp.pop %v3648
  %v3665 = vrcp.pop %v3649
  %v3666 = vrcp.pop %v3650
  %v3667 = vrcp.pop %v3651
  %v3668 = vrcp.pop %v3652
  %v3669 = vrcp.pop %v3653
  %v3670 = vrcp.pop %v3654
  %v3671 = vrcp.pop %v3655
  %v3672 = vrcp.pop %v3656
  %v3673 = vrcp.pop %v3657
  %v3674 = vrcp.pop %v3658
  %v3675 = vmul.f32 %v3579, %v3659
  %v3676 = vmul.f32 %v3580, %v3660
  %v3677 = vmul.f32 %v3581, %v3661
  %v3678 = vmul.f32 %v3582, %v3662
  %v3679 = vmul.f32 %v3583, %v3663
  %v3680 = vmul.f32 %v3584, %v3664
  %v3681 = vmul.f32 %v3585, %v3665
  %v3682 = vmul.f32 %v3586, %v3666
  %v3683 = vmul.f32 %v3587, %v3667
  %v3684 = vmul.f32 %v3588, %v3668
  %v3685 = vmul.f32 %v3589, %v3669
  %v3686 = vmul.f32 %v3590, %v3670
  %v3687 = vmul.f32 %v3591, %v3671
  %v3688 = vmul.f32 %v3592, %v3672
  %v3689 = vmul.f32 %v3593, %v3673
  %v3690 = vmul.f32 %v3594, %v3674
  %3691 = vrot.lane.b32.xlu0 %v2729, 56
  %v3692 = vpop.permute.xlu0 %3691
  %3693 = vrot.lane.b32.xlu0 %v2732, 56
  %v3694 = vpop.permute.xlu0 %3693
  %3695 = vrot.lane.b32.xlu0 %v2735, 56
  %v3696 = vpop.permute.xlu0 %3695
  %3697 = vrot.lane.b32.xlu0 %v2738, 56
  %v3698 = vpop.permute.xlu0 %3697
  %3699 = vrot.lane.b32.xlu0 %v2741, 56
  %v3700 = vpop.permute.xlu0 %3699
  %3701 = vrot.lane.b32.xlu0 %v2744, 56
  %v3702 = vpop.permute.xlu0 %3701
  %3703 = vrot.lane.b32.xlu0 %v2747, 56
  %v3704 = vpop.permute.xlu0 %3703
  %3705 = vrot.lane.b32.xlu0 %v2750, 56
  %v3706 = vpop.permute.xlu0 %3705
  %3707 = vrot.lane.b32.xlu0 %v2753, 56
  %v3708 = vpop.permute.xlu0 %3707
  %3709 = vrot.lane.b32.xlu0 %v2756, 56
  %v3710 = vpop.permute.xlu0 %3709
  %3711 = vrot.lane.b32.xlu0 %v2759, 56
  %v3712 = vpop.permute.xlu0 %3711
  %3713 = vrot.lane.b32.xlu0 %v2762, 56
  %v3714 = vpop.permute.xlu0 %3713
  %3715 = vrot.lane.b32.xlu0 %v2765, 56
  %v3716 = vpop.permute.xlu0 %3715
  %3717 = vrot.lane.b32.xlu0 %v2768, 56
  %v3718 = vpop.permute.xlu0 %3717
  %3719 = vrot.lane.b32.xlu0 %v2771, 56
  %v3720 = vpop.permute.xlu0 %3719
  %3721 = vrot.lane.b32.xlu0 %v2774, 56
  %v3722 = vpop.permute.xlu0 %3721
  %3739 = vmatpush.msra.mxu0 %v3722
  %3740 = vmatpush.msra.mxu0 %v3720
  %3741 = vmatpush.msra.mxu0 %v3718
  %3742 = vmatpush.msra.mxu0 %v3716
  %3743 = vmatpush.msra.mxu0 %v3714
  %3744 = vmatpush.msra.mxu0 %v3712
  %3745 = vmatpush.msra.mxu0 %v3710
  %3746 = vmatpush.msra.mxu0 %v3708
  %3747 = vmatpush.msra.mxu0 %v3706
  %3748 = vmatpush.msra.mxu0 %v3704
  %3749 = vmatpush.msra.mxu0 %v3702
  %3750 = vmatpush.msra.mxu0 %v3700
  %3751 = vmatpush.msra.mxu0 %v3698
  %3752 = vmatpush.msra.mxu0 %v3696
  %3753 = vmatpush.msra.mxu0 %v3694
  %3754 = vmatpush.msra.mxu0 %v3692
  %3755 = vmatmul.f32.gmra.mxu0 %v3675
  %v3756 = vpop.f32.mrf.mxu0
  %v3757 = vadd.f32 0.0, %v3756
  %3758 = vmatmul.f32.gmra.mxu0 %v3676
  %v3759 = vpop.f32.mrf.mxu0
  %v3760 = vadd.f32 0.0, %v3759
  %3761 = vmatmul.f32.gmra.mxu0 %v3677
  %v3762 = vpop.f32.mrf.mxu0
  %v3763 = vadd.f32 0.0, %v3762
  %3764 = vmatmul.f32.gmra.mxu0 %v3678
  %v3765 = vpop.f32.mrf.mxu0
  %v3766 = vadd.f32 0.0, %v3765
  %3767 = vmatmul.f32.gmra.mxu0 %v3679
  %v3768 = vpop.f32.mrf.mxu0
  %v3769 = vadd.f32 0.0, %v3768
  %3770 = vmatmul.f32.gmra.mxu0 %v3680
  %v3771 = vpop.f32.mrf.mxu0
  %v3772 = vadd.f32 0.0, %v3771
  %3773 = vmatmul.f32.gmra.mxu0 %v3681
  %v3774 = vpop.f32.mrf.mxu0
  %v3775 = vadd.f32 0.0, %v3774
  %3776 = vmatmul.f32.gmra.mxu0 %v3682
  %v3777 = vpop.f32.mrf.mxu0
  %v3778 = vadd.f32 0.0, %v3777
  %3779 = vmatmul.f32.gmra.mxu0 %v3683
  %v3780 = vpop.f32.mrf.mxu0
  %v3781 = vadd.f32 0.0, %v3780
  %3782 = vmatmul.f32.gmra.mxu0 %v3684
  %v3783 = vpop.f32.mrf.mxu0
  %v3784 = vadd.f32 0.0, %v3783
  %3785 = vmatmul.f32.gmra.mxu0 %v3685
  %v3786 = vpop.f32.mrf.mxu0
  %v3787 = vadd.f32 0.0, %v3786
  %3788 = vmatmul.f32.gmra.mxu0 %v3686
  %v3789 = vpop.f32.mrf.mxu0
  %v3790 = vadd.f32 0.0, %v3789
  %3791 = vmatmul.f32.gmra.mxu0 %v3687
  %v3792 = vpop.f32.mrf.mxu0
  %v3793 = vadd.f32 0.0, %v3792
  %3794 = vmatmul.f32.gmra.mxu0 %v3688
  %v3795 = vpop.f32.mrf.mxu0
  %v3796 = vadd.f32 0.0, %v3795
  %3797 = vmatmul.f32.gmra.mxu0 %v3689
  %v3798 = vpop.f32.mrf.mxu0
  %v3799 = vadd.f32 0.0, %v3798
  %3800 = vmatmul.f32.gmra.mxu0 %v3690
  %v3801 = vpop.f32.mrf.mxu0
  %v3802 = vadd.f32 0.0, %v3801
  %3803 = vdwg.mxu0
  %3820 = vrot.lane.b32.xlu0 %v3757, 8
  %v3821 = vpop.permute.xlu0 %3820
  %3822 = vrot.lane.b32.xlu0 %v3760, 8
  %v3823 = vpop.permute.xlu0 %3822
  %3824 = vrot.lane.b32.xlu0 %v3763, 8
  %v3825 = vpop.permute.xlu0 %3824
  %3826 = vrot.lane.b32.xlu0 %v3766, 8
  %v3827 = vpop.permute.xlu0 %3826
  %3828 = vrot.lane.b32.xlu0 %v3769, 8
  %v3829 = vpop.permute.xlu0 %3828
  %3830 = vrot.lane.b32.xlu0 %v3772, 8
  %v3831 = vpop.permute.xlu0 %3830
  %3832 = vrot.lane.b32.xlu0 %v3775, 8
  %v3833 = vpop.permute.xlu0 %3832
  %3834 = vrot.lane.b32.xlu0 %v3778, 8
  %v3835 = vpop.permute.xlu0 %3834
  %3836 = vrot.lane.b32.xlu0 %v3781, 8
  %v3837 = vpop.permute.xlu0 %3836
  %3838 = vrot.lane.b32.xlu0 %v3784, 8
  %v3839 = vpop.permute.xlu0 %3838
  %3840 = vrot.lane.b32.xlu0 %v3787, 8
  %v3841 = vpop.permute.xlu0 %3840
  %3842 = vrot.lane.b32.xlu0 %v3790, 8
  %v3843 = vpop.permute.xlu0 %3842
  %3844 = vrot.lane.b32.xlu0 %v3793, 8
  %v3845 = vpop.permute.xlu0 %3844
  %3846 = vrot.lane.b32.xlu0 %v3796, 8
  %v3847 = vpop.permute.xlu0 %3846
  %3848 = vrot.lane.b32.xlu0 %v3799, 8
  %v3849 = vpop.permute.xlu0 %3848
  %3850 = vrot.lane.b32.xlu0 %v3802, 8
  %v3851 = vpop.permute.xlu0 %3850
  %3868 = vst.msk [vmem:[#allocation2] sm:$0xff] %vm1383, %v3821
  %3869 = vst.msk [vmem:[#allocation2 + $0x8] sm:$0xff] %vm1383, %v3823
  %3870 = vst.msk [vmem:[#allocation2 + $0x10] sm:$0xff] %vm1383, %v3825
  %3871 = vst.msk [vmem:[#allocation2 + $0x18] sm:$0xff] %vm1383, %v3827
  %3872 = vst.msk [vmem:[#allocation2 + $0x20] sm:$0xff] %vm1383, %v3829
  %3873 = vst.msk [vmem:[#allocation2 + $0x28] sm:$0xff] %vm1383, %v3831
  %3874 = vst.msk [vmem:[#allocation2 + $0x30] sm:$0xff] %vm1383, %v3833
  %3875 = vst.msk [vmem:[#allocation2 + $0x38] sm:$0xff] %vm1383, %v3835
  %3876 = vst.msk [vmem:[#allocation2 + $0x40] sm:$0xff] %vm1383, %v3837
  %3877 = vst.msk [vmem:[#allocation2 + $0x48] sm:$0xff] %vm1383, %v3839
  %3878 = vst.msk [vmem:[#allocation2 + $0x50] sm:$0xff] %vm1383, %v3841
  %3879 = vst.msk [vmem:[#allocation2 + $0x58] sm:$0xff] %vm1383, %v3843
  %3880 = vst.msk [vmem:[#allocation2 + $0x60] sm:$0xff] %vm1383, %v3845
  %3881 = vst.msk [vmem:[#allocation2 + $0x68] sm:$0xff] %vm1383, %v3847
  %3882 = vst.msk [vmem:[#allocation2 + $0x70] sm:$0xff] %vm1383, %v3849
  %3883 = vst.msk [vmem:[#allocation2 + $0x78] sm:$0xff] %vm1383, %v3851
  %3884 = vrot.lane.b32.xlu0 %v2776, 112
  %v3885 = vpop.permute.xlu0 %3884
  %3886 = vrot.lane.b32.xlu0 %v2777, 112
  %v3887 = vpop.permute.xlu0 %3886
  %3888 = vrot.lane.b32.xlu0 %v2778, 112
  %v3889 = vpop.permute.xlu0 %3888
  %3890 = vrot.lane.b32.xlu0 %v2779, 112
  %v3891 = vpop.permute.xlu0 %3890
  %3892 = vrot.lane.b32.xlu0 %v2780, 112
  %v3893 = vpop.permute.xlu0 %3892
  %3894 = vrot.lane.b32.xlu0 %v2781, 112
  %v3895 = vpop.permute.xlu0 %3894
  %3896 = vrot.lane.b32.xlu0 %v2782, 112
  %v3897 = vpop.permute.xlu0 %3896
  %3898 = vrot.lane.b32.xlu0 %v2783, 112
  %v3899 = vpop.permute.xlu0 %3898
  %3900 = vrot.lane.b32.xlu0 %v2784, 112
  %v3901 = vpop.permute.xlu0 %3900
  %3902 = vrot.lane.b32.xlu0 %v2785, 112
  %v3903 = vpop.permute.xlu0 %3902
  %3904 = vrot.lane.b32.xlu0 %v2786, 112
  %v3905 = vpop.permute.xlu0 %3904
  %3906 = vrot.lane.b32.xlu0 %v2787, 112
  %v3907 = vpop.permute.xlu0 %3906
  %3908 = vrot.lane.b32.xlu0 %v2788, 112
  %v3909 = vpop.permute.xlu0 %3908
  %3910 = vrot.lane.b32.xlu0 %v2789, 112
  %v3911 = vpop.permute.xlu0 %3910
  %3912 = vrot.lane.b32.xlu0 %v2790, 112
  %v3913 = vpop.permute.xlu0 %3912
  %3914 = vrot.lane.b32.xlu0 %v2791, 112
  %v3915 = vpop.permute.xlu0 %3914
  %3916 = vrot.lane.b32.xlu0 %v2729, 80
  %v3917 = vpop.permute.xlu0 %3916
  %3918 = vrot.lane.b32.xlu0 %v2732, 80
  %v3919 = vpop.permute.xlu0 %3918
  %3920 = vrot.lane.b32.xlu0 %v2735, 80
  %v3921 = vpop.permute.xlu0 %3920
  %3922 = vrot.lane.b32.xlu0 %v2738, 80
  %v3923 = vpop.permute.xlu0 %3922
  %3924 = vrot.lane.b32.xlu0 %v2741, 80
  %v3925 = vpop.permute.xlu0 %3924
  %3926 = vrot.lane.b32.xlu0 %v2744, 80
  %v3927 = vpop.permute.xlu0 %3926
  %3928 = vrot.lane.b32.xlu0 %v2747, 80
  %v3929 = vpop.permute.xlu0 %3928
  %3930 = vrot.lane.b32.xlu0 %v2750, 80
  %v3931 = vpop.permute.xlu0 %3930
  %3932 = vrot.lane.b32.xlu0 %v2753, 80
  %v3933 = vpop.permute.xlu0 %3932
  %3934 = vrot.lane.b32.xlu0 %v2756, 80
  %v3935 = vpop.permute.xlu0 %3934
  %3936 = vrot.lane.b32.xlu0 %v2759, 80
  %v3937 = vpop.permute.xlu0 %3936
  %3938 = vrot.lane.b32.xlu0 %v2762, 80
  %v3939 = vpop.permute.xlu0 %3938
  %3940 = vrot.lane.b32.xlu0 %v2765, 80
  %v3941 = vpop.permute.xlu0 %3940
  %3942 = vrot.lane.b32.xlu0 %v2768, 80
  %v3943 = vpop.permute.xlu0 %3942
  %3944 = vrot.lane.b32.xlu0 %v2771, 80
  %v3945 = vpop.permute.xlu0 %3944
  %3946 = vrot.lane.b32.xlu0 %v2774, 80
  %v3947 = vpop.permute.xlu0 %3946
  %v3948 = vsel %vm354, %v3885, 0
  %v3950 = vsel %vm354, %v3887, 0
  %v3952 = vsel %vm354, %v3889, 0
  %v3954 = vsel %vm354, %v3891, 0
  %v3956 = vsel %vm354, %v3893, 0
  %v3958 = vsel %vm354, %v3895, 0
  %v3960 = vsel %vm354, %v3897, 0
  %v3962 = vsel %vm354, %v3899, 0
  %v3964 = vsel %vm354, %v3901, 0
  %v3966 = vsel %vm354, %v3903, 0
  %v3968 = vsel %vm354, %v3905, 0
  %v3970 = vsel %vm354, %v3907, 0
  %v3972 = vsel %vm354, %v3909, 0
  %v3974 = vsel %vm354, %v3911, 0
  %v3976 = vsel %vm354, %v3913, 0
  %v3978 = vsel %vm354, %v3915, 0
  %v3980 = vsel %vm354, %v3917, 0
  %v3982 = vsel %vm354, %v3919, 0
  %v3984 = vsel %vm354, %v3921, 0
  %v3986 = vsel %vm354, %v3923, 0
  %v3988 = vsel %vm354, %v3925, 0
  %v3990 = vsel %vm354, %v3927, 0
  %v3992 = vsel %vm354, %v3929, 0
  %v3994 = vsel %vm354, %v3931, 0
  %v3996 = vsel %vm354, %v3933, 0
  %v3998 = vsel %vm354, %v3935, 0
  %v4000 = vsel %vm354, %v3937, 0
  %v4002 = vsel %vm354, %v3939, 0
  %v4004 = vsel %vm354, %v3941, 0
  %v4006 = vsel %vm354, %v3943, 0
  %v4008 = vsel %vm354, %v3945, 0
  %v4010 = vsel %vm354, %v3947, 0
  %4012 = vmatpush.xpose.msra.mxu0 %v4010
  %4013 = vmatpush.xpose.msra.mxu0 %v4008
  %4014 = vmatpush.xpose.msra.mxu0 %v4006
  %4015 = vmatpush.xpose.msra.mxu0 %v4004
  %4016 = vmatpush.xpose.msra.mxu0 %v4002
  %4017 = vmatpush.xpose.msra.mxu0 %v4000
  %4018 = vmatpush.xpose.msra.mxu0 %v3998
  %4019 = vmatpush.xpose.msra.mxu0 %v3996
  %4020 = vmatpush.xpose.msra.mxu0 %v3994
  %4021 = vmatpush.xpose.msra.mxu0 %v3992
  %4022 = vmatpush.xpose.msra.mxu0 %v3990
  %4023 = vmatpush.xpose.msra.mxu0 %v3988
  %4024 = vmatpush.xpose.msra.mxu0 %v3986
  %4025 = vmatpush.xpose.msra.mxu0 %v3984
  %4026 = vmatpush.xpose.msra.mxu0 %v3982
  %4027 = vmatpush.xpose.msra.mxu0 %v3980
  %4028 = vmatmul.f32.gmra.mxu0 %v3948
  %v4029 = vpop.f32.mrf.mxu0
  %v4030 = vadd.f32 %v138, %v4029
  %4031 = vmatmul.f32.gmra.mxu0 %v3950
  %v4032 = vpop.f32.mrf.mxu0
  %v4033 = vadd.f32 %v139, %v4032
  %4034 = vmatmul.f32.gmra.mxu0 %v3952
  %v4035 = vpop.f32.mrf.mxu0
  %v4036 = vadd.f32 %v140, %v4035
  %4037 = vmatmul.f32.gmra.mxu0 %v3954
  %v4038 = vpop.f32.mrf.mxu0
  %v4039 = vadd.f32 %v141, %v4038
  %4040 = vmatmul.f32.gmra.mxu0 %v3956
  %v4041 = vpop.f32.mrf.mxu0
  %v4042 = vadd.f32 %v142, %v4041
  %4043 = vmatmul.f32.gmra.mxu0 %v3958
  %v4044 = vpop.f32.mrf.mxu0
  %v4045 = vadd.f32 %v143, %v4044
  %4046 = vmatmul.f32.gmra.mxu0 %v3960
  %v4047 = vpop.f32.mrf.mxu0
  %v4048 = vadd.f32 %v144, %v4047
  %4049 = vmatmul.f32.gmra.mxu0 %v3962
  %v4050 = vpop.f32.mrf.mxu0
  %v4051 = vadd.f32 %v145, %v4050
  %4052 = vmatmul.f32.gmra.mxu0 %v3964
  %v4053 = vpop.f32.mrf.mxu0
  %v4054 = vadd.f32 %v146, %v4053
  %4055 = vmatmul.f32.gmra.mxu0 %v3966
  %v4056 = vpop.f32.mrf.mxu0
  %v4057 = vadd.f32 %v147, %v4056
  %4058 = vmatmul.f32.gmra.mxu0 %v3968
  %v4059 = vpop.f32.mrf.mxu0
  %v4060 = vadd.f32 %v148, %v4059
  %4061 = vmatmul.f32.gmra.mxu0 %v3970
  %v4062 = vpop.f32.mrf.mxu0
  %v4063 = vadd.f32 %v149, %v4062
  %4064 = vmatmul.f32.gmra.mxu0 %v3972
  %v4065 = vpop.f32.mrf.mxu0
  %v4066 = vadd.f32 %v150, %v4065
  %4067 = vmatmul.f32.gmra.mxu0 %v3974
  %v4068 = vpop.f32.mrf.mxu0
  %v4069 = vadd.f32 %v151, %v4068
  %4070 = vmatmul.f32.gmra.mxu0 %v3976
  %v4071 = vpop.f32.mrf.mxu0
  %v4072 = vadd.f32 %v152, %v4071
  %4073 = vmatmul.f32.gmra.mxu0 %v3978
  %v4074 = vpop.f32.mrf.mxu0
  %v4075 = vadd.f32 %v153, %v4074
  %4076 = vdwg.mxu0
  %4077 = vmax.xlane.f32.xlu0 %v4030
  %v4078 = vpop.xlane.xlu0 %4077
  %4079 = vmax.xlane.f32.xlu0 %v4033
  %v4080 = vpop.xlane.xlu0 %4079
  %4081 = vmax.xlane.f32.xlu0 %v4036
  %v4082 = vpop.xlane.xlu0 %4081
  %4083 = vmax.xlane.f32.xlu0 %v4039
  %v4084 = vpop.xlane.xlu0 %4083
  %4085 = vmax.xlane.f32.xlu0 %v4042
  %v4086 = vpop.xlane.xlu0 %4085
  %4087 = vmax.xlane.f32.xlu0 %v4045
  %v4088 = vpop.xlane.xlu0 %4087
  %4089 = vmax.xlane.f32.xlu0 %v4048
  %v4090 = vpop.xlane.xlu0 %4089
  %4091 = vmax.xlane.f32.xlu0 %v4051
  %v4092 = vpop.xlane.xlu0 %4091
  %4093 = vmax.xlane.f32.xlu0 %v4054
  %v4094 = vpop.xlane.xlu0 %4093
  %4095 = vmax.xlane.f32.xlu0 %v4057
  %v4096 = vpop.xlane.xlu0 %4095
  %4097 = vmax.xlane.f32.xlu0 %v4060
  %v4098 = vpop.xlane.xlu0 %4097
  %4099 = vmax.xlane.f32.xlu0 %v4063
  %v4100 = vpop.xlane.xlu0 %4099
  %4101 = vmax.xlane.f32.xlu0 %v4066
  %v4102 = vpop.xlane.xlu0 %4101
  %4103 = vmax.xlane.f32.xlu0 %v4069
  %v4104 = vpop.xlane.xlu0 %4103
  %4105 = vmax.xlane.f32.xlu0 %v4072
  %v4106 = vpop.xlane.xlu0 %4105
  %4107 = vmax.xlane.f32.xlu0 %v4075
  %v4108 = vpop.xlane.xlu0 %4107
  %v4109 = vsub.f32 %v4030, %v4078
  %v4110 = vsub.f32 %v4033, %v4080
  %v4111 = vsub.f32 %v4036, %v4082
  %v4112 = vsub.f32 %v4039, %v4084
  %v4113 = vsub.f32 %v4042, %v4086
  %v4114 = vsub.f32 %v4045, %v4088
  %v4115 = vsub.f32 %v4048, %v4090
  %v4116 = vsub.f32 %v4051, %v4092
  %v4117 = vsub.f32 %v4054, %v4094
  %v4118 = vsub.f32 %v4057, %v4096
  %v4119 = vsub.f32 %v4060, %v4098
  %v4120 = vsub.f32 %v4063, %v4100
  %v4121 = vsub.f32 %v4066, %v4102
  %v4122 = vsub.f32 %v4069, %v4104
  %v4123 = vsub.f32 %v4072, %v4106
  %v4124 = vsub.f32 %v4075, %v4108
  %v4125 = vmul.f32 %v4109, 1.442695
  %v4126 = vpow.pop %v4125
  %v4127 = vmul.f32 %v4110, 1.442695
  %v4128 = vpow.pop %v4127
  %v4129 = vmul.f32 %v4111, 1.442695
  %v4130 = vpow.pop %v4129
  %v4131 = vmul.f32 %v4112, 1.442695
  %v4132 = vpow.pop %v4131
  %v4133 = vmul.f32 %v4113, 1.442695
  %v4134 = vpow.pop %v4133
  %v4135 = vmul.f32 %v4114, 1.442695
  %v4136 = vpow.pop %v4135
  %v4137 = vmul.f32 %v4115, 1.442695
  %v4138 = vpow.pop %v4137
  %v4139 = vmul.f32 %v4116, 1.442695
  %v4140 = vpow.pop %v4139
  %v4141 = vmul.f32 %v4117, 1.442695
  %v4142 = vpow.pop %v4141
  %v4143 = vmul.f32 %v4118, 1.442695
  %v4144 = vpow.pop %v4143
  %v4145 = vmul.f32 %v4119, 1.442695
  %v4146 = vpow.pop %v4145
  %v4147 = vmul.f32 %v4120, 1.442695
  %v4148 = vpow.pop %v4147
  %v4149 = vmul.f32 %v4121, 1.442695
  %v4150 = vpow.pop %v4149
  %v4151 = vmul.f32 %v4122, 1.442695
  %v4152 = vpow.pop %v4151
  %v4153 = vmul.f32 %v4123, 1.442695
  %v4154 = vpow.pop %v4153
  %v4155 = vmul.f32 %v4124, 1.442695
  %v4156 = vpow.pop %v4155
  %v4157 = vmul.f32 %v4126, %v106
  %v4158 = vmul.f32 %v4128, %v107
  %v4159 = vmul.f32 %v4130, %v108
  %v4160 = vmul.f32 %v4132, %v109
  %v4161 = vmul.f32 %v4134, %v110
  %v4162 = vmul.f32 %v4136, %v111
  %v4163 = vmul.f32 %v4138, %v112
  %v4164 = vmul.f32 %v4140, %v113
  %v4165 = vmul.f32 %v4142, %v114
  %v4166 = vmul.f32 %v4144, %v115
  %v4167 = vmul.f32 %v4146, %v116
  %v4168 = vmul.f32 %v4148, %v117
  %v4169 = vmul.f32 %v4150, %v118
  %v4170 = vmul.f32 %v4152, %v119
  %v4171 = vmul.f32 %v4154, %v120
  %v4172 = vmul.f32 %v4156, %v121
  %4173 = vadd.xlane.f32.xlu0 %v4157
  %v4174 = vpop.xlane.xlu0 %4173
  %4175 = vadd.xlane.f32.xlu0 %v4158
  %v4176 = vpop.xlane.xlu0 %4175
  %4177 = vadd.xlane.f32.xlu0 %v4159
  %v4178 = vpop.xlane.xlu0 %4177
  %4179 = vadd.xlane.f32.xlu0 %v4160
  %v4180 = vpop.xlane.xlu0 %4179
  %4181 = vadd.xlane.f32.xlu0 %v4161
  %v4182 = vpop.xlane.xlu0 %4181
  %4183 = vadd.xlane.f32.xlu0 %v4162
  %v4184 = vpop.xlane.xlu0 %4183
  %4185 = vadd.xlane.f32.xlu0 %v4163
  %v4186 = vpop.xlane.xlu0 %4185
  %4187 = vadd.xlane.f32.xlu0 %v4164
  %v4188 = vpop.xlane.xlu0 %4187
  %4189 = vadd.xlane.f32.xlu0 %v4165
  %v4190 = vpop.xlane.xlu0 %4189
  %4191 = vadd.xlane.f32.xlu0 %v4166
  %v4192 = vpop.xlane.xlu0 %4191
  %4193 = vadd.xlane.f32.xlu0 %v4167
  %v4194 = vpop.xlane.xlu0 %4193
  %4195 = vadd.xlane.f32.xlu0 %v4168
  %v4196 = vpop.xlane.xlu0 %4195
  %4197 = vadd.xlane.f32.xlu0 %v4169
  %v4198 = vpop.xlane.xlu0 %4197
  %4199 = vadd.xlane.f32.xlu0 %v4170
  %v4200 = vpop.xlane.xlu0 %4199
  %4201 = vadd.xlane.f32.xlu0 %v4171
  %v4202 = vpop.xlane.xlu0 %4201
  %4203 = vadd.xlane.f32.xlu0 %v4172
  %v4204 = vpop.xlane.xlu0 %4203
  %vm4205 = vcmp.gt.f32.partialorder %v4174, 0.0
  %vm4206 = vcmp.gt.f32.partialorder %v4176, 0.0
  %vm4207 = vcmp.gt.f32.partialorder %v4178, 0.0
  %vm4208 = vcmp.gt.f32.partialorder %v4180, 0.0
  %vm4209 = vcmp.gt.f32.partialorder %v4182, 0.0
  %vm4210 = vcmp.gt.f32.partialorder %v4184, 0.0
  %vm4211 = vcmp.gt.f32.partialorder %v4186, 0.0
  %vm4212 = vcmp.gt.f32.partialorder %v4188, 0.0
  %vm4213 = vcmp.gt.f32.partialorder %v4190, 0.0
  %vm4214 = vcmp.gt.f32.partialorder %v4192, 0.0
  %vm4215 = vcmp.gt.f32.partialorder %v4194, 0.0
  %vm4216 = vcmp.gt.f32.partialorder %v4196, 0.0
  %vm4217 = vcmp.gt.f32.partialorder %v4198, 0.0
  %vm4218 = vcmp.gt.f32.partialorder %v4200, 0.0
  %vm4219 = vcmp.gt.f32.partialorder %v4202, 0.0
  %vm4220 = vcmp.gt.f32.partialorder %v4204, 0.0
  %v4221 = vsel %vm4205, %v4174, 1.0
  %v4222 = vsel %vm4206, %v4176, 1.0
  %v4223 = vsel %vm4207, %v4178, 1.0
  %v4224 = vsel %vm4208, %v4180, 1.0
  %v4225 = vsel %vm4209, %v4182, 1.0
  %v4226 = vsel %vm4210, %v4184, 1.0
  %v4227 = vsel %vm4211, %v4186, 1.0
  %v4228 = vsel %vm4212, %v4188, 1.0
  %v4229 = vsel %vm4213, %v4190, 1.0
  %v4230 = vsel %vm4214, %v4192, 1.0
  %v4231 = vsel %vm4215, %v4194, 1.0
  %v4232 = vsel %vm4216, %v4196, 1.0
  %v4233 = vsel %vm4217, %v4198, 1.0
  %v4234 = vsel %vm4218, %v4200, 1.0
  %v4235 = vsel %vm4219, %v4202, 1.0
  %v4236 = vsel %vm4220, %v4204, 1.0
  %v4237 = vrcp.pop %v4221
  %v4238 = vrcp.pop %v4222
  %v4239 = vrcp.pop %v4223
  %v4240 = vrcp.pop %v4224
  %v4241 = vrcp.pop %v4225
  %v4242 = vrcp.pop %v4226
  %v4243 = vrcp.pop %v4227
  %v4244 = vrcp.pop %v4228
  %v4245 = vrcp.pop %v4229
  %v4246 = vrcp.pop %v4230
  %v4247 = vrcp.pop %v4231
  %v4248 = vrcp.pop %v4232
  %v4249 = vrcp.pop %v4233
  %v4250 = vrcp.pop %v4234
  %v4251 = vrcp.pop %v4235
  %v4252 = vrcp.pop %v4236
  %v4253 = vmul.f32 %v4157, %v4237
  %v4254 = vmul.f32 %v4158, %v4238
  %v4255 = vmul.f32 %v4159, %v4239
  %v4256 = vmul.f32 %v4160, %v4240
  %v4257 = vmul.f32 %v4161, %v4241
  %v4258 = vmul.f32 %v4162, %v4242
  %v4259 = vmul.f32 %v4163, %v4243
  %v4260 = vmul.f32 %v4164, %v4244
  %v4261 = vmul.f32 %v4165, %v4245
  %v4262 = vmul.f32 %v4166, %v4246
  %v4263 = vmul.f32 %v4167, %v4247
  %v4264 = vmul.f32 %v4168, %v4248
  %v4265 = vmul.f32 %v4169, %v4249
  %v4266 = vmul.f32 %v4170, %v4250
  %v4267 = vmul.f32 %v4171, %v4251
  %v4268 = vmul.f32 %v4172, %v4252
  %4269 = vrot.lane.b32.xlu0 %v2729, 48
  %v4270 = vpop.permute.xlu0 %4269
  %4271 = vrot.lane.b32.xlu0 %v2732, 48
  %v4272 = vpop.permute.xlu0 %4271
  %4273 = vrot.lane.b32.xlu0 %v2735, 48
  %v4274 = vpop.permute.xlu0 %4273
  %4275 = vrot.lane.b32.xlu0 %v2738, 48
  %v4276 = vpop.permute.xlu0 %4275
  %4277 = vrot.lane.b32.xlu0 %v2741, 48
  %v4278 = vpop.permute.xlu0 %4277
  %4279 = vrot.lane.b32.xlu0 %v2744, 48
  %v4280 = vpop.permute.xlu0 %4279
  %4281 = vrot.lane.b32.xlu0 %v2747, 48
  %v4282 = vpop.permute.xlu0 %4281
  %4283 = vrot.lane.b32.xlu0 %v2750, 48
  %v4284 = vpop.permute.xlu0 %4283
  %4285 = vrot.lane.b32.xlu0 %v2753, 48
  %v4286 = vpop.permute.xlu0 %4285
  %4287 = vrot.lane.b32.xlu0 %v2756, 48
  %v4288 = vpop.permute.xlu0 %4287
  %4289 = vrot.lane.b32.xlu0 %v2759, 48
  %v4290 = vpop.permute.xlu0 %4289
  %4291 = vrot.lane.b32.xlu0 %v2762, 48
  %v4292 = vpop.permute.xlu0 %4291
  %4293 = vrot.lane.b32.xlu0 %v2765, 48
  %v4294 = vpop.permute.xlu0 %4293
  %4295 = vrot.lane.b32.xlu0 %v2768, 48
  %v4296 = vpop.permute.xlu0 %4295
  %4297 = vrot.lane.b32.xlu0 %v2771, 48
  %v4298 = vpop.permute.xlu0 %4297
  %4299 = vrot.lane.b32.xlu0 %v2774, 48
  %v4300 = vpop.permute.xlu0 %4299
  %4317 = vmatpush.msra.mxu0 %v4300
  %4318 = vmatpush.msra.mxu0 %v4298
  %4319 = vmatpush.msra.mxu0 %v4296
  %4320 = vmatpush.msra.mxu0 %v4294
  %4321 = vmatpush.msra.mxu0 %v4292
  %4322 = vmatpush.msra.mxu0 %v4290
  %4323 = vmatpush.msra.mxu0 %v4288
  %4324 = vmatpush.msra.mxu0 %v4286
  %4325 = vmatpush.msra.mxu0 %v4284
  %4326 = vmatpush.msra.mxu0 %v4282
  %4327 = vmatpush.msra.mxu0 %v4280
  %4328 = vmatpush.msra.mxu0 %v4278
  %4329 = vmatpush.msra.mxu0 %v4276
  %4330 = vmatpush.msra.mxu0 %v4274
  %4331 = vmatpush.msra.mxu0 %v4272
  %4332 = vmatpush.msra.mxu0 %v4270
  %4333 = vmatmul.f32.gmra.mxu0 %v4253
  %v4334 = vpop.f32.mrf.mxu0
  %v4335 = vadd.f32 0.0, %v4334
  %4336 = vmatmul.f32.gmra.mxu0 %v4254
  %v4337 = vpop.f32.mrf.mxu0
  %v4338 = vadd.f32 0.0, %v4337
  %4339 = vmatmul.f32.gmra.mxu0 %v4255
  %v4340 = vpop.f32.mrf.mxu0
  %v4341 = vadd.f32 0.0, %v4340
  %4342 = vmatmul.f32.gmra.mxu0 %v4256
  %v4343 = vpop.f32.mrf.mxu0
  %v4344 = vadd.f32 0.0, %v4343
  %4345 = vmatmul.f32.gmra.mxu0 %v4257
  %v4346 = vpop.f32.mrf.mxu0
  %v4347 = vadd.f32 0.0, %v4346
  %4348 = vmatmul.f32.gmra.mxu0 %v4258
  %v4349 = vpop.f32.mrf.mxu0
  %v4350 = vadd.f32 0.0, %v4349
  %4351 = vmatmul.f32.gmra.mxu0 %v4259
  %v4352 = vpop.f32.mrf.mxu0
  %v4353 = vadd.f32 0.0, %v4352
  %4354 = vmatmul.f32.gmra.mxu0 %v4260
  %v4355 = vpop.f32.mrf.mxu0
  %v4356 = vadd.f32 0.0, %v4355
  %4357 = vmatmul.f32.gmra.mxu0 %v4261
  %v4358 = vpop.f32.mrf.mxu0
  %v4359 = vadd.f32 0.0, %v4358
  %4360 = vmatmul.f32.gmra.mxu0 %v4262
  %v4361 = vpop.f32.mrf.mxu0
  %v4362 = vadd.f32 0.0, %v4361
  %4363 = vmatmul.f32.gmra.mxu0 %v4263
  %v4364 = vpop.f32.mrf.mxu0
  %v4365 = vadd.f32 0.0, %v4364
  %4366 = vmatmul.f32.gmra.mxu0 %v4264
  %v4367 = vpop.f32.mrf.mxu0
  %v4368 = vadd.f32 0.0, %v4367
  %4369 = vmatmul.f32.gmra.mxu0 %v4265
  %v4370 = vpop.f32.mrf.mxu0
  %v4371 = vadd.f32 0.0, %v4370
  %4372 = vmatmul.f32.gmra.mxu0 %v4266
  %v4373 = vpop.f32.mrf.mxu0
  %v4374 = vadd.f32 0.0, %v4373
  %4375 = vmatmul.f32.gmra.mxu0 %v4267
  %v4376 = vpop.f32.mrf.mxu0
  %v4377 = vadd.f32 0.0, %v4376
  %4378 = vmatmul.f32.gmra.mxu0 %v4268
  %v4379 = vpop.f32.mrf.mxu0
  %v4380 = vadd.f32 0.0, %v4379
  %4381 = vdwg.mxu0
  %4398 = vrot.lane.b32.xlu0 %v4335, 16
  %v4399 = vpop.permute.xlu0 %4398
  %4400 = vrot.lane.b32.xlu0 %v4338, 16
  %v4401 = vpop.permute.xlu0 %4400
  %4402 = vrot.lane.b32.xlu0 %v4341, 16
  %v4403 = vpop.permute.xlu0 %4402
  %4404 = vrot.lane.b32.xlu0 %v4344, 16
  %v4405 = vpop.permute.xlu0 %4404
  %4406 = vrot.lane.b32.xlu0 %v4347, 16
  %v4407 = vpop.permute.xlu0 %4406
  %4408 = vrot.lane.b32.xlu0 %v4350, 16
  %v4409 = vpop.permute.xlu0 %4408
  %4410 = vrot.lane.b32.xlu0 %v4353, 16
  %v4411 = vpop.permute.xlu0 %4410
  %4412 = vrot.lane.b32.xlu0 %v4356, 16
  %v4413 = vpop.permute.xlu0 %4412
  %4414 = vrot.lane.b32.xlu0 %v4359, 16
  %v4415 = vpop.permute.xlu0 %4414
  %4416 = vrot.lane.b32.xlu0 %v4362, 16
  %v4417 = vpop.permute.xlu0 %4416
  %4418 = vrot.lane.b32.xlu0 %v4365, 16
  %v4419 = vpop.permute.xlu0 %4418
  %4420 = vrot.lane.b32.xlu0 %v4368, 16
  %v4421 = vpop.permute.xlu0 %4420
  %4422 = vrot.lane.b32.xlu0 %v4371, 16
  %v4423 = vpop.permute.xlu0 %4422
  %4424 = vrot.lane.b32.xlu0 %v4374, 16
  %v4425 = vpop.permute.xlu0 %4424
  %4426 = vrot.lane.b32.xlu0 %v4377, 16
  %v4427 = vpop.permute.xlu0 %4426
  %4428 = vrot.lane.b32.xlu0 %v4380, 16
  %v4429 = vpop.permute.xlu0 %4428
  %4446 = vst.msk [vmem:[#allocation2] sm:$0xff] %vm1962, %v4399
  %4447 = vst.msk [vmem:[#allocation2 + $0x8] sm:$0xff] %vm1962, %v4401
  %4448 = vst.msk [vmem:[#allocation2 + $0x10] sm:$0xff] %vm1962, %v4403
  %4449 = vst.msk [vmem:[#allocation2 + $0x18] sm:$0xff] %vm1962, %v4405
  %4450 = vst.msk [vmem:[#allocation2 + $0x20] sm:$0xff] %vm1962, %v4407
  %4451 = vst.msk [vmem:[#allocation2 + $0x28] sm:$0xff] %vm1962, %v4409
  %4452 = vst.msk [vmem:[#allocation2 + $0x30] sm:$0xff] %vm1962, %v4411
  %4453 = vst.msk [vmem:[#allocation2 + $0x38] sm:$0xff] %vm1962, %v4413
  %4454 = vst.msk [vmem:[#allocation2 + $0x40] sm:$0xff] %vm1962, %v4415
  %4455 = vst.msk [vmem:[#allocation2 + $0x48] sm:$0xff] %vm1962, %v4417
  %4456 = vst.msk [vmem:[#allocation2 + $0x50] sm:$0xff] %vm1962, %v4419
  %4457 = vst.msk [vmem:[#allocation2 + $0x58] sm:$0xff] %vm1962, %v4421
  %4458 = vst.msk [vmem:[#allocation2 + $0x60] sm:$0xff] %vm1962, %v4423
  %4459 = vst.msk [vmem:[#allocation2 + $0x68] sm:$0xff] %vm1962, %v4425
  %4460 = vst.msk [vmem:[#allocation2 + $0x70] sm:$0xff] %vm1962, %v4427
  %4461 = vst.msk [vmem:[#allocation2 + $0x78] sm:$0xff] %vm1962, %v4429
  %4462 = vrot.lane.b32.xlu0 %v2776, 104
  %v4463 = vpop.permute.xlu0 %4462
  %4464 = vrot.lane.b32.xlu0 %v2777, 104
  %v4465 = vpop.permute.xlu0 %4464
  %4466 = vrot.lane.b32.xlu0 %v2778, 104
  %v4467 = vpop.permute.xlu0 %4466
  %4468 = vrot.lane.b32.xlu0 %v2779, 104
  %v4469 = vpop.permute.xlu0 %4468
  %4470 = vrot.lane.b32.xlu0 %v2780, 104
  %v4471 = vpop.permute.xlu0 %4470
  %4472 = vrot.lane.b32.xlu0 %v2781, 104
  %v4473 = vpop.permute.xlu0 %4472
  %4474 = vrot.lane.b32.xlu0 %v2782, 104
  %v4475 = vpop.permute.xlu0 %4474
  %4476 = vrot.lane.b32.xlu0 %v2783, 104
  %v4477 = vpop.permute.xlu0 %4476
  %4478 = vrot.lane.b32.xlu0 %v2784, 104
  %v4479 = vpop.permute.xlu0 %4478
  %4480 = vrot.lane.b32.xlu0 %v2785, 104
  %v4481 = vpop.permute.xlu0 %4480
  %4482 = vrot.lane.b32.xlu0 %v2786, 104
  %v4483 = vpop.permute.xlu0 %4482
  %4484 = vrot.lane.b32.xlu0 %v2787, 104
  %v4485 = vpop.permute.xlu0 %4484
  %4486 = vrot.lane.b32.xlu0 %v2788, 104
  %v4487 = vpop.permute.xlu0 %4486
  %4488 = vrot.lane.b32.xlu0 %v2789, 104
  %v4489 = vpop.permute.xlu0 %4488
  %4490 = vrot.lane.b32.xlu0 %v2790, 104
  %v4491 = vpop.permute.xlu0 %4490
  %4492 = vrot.lane.b32.xlu0 %v2791, 104
  %v4493 = vpop.permute.xlu0 %4492
  %4494 = vrot.lane.b32.xlu0 %v2729, 72
  %v4495 = vpop.permute.xlu0 %4494
  %4496 = vrot.lane.b32.xlu0 %v2732, 72
  %v4497 = vpop.permute.xlu0 %4496
  %4498 = vrot.lane.b32.xlu0 %v2735, 72
  %v4499 = vpop.permute.xlu0 %4498
  %4500 = vrot.lane.b32.xlu0 %v2738, 72
  %v4501 = vpop.permute.xlu0 %4500
  %4502 = vrot.lane.b32.xlu0 %v2741, 72
  %v4503 = vpop.permute.xlu0 %4502
  %4504 = vrot.lane.b32.xlu0 %v2744, 72
  %v4505 = vpop.permute.xlu0 %4504
  %4506 = vrot.lane.b32.xlu0 %v2747, 72
  %v4507 = vpop.permute.xlu0 %4506
  %4508 = vrot.lane.b32.xlu0 %v2750, 72
  %v4509 = vpop.permute.xlu0 %4508
  %4510 = vrot.lane.b32.xlu0 %v2753, 72
  %v4511 = vpop.permute.xlu0 %4510
  %4512 = vrot.lane.b32.xlu0 %v2756, 72
  %v4513 = vpop.permute.xlu0 %4512
  %4514 = vrot.lane.b32.xlu0 %v2759, 72
  %v4515 = vpop.permute.xlu0 %4514
  %4516 = vrot.lane.b32.xlu0 %v2762, 72
  %v4517 = vpop.permute.xlu0 %4516
  %4518 = vrot.lane.b32.xlu0 %v2765, 72
  %v4519 = vpop.permute.xlu0 %4518
  %4520 = vrot.lane.b32.xlu0 %v2768, 72
  %v4521 = vpop.permute.xlu0 %4520
  %4522 = vrot.lane.b32.xlu0 %v2771, 72
  %v4523 = vpop.permute.xlu0 %4522
  %4524 = vrot.lane.b32.xlu0 %v2774, 72
  %v4525 = vpop.permute.xlu0 %4524
  %v4526 = vsel %vm354, %v4463, 0
  %v4528 = vsel %vm354, %v4465, 0
  %v4530 = vsel %vm354, %v4467, 0
  %v4532 = vsel %vm354, %v4469, 0
  %v4534 = vsel %vm354, %v4471, 0
  %v4536 = vsel %vm354, %v4473, 0
  %v4538 = vsel %vm354, %v4475, 0
  %v4540 = vsel %vm354, %v4477, 0
  %v4542 = vsel %vm354, %v4479, 0
  %v4544 = vsel %vm354, %v4481, 0
  %v4546 = vsel %vm354, %v4483, 0
  %v4548 = vsel %vm354, %v4485, 0
  %v4550 = vsel %vm354, %v4487, 0
  %v4552 = vsel %vm354, %v4489, 0
  %v4554 = vsel %vm354, %v4491, 0
  %v4556 = vsel %vm354, %v4493, 0
  %v4558 = vsel %vm354, %v4495, 0
  %v4560 = vsel %vm354, %v4497, 0
  %v4562 = vsel %vm354, %v4499, 0
  %v4564 = vsel %vm354, %v4501, 0
  %v4566 = vsel %vm354, %v4503, 0
  %v4568 = vsel %vm354, %v4505, 0
  %v4570 = vsel %vm354, %v4507, 0
  %v4572 = vsel %vm354, %v4509, 0
  %v4574 = vsel %vm354, %v4511, 0
  %v4576 = vsel %vm354, %v4513, 0
  %v4578 = vsel %vm354, %v4515, 0
  %v4580 = vsel %vm354, %v4517, 0
  %v4582 = vsel %vm354, %v4519, 0
  %v4584 = vsel %vm354, %v4521, 0
  %v4586 = vsel %vm354, %v4523, 0
  %v4588 = vsel %vm354, %v4525, 0
  %4590 = vmatpush.xpose.msra.mxu0 %v4588
  %4591 = vmatpush.xpose.msra.mxu0 %v4586
  %4592 = vmatpush.xpose.msra.mxu0 %v4584
  %4593 = vmatpush.xpose.msra.mxu0 %v4582
  %4594 = vmatpush.xpose.msra.mxu0 %v4580
  %4595 = vmatpush.xpose.msra.mxu0 %v4578
  %4596 = vmatpush.xpose.msra.mxu0 %v4576
  %4597 = vmatpush.xpose.msra.mxu0 %v4574
  %4598 = vmatpush.xpose.msra.mxu0 %v4572
  %4599 = vmatpush.xpose.msra.mxu0 %v4570
  %4600 = vmatpush.xpose.msra.mxu0 %v4568
  %4601 = vmatpush.xpose.msra.mxu0 %v4566
  %4602 = vmatpush.xpose.msra.mxu0 %v4564
  %4603 = vmatpush.xpose.msra.mxu0 %v4562
  %4604 = vmatpush.xpose.msra.mxu0 %v4560
  %4605 = vmatpush.xpose.msra.mxu0 %v4558
  %4606 = vmatmul.f32.gmra.mxu0 %v4526
  %v4607 = vpop.f32.mrf.mxu0
  %v4608 = vadd.f32 %v138, %v4607
  %4609 = vmatmul.f32.gmra.mxu0 %v4528
  %v4610 = vpop.f32.mrf.mxu0
  %v4611 = vadd.f32 %v139, %v4610
  %4612 = vmatmul.f32.gmra.mxu0 %v4530
  %v4613 = vpop.f32.mrf.mxu0
  %v4614 = vadd.f32 %v140, %v4613
  %4615 = vmatmul.f32.gmra.mxu0 %v4532
  %v4616 = vpop.f32.mrf.mxu0
  %v4617 = vadd.f32 %v141, %v4616
  %4618 = vmatmul.f32.gmra.mxu0 %v4534
  %v4619 = vpop.f32.mrf.mxu0
  %v4620 = vadd.f32 %v142, %v4619
  %4621 = vmatmul.f32.gmra.mxu0 %v4536
  %v4622 = vpop.f32.mrf.mxu0
  %v4623 = vadd.f32 %v143, %v4622
  %4624 = vmatmul.f32.gmra.mxu0 %v4538
  %v4625 = vpop.f32.mrf.mxu0
  %v4626 = vadd.f32 %v144, %v4625
  %4627 = vmatmul.f32.gmra.mxu0 %v4540
  %v4628 = vpop.f32.mrf.mxu0
  %v4629 = vadd.f32 %v145, %v4628
  %4630 = vmatmul.f32.gmra.mxu0 %v4542
  %v4631 = vpop.f32.mrf.mxu0
  %v4632 = vadd.f32 %v146, %v4631
  %4633 = vmatmul.f32.gmra.mxu0 %v4544
  %v4634 = vpop.f32.mrf.mxu0
  %v4635 = vadd.f32 %v147, %v4634
  %4636 = vmatmul.f32.gmra.mxu0 %v4546
  %v4637 = vpop.f32.mrf.mxu0
  %v4638 = vadd.f32 %v148, %v4637
  %4639 = vmatmul.f32.gmra.mxu0 %v4548
  %v4640 = vpop.f32.mrf.mxu0
  %v4641 = vadd.f32 %v149, %v4640
  %4642 = vmatmul.f32.gmra.mxu0 %v4550
  %v4643 = vpop.f32.mrf.mxu0
  %v4644 = vadd.f32 %v150, %v4643
  %4645 = vmatmul.f32.gmra.mxu0 %v4552
  %v4646 = vpop.f32.mrf.mxu0
  %v4647 = vadd.f32 %v151, %v4646
  %4648 = vmatmul.f32.gmra.mxu0 %v4554
  %v4649 = vpop.f32.mrf.mxu0
  %v4650 = vadd.f32 %v152, %v4649
  %4651 = vmatmul.f32.gmra.mxu0 %v4556
  %v4652 = vpop.f32.mrf.mxu0
  %v4653 = vadd.f32 %v153, %v4652
  %4654 = vdwg.mxu0
  %4655 = vmax.xlane.f32.xlu0 %v4608
  %v4656 = vpop.xlane.xlu0 %4655
  %4657 = vmax.xlane.f32.xlu0 %v4611
  %v4658 = vpop.xlane.xlu0 %4657
  %4659 = vmax.xlane.f32.xlu0 %v4614
  %v4660 = vpop.xlane.xlu0 %4659
  %4661 = vmax.xlane.f32.xlu0 %v4617
  %v4662 = vpop.xlane.xlu0 %4661
  %4663 = vmax.xlane.f32.xlu0 %v4620
  %v4664 = vpop.xlane.xlu0 %4663
  %4665 = vmax.xlane.f32.xlu0 %v4623
  %v4666 = vpop.xlane.xlu0 %4665
  %4667 = vmax.xlane.f32.xlu0 %v4626
  %v4668 = vpop.xlane.xlu0 %4667
  %4669 = vmax.xlane.f32.xlu0 %v4629
  %v4670 = vpop.xlane.xlu0 %4669
  %4671 = vmax.xlane.f32.xlu0 %v4632
  %v4672 = vpop.xlane.xlu0 %4671
  %4673 = vmax.xlane.f32.xlu0 %v4635
  %v4674 = vpop.xlane.xlu0 %4673
  %4675 = vmax.xlane.f32.xlu0 %v4638
  %v4676 = vpop.xlane.xlu0 %4675
  %4677 = vmax.xlane.f32.xlu0 %v4641
  %v4678 = vpop.xlane.xlu0 %4677
  %4679 = vmax.xlane.f32.xlu0 %v4644
  %v4680 = vpop.xlane.xlu0 %4679
  %4681 = vmax.xlane.f32.xlu0 %v4647
  %v4682 = vpop.xlane.xlu0 %4681
  %4683 = vmax.xlane.f32.xlu0 %v4650
  %v4684 = vpop.xlane.xlu0 %4683
  %4685 = vmax.xlane.f32.xlu0 %v4653
  %v4686 = vpop.xlane.xlu0 %4685
  %v4687 = vsub.f32 %v4608, %v4656
  %v4688 = vsub.f32 %v4611, %v4658
  %v4689 = vsub.f32 %v4614, %v4660
  %v4690 = vsub.f32 %v4617, %v4662
  %v4691 = vsub.f32 %v4620, %v4664
  %v4692 = vsub.f32 %v4623, %v4666
  %v4693 = vsub.f32 %v4626, %v4668
  %v4694 = vsub.f32 %v4629, %v4670
  %v4695 = vsub.f32 %v4632, %v4672
  %v4696 = vsub.f32 %v4635, %v4674
  %v4697 = vsub.f32 %v4638, %v4676
  %v4698 = vsub.f32 %v4641, %v4678
  %v4699 = vsub.f32 %v4644, %v4680
  %v4700 = vsub.f32 %v4647, %v4682
  %v4701 = vsub.f32 %v4650, %v4684
  %v4702 = vsub.f32 %v4653, %v4686
  %v4703 = vmul.f32 %v4687, 1.442695
  %v4704 = vpow.pop %v4703
  %v4705 = vmul.f32 %v4688, 1.442695
  %v4706 = vpow.pop %v4705
  %v4707 = vmul.f32 %v4689, 1.442695
  %v4708 = vpow.pop %v4707
  %v4709 = vmul.f32 %v4690, 1.442695
  %v4710 = vpow.pop %v4709
  %v4711 = vmul.f32 %v4691, 1.442695
  %v4712 = vpow.pop %v4711
  %v4713 = vmul.f32 %v4692, 1.442695
  %v4714 = vpow.pop %v4713
  %v4715 = vmul.f32 %v4693, 1.442695
  %v4716 = vpow.pop %v4715
  %v4717 = vmul.f32 %v4694, 1.442695
  %v4718 = vpow.pop %v4717
  %v4719 = vmul.f32 %v4695, 1.442695
  %v4720 = vpow.pop %v4719
  %v4721 = vmul.f32 %v4696, 1.442695
  %v4722 = vpow.pop %v4721
  %v4723 = vmul.f32 %v4697, 1.442695
  %v4724 = vpow.pop %v4723
  %v4725 = vmul.f32 %v4698, 1.442695
  %v4726 = vpow.pop %v4725
  %v4727 = vmul.f32 %v4699, 1.442695
  %v4728 = vpow.pop %v4727
  %v4729 = vmul.f32 %v4700, 1.442695
  %v4730 = vpow.pop %v4729
  %v4731 = vmul.f32 %v4701, 1.442695
  %v4732 = vpow.pop %v4731
  %v4733 = vmul.f32 %v4702, 1.442695
  %v4734 = vpow.pop %v4733
  %v4735 = vmul.f32 %v4704, %v106
  %v4736 = vmul.f32 %v4706, %v107
  %v4737 = vmul.f32 %v4708, %v108
  %v4738 = vmul.f32 %v4710, %v109
  %v4739 = vmul.f32 %v4712, %v110
  %v4740 = vmul.f32 %v4714, %v111
  %v4741 = vmul.f32 %v4716, %v112
  %v4742 = vmul.f32 %v4718, %v113
  %v4743 = vmul.f32 %v4720, %v114
  %v4744 = vmul.f32 %v4722, %v115
  %v4745 = vmul.f32 %v4724, %v116
  %v4746 = vmul.f32 %v4726, %v117
  %v4747 = vmul.f32 %v4728, %v118
  %v4748 = vmul.f32 %v4730, %v119
  %v4749 = vmul.f32 %v4732, %v120
  %v4750 = vmul.f32 %v4734, %v121
  %4751 = vadd.xlane.f32.xlu0 %v4735
  %v4752 = vpop.xlane.xlu0 %4751
  %4753 = vadd.xlane.f32.xlu0 %v4736
  %v4754 = vpop.xlane.xlu0 %4753
  %4755 = vadd.xlane.f32.xlu0 %v4737
  %v4756 = vpop.xlane.xlu0 %4755
  %4757 = vadd.xlane.f32.xlu0 %v4738
  %v4758 = vpop.xlane.xlu0 %4757
  %4759 = vadd.xlane.f32.xlu0 %v4739
  %v4760 = vpop.xlane.xlu0 %4759
  %4761 = vadd.xlane.f32.xlu0 %v4740
  %v4762 = vpop.xlane.xlu0 %4761
  %4763 = vadd.xlane.f32.xlu0 %v4741
  %v4764 = vpop.xlane.xlu0 %4763
  %4765 = vadd.xlane.f32.xlu0 %v4742
  %v4766 = vpop.xlane.xlu0 %4765
  %4767 = vadd.xlane.f32.xlu0 %v4743
  %v4768 = vpop.xlane.xlu0 %4767
  %4769 = vadd.xlane.f32.xlu0 %v4744
  %v4770 = vpop.xlane.xlu0 %4769
  %4771 = vadd.xlane.f32.xlu0 %v4745
  %v4772 = vpop.xlane.xlu0 %4771
  %4773 = vadd.xlane.f32.xlu0 %v4746
  %v4774 = vpop.xlane.xlu0 %4773
  %4775 = vadd.xlane.f32.xlu0 %v4747
  %v4776 = vpop.xlane.xlu0 %4775
  %4777 = vadd.xlane.f32.xlu0 %v4748
  %v4778 = vpop.xlane.xlu0 %4777
  %4779 = vadd.xlane.f32.xlu0 %v4749
  %v4780 = vpop.xlane.xlu0 %4779
  %4781 = vadd.xlane.f32.xlu0 %v4750
  %v4782 = vpop.xlane.xlu0 %4781
  %vm4783 = vcmp.gt.f32.partialorder %v4752, 0.0
  %vm4784 = vcmp.gt.f32.partialorder %v4754, 0.0
  %vm4785 = vcmp.gt.f32.partialorder %v4756, 0.0
  %vm4786 = vcmp.gt.f32.partialorder %v4758, 0.0
  %vm4787 = vcmp.gt.f32.partialorder %v4760, 0.0
  %vm4788 = vcmp.gt.f32.partialorder %v4762, 0.0
  %vm4789 = vcmp.gt.f32.partialorder %v4764, 0.0
  %vm4790 = vcmp.gt.f32.partialorder %v4766, 0.0
  %vm4791 = vcmp.gt.f32.partialorder %v4768, 0.0
  %vm4792 = vcmp.gt.f32.partialorder %v4770, 0.0
  %vm4793 = vcmp.gt.f32.partialorder %v4772, 0.0
  %vm4794 = vcmp.gt.f32.partialorder %v4774, 0.0
  %vm4795 = vcmp.gt.f32.partialorder %v4776, 0.0
  %vm4796 = vcmp.gt.f32.partialorder %v4778, 0.0
  %vm4797 = vcmp.gt.f32.partialorder %v4780, 0.0
  %vm4798 = vcmp.gt.f32.partialorder %v4782, 0.0
  %v4799 = vsel %vm4783, %v4752, 1.0
  %v4800 = vsel %vm4784, %v4754, 1.0
  %v4801 = vsel %vm4785, %v4756, 1.0
  %v4802 = vsel %vm4786, %v4758, 1.0
  %v4803 = vsel %vm4787, %v4760, 1.0
  %v4804 = vsel %vm4788, %v4762, 1.0
  %v4805 = vsel %vm4789, %v4764, 1.0
  %v4806 = vsel %vm4790, %v4766, 1.0
  %v4807 = vsel %vm4791, %v4768, 1.0
  %v4808 = vsel %vm4792, %v4770, 1.0
  %v4809 = vsel %vm4793, %v4772, 1.0
  %v4810 = vsel %vm4794, %v4774, 1.0
  %v4811 = vsel %vm4795, %v4776, 1.0
  %v4812 = vsel %vm4796, %v4778, 1.0
  %v4813 = vsel %vm4797, %v4780, 1.0
  %v4814 = vsel %vm4798, %v4782, 1.0
  %v4815 = vrcp.pop %v4799
  %v4816 = vrcp.pop %v4800
  %v4817 = vrcp.pop %v4801
  %v4818 = vrcp.pop %v4802
  %v4819 = vrcp.pop %v4803
  %v4820 = vrcp.pop %v4804
  %v4821 = vrcp.pop %v4805
  %v4822 = vrcp.pop %v4806
  %v4823 = vrcp.pop %v4807
  %v4824 = vrcp.pop %v4808
  %v4825 = vrcp.pop %v4809
  %v4826 = vrcp.pop %v4810
  %v4827 = vrcp.pop %v4811
  %v4828 = vrcp.pop %v4812
  %v4829 = vrcp.pop %v4813
  %v4830 = vrcp.pop %v4814
  %v4831 = vmul.f32 %v4735, %v4815
  %v4832 = vmul.f32 %v4736, %v4816
  %v4833 = vmul.f32 %v4737, %v4817
  %v4834 = vmul.f32 %v4738, %v4818
  %v4835 = vmul.f32 %v4739, %v4819
  %v4836 = vmul.f32 %v4740, %v4820
  %v4837 = vmul.f32 %v4741, %v4821
  %v4838 = vmul.f32 %v4742, %v4822
  %v4839 = vmul.f32 %v4743, %v4823
  %v4840 = vmul.f32 %v4744, %v4824
  %v4841 = vmul.f32 %v4745, %v4825
  %v4842 = vmul.f32 %v4746, %v4826
  %v4843 = vmul.f32 %v4747, %v4827
  %v4844 = vmul.f32 %v4748, %v4828
  %v4845 = vmul.f32 %v4749, %v4829
  %v4846 = vmul.f32 %v4750, %v4830
  %4847 = vrot.lane.b32.xlu0 %v2729, 40
  %v4848 = vpop.permute.xlu0 %4847
  %4849 = vrot.lane.b32.xlu0 %v2732, 40
  %v4850 = vpop.permute.xlu0 %4849
  %4851 = vrot.lane.b32.xlu0 %v2735, 40
  %v4852 = vpop.permute.xlu0 %4851
  %4853 = vrot.lane.b32.xlu0 %v2738, 40
  %v4854 = vpop.permute.xlu0 %4853
  %4855 = vrot.lane.b32.xlu0 %v2741, 40
  %v4856 = vpop.permute.xlu0 %4855
  %4857 = vrot.lane.b32.xlu0 %v2744, 40
  %v4858 = vpop.permute.xlu0 %4857
  %4859 = vrot.lane.b32.xlu0 %v2747, 40
  %v4860 = vpop.permute.xlu0 %4859
  %4861 = vrot.lane.b32.xlu0 %v2750, 40
  %v4862 = vpop.permute.xlu0 %4861
  %4863 = vrot.lane.b32.xlu0 %v2753, 40
  %v4864 = vpop.permute.xlu0 %4863
  %4865 = vrot.lane.b32.xlu0 %v2756, 40
  %v4866 = vpop.permute.xlu0 %4865
  %4867 = vrot.lane.b32.xlu0 %v2759, 40
  %v4868 = vpop.permute.xlu0 %4867
  %4869 = vrot.lane.b32.xlu0 %v2762, 40
  %v4870 = vpop.permute.xlu0 %4869
  %4871 = vrot.lane.b32.xlu0 %v2765, 40
  %v4872 = vpop.permute.xlu0 %4871
  %4873 = vrot.lane.b32.xlu0 %v2768, 40
  %v4874 = vpop.permute.xlu0 %4873
  %4875 = vrot.lane.b32.xlu0 %v2771, 40
  %v4876 = vpop.permute.xlu0 %4875
  %4877 = vrot.lane.b32.xlu0 %v2774, 40
  %v4878 = vpop.permute.xlu0 %4877
  %4895 = vmatpush.msra.mxu0 %v4878
  %4896 = vmatpush.msra.mxu0 %v4876
  %4897 = vmatpush.msra.mxu0 %v4874
  %4898 = vmatpush.msra.mxu0 %v4872
  %4899 = vmatpush.msra.mxu0 %v4870
  %4900 = vmatpush.msra.mxu0 %v4868
  %4901 = vmatpush.msra.mxu0 %v4866
  %4902 = vmatpush.msra.mxu0 %v4864
  %4903 = vmatpush.msra.mxu0 %v4862
  %4904 = vmatpush.msra.mxu0 %v4860
  %4905 = vmatpush.msra.mxu0 %v4858
  %4906 = vmatpush.msra.mxu0 %v4856
  %4907 = vmatpush.msra.mxu0 %v4854
  %4908 = vmatpush.msra.mxu0 %v4852
  %4909 = vmatpush.msra.mxu0 %v4850
  %4910 = vmatpush.msra.mxu0 %v4848
  %4911 = vmatmul.f32.gmra.mxu0 %v4831
  %v4912 = vpop.f32.mrf.mxu0
  %v4913 = vadd.f32 0.0, %v4912
  %4914 = vmatmul.f32.gmra.mxu0 %v4832
  %v4915 = vpop.f32.mrf.mxu0
  %v4916 = vadd.f32 0.0, %v4915
  %4917 = vmatmul.f32.gmra.mxu0 %v4833
  %v4918 = vpop.f32.mrf.mxu0
  %v4919 = vadd.f32 0.0, %v4918
  %4920 = vmatmul.f32.gmra.mxu0 %v4834
  %v4921 = vpop.f32.mrf.mxu0
  %v4922 = vadd.f32 0.0, %v4921
  %4923 = vmatmul.f32.gmra.mxu0 %v4835
  %v4924 = vpop.f32.mrf.mxu0
  %v4925 = vadd.f32 0.0, %v4924
  %4926 = vmatmul.f32.gmra.mxu0 %v4836
  %v4927 = vpop.f32.mrf.mxu0
  %v4928 = vadd.f32 0.0, %v4927
  %4929 = vmatmul.f32.gmra.mxu0 %v4837
  %v4930 = vpop.f32.mrf.mxu0
  %v4931 = vadd.f32 0.0, %v4930
  %4932 = vmatmul.f32.gmra.mxu0 %v4838
  %v4933 = vpop.f32.mrf.mxu0
  %v4934 = vadd.f32 0.0, %v4933
  %4935 = vmatmul.f32.gmra.mxu0 %v4839
  %v4936 = vpop.f32.mrf.mxu0
  %v4937 = vadd.f32 0.0, %v4936
  %4938 = vmatmul.f32.gmra.mxu0 %v4840
  %v4939 = vpop.f32.mrf.mxu0
  %v4940 = vadd.f32 0.0, %v4939
  %4941 = vmatmul.f32.gmra.mxu0 %v4841
  %v4942 = vpop.f32.mrf.mxu0
  %v4943 = vadd.f32 0.0, %v4942
  %4944 = vmatmul.f32.gmra.mxu0 %v4842
  %v4945 = vpop.f32.mrf.mxu0
  %v4946 = vadd.f32 0.0, %v4945
  %4947 = vmatmul.f32.gmra.mxu0 %v4843
  %v4948 = vpop.f32.mrf.mxu0
  %v4949 = vadd.f32 0.0, %v4948
  %4950 = vmatmul.f32.gmra.mxu0 %v4844
  %v4951 = vpop.f32.mrf.mxu0
  %v4952 = vadd.f32 0.0, %v4951
  %4953 = vmatmul.f32.gmra.mxu0 %v4845
  %v4954 = vpop.f32.mrf.mxu0
  %v4955 = vadd.f32 0.0, %v4954
  %4956 = vmatmul.f32.gmra.mxu0 %v4846
  %v4957 = vpop.f32.mrf.mxu0
  %v4958 = vadd.f32 0.0, %v4957
  %4959 = vdwg.mxu0
  %4976 = vrot.lane.b32.xlu0 %v4913, 24
  %v4977 = vpop.permute.xlu0 %4976
  %4978 = vrot.lane.b32.xlu0 %v4916, 24
  %v4979 = vpop.permute.xlu0 %4978
  %4980 = vrot.lane.b32.xlu0 %v4919, 24
  %v4981 = vpop.permute.xlu0 %4980
  %4982 = vrot.lane.b32.xlu0 %v4922, 24
  %v4983 = vpop.permute.xlu0 %4982
  %4984 = vrot.lane.b32.xlu0 %v4925, 24
  %v4985 = vpop.permute.xlu0 %4984
  %4986 = vrot.lane.b32.xlu0 %v4928, 24
  %v4987 = vpop.permute.xlu0 %4986
  %4988 = vrot.lane.b32.xlu0 %v4931, 24
  %v4989 = vpop.permute.xlu0 %4988
  %4990 = vrot.lane.b32.xlu0 %v4934, 24
  %v4991 = vpop.permute.xlu0 %4990
  %4992 = vrot.lane.b32.xlu0 %v4937, 24
  %v4993 = vpop.permute.xlu0 %4992
  %4994 = vrot.lane.b32.xlu0 %v4940, 24
  %v4995 = vpop.permute.xlu0 %4994
  %4996 = vrot.lane.b32.xlu0 %v4943, 24
  %v4997 = vpop.permute.xlu0 %4996
  %4998 = vrot.lane.b32.xlu0 %v4946, 24
  %v4999 = vpop.permute.xlu0 %4998
  %5000 = vrot.lane.b32.xlu0 %v4949, 24
  %v5001 = vpop.permute.xlu0 %5000
  %5002 = vrot.lane.b32.xlu0 %v4952, 24
  %v5003 = vpop.permute.xlu0 %5002
  %5004 = vrot.lane.b32.xlu0 %v4955, 24
  %v5005 = vpop.permute.xlu0 %5004
  %5006 = vrot.lane.b32.xlu0 %v4958, 24
  %v5007 = vpop.permute.xlu0 %5006
  %5024 = vst.msk [vmem:[#allocation2] sm:$0xff] %vm2541, %v4977
  %5025 = vst.msk [vmem:[#allocation2 + $0x8] sm:$0xff] %vm2541, %v4979
  %5026 = vst.msk [vmem:[#allocation2 + $0x10] sm:$0xff] %vm2541, %v4981
  %5027 = vst.msk [vmem:[#allocation2 + $0x18] sm:$0xff] %vm2541, %v4983
  %5028 = vst.msk [vmem:[#allocation2 + $0x20] sm:$0xff] %vm2541, %v4985
  %5029 = vst.msk [vmem:[#allocation2 + $0x28] sm:$0xff] %vm2541, %v4987
  %5030 = vst.msk [vmem:[#allocation2 + $0x30] sm:$0xff] %vm2541, %v4989
  %5031 = vst.msk [vmem:[#allocation2 + $0x38] sm:$0xff] %vm2541, %v4991
  %5032 = vst.msk [vmem:[#allocation2 + $0x40] sm:$0xff] %vm2541, %v4993
  %5033 = vst.msk [vmem:[#allocation2 + $0x48] sm:$0xff] %vm2541, %v4995
  %5034 = vst.msk [vmem:[#allocation2 + $0x50] sm:$0xff] %vm2541, %v4997
  %5035 = vst.msk [vmem:[#allocation2 + $0x58] sm:$0xff] %vm2541, %v4999
  %5036 = vst.msk [vmem:[#allocation2 + $0x60] sm:$0xff] %vm2541, %v5001
  %5037 = vst.msk [vmem:[#allocation2 + $0x68] sm:$0xff] %vm2541, %v5003
  %5038 = vst.msk [vmem:[#allocation2 + $0x70] sm:$0xff] %vm2541, %v5005
  %5039 = vst.msk [vmem:[#allocation2 + $0x78] sm:$0xff] %vm2541, %v5007
  %v5040 = vld [vmem:[#allocation2] sm:$0xff]
  %v5041 = vld [vmem:[#allocation2 + $0x8] sm:$0xff]
  %v5042 = vld [vmem:[#allocation2 + $0x10] sm:$0xff]
  %v5043 = vld [vmem:[#allocation2 + $0x18] sm:$0xff]
  %v5044 = vld [vmem:[#allocation2 + $0x20] sm:$0xff]
  %v5045 = vld [vmem:[#allocation2 + $0x28] sm:$0xff]
  %v5046 = vld [vmem:[#allocation2 + $0x30] sm:$0xff]
  %v5047 = vld [vmem:[#allocation2 + $0x38] sm:$0xff]
  %v5048 = vld [vmem:[#allocation2 + $0x40] sm:$0xff]
  %v5049 = vld [vmem:[#allocation2 + $0x48] sm:$0xff]
  %v5050 = vld [vmem:[#allocation2 + $0x50] sm:$0xff]
  %v5051 = vld [vmem:[#allocation2 + $0x58] sm:$0xff]
  %v5052 = vld [vmem:[#allocation2 + $0x60] sm:$0xff]
  %v5053 = vld [vmem:[#allocation2 + $0x68] sm:$0xff]
  %v5054 = vld [vmem:[#allocation2 + $0x70] sm:$0xff]
  %v5055 = vld [vmem:[#allocation2 + $0x78] sm:$0xff]
  %5056 = vrot.lane.b32.xlu0 %v2729, 32
  %v5057 = vpop.permute.xlu0 %5056
  %5058 = vrot.lane.b32.xlu0 %v2732, 32
  %v5059 = vpop.permute.xlu0 %5058
  %5060 = vrot.lane.b32.xlu0 %v2735, 32
  %v5061 = vpop.permute.xlu0 %5060
  %5062 = vrot.lane.b32.xlu0 %v2738, 32
  %v5063 = vpop.permute.xlu0 %5062
  %5064 = vrot.lane.b32.xlu0 %v2741, 32
  %v5065 = vpop.permute.xlu0 %5064
  %5066 = vrot.lane.b32.xlu0 %v2744, 32
  %v5067 = vpop.permute.xlu0 %5066
  %5068 = vrot.lane.b32.xlu0 %v2747, 32
  %v5069 = vpop.permute.xlu0 %5068
  %5070 = vrot.lane.b32.xlu0 %v2750, 32
  %v5071 = vpop.permute.xlu0 %5070
  %5072 = vrot.lane.b32.xlu0 %v2753, 32
  %v5073 = vpop.permute.xlu0 %5072
  %5074 = vrot.lane.b32.xlu0 %v2756, 32
  %v5075 = vpop.permute.xlu0 %5074
  %5076 = vrot.lane.b32.xlu0 %v2759, 32
  %v5077 = vpop.permute.xlu0 %5076
  %5078 = vrot.lane.b32.xlu0 %v2762, 32
  %v5079 = vpop.permute.xlu0 %5078
  %5080 = vrot.lane.b32.xlu0 %v2765, 32
  %v5081 = vpop.permute.xlu0 %5080
  %5082 = vrot.lane.b32.xlu0 %v2768, 32
  %v5083 = vpop.permute.xlu0 %5082
  %5084 = vrot.lane.b32.xlu0 %v2771, 32
  %v5085 = vpop.permute.xlu0 %5084
  %5086 = vrot.lane.b32.xlu0 %v2774, 32
  %v5087 = vpop.permute.xlu0 %5086
  %v5104 = vadd.f32 %v5040, %v5057
  %v5105 = vadd.f32 %v5041, %v5059
  %v5106 = vadd.f32 %v5042, %v5061
  %v5107 = vadd.f32 %v5043, %v5063
  %v5108 = vadd.f32 %v5044, %v5065
  %v5109 = vadd.f32 %v5045, %v5067
  %v5110 = vadd.f32 %v5046, %v5069
  %v5111 = vadd.f32 %v5047, %v5071
  %v5112 = vadd.f32 %v5048, %v5073
  %v5113 = vadd.f32 %v5049, %v5075
  %v5114 = vadd.f32 %v5050, %v5077
  %v5115 = vadd.f32 %v5051, %v5079
  %v5116 = vadd.f32 %v5052, %v5081
  %v5117 = vadd.f32 %v5053, %v5083
  %v5118 = vadd.f32 %v5054, %v5085
  %v5119 = vadd.f32 %v5055, %v5087
  %v5120 = vmax.f32 %v5104, 0.0
  %v5121 = vmax.f32 %v5105, 0.0
  %v5122 = vmax.f32 %v5106, 0.0
  %v5123 = vmax.f32 %v5107, 0.0
  %v5124 = vmax.f32 %v5108, 0.0
  %v5125 = vmax.f32 %v5109, 0.0
  %v5126 = vmax.f32 %v5110, 0.0
  %v5127 = vmax.f32 %v5111, 0.0
  %v5128 = vmax.f32 %v5112, 0.0
  %v5129 = vmax.f32 %v5113, 0.0
  %v5130 = vmax.f32 %v5114, 0.0
  %v5131 = vmax.f32 %v5115, 0.0
  %v5132 = vmax.f32 %v5116, 0.0
  %v5133 = vmax.f32 %v5117, 0.0
  %v5134 = vmax.f32 %v5118, 0.0
  %v5135 = vmax.f32 %v5119, 0.0
  %v5136 = vld [vmem:[%s7] sm:$0xff]
  %v5137 = vld [vmem:[%s7 + $0x8] sm:$0xff]
  %v5138 = vld [vmem:[%s7 + $0x10] sm:$0xff]
  %v5139 = vld [vmem:[%s7 + $0x18] sm:$0xff]
  %v5140 = vld [vmem:[%s8] sm:$0x1]
  %v5142 = vperm.slane %v5140, 0
  %v5145 = vsel %vm2662, %v5120, 0
  %v5148 = vsel %vm2662, %v5121, 0
  %v5151 = vsel %vm2662, %v5122, 0
  %v5154 = vsel %vm2662, %v5123, 0
  %v5157 = vsel %vm2662, %v5124, 0
  %v5160 = vsel %vm2662, %v5125, 0
  %v5163 = vsel %vm2662, %v5126, 0
  %v5166 = vsel %vm2662, %v5127, 0
  %v5169 = vsel %vm2662, %v5128, 0
  %v5172 = vsel %vm2662, %v5129, 0
  %v5175 = vsel %vm2662, %v5130, 0
  %v5178 = vsel %vm2662, %v5131, 0
  %v5181 = vsel %vm2662, %v5132, 0
  %v5184 = vsel %vm2662, %v5133, 0
  %v5187 = vsel %vm2662, %v5134, 0
  %v5190 = vsel %vm2662, %v5135, 0
  %5192 = vmatpush.msra.mxu0 0.0
  %5193 = vmatpush.msra.mxu0 0.0
  %5194 = vmatpush.msra.mxu0 0.0
  %5195 = vmatpush.msra.mxu0 0.0
  %5196 = vmatpush.msra.mxu0 0.0
  %5197 = vmatpush.msra.mxu0 0.0
  %5198 = vmatpush.msra.mxu0 0.0
  %5199 = vmatpush.msra.mxu0 0.0
  %5200 = vmatpush.msra.mxu0 0.0
  %5201 = vmatpush.msra.mxu0 0.0
  %5202 = vmatpush.msra.mxu0 0.0
  %5203 = vmatpush.msra.mxu0 0.0
  %5204 = vmatpush.msra.mxu0 %v5139
  %5205 = vmatpush.msra.mxu0 %v5138
  %5206 = vmatpush.msra.mxu0 %v5137
  %5207 = vmatpush.msra.mxu0 %v5136
  %5208 = vmatmul.f32.gmra.mxu0 %v5145
  %v5209 = vpop.f32.mrf.mxu0
  %v5210 = vadd.f32 %v5142, %v5209
  %5211 = vmatmul.f32.gmra.mxu0 %v5148
  %v5212 = vpop.f32.mrf.mxu0
  %v5213 = vadd.f32 %v5142, %v5212
  %5214 = vmatmul.f32.gmra.mxu0 %v5151
  %v5215 = vpop.f32.mrf.mxu0
  %v5216 = vadd.f32 %v5142, %v5215
  %5217 = vmatmul.f32.gmra.mxu0 %v5154
  %v5218 = vpop.f32.mrf.mxu0
  %v5219 = vadd.f32 %v5142, %v5218
  %5220 = vmatmul.f32.gmra.mxu0 %v5157
  %v5221 = vpop.f32.mrf.mxu0
  %v5222 = vadd.f32 %v5142, %v5221
  %5223 = vmatmul.f32.gmra.mxu0 %v5160
  %v5224 = vpop.f32.mrf.mxu0
  %v5225 = vadd.f32 %v5142, %v5224
  %5226 = vmatmul.f32.gmra.mxu0 %v5163
  %v5227 = vpop.f32.mrf.mxu0
  %v5228 = vadd.f32 %v5142, %v5227
  %5229 = vmatmul.f32.gmra.mxu0 %v5166
  %v5230 = vpop.f32.mrf.mxu0
  %v5231 = vadd.f32 %v5142, %v5230
  %5232 = vmatmul.f32.gmra.mxu0 %v5169
  %v5233 = vpop.f32.mrf.mxu0
  %v5234 = vadd.f32 %v5142, %v5233
  %5235 = vmatmul.f32.gmra.mxu0 %v5172
  %v5236 = vpop.f32.mrf.mxu0
  %v5237 = vadd.f32 %v5142, %v5236
  %5238 = vmatmul.f32.gmra.mxu0 %v5175
  %v5239 = vpop.f32.mrf.mxu0
  %v5240 = vadd.f32 %v5142, %v5239
  %5241 = vmatmul.f32.gmra.mxu0 %v5178
  %v5242 = vpop.f32.mrf.mxu0
  %v5243 = vadd.f32 %v5142, %v5242
  %5244 = vmatmul.f32.gmra.mxu0 %v5181
  %v5245 = vpop.f32.mrf.mxu0
  %v5246 = vadd.f32 %v5142, %v5245
  %5247 = vmatmul.f32.gmra.mxu0 %v5184
  %v5248 = vpop.f32.mrf.mxu0
  %v5249 = vadd.f32 %v5142, %v5248
  %5250 = vmatmul.f32.gmra.mxu0 %v5187
  %v5251 = vpop.f32.mrf.mxu0
  %v5252 = vadd.f32 %v5142, %v5251
  %5253 = vmatmul.f32.gmra.mxu0 %v5190
  %v5254 = vpop.f32.mrf.mxu0
  %v5255 = vadd.f32 %v5142, %v5254
  %5256 = vdwg.mxu0
  %v5257 = vmul.f32 %v5210, 0.35355338
  %v5258 = vmul.f32 %v5213, 0.35355338
  %v5259 = vmul.f32 %v5216, 0.35355338
  %v5260 = vmul.f32 %v5219, 0.35355338
  %v5261 = vmul.f32 %v5222, 0.35355338
  %v5262 = vmul.f32 %v5225, 0.35355338
  %v5263 = vmul.f32 %v5228, 0.35355338
  %v5264 = vmul.f32 %v5231, 0.35355338
  %v5265 = vmul.f32 %v5234, 0.35355338
  %v5266 = vmul.f32 %v5237, 0.35355338
  %v5267 = vmul.f32 %v5240, 0.35355338
  %v5268 = vmul.f32 %v5243, 0.35355338
  %v5269 = vmul.f32 %v5246, 0.35355338
  %v5270 = vmul.f32 %v5249, 0.35355338
  %v5271 = vmul.f32 %v5252, 0.35355338
  %v5272 = vmul.f32 %v5255, 0.35355338
  %5289 = vrot.lane.b32.xlu0 %v5210, 96
  %v5290 = vpop.permute.xlu0 %5289
  %5291 = vrot.lane.b32.xlu0 %v5213, 96
  %v5292 = vpop.permute.xlu0 %5291
  %5293 = vrot.lane.b32.xlu0 %v5216, 96
  %v5294 = vpop.permute.xlu0 %5293
  %5295 = vrot.lane.b32.xlu0 %v5219, 96
  %v5296 = vpop.permute.xlu0 %5295
  %5297 = vrot.lane.b32.xlu0 %v5222, 96
  %v5298 = vpop.permute.xlu0 %5297
  %5299 = vrot.lane.b32.xlu0 %v5225, 96
  %v5300 = vpop.permute.xlu0 %5299
  %5301 = vrot.lane.b32.xlu0 %v5228, 96
  %v5302 = vpop.permute.xlu0 %5301
  %5303 = vrot.lane.b32.xlu0 %v5231, 96
  %v5304 = vpop.permute.xlu0 %5303
  %5305 = vrot.lane.b32.xlu0 %v5234, 96
  %v5306 = vpop.permute.xlu0 %5305
  %5307 = vrot.lane.b32.xlu0 %v5237, 96
  %v5308 = vpop.permute.xlu0 %5307
  %5309 = vrot.lane.b32.xlu0 %v5240, 96
  %v5310 = vpop.permute.xlu0 %5309
  %5311 = vrot.lane.b32.xlu0 %v5243, 96
  %v5312 = vpop.permute.xlu0 %5311
  %5313 = vrot.lane.b32.xlu0 %v5246, 96
  %v5314 = vpop.permute.xlu0 %5313
  %5315 = vrot.lane.b32.xlu0 %v5249, 96
  %v5316 = vpop.permute.xlu0 %5315
  %5317 = vrot.lane.b32.xlu0 %v5252, 96
  %v5318 = vpop.permute.xlu0 %5317
  %5319 = vrot.lane.b32.xlu0 %v5255, 96
  %v5320 = vpop.permute.xlu0 %5319
  %v5322 = vsel %vm354, %v5257, 0
  %v5325 = vsel %vm354, %v5258, 0
  %v5328 = vsel %vm354, %v5259, 0
  %v5331 = vsel %vm354, %v5260, 0
  %v5334 = vsel %vm354, %v5261, 0
  %v5337 = vsel %vm354, %v5262, 0
  %v5340 = vsel %vm354, %v5263, 0
  %v5343 = vsel %vm354, %v5264, 0
  %v5346 = vsel %vm354, %v5265, 0
  %v5349 = vsel %vm354, %v5266, 0
  %v5352 = vsel %vm354, %v5267, 0
  %v5355 = vsel %vm354, %v5268, 0
  %v5358 = vsel %vm354, %v5269, 0
  %v5361 = vsel %vm354, %v5270, 0
  %v5364 = vsel %vm354, %v5271, 0
  %v5367 = vsel %vm354, %v5272, 0
  %v5369 = vsel %vm354, %v5290, 0
  %v5371 = vsel %vm354, %v5292, 0
  %v5373 = vsel %vm354, %v5294, 0
  %v5375 = vsel %vm354, %v5296, 0
  %v5377 = vsel %vm354, %v5298, 0
  %v5379 = vsel %vm354, %v5300, 0
  %v5381 = vsel %vm354, %v5302, 0
  %v5383 = vsel %vm354, %v5304, 0
  %v5385 = vsel %vm354, %v5306, 0
  %v5387 = vsel %vm354, %v5308, 0
  %v5389 = vsel %vm354, %v5310, 0
  %v5391 = vsel %vm354, %v5312, 0
  %v5393 = vsel %vm354, %v5314, 0
  %v5395 = vsel %vm354, %v5316, 0
  %v5397 = vsel %vm354, %v5318, 0
  %v5399 = vsel %vm354, %v5320, 0
  %5401 = vmatpush.xpose.msra.mxu0 %v5399
  %5402 = vmatpush.xpose.msra.mxu0 %v5397
  %5403 = vmatpush.xpose.msra.mxu0 %v5395
  %5404 = vmatpush.xpose.msra.mxu0 %v5393
  %5405 = vmatpush.xpose.msra.mxu0 %v5391
  %5406 = vmatpush.xpose.msra.mxu0 %v5389
  %5407 = vmatpush.xpose.msra.mxu0 %v5387
  %5408 = vmatpush.xpose.msra.mxu0 %v5385
  %5409 = vmatpush.xpose.msra.mxu0 %v5383
  %5410 = vmatpush.xpose.msra.mxu0 %v5381
  %5411 = vmatpush.xpose.msra.mxu0 %v5379
  %5412 = vmatpush.xpose.msra.mxu0 %v5377
  %5413 = vmatpush.xpose.msra.mxu0 %v5375
  %5414 = vmatpush.xpose.msra.mxu0 %v5373
  %5415 = vmatpush.xpose.msra.mxu0 %v5371
  %5416 = vmatpush.xpose.msra.mxu0 %v5369
  %5417 = vmatmul.f32.gmra.mxu0 %v5322
  %v5418 = vpop.f32.mrf.mxu0
  %v5419 = vadd.f32 %v138, %v5418
  %5420 = vmatmul.f32.gmra.mxu0 %v5325
  %v5421 = vpop.f32.mrf.mxu0
  %v5422 = vadd.f32 %v139, %v5421
  %5423 = vmatmul.f32.gmra.mxu0 %v5328
  %v5424 = vpop.f32.mrf.mxu0
  %v5425 = vadd.f32 %v140, %v5424
  %5426 = vmatmul.f32.gmra.mxu0 %v5331
  %v5427 = vpop.f32.mrf.mxu0
  %v5428 = vadd.f32 %v141, %v5427
  %5429 = vmatmul.f32.gmra.mxu0 %v5334
  %v5430 = vpop.f32.mrf.mxu0
  %v5431 = vadd.f32 %v142, %v5430
  %5432 = vmatmul.f32.gmra.mxu0 %v5337
  %v5433 = vpop.f32.mrf.mxu0
  %v5434 = vadd.f32 %v143, %v5433
  %5435 = vmatmul.f32.gmra.mxu0 %v5340
  %v5436 = vpop.f32.mrf.mxu0
  %v5437 = vadd.f32 %v144, %v5436
  %5438 = vmatmul.f32.gmra.mxu0 %v5343
  %v5439 = vpop.f32.mrf.mxu0
  %v5440 = vadd.f32 %v145, %v5439
  %5441 = vmatmul.f32.gmra.mxu0 %v5346
  %v5442 = vpop.f32.mrf.mxu0
  %v5443 = vadd.f32 %v146, %v5442
  %5444 = vmatmul.f32.gmra.mxu0 %v5349
  %v5445 = vpop.f32.mrf.mxu0
  %v5446 = vadd.f32 %v147, %v5445
  %5447 = vmatmul.f32.gmra.mxu0 %v5352
  %v5448 = vpop.f32.mrf.mxu0
  %v5449 = vadd.f32 %v148, %v5448
  %5450 = vmatmul.f32.gmra.mxu0 %v5355
  %v5451 = vpop.f32.mrf.mxu0
  %v5452 = vadd.f32 %v149, %v5451
  %5453 = vmatmul.f32.gmra.mxu0 %v5358
  %v5454 = vpop.f32.mrf.mxu0
  %v5455 = vadd.f32 %v150, %v5454
  %5456 = vmatmul.f32.gmra.mxu0 %v5361
  %v5457 = vpop.f32.mrf.mxu0
  %v5458 = vadd.f32 %v151, %v5457
  %5459 = vmatmul.f32.gmra.mxu0 %v5364
  %v5460 = vpop.f32.mrf.mxu0
  %v5461 = vadd.f32 %v152, %v5460
  %5462 = vmatmul.f32.gmra.mxu0 %v5367
  %v5463 = vpop.f32.mrf.mxu0
  %v5464 = vadd.f32 %v153, %v5463
  %5465 = vdwg.mxu0
  %5466 = vmax.xlane.f32.xlu0 %v5419
  %v5467 = vpop.xlane.xlu0 %5466
  %5468 = vmax.xlane.f32.xlu0 %v5422
  %v5469 = vpop.xlane.xlu0 %5468
  %5470 = vmax.xlane.f32.xlu0 %v5425
  %v5471 = vpop.xlane.xlu0 %5470
  %5472 = vmax.xlane.f32.xlu0 %v5428
  %v5473 = vpop.xlane.xlu0 %5472
  %5474 = vmax.xlane.f32.xlu0 %v5431
  %v5475 = vpop.xlane.xlu0 %5474
  %5476 = vmax.xlane.f32.xlu0 %v5434
  %v5477 = vpop.xlane.xlu0 %5476
  %5478 = vmax.xlane.f32.xlu0 %v5437
  %v5479 = vpop.xlane.xlu0 %5478
  %5480 = vmax.xlane.f32.xlu0 %v5440
  %v5481 = vpop.xlane.xlu0 %5480
  %5482 = vmax.xlane.f32.xlu0 %v5443
  %v5483 = vpop.xlane.xlu0 %5482
  %5484 = vmax.xlane.f32.xlu0 %v5446
  %v5485 = vpop.xlane.xlu0 %5484
  %5486 = vmax.xlane.f32.xlu0 %v5449
  %v5487 = vpop.xlane.xlu0 %5486
  %5488 = vmax.xlane.f32.xlu0 %v5452
  %v5489 = vpop.xlane.xlu0 %5488
  %5490 = vmax.xlane.f32.xlu0 %v5455
  %v5491 = vpop.xlane.xlu0 %5490
  %5492 = vmax.xlane.f32.xlu0 %v5458
  %v5493 = vpop.xlane.xlu0 %5492
  %5494 = vmax.xlane.f32.xlu0 %v5461
  %v5495 = vpop.xlane.xlu0 %5494
  %5496 = vmax.xlane.f32.xlu0 %v5464
  %v5497 = vpop.xlane.xlu0 %5496
  %v5498 = vsub.f32 %v5419, %v5467
  %v5499 = vsub.f32 %v5422, %v5469
  %v5500 = vsub.f32 %v5425, %v5471
  %v5501 = vsub.f32 %v5428, %v5473
  %v5502 = vsub.f32 %v5431, %v5475
  %v5503 = vsub.f32 %v5434, %v5477
  %v5504 = vsub.f32 %v5437, %v5479
  %v5505 = vsub.f32 %v5440, %v5481
  %v5506 = vsub.f32 %v5443, %v5483
  %v5507 = vsub.f32 %v5446, %v5485
  %v5508 = vsub.f32 %v5449, %v5487
  %v5509 = vsub.f32 %v5452, %v5489
  %v5510 = vsub.f32 %v5455, %v5491
  %v5511 = vsub.f32 %v5458, %v5493
  %v5512 = vsub.f32 %v5461, %v5495
  %v5513 = vsub.f32 %v5464, %v5497
  %v5514 = vmul.f32 %v5498, 1.442695
  %v5515 = vpow.pop %v5514
  %v5516 = vmul.f32 %v5499, 1.442695
  %v5517 = vpow.pop %v5516
  %v5518 = vmul.f32 %v5500, 1.442695
  %v5519 = vpow.pop %v5518
  %v5520 = vmul.f32 %v5501, 1.442695
  %v5521 = vpow.pop %v5520
  %v5522 = vmul.f32 %v5502, 1.442695
  %v5523 = vpow.pop %v5522
  %v5524 = vmul.f32 %v5503, 1.442695
  %v5525 = vpow.pop %v5524
  %v5526 = vmul.f32 %v5504, 1.442695
  %v5527 = vpow.pop %v5526
  %v5528 = vmul.f32 %v5505, 1.442695
  %v5529 = vpow.pop %v5528
  %v5530 = vmul.f32 %v5506, 1.442695
  %v5531 = vpow.pop %v5530
  %v5532 = vmul.f32 %v5507, 1.442695
  %v5533 = vpow.pop %v5532
  %v5534 = vmul.f32 %v5508, 1.442695
  %v5535 = vpow.pop %v5534
  %v5536 = vmul.f32 %v5509, 1.442695
  %v5537 = vpow.pop %v5536
  %v5538 = vmul.f32 %v5510, 1.442695
  %v5539 = vpow.pop %v5538
  %v5540 = vmul.f32 %v5511, 1.442695
  %v5541 = vpow.pop %v5540
  %v5542 = vmul.f32 %v5512, 1.442695
  %v5543 = vpow.pop %v5542
  %v5544 = vmul.f32 %v5513, 1.442695
  %v5545 = vpow.pop %v5544
  %v5546 = vmul.f32 %v5515, %v106
  %v5547 = vmul.f32 %v5517, %v107
  %v5548 = vmul.f32 %v5519, %v108
  %v5549 = vmul.f32 %v5521, %v109
  %v5550 = vmul.f32 %v5523, %v110
  %v5551 = vmul.f32 %v5525, %v111
  %v5552 = vmul.f32 %v5527, %v112
  %v5553 = vmul.f32 %v5529, %v113
  %v5554 = vmul.f32 %v5531, %v114
  %v5555 = vmul.f32 %v5533, %v115
  %v5556 = vmul.f32 %v5535, %v116
  %v5557 = vmul.f32 %v5537, %v117
  %v5558 = vmul.f32 %v5539, %v118
  %v5559 = vmul.f32 %v5541, %v119
  %v5560 = vmul.f32 %v5543, %v120
  %v5561 = vmul.f32 %v5545, %v121
  %5562 = vadd.xlane.f32.xlu0 %v5546
  %v5563 = vpop.xlane.xlu0 %5562
  %5564 = vadd.xlane.f32.xlu0 %v5547
  %v5565 = vpop.xlane.xlu0 %5564
  %5566 = vadd.xlane.f32.xlu0 %v5548
  %v5567 = vpop.xlane.xlu0 %5566
  %5568 = vadd.xlane.f32.xlu0 %v5549
  %v5569 = vpop.xlane.xlu0 %5568
  %5570 = vadd.xlane.f32.xlu0 %v5550
  %v5571 = vpop.xlane.xlu0 %5570
  %5572 = vadd.xlane.f32.xlu0 %v5551
  %v5573 = vpop.xlane.xlu0 %5572
  %5574 = vadd.xlane.f32.xlu0 %v5552
  %v5575 = vpop.xlane.xlu0 %5574
  %5576 = vadd.xlane.f32.xlu0 %v5553
  %v5577 = vpop.xlane.xlu0 %5576
  %5578 = vadd.xlane.f32.xlu0 %v5554
  %v5579 = vpop.xlane.xlu0 %5578
  %5580 = vadd.xlane.f32.xlu0 %v5555
  %v5581 = vpop.xlane.xlu0 %5580
  %5582 = vadd.xlane.f32.xlu0 %v5556
  %v5583 = vpop.xlane.xlu0 %5582
  %5584 = vadd.xlane.f32.xlu0 %v5557
  %v5585 = vpop.xlane.xlu0 %5584
  %5586 = vadd.xlane.f32.xlu0 %v5558
  %v5587 = vpop.xlane.xlu0 %5586
  %5588 = vadd.xlane.f32.xlu0 %v5559
  %v5589 = vpop.xlane.xlu0 %5588
  %5590 = vadd.xlane.f32.xlu0 %v5560
  %v5591 = vpop.xlane.xlu0 %5590
  %5592 = vadd.xlane.f32.xlu0 %v5561
  %v5593 = vpop.xlane.xlu0 %5592
  %vm5594 = vcmp.gt.f32.partialorder %v5563, 0.0
  %vm5595 = vcmp.gt.f32.partialorder %v5565, 0.0
  %vm5596 = vcmp.gt.f32.partialorder %v5567, 0.0
  %vm5597 = vcmp.gt.f32.partialorder %v5569, 0.0
  %vm5598 = vcmp.gt.f32.partialorder %v5571, 0.0
  %vm5599 = vcmp.gt.f32.partialorder %v5573, 0.0
  %vm5600 = vcmp.gt.f32.partialorder %v5575, 0.0
  %vm5601 = vcmp.gt.f32.partialorder %v5577, 0.0
  %vm5602 = vcmp.gt.f32.partialorder %v5579, 0.0
  %vm5603 = vcmp.gt.f32.partialorder %v5581, 0.0
  %vm5604 = vcmp.gt.f32.partialorder %v5583, 0.0
  %vm5605 = vcmp.gt.f32.partialorder %v5585, 0.0
  %vm5606 = vcmp.gt.f32.partialorder %v5587, 0.0
  %vm5607 = vcmp.gt.f32.partialorder %v5589, 0.0
  %vm5608 = vcmp.gt.f32.partialorder %v5591, 0.0
  %vm5609 = vcmp.gt.f32.partialorder %v5593, 0.0
  %v5610 = vsel %vm5594, %v5563, 1.0
  %v5611 = vsel %vm5595, %v5565, 1.0
  %v5612 = vsel %vm5596, %v5567, 1.0
  %v5613 = vsel %vm5597, %v5569, 1.0
  %v5614 = vsel %vm5598, %v5571, 1.0
  %v5615 = vsel %vm5599, %v5573, 1.0
  %v5616 = vsel %vm5600, %v5575, 1.0
  %v5617 = vsel %vm5601, %v5577, 1.0
  %v5618 = vsel %vm5602, %v5579, 1.0
  %v5619 = vsel %vm5603, %v5581, 1.0
  %v5620 = vsel %vm5604, %v5583, 1.0
  %v5621 = vsel %vm5605, %v5585, 1.0
  %v5622 = vsel %vm5606, %v5587, 1.0
  %v5623 = vsel %vm5607, %v5589, 1.0
  %v5624 = vsel %vm5608, %v5591, 1.0
  %v5625 = vsel %vm5609, %v5593, 1.0
  %v5626 = vrcp.pop %v5610
  %v5627 = vrcp.pop %v5611
  %v5628 = vrcp.pop %v5612
  %v5629 = vrcp.pop %v5613
  %v5630 = vrcp.pop %v5614
  %v5631 = vrcp.pop %v5615
  %v5632 = vrcp.pop %v5616
  %v5633 = vrcp.pop %v5617
  %v5634 = vrcp.pop %v5618
  %v5635 = vrcp.pop %v5619
  %v5636 = vrcp.pop %v5620
  %v5637 = vrcp.pop %v5621
  %v5638 = vrcp.pop %v5622
  %v5639 = vrcp.pop %v5623
  %v5640 = vrcp.pop %v5624
  %v5641 = vrcp.pop %v5625
  %v5642 = vmul.f32 %v5546, %v5626
  %v5643 = vmul.f32 %v5547, %v5627
  %v5644 = vmul.f32 %v5548, %v5628
  %v5645 = vmul.f32 %v5549, %v5629
  %v5646 = vmul.f32 %v5550, %v5630
  %v5647 = vmul.f32 %v5551, %v5631
  %v5648 = vmul.f32 %v5552, %v5632
  %v5649 = vmul.f32 %v5553, %v5633
  %v5650 = vmul.f32 %v5554, %v5634
  %v5651 = vmul.f32 %v5555, %v5635
  %v5652 = vmul.f32 %v5556, %v5636
  %v5653 = vmul.f32 %v5557, %v5637
  %v5654 = vmul.f32 %v5558, %v5638
  %v5655 = vmul.f32 %v5559, %v5639
  %v5656 = vmul.f32 %v5560, %v5640
  %v5657 = vmul.f32 %v5561, %v5641
  %5658 = vrot.lane.b32.xlu0 %v5210, 64
  %v5659 = vpop.permute.xlu0 %5658
  %5660 = vrot.lane.b32.xlu0 %v5213, 64
  %v5661 = vpop.permute.xlu0 %5660
  %5662 = vrot.lane.b32.xlu0 %v5216, 64
  %v5663 = vpop.permute.xlu0 %5662
  %5664 = vrot.lane.b32.xlu0 %v5219, 64
  %v5665 = vpop.permute.xlu0 %5664
  %5666 = vrot.lane.b32.xlu0 %v5222, 64
  %v5667 = vpop.permute.xlu0 %5666
  %5668 = vrot.lane.b32.xlu0 %v5225, 64
  %v5669 = vpop.permute.xlu0 %5668
  %5670 = vrot.lane.b32.xlu0 %v5228, 64
  %v5671 = vpop.permute.xlu0 %5670
  %5672 = vrot.lane.b32.xlu0 %v5231, 64
  %v5673 = vpop.permute.xlu0 %5672
  %5674 = vrot.lane.b32.xlu0 %v5234, 64
  %v5675 = vpop.permute.xlu0 %5674
  %5676 = vrot.lane.b32.xlu0 %v5237, 64
  %v5677 = vpop.permute.xlu0 %5676
  %5678 = vrot.lane.b32.xlu0 %v5240, 64
  %v5679 = vpop.permute.xlu0 %5678
  %5680 = vrot.lane.b32.xlu0 %v5243, 64
  %v5681 = vpop.permute.xlu0 %5680
  %5682 = vrot.lane.b32.xlu0 %v5246, 64
  %v5683 = vpop.permute.xlu0 %5682
  %5684 = vrot.lane.b32.xlu0 %v5249, 64
  %v5685 = vpop.permute.xlu0 %5684
  %5686 = vrot.lane.b32.xlu0 %v5252, 64
  %v5687 = vpop.permute.xlu0 %5686
  %5688 = vrot.lane.b32.xlu0 %v5255, 64
  %v5689 = vpop.permute.xlu0 %5688
  %5706 = vmatpush.msra.mxu0 %v5689
  %5707 = vmatpush.msra.mxu0 %v5687
  %5708 = vmatpush.msra.mxu0 %v5685
  %5709 = vmatpush.msra.mxu0 %v5683
  %5710 = vmatpush.msra.mxu0 %v5681
  %5711 = vmatpush.msra.mxu0 %v5679
  %5712 = vmatpush.msra.mxu0 %v5677
  %5713 = vmatpush.msra.mxu0 %v5675
  %5714 = vmatpush.msra.mxu0 %v5673
  %5715 = vmatpush.msra.mxu0 %v5671
  %5716 = vmatpush.msra.mxu0 %v5669
  %5717 = vmatpush.msra.mxu0 %v5667
  %5718 = vmatpush.msra.mxu0 %v5665
  %5719 = vmatpush.msra.mxu0 %v5663
  %5720 = vmatpush.msra.mxu0 %v5661
  %5721 = vmatpush.msra.mxu0 %v5659
  %5722 = vmatmul.f32.gmra.mxu0 %v5642
  %v5723 = vpop.f32.mrf.mxu0
  %v5724 = vadd.f32 0.0, %v5723
  %5725 = vmatmul.f32.gmra.mxu0 %v5643
  %v5726 = vpop.f32.mrf.mxu0
  %v5727 = vadd.f32 0.0, %v5726
  %5728 = vmatmul.f32.gmra.mxu0 %v5644
  %v5729 = vpop.f32.mrf.mxu0
  %v5730 = vadd.f32 0.0, %v5729
  %5731 = vmatmul.f32.gmra.mxu0 %v5645
  %v5732 = vpop.f32.mrf.mxu0
  %v5733 = vadd.f32 0.0, %v5732
  %5734 = vmatmul.f32.gmra.mxu0 %v5646
  %v5735 = vpop.f32.mrf.mxu0
  %v5736 = vadd.f32 0.0, %v5735
  %5737 = vmatmul.f32.gmra.mxu0 %v5647
  %v5738 = vpop.f32.mrf.mxu0
  %v5739 = vadd.f32 0.0, %v5738
  %5740 = vmatmul.f32.gmra.mxu0 %v5648
  %v5741 = vpop.f32.mrf.mxu0
  %v5742 = vadd.f32 0.0, %v5741
  %5743 = vmatmul.f32.gmra.mxu0 %v5649
  %v5744 = vpop.f32.mrf.mxu0
  %v5745 = vadd.f32 0.0, %v5744
  %5746 = vmatmul.f32.gmra.mxu0 %v5650
  %v5747 = vpop.f32.mrf.mxu0
  %v5748 = vadd.f32 0.0, %v5747
  %5749 = vmatmul.f32.gmra.mxu0 %v5651
  %v5750 = vpop.f32.mrf.mxu0
  %v5751 = vadd.f32 0.0, %v5750
  %5752 = vmatmul.f32.gmra.mxu0 %v5652
  %v5753 = vpop.f32.mrf.mxu0
  %v5754 = vadd.f32 0.0, %v5753
  %5755 = vmatmul.f32.gmra.mxu0 %v5653
  %v5756 = vpop.f32.mrf.mxu0
  %v5757 = vadd.f32 0.0, %v5756
  %5758 = vmatmul.f32.gmra.mxu0 %v5654
  %v5759 = vpop.f32.mrf.mxu0
  %v5760 = vadd.f32 0.0, %v5759
  %5761 = vmatmul.f32.gmra.mxu0 %v5655
  %v5762 = vpop.f32.mrf.mxu0
  %v5763 = vadd.f32 0.0, %v5762
  %5764 = vmatmul.f32.gmra.mxu0 %v5656
  %v5765 = vpop.f32.mrf.mxu0
  %v5766 = vadd.f32 0.0, %v5765
  %5767 = vmatmul.f32.gmra.mxu0 %v5657
  %v5768 = vpop.f32.mrf.mxu0
  %v5769 = vadd.f32 0.0, %v5768
  %5770 = vdwg.mxu0
  %5771 = vst.msk [vmem:[#allocation2] sm:$0xff] %vm354, %v5724
  %5772 = vst.msk [vmem:[#allocation2 + $0x8] sm:$0xff] %vm354, %v5727
  %5773 = vst.msk [vmem:[#allocation2 + $0x10] sm:$0xff] %vm354, %v5730
  %5774 = vst.msk [vmem:[#allocation2 + $0x18] sm:$0xff] %vm354, %v5733
  %5775 = vst.msk [vmem:[#allocation2 + $0x20] sm:$0xff] %vm354, %v5736
  %5776 = vst.msk [vmem:[#allocation2 + $0x28] sm:$0xff] %vm354, %v5739
  %5777 = vst.msk [vmem:[#allocation2 + $0x30] sm:$0xff] %vm354, %v5742
  %5778 = vst.msk [vmem:[#allocation2 + $0x38] sm:$0xff] %vm354, %v5745
  %5779 = vst.msk [vmem:[#allocation2 + $0x40] sm:$0xff] %vm354, %v5748
  %5780 = vst.msk [vmem:[#allocation2 + $0x48] sm:$0xff] %vm354, %v5751
  %5781 = vst.msk [vmem:[#allocation2 + $0x50] sm:$0xff] %vm354, %v5754
  %5782 = vst.msk [vmem:[#allocation2 + $0x58] sm:$0xff] %vm354, %v5757
  %5783 = vst.msk [vmem:[#allocation2 + $0x60] sm:$0xff] %vm354, %v5760
  %5784 = vst.msk [vmem:[#allocation2 + $0x68] sm:$0xff] %vm354, %v5763
  %5785 = vst.msk [vmem:[#allocation2 + $0x70] sm:$0xff] %vm354, %v5766
  %5786 = vst.msk [vmem:[#allocation2 + $0x78] sm:$0xff] %vm354, %v5769
  %5787 = vrot.lane.b32.xlu0 %v5257, 120
  %v5788 = vpop.permute.xlu0 %5787
  %5789 = vrot.lane.b32.xlu0 %v5258, 120
  %v5790 = vpop.permute.xlu0 %5789
  %5791 = vrot.lane.b32.xlu0 %v5259, 120
  %v5792 = vpop.permute.xlu0 %5791
  %5793 = vrot.lane.b32.xlu0 %v5260, 120
  %v5794 = vpop.permute.xlu0 %5793
  %5795 = vrot.lane.b32.xlu0 %v5261, 120
  %v5796 = vpop.permute.xlu0 %5795
  %5797 = vrot.lane.b32.xlu0 %v5262, 120
  %v5798 = vpop.permute.xlu0 %5797
  %5799 = vrot.lane.b32.xlu0 %v5263, 120
  %v5800 = vpop.permute.xlu0 %5799
  %5801 = vrot.lane.b32.xlu0 %v5264, 120
  %v5802 = vpop.permute.xlu0 %5801
  %5803 = vrot.lane.b32.xlu0 %v5265, 120
  %v5804 = vpop.permute.xlu0 %5803
  %5805 = vrot.lane.b32.xlu0 %v5266, 120
  %v5806 = vpop.permute.xlu0 %5805
  %5807 = vrot.lane.b32.xlu0 %v5267, 120
  %v5808 = vpop.permute.xlu0 %5807
  %5809 = vrot.lane.b32.xlu0 %v5268, 120
  %v5810 = vpop.permute.xlu0 %5809
  %5811 = vrot.lane.b32.xlu0 %v5269, 120
  %v5812 = vpop.permute.xlu0 %5811
  %5813 = vrot.lane.b32.xlu0 %v5270, 120
  %v5814 = vpop.permute.xlu0 %5813
  %5815 = vrot.lane.b32.xlu0 %v5271, 120
  %v5816 = vpop.permute.xlu0 %5815
  %5817 = vrot.lane.b32.xlu0 %v5272, 120
  %v5818 = vpop.permute.xlu0 %5817
  %5819 = vrot.lane.b32.xlu0 %v5210, 88
  %v5820 = vpop.permute.xlu0 %5819
  %5821 = vrot.lane.b32.xlu0 %v5213, 88
  %v5822 = vpop.permute.xlu0 %5821
  %5823 = vrot.lane.b32.xlu0 %v5216, 88
  %v5824 = vpop.permute.xlu0 %5823
  %5825 = vrot.lane.b32.xlu0 %v5219, 88
  %v5826 = vpop.permute.xlu0 %5825
  %5827 = vrot.lane.b32.xlu0 %v5222, 88
  %v5828 = vpop.permute.xlu0 %5827
  %5829 = vrot.lane.b32.xlu0 %v5225, 88
  %v5830 = vpop.permute.xlu0 %5829
  %5831 = vrot.lane.b32.xlu0 %v5228, 88
  %v5832 = vpop.permute.xlu0 %5831
  %5833 = vrot.lane.b32.xlu0 %v5231, 88
  %v5834 = vpop.permute.xlu0 %5833
  %5835 = vrot.lane.b32.xlu0 %v5234, 88
  %v5836 = vpop.permute.xlu0 %5835
  %5837 = vrot.lane.b32.xlu0 %v5237, 88
  %v5838 = vpop.permute.xlu0 %5837
  %5839 = vrot.lane.b32.xlu0 %v5240, 88
  %v5840 = vpop.permute.xlu0 %5839
  %5841 = vrot.lane.b32.xlu0 %v5243, 88
  %v5842 = vpop.permute.xlu0 %5841
  %5843 = vrot.lane.b32.xlu0 %v5246, 88
  %v5844 = vpop.permute.xlu0 %5843
  %5845 = vrot.lane.b32.xlu0 %v5249, 88
  %v5846 = vpop.permute.xlu0 %5845
  %5847 = vrot.lane.b32.xlu0 %v5252, 88
  %v5848 = vpop.permute.xlu0 %5847
  %5849 = vrot.lane.b32.xlu0 %v5255, 88
  %v5850 = vpop.permute.xlu0 %5849
  %v5851 = vsel %vm354, %v5788, 0
  %v5853 = vsel %vm354, %v5790, 0
  %v5855 = vsel %vm354, %v5792, 0
  %v5857 = vsel %vm354, %v5794, 0
  %v5859 = vsel %vm354, %v5796, 0
  %v5861 = vsel %vm354, %v5798, 0
  %v5863 = vsel %vm354, %v5800, 0
  %v5865 = vsel %vm354, %v5802, 0
  %v5867 = vsel %vm354, %v5804, 0
  %v5869 = vsel %vm354, %v5806, 0
  %v5871 = vsel %vm354, %v5808, 0
  %v5873 = vsel %vm354, %v5810, 0
  %v5875 = vsel %vm354, %v5812, 0
  %v5877 = vsel %vm354, %v5814, 0
  %v5879 = vsel %vm354, %v5816, 0
  %v5881 = vsel %vm354, %v5818, 0
  %v5883 = vsel %vm354, %v5820, 0
  %v5885 = vsel %vm354, %v5822, 0
  %v5887 = vsel %vm354, %v5824, 0
  %v5889 = vsel %vm354, %v5826, 0
  %v5891 = vsel %vm354, %v5828, 0
  %v5893 = vsel %vm354, %v5830, 0
  %v5895 = vsel %vm354, %v5832, 0
  %v5897 = vsel %vm354, %v5834, 0
  %v5899 = vsel %vm354, %v5836, 0
  %v5901 = vsel %vm354, %v5838, 0
  %v5903 = vsel %vm354, %v5840, 0
  %v5905 = vsel %vm354, %v5842, 0
  %v5907 = vsel %vm354, %v5844, 0
  %v5909 = vsel %vm354, %v5846, 0
  %v5911 = vsel %vm354, %v5848, 0
  %v5913 = vsel %vm354, %v5850, 0
  %5915 = vmatpush.xpose.msra.mxu0 %v5913
  %5916 = vmatpush.xpose.msra.mxu0 %v5911
  %5917 = vmatpush.xpose.msra.mxu0 %v5909
  %5918 = vmatpush.xpose.msra.mxu0 %v5907
  %5919 = vmatpush.xpose.msra.mxu0 %v5905
  %5920 = vmatpush.xpose.msra.mxu0 %v5903
  %5921 = vmatpush.xpose.msra.mxu0 %v5901
  %5922 = vmatpush.xpose.msra.mxu0 %v5899
  %5923 = vmatpush.xpose.msra.mxu0 %v5897
  %5924 = vmatpush.xpose.msra.mxu0 %v5895
  %5925 = vmatpush.xpose.msra.mxu0 %v5893
  %5926 = vmatpush.xpose.msra.mxu0 %v5891
  %5927 = vmatpush.xpose.msra.mxu0 %v5889
  %5928 = vmatpush.xpose.msra.mxu0 %v5887
  %5929 = vmatpush.xpose.msra.mxu0 %v5885
  %5930 = vmatpush.xpose.msra.mxu0 %v5883
  %5931 = vmatmul.f32.gmra.mxu0 %v5851
  %v5932 = vpop.f32.mrf.mxu0
  %v5933 = vadd.f32 %v138, %v5932
  %5934 = vmatmul.f32.gmra.mxu0 %v5853
  %v5935 = vpop.f32.mrf.mxu0
  %v5936 = vadd.f32 %v139, %v5935
  %5937 = vmatmul.f32.gmra.mxu0 %v5855
  %v5938 = vpop.f32.mrf.mxu0
  %v5939 = vadd.f32 %v140, %v5938
  %5940 = vmatmul.f32.gmra.mxu0 %v5857
  %v5941 = vpop.f32.mrf.mxu0
  %v5942 = vadd.f32 %v141, %v5941
  %5943 = vmatmul.f32.gmra.mxu0 %v5859
  %v5944 = vpop.f32.mrf.mxu0
  %v5945 = vadd.f32 %v142, %v5944
  %5946 = vmatmul.f32.gmra.mxu0 %v5861
  %v5947 = vpop.f32.mrf.mxu0
  %v5948 = vadd.f32 %v143, %v5947
  %5949 = vmatmul.f32.gmra.mxu0 %v5863
  %v5950 = vpop.f32.mrf.mxu0
  %v5951 = vadd.f32 %v144, %v5950
  %5952 = vmatmul.f32.gmra.mxu0 %v5865
  %v5953 = vpop.f32.mrf.mxu0
  %v5954 = vadd.f32 %v145, %v5953
  %5955 = vmatmul.f32.gmra.mxu0 %v5867
  %v5956 = vpop.f32.mrf.mxu0
  %v5957 = vadd.f32 %v146, %v5956
  %5958 = vmatmul.f32.gmra.mxu0 %v5869
  %v5959 = vpop.f32.mrf.mxu0
  %v5960 = vadd.f32 %v147, %v5959
  %5961 = vmatmul.f32.gmra.mxu0 %v5871
  %v5962 = vpop.f32.mrf.mxu0
  %v5963 = vadd.f32 %v148, %v5962
  %5964 = vmatmul.f32.gmra.mxu0 %v5873
  %v5965 = vpop.f32.mrf.mxu0
  %v5966 = vadd.f32 %v149, %v5965
  %5967 = vmatmul.f32.gmra.mxu0 %v5875
  %v5968 = vpop.f32.mrf.mxu0
  %v5969 = vadd.f32 %v150, %v5968
  %5970 = vmatmul.f32.gmra.mxu0 %v5877
  %v5971 = vpop.f32.mrf.mxu0
  %v5972 = vadd.f32 %v151, %v5971
  %5973 = vmatmul.f32.gmra.mxu0 %v5879
  %v5974 = vpop.f32.mrf.mxu0
  %v5975 = vadd.f32 %v152, %v5974
  %5976 = vmatmul.f32.gmra.mxu0 %v5881
  %v5977 = vpop.f32.mrf.mxu0
  %v5978 = vadd.f32 %v153, %v5977
  %5979 = vdwg.mxu0
  %5980 = vmax.xlane.f32.xlu0 %v5933
  %v5981 = vpop.xlane.xlu0 %5980
  %5982 = vmax.xlane.f32.xlu0 %v5936
  %v5983 = vpop.xlane.xlu0 %5982
  %5984 = vmax.xlane.f32.xlu0 %v5939
  %v5985 = vpop.xlane.xlu0 %5984
  %5986 = vmax.xlane.f32.xlu0 %v5942
  %v5987 = vpop.xlane.xlu0 %5986
  %5988 = vmax.xlane.f32.xlu0 %v5945
  %v5989 = vpop.xlane.xlu0 %5988
  %5990 = vmax.xlane.f32.xlu0 %v5948
  %v5991 = vpop.xlane.xlu0 %5990
  %5992 = vmax.xlane.f32.xlu0 %v5951
  %v5993 = vpop.xlane.xlu0 %5992
  %5994 = vmax.xlane.f32.xlu0 %v5954
  %v5995 = vpop.xlane.xlu0 %5994
  %5996 = vmax.xlane.f32.xlu0 %v5957
  %v5997 = vpop.xlane.xlu0 %5996
  %5998 = vmax.xlane.f32.xlu0 %v5960
  %v5999 = vpop.xlane.xlu0 %5998
  %6000 = vmax.xlane.f32.xlu0 %v5963
  %v6001 = vpop.xlane.xlu0 %6000
  %6002 = vmax.xlane.f32.xlu0 %v5966
  %v6003 = vpop.xlane.xlu0 %6002
  %6004 = vmax.xlane.f32.xlu0 %v5969
  %v6005 = vpop.xlane.xlu0 %6004
  %6006 = vmax.xlane.f32.xlu0 %v5972
  %v6007 = vpop.xlane.xlu0 %6006
  %6008 = vmax.xlane.f32.xlu0 %v5975
  %v6009 = vpop.xlane.xlu0 %6008
  %6010 = vmax.xlane.f32.xlu0 %v5978
  %v6011 = vpop.xlane.xlu0 %6010
  %v6012 = vsub.f32 %v5933, %v5981
  %v6013 = vsub.f32 %v5936, %v5983
  %v6014 = vsub.f32 %v5939, %v5985
  %v6015 = vsub.f32 %v5942, %v5987
  %v6016 = vsub.f32 %v5945, %v5989
  %v6017 = vsub.f32 %v5948, %v5991
  %v6018 = vsub.f32 %v5951, %v5993
  %v6019 = vsub.f32 %v5954, %v5995
  %v6020 = vsub.f32 %v5957, %v5997
  %v6021 = vsub.f32 %v5960, %v5999
  %v6022 = vsub.f32 %v5963, %v6001
  %v6023 = vsub.f32 %v5966, %v6003
  %v6024 = vsub.f32 %v5969, %v6005
  %v6025 = vsub.f32 %v5972, %v6007
  %v6026 = vsub.f32 %v5975, %v6009
  %v6027 = vsub.f32 %v5978, %v6011
  %v6028 = vmul.f32 %v6012, 1.442695
  %v6029 = vpow.pop %v6028
  %v6030 = vmul.f32 %v6013, 1.442695
  %v6031 = vpow.pop %v6030
  %v6032 = vmul.f32 %v6014, 1.442695
  %v6033 = vpow.pop %v6032
  %v6034 = vmul.f32 %v6015, 1.442695
  %v6035 = vpow.pop %v6034
  %v6036 = vmul.f32 %v6016, 1.442695
  %v6037 = vpow.pop %v6036
  %v6038 = vmul.f32 %v6017, 1.442695
  %v6039 = vpow.pop %v6038
  %v6040 = vmul.f32 %v6018, 1.442695
  %v6041 = vpow.pop %v6040
  %v6042 = vmul.f32 %v6019, 1.442695
  %v6043 = vpow.pop %v6042
  %v6044 = vmul.f32 %v6020, 1.442695
  %v6045 = vpow.pop %v6044
  %v6046 = vmul.f32 %v6021, 1.442695
  %v6047 = vpow.pop %v6046
  %v6048 = vmul.f32 %v6022, 1.442695
  %v6049 = vpow.pop %v6048
  %v6050 = vmul.f32 %v6023, 1.442695
  %v6051 = vpow.pop %v6050
  %v6052 = vmul.f32 %v6024, 1.442695
  %v6053 = vpow.pop %v6052
  %v6054 = vmul.f32 %v6025, 1.442695
  %v6055 = vpow.pop %v6054
  %v6056 = vmul.f32 %v6026, 1.442695
  %v6057 = vpow.pop %v6056
  %v6058 = vmul.f32 %v6027, 1.442695
  %v6059 = vpow.pop %v6058
  %v6060 = vmul.f32 %v6029, %v106
  %v6061 = vmul.f32 %v6031, %v107
  %v6062 = vmul.f32 %v6033, %v108
  %v6063 = vmul.f32 %v6035, %v109
  %v6064 = vmul.f32 %v6037, %v110
  %v6065 = vmul.f32 %v6039, %v111
  %v6066 = vmul.f32 %v6041, %v112
  %v6067 = vmul.f32 %v6043, %v113
  %v6068 = vmul.f32 %v6045, %v114
  %v6069 = vmul.f32 %v6047, %v115
  %v6070 = vmul.f32 %v6049, %v116
  %v6071 = vmul.f32 %v6051, %v117
  %v6072 = vmul.f32 %v6053, %v118
  %v6073 = vmul.f32 %v6055, %v119
  %v6074 = vmul.f32 %v6057, %v120
  %v6075 = vmul.f32 %v6059, %v121
  %6076 = vadd.xlane.f32.xlu0 %v6060
  %v6077 = vpop.xlane.xlu0 %6076
  %6078 = vadd.xlane.f32.xlu0 %v6061
  %v6079 = vpop.xlane.xlu0 %6078
  %6080 = vadd.xlane.f32.xlu0 %v6062
  %v6081 = vpop.xlane.xlu0 %6080
  %6082 = vadd.xlane.f32.xlu0 %v6063
  %v6083 = vpop.xlane.xlu0 %6082
  %6084 = vadd.xlane.f32.xlu0 %v6064
  %v6085 = vpop.xlane.xlu0 %6084
  %6086 = vadd.xlane.f32.xlu0 %v6065
  %v6087 = vpop.xlane.xlu0 %6086
  %6088 = vadd.xlane.f32.xlu0 %v6066
  %v6089 = vpop.xlane.xlu0 %6088
  %6090 = vadd.xlane.f32.xlu0 %v6067
  %v6091 = vpop.xlane.xlu0 %6090
  %6092 = vadd.xlane.f32.xlu0 %v6068
  %v6093 = vpop.xlane.xlu0 %6092
  %6094 = vadd.xlane.f32.xlu0 %v6069
  %v6095 = vpop.xlane.xlu0 %6094
  %6096 = vadd.xlane.f32.xlu0 %v6070
  %v6097 = vpop.xlane.xlu0 %6096
  %6098 = vadd.xlane.f32.xlu0 %v6071
  %v6099 = vpop.xlane.xlu0 %6098
  %6100 = vadd.xlane.f32.xlu0 %v6072
  %v6101 = vpop.xlane.xlu0 %6100
  %6102 = vadd.xlane.f32.xlu0 %v6073
  %v6103 = vpop.xlane.xlu0 %6102
  %6104 = vadd.xlane.f32.xlu0 %v6074
  %v6105 = vpop.xlane.xlu0 %6104
  %6106 = vadd.xlane.f32.xlu0 %v6075
  %v6107 = vpop.xlane.xlu0 %6106
  %vm6108 = vcmp.gt.f32.partialorder %v6077, 0.0
  %vm6109 = vcmp.gt.f32.partialorder %v6079, 0.0
  %vm6110 = vcmp.gt.f32.partialorder %v6081, 0.0
  %vm6111 = vcmp.gt.f32.partialorder %v6083, 0.0
  %vm6112 = vcmp.gt.f32.partialorder %v6085, 0.0
  %vm6113 = vcmp.gt.f32.partialorder %v6087, 0.0
  %vm6114 = vcmp.gt.f32.partialorder %v6089, 0.0
  %vm6115 = vcmp.gt.f32.partialorder %v6091, 0.0
  %vm6116 = vcmp.gt.f32.partialorder %v6093, 0.0
  %vm6117 = vcmp.gt.f32.partialorder %v6095, 0.0
  %vm6118 = vcmp.gt.f32.partialorder %v6097, 0.0
  %vm6119 = vcmp.gt.f32.partialorder %v6099, 0.0
  %vm6120 = vcmp.gt.f32.partialorder %v6101, 0.0
  %vm6121 = vcmp.gt.f32.partialorder %v6103, 0.0
  %vm6122 = vcmp.gt.f32.partialorder %v6105, 0.0
  %vm6123 = vcmp.gt.f32.partialorder %v6107, 0.0
  %v6124 = vsel %vm6108, %v6077, 1.0
  %v6125 = vsel %vm6109, %v6079, 1.0
  %v6126 = vsel %vm6110, %v6081, 1.0
  %v6127 = vsel %vm6111, %v6083, 1.0
  %v6128 = vsel %vm6112, %v6085, 1.0
  %v6129 = vsel %vm6113, %v6087, 1.0
  %v6130 = vsel %vm6114, %v6089, 1.0
  %v6131 = vsel %vm6115, %v6091, 1.0
  %v6132 = vsel %vm6116, %v6093, 1.0
  %v6133 = vsel %vm6117, %v6095, 1.0
  %v6134 = vsel %vm6118, %v6097, 1.0
  %v6135 = vsel %vm6119, %v6099, 1.0
  %v6136 = vsel %vm6120, %v6101, 1.0
  %v6137 = vsel %vm6121, %v6103, 1.0
  %v6138 = vsel %vm6122, %v6105, 1.0
  %v6139 = vsel %vm6123, %v6107, 1.0
  %v6140 = vrcp.pop %v6124
  %v6141 = vrcp.pop %v6125
  %v6142 = vrcp.pop %v6126
  %v6143 = vrcp.pop %v6127
  %v6144 = vrcp.pop %v6128
  %v6145 = vrcp.pop %v6129
  %v6146 = vrcp.pop %v6130
  %v6147 = vrcp.pop %v6131
  %v6148 = vrcp.pop %v6132
  %v6149 = vrcp.pop %v6133
  %v6150 = vrcp.pop %v6134
  %v6151 = vrcp.pop %v6135
  %v6152 = vrcp.pop %v6136
  %v6153 = vrcp.pop %v6137
  %v6154 = vrcp.pop %v6138
  %v6155 = vrcp.pop %v6139
  %v6156 = vmul.f32 %v6060, %v6140
  %v6157 = vmul.f32 %v6061, %v6141
  %v6158 = vmul.f32 %v6062, %v6142
  %v6159 = vmul.f32 %v6063, %v6143
  %v6160 = vmul.f32 %v6064, %v6144
  %v6161 = vmul.f32 %v6065, %v6145
  %v6162 = vmul.f32 %v6066, %v6146
  %v6163 = vmul.f32 %v6067, %v6147
  %v6164 = vmul.f32 %v6068, %v6148
  %v6165 = vmul.f32 %v6069, %v6149
  %v6166 = vmul.f32 %v6070, %v6150
  %v6167 = vmul.f32 %v6071, %v6151
  %v6168 = vmul.f32 %v6072, %v6152
  %v6169 = vmul.f32 %v6073, %v6153
  %v6170 = vmul.f32 %v6074, %v6154
  %v6171 = vmul.f32 %v6075, %v6155
  %6172 = vrot.lane.b32.xlu0 %v5210, 56
  %v6173 = vpop.permute.xlu0 %6172
  %6174 = vrot.lane.b32.xlu0 %v5213, 56
  %v6175 = vpop.permute.xlu0 %6174
  %6176 = vrot.lane.b32.xlu0 %v5216, 56
  %v6177 = vpop.permute.xlu0 %6176
  %6178 = vrot.lane.b32.xlu0 %v5219, 56
  %v6179 = vpop.permute.xlu0 %6178
  %6180 = vrot.lane.b32.xlu0 %v5222, 56
  %v6181 = vpop.permute.xlu0 %6180
  %6182 = vrot.lane.b32.xlu0 %v5225, 56
  %v6183 = vpop.permute.xlu0 %6182
  %6184 = vrot.lane.b32.xlu0 %v5228, 56
  %v6185 = vpop.permute.xlu0 %6184
  %6186 = vrot.lane.b32.xlu0 %v5231, 56
  %v6187 = vpop.permute.xlu0 %6186
  %6188 = vrot.lane.b32.xlu0 %v5234, 56
  %v6189 = vpop.permute.xlu0 %6188
  %6190 = vrot.lane.b32.xlu0 %v5237, 56
  %v6191 = vpop.permute.xlu0 %6190
  %6192 = vrot.lane.b32.xlu0 %v5240, 56
  %v6193 = vpop.permute.xlu0 %6192
  %6194 = vrot.lane.b32.xlu0 %v5243, 56
  %v6195 = vpop.permute.xlu0 %6194
  %6196 = vrot.lane.b32.xlu0 %v5246, 56
  %v6197 = vpop.permute.xlu0 %6196
  %6198 = vrot.lane.b32.xlu0 %v5249, 56
  %v6199 = vpop.permute.xlu0 %6198
  %6200 = vrot.lane.b32.xlu0 %v5252, 56
  %v6201 = vpop.permute.xlu0 %6200
  %6202 = vrot.lane.b32.xlu0 %v5255, 56
  %v6203 = vpop.permute.xlu0 %6202
  %6220 = vmatpush.msra.mxu0 %v6203
  %6221 = vmatpush.msra.mxu0 %v6201
  %6222 = vmatpush.msra.mxu0 %v6199
  %6223 = vmatpush.msra.mxu0 %v6197
  %6224 = vmatpush.msra.mxu0 %v6195
  %6225 = vmatpush.msra.mxu0 %v6193
  %6226 = vmatpush.msra.mxu0 %v6191
  %6227 = vmatpush.msra.mxu0 %v6189
  %6228 = vmatpush.msra.mxu0 %v6187
  %6229 = vmatpush.msra.mxu0 %v6185
  %6230 = vmatpush.msra.mxu0 %v6183
  %6231 = vmatpush.msra.mxu0 %v6181
  %6232 = vmatpush.msra.mxu0 %v6179
  %6233 = vmatpush.msra.mxu0 %v6177
  %6234 = vmatpush.msra.mxu0 %v6175
  %6235 = vmatpush.msra.mxu0 %v6173
  %6236 = vmatmul.f32.gmra.mxu0 %v6156
  %v6237 = vpop.f32.mrf.mxu0
  %v6238 = vadd.f32 0.0, %v6237
  %6239 = vmatmul.f32.gmra.mxu0 %v6157
  %v6240 = vpop.f32.mrf.mxu0
  %v6241 = vadd.f32 0.0, %v6240
  %6242 = vmatmul.f32.gmra.mxu0 %v6158
  %v6243 = vpop.f32.mrf.mxu0
  %v6244 = vadd.f32 0.0, %v6243
  %6245 = vmatmul.f32.gmra.mxu0 %v6159
  %v6246 = vpop.f32.mrf.mxu0
  %v6247 = vadd.f32 0.0, %v6246
  %6248 = vmatmul.f32.gmra.mxu0 %v6160
  %v6249 = vpop.f32.mrf.mxu0
  %v6250 = vadd.f32 0.0, %v6249
  %6251 = vmatmul.f32.gmra.mxu0 %v6161
  %v6252 = vpop.f32.mrf.mxu0
  %v6253 = vadd.f32 0.0, %v6252
  %6254 = vmatmul.f32.gmra.mxu0 %v6162
  %v6255 = vpop.f32.mrf.mxu0
  %v6256 = vadd.f32 0.0, %v6255
  %6257 = vmatmul.f32.gmra.mxu0 %v6163
  %v6258 = vpop.f32.mrf.mxu0
  %v6259 = vadd.f32 0.0, %v6258
  %6260 = vmatmul.f32.gmra.mxu0 %v6164
  %v6261 = vpop.f32.mrf.mxu0
  %v6262 = vadd.f32 0.0, %v6261
  %6263 = vmatmul.f32.gmra.mxu0 %v6165
  %v6264 = vpop.f32.mrf.mxu0
  %v6265 = vadd.f32 0.0, %v6264
  %6266 = vmatmul.f32.gmra.mxu0 %v6166
  %v6267 = vpop.f32.mrf.mxu0
  %v6268 = vadd.f32 0.0, %v6267
  %6269 = vmatmul.f32.gmra.mxu0 %v6167
  %v6270 = vpop.f32.mrf.mxu0
  %v6271 = vadd.f32 0.0, %v6270
  %6272 = vmatmul.f32.gmra.mxu0 %v6168
  %v6273 = vpop.f32.mrf.mxu0
  %v6274 = vadd.f32 0.0, %v6273
  %6275 = vmatmul.f32.gmra.mxu0 %v6169
  %v6276 = vpop.f32.mrf.mxu0
  %v6277 = vadd.f32 0.0, %v6276
  %6278 = vmatmul.f32.gmra.mxu0 %v6170
  %v6279 = vpop.f32.mrf.mxu0
  %v6280 = vadd.f32 0.0, %v6279
  %6281 = vmatmul.f32.gmra.mxu0 %v6171
  %v6282 = vpop.f32.mrf.mxu0
  %v6283 = vadd.f32 0.0, %v6282
  %6284 = vdwg.mxu0
  %6301 = vrot.lane.b32.xlu0 %v6238, 8
  %v6302 = vpop.permute.xlu0 %6301
  %6303 = vrot.lane.b32.xlu0 %v6241, 8
  %v6304 = vpop.permute.xlu0 %6303
  %6305 = vrot.lane.b32.xlu0 %v6244, 8
  %v6306 = vpop.permute.xlu0 %6305
  %6307 = vrot.lane.b32.xlu0 %v6247, 8
  %v6308 = vpop.permute.xlu0 %6307
  %6309 = vrot.lane.b32.xlu0 %v6250, 8
  %v6310 = vpop.permute.xlu0 %6309
  %6311 = vrot.lane.b32.xlu0 %v6253, 8
  %v6312 = vpop.permute.xlu0 %6311
  %6313 = vrot.lane.b32.xlu0 %v6256, 8
  %v6314 = vpop.permute.xlu0 %6313
  %6315 = vrot.lane.b32.xlu0 %v6259, 8
  %v6316 = vpop.permute.xlu0 %6315
  %6317 = vrot.lane.b32.xlu0 %v6262, 8
  %v6318 = vpop.permute.xlu0 %6317
  %6319 = vrot.lane.b32.xlu0 %v6265, 8
  %v6320 = vpop.permute.xlu0 %6319
  %6321 = vrot.lane.b32.xlu0 %v6268, 8
  %v6322 = vpop.permute.xlu0 %6321
  %6323 = vrot.lane.b32.xlu0 %v6271, 8
  %v6324 = vpop.permute.xlu0 %6323
  %6325 = vrot.lane.b32.xlu0 %v6274, 8
  %v6326 = vpop.permute.xlu0 %6325
  %6327 = vrot.lane.b32.xlu0 %v6277, 8
  %v6328 = vpop.permute.xlu0 %6327
  %6329 = vrot.lane.b32.xlu0 %v6280, 8
  %v6330 = vpop.permute.xlu0 %6329
  %6331 = vrot.lane.b32.xlu0 %v6283, 8
  %v6332 = vpop.permute.xlu0 %6331
  %6349 = vst.msk [vmem:[#allocation2] sm:$0xff] %vm1383, %v6302
  %6350 = vst.msk [vmem:[#allocation2 + $0x8] sm:$0xff] %vm1383, %v6304
  %6351 = vst.msk [vmem:[#allocation2 + $0x10] sm:$0xff] %vm1383, %v6306
  %6352 = vst.msk [vmem:[#allocation2 + $0x18] sm:$0xff] %vm1383, %v6308
  %6353 = vst.msk [vmem:[#allocation2 + $0x20] sm:$0xff] %vm1383, %v6310
  %6354 = vst.msk [vmem:[#allocation2 + $0x28] sm:$0xff] %vm1383, %v6312
  %6355 = vst.msk [vmem:[#allocation2 + $0x30] sm:$0xff] %vm1383, %v6314
  %6356 = vst.msk [vmem:[#allocation2 + $0x38] sm:$0xff] %vm1383, %v6316
  %6357 = vst.msk [vmem:[#allocation2 + $0x40] sm:$0xff] %vm1383, %v6318
  %6358 = vst.msk [vmem:[#allocation2 + $0x48] sm:$0xff] %vm1383, %v6320
  %6359 = vst.msk [vmem:[#allocation2 + $0x50] sm:$0xff] %vm1383, %v6322
  %6360 = vst.msk [vmem:[#allocation2 + $0x58] sm:$0xff] %vm1383, %v6324
  %6361 = vst.msk [vmem:[#allocation2 + $0x60] sm:$0xff] %vm1383, %v6326
  %6362 = vst.msk [vmem:[#allocation2 + $0x68] sm:$0xff] %vm1383, %v6328
  %6363 = vst.msk [vmem:[#allocation2 + $0x70] sm:$0xff] %vm1383, %v6330
  %6364 = vst.msk [vmem:[#allocation2 + $0x78] sm:$0xff] %vm1383, %v6332
  %6365 = vrot.lane.b32.xlu0 %v5257, 112
  %v6366 = vpop.permute.xlu0 %6365
  %6367 = vrot.lane.b32.xlu0 %v5258, 112
  %v6368 = vpop.permute.xlu0 %6367
  %6369 = vrot.lane.b32.xlu0 %v5259, 112
  %v6370 = vpop.permute.xlu0 %6369
  %6371 = vrot.lane.b32.xlu0 %v5260, 112
  %v6372 = vpop.permute.xlu0 %6371
  %6373 = vrot.lane.b32.xlu0 %v5261, 112
  %v6374 = vpop.permute.xlu0 %6373
  %6375 = vrot.lane.b32.xlu0 %v5262, 112
  %v6376 = vpop.permute.xlu0 %6375
  %6377 = vrot.lane.b32.xlu0 %v5263, 112
  %v6378 = vpop.permute.xlu0 %6377
  %6379 = vrot.lane.b32.xlu0 %v5264, 112
  %v6380 = vpop.permute.xlu0 %6379
  %6381 = vrot.lane.b32.xlu0 %v5265, 112
  %v6382 = vpop.permute.xlu0 %6381
  %6383 = vrot.lane.b32.xlu0 %v5266, 112
  %v6384 = vpop.permute.xlu0 %6383
  %6385 = vrot.lane.b32.xlu0 %v5267, 112
  %v6386 = vpop.permute.xlu0 %6385
  %6387 = vrot.lane.b32.xlu0 %v5268, 112
  %v6388 = vpop.permute.xlu0 %6387
  %6389 = vrot.lane.b32.xlu0 %v5269, 112
  %v6390 = vpop.permute.xlu0 %6389
  %6391 = vrot.lane.b32.xlu0 %v5270, 112
  %v6392 = vpop.permute.xlu0 %6391
  %6393 = vrot.lane.b32.xlu0 %v5271, 112
  %v6394 = vpop.permute.xlu0 %6393
  %6395 = vrot.lane.b32.xlu0 %v5272, 112
  %v6396 = vpop.permute.xlu0 %6395
  %6397 = vrot.lane.b32.xlu0 %v5210, 80
  %v6398 = vpop.permute.xlu0 %6397
  %6399 = vrot.lane.b32.xlu0 %v5213, 80
  %v6400 = vpop.permute.xlu0 %6399
  %6401 = vrot.lane.b32.xlu0 %v5216, 80
  %v6402 = vpop.permute.xlu0 %6401
  %6403 = vrot.lane.b32.xlu0 %v5219, 80
  %v6404 = vpop.permute.xlu0 %6403
  %6405 = vrot.lane.b32.xlu0 %v5222, 80
  %v6406 = vpop.permute.xlu0 %6405
  %6407 = vrot.lane.b32.xlu0 %v5225, 80
  %v6408 = vpop.permute.xlu0 %6407
  %6409 = vrot.lane.b32.xlu0 %v5228, 80
  %v6410 = vpop.permute.xlu0 %6409
  %6411 = vrot.lane.b32.xlu0 %v5231, 80
  %v6412 = vpop.permute.xlu0 %6411
  %6413 = vrot.lane.b32.xlu0 %v5234, 80
  %v6414 = vpop.permute.xlu0 %6413
  %6415 = vrot.lane.b32.xlu0 %v5237, 80
  %v6416 = vpop.permute.xlu0 %6415
  %6417 = vrot.lane.b32.xlu0 %v5240, 80
  %v6418 = vpop.permute.xlu0 %6417
  %6419 = vrot.lane.b32.xlu0 %v5243, 80
  %v6420 = vpop.permute.xlu0 %6419
  %6421 = vrot.lane.b32.xlu0 %v5246, 80
  %v6422 = vpop.permute.xlu0 %6421
  %6423 = vrot.lane.b32.xlu0 %v5249, 80
  %v6424 = vpop.permute.xlu0 %6423
  %6425 = vrot.lane.b32.xlu0 %v5252, 80
  %v6426 = vpop.permute.xlu0 %6425
  %6427 = vrot.lane.b32.xlu0 %v5255, 80
  %v6428 = vpop.permute.xlu0 %6427
  %v6429 = vsel %vm354, %v6366, 0
  %v6431 = vsel %vm354, %v6368, 0
  %v6433 = vsel %vm354, %v6370, 0
  %v6435 = vsel %vm354, %v6372, 0
  %v6437 = vsel %vm354, %v6374, 0
  %v6439 = vsel %vm354, %v6376, 0
  %v6441 = vsel %vm354, %v6378, 0
  %v6443 = vsel %vm354, %v6380, 0
  %v6445 = vsel %vm354, %v6382, 0
  %v6447 = vsel %vm354, %v6384, 0
  %v6449 = vsel %vm354, %v6386, 0
  %v6451 = vsel %vm354, %v6388, 0
  %v6453 = vsel %vm354, %v6390, 0
  %v6455 = vsel %vm354, %v6392, 0
  %v6457 = vsel %vm354, %v6394, 0
  %v6459 = vsel %vm354, %v6396, 0
  %v6461 = vsel %vm354, %v6398, 0
  %v6463 = vsel %vm354, %v6400, 0
  %v6465 = vsel %vm354, %v6402, 0
  %v6467 = vsel %vm354, %v6404, 0
  %v6469 = vsel %vm354, %v6406, 0
  %v6471 = vsel %vm354, %v6408, 0
  %v6473 = vsel %vm354, %v6410, 0
  %v6475 = vsel %vm354, %v6412, 0
  %v6477 = vsel %vm354, %v6414, 0
  %v6479 = vsel %vm354, %v6416, 0
  %v6481 = vsel %vm354, %v6418, 0
  %v6483 = vsel %vm354, %v6420, 0
  %v6485 = vsel %vm354, %v6422, 0
  %v6487 = vsel %vm354, %v6424, 0
  %v6489 = vsel %vm354, %v6426, 0
  %v6491 = vsel %vm354, %v6428, 0
  %6493 = vmatpush.xpose.msra.mxu0 %v6491
  %6494 = vmatpush.xpose.msra.mxu0 %v6489
  %6495 = vmatpush.xpose.msra.mxu0 %v6487
  %6496 = vmatpush.xpose.msra.mxu0 %v6485
  %6497 = vmatpush.xpose.msra.mxu0 %v6483
  %6498 = vmatpush.xpose.msra.mxu0 %v6481
  %6499 = vmatpush.xpose.msra.mxu0 %v6479
  %6500 = vmatpush.xpose.msra.mxu0 %v6477
  %6501 = vmatpush.xpose.msra.mxu0 %v6475
  %6502 = vmatpush.xpose.msra.mxu0 %v6473
  %6503 = vmatpush.xpose.msra.mxu0 %v6471
  %6504 = vmatpush.xpose.msra.mxu0 %v6469
  %6505 = vmatpush.xpose.msra.mxu0 %v6467
  %6506 = vmatpush.xpose.msra.mxu0 %v6465
  %6507 = vmatpush.xpose.msra.mxu0 %v6463
  %6508 = vmatpush.xpose.msra.mxu0 %v6461
  %6509 = vmatmul.f32.gmra.mxu0 %v6429
  %v6510 = vpop.f32.mrf.mxu0
  %v6511 = vadd.f32 %v138, %v6510
  %6512 = vmatmul.f32.gmra.mxu0 %v6431
  %v6513 = vpop.f32.mrf.mxu0
  %v6514 = vadd.f32 %v139, %v6513
  %6515 = vmatmul.f32.gmra.mxu0 %v6433
  %v6516 = vpop.f32.mrf.mxu0
  %v6517 = vadd.f32 %v140, %v6516
  %6518 = vmatmul.f32.gmra.mxu0 %v6435
  %v6519 = vpop.f32.mrf.mxu0
  %v6520 = vadd.f32 %v141, %v6519
  %6521 = vmatmul.f32.gmra.mxu0 %v6437
  %v6522 = vpop.f32.mrf.mxu0
  %v6523 = vadd.f32 %v142, %v6522
  %6524 = vmatmul.f32.gmra.mxu0 %v6439
  %v6525 = vpop.f32.mrf.mxu0
  %v6526 = vadd.f32 %v143, %v6525
  %6527 = vmatmul.f32.gmra.mxu0 %v6441
  %v6528 = vpop.f32.mrf.mxu0
  %v6529 = vadd.f32 %v144, %v6528
  %6530 = vmatmul.f32.gmra.mxu0 %v6443
  %v6531 = vpop.f32.mrf.mxu0
  %v6532 = vadd.f32 %v145, %v6531
  %6533 = vmatmul.f32.gmra.mxu0 %v6445
  %v6534 = vpop.f32.mrf.mxu0
  %v6535 = vadd.f32 %v146, %v6534
  %6536 = vmatmul.f32.gmra.mxu0 %v6447
  %v6537 = vpop.f32.mrf.mxu0
  %v6538 = vadd.f32 %v147, %v6537
  %6539 = vmatmul.f32.gmra.mxu0 %v6449
  %v6540 = vpop.f32.mrf.mxu0
  %v6541 = vadd.f32 %v148, %v6540
  %6542 = vmatmul.f32.gmra.mxu0 %v6451
  %v6543 = vpop.f32.mrf.mxu0
  %v6544 = vadd.f32 %v149, %v6543
  %6545 = vmatmul.f32.gmra.mxu0 %v6453
  %v6546 = vpop.f32.mrf.mxu0
  %v6547 = vadd.f32 %v150, %v6546
  %6548 = vmatmul.f32.gmra.mxu0 %v6455
  %v6549 = vpop.f32.mrf.mxu0
  %v6550 = vadd.f32 %v151, %v6549
  %6551 = vmatmul.f32.gmra.mxu0 %v6457
  %v6552 = vpop.f32.mrf.mxu0
  %v6553 = vadd.f32 %v152, %v6552
  %6554 = vmatmul.f32.gmra.mxu0 %v6459
  %v6555 = vpop.f32.mrf.mxu0
  %v6556 = vadd.f32 %v153, %v6555
  %6557 = vdwg.mxu0
  %6558 = vmax.xlane.f32.xlu0 %v6511
  %v6559 = vpop.xlane.xlu0 %6558
  %6560 = vmax.xlane.f32.xlu0 %v6514
  %v6561 = vpop.xlane.xlu0 %6560
  %6562 = vmax.xlane.f32.xlu0 %v6517
  %v6563 = vpop.xlane.xlu0 %6562
  %6564 = vmax.xlane.f32.xlu0 %v6520
  %v6565 = vpop.xlane.xlu0 %6564
  %6566 = vmax.xlane.f32.xlu0 %v6523
  %v6567 = vpop.xlane.xlu0 %6566
  %6568 = vmax.xlane.f32.xlu0 %v6526
  %v6569 = vpop.xlane.xlu0 %6568
  %6570 = vmax.xlane.f32.xlu0 %v6529
  %v6571 = vpop.xlane.xlu0 %6570
  %6572 = vmax.xlane.f32.xlu0 %v6532
  %v6573 = vpop.xlane.xlu0 %6572
  %6574 = vmax.xlane.f32.xlu0 %v6535
  %v6575 = vpop.xlane.xlu0 %6574
  %6576 = vmax.xlane.f32.xlu0 %v6538
  %v6577 = vpop.xlane.xlu0 %6576
  %6578 = vmax.xlane.f32.xlu0 %v6541
  %v6579 = vpop.xlane.xlu0 %6578
  %6580 = vmax.xlane.f32.xlu0 %v6544
  %v6581 = vpop.xlane.xlu0 %6580
  %6582 = vmax.xlane.f32.xlu0 %v6547
  %v6583 = vpop.xlane.xlu0 %6582
  %6584 = vmax.xlane.f32.xlu0 %v6550
  %v6585 = vpop.xlane.xlu0 %6584
  %6586 = vmax.xlane.f32.xlu0 %v6553
  %v6587 = vpop.xlane.xlu0 %6586
  %6588 = vmax.xlane.f32.xlu0 %v6556
  %v6589 = vpop.xlane.xlu0 %6588
  %v6590 = vsub.f32 %v6511, %v6559
  %v6591 = vsub.f32 %v6514, %v6561
  %v6592 = vsub.f32 %v6517, %v6563
  %v6593 = vsub.f32 %v6520, %v6565
  %v6594 = vsub.f32 %v6523, %v6567
  %v6595 = vsub.f32 %v6526, %v6569
  %v6596 = vsub.f32 %v6529, %v6571
  %v6597 = vsub.f32 %v6532, %v6573
  %v6598 = vsub.f32 %v6535, %v6575
  %v6599 = vsub.f32 %v6538, %v6577
  %v6600 = vsub.f32 %v6541, %v6579
  %v6601 = vsub.f32 %v6544, %v6581
  %v6602 = vsub.f32 %v6547, %v6583
  %v6603 = vsub.f32 %v6550, %v6585
  %v6604 = vsub.f32 %v6553, %v6587
  %v6605 = vsub.f32 %v6556, %v6589
  %v6606 = vmul.f32 %v6590, 1.442695
  %v6607 = vpow.pop %v6606
  %v6608 = vmul.f32 %v6591, 1.442695
  %v6609 = vpow.pop %v6608
  %v6610 = vmul.f32 %v6592, 1.442695
  %v6611 = vpow.pop %v6610
  %v6612 = vmul.f32 %v6593, 1.442695
  %v6613 = vpow.pop %v6612
  %v6614 = vmul.f32 %v6594, 1.442695
  %v6615 = vpow.pop %v6614
  %v6616 = vmul.f32 %v6595, 1.442695
  %v6617 = vpow.pop %v6616
  %v6618 = vmul.f32 %v6596, 1.442695
  %v6619 = vpow.pop %v6618
  %v6620 = vmul.f32 %v6597, 1.442695
  %v6621 = vpow.pop %v6620
  %v6622 = vmul.f32 %v6598, 1.442695
  %v6623 = vpow.pop %v6622
  %v6624 = vmul.f32 %v6599, 1.442695
  %v6625 = vpow.pop %v6624
  %v6626 = vmul.f32 %v6600, 1.442695
  %v6627 = vpow.pop %v6626
  %v6628 = vmul.f32 %v6601, 1.442695
  %v6629 = vpow.pop %v6628
  %v6630 = vmul.f32 %v6602, 1.442695
  %v6631 = vpow.pop %v6630
  %v6632 = vmul.f32 %v6603, 1.442695
  %v6633 = vpow.pop %v6632
  %v6634 = vmul.f32 %v6604, 1.442695
  %v6635 = vpow.pop %v6634
  %v6636 = vmul.f32 %v6605, 1.442695
  %v6637 = vpow.pop %v6636
  %v6638 = vmul.f32 %v6607, %v106
  %v6639 = vmul.f32 %v6609, %v107
  %v6640 = vmul.f32 %v6611, %v108
  %v6641 = vmul.f32 %v6613, %v109
  %v6642 = vmul.f32 %v6615, %v110
  %v6643 = vmul.f32 %v6617, %v111
  %v6644 = vmul.f32 %v6619, %v112
  %v6645 = vmul.f32 %v6621, %v113
  %v6646 = vmul.f32 %v6623, %v114
  %v6647 = vmul.f32 %v6625, %v115
  %v6648 = vmul.f32 %v6627, %v116
  %v6649 = vmul.f32 %v6629, %v117
  %v6650 = vmul.f32 %v6631, %v118
  %v6651 = vmul.f32 %v6633, %v119
  %v6652 = vmul.f32 %v6635, %v120
  %v6653 = vmul.f32 %v6637, %v121
  %6654 = vadd.xlane.f32.xlu0 %v6638
  %v6655 = vpop.xlane.xlu0 %6654
  %6656 = vadd.xlane.f32.xlu0 %v6639
  %v6657 = vpop.xlane.xlu0 %6656
  %6658 = vadd.xlane.f32.xlu0 %v6640
  %v6659 = vpop.xlane.xlu0 %6658
  %6660 = vadd.xlane.f32.xlu0 %v6641
  %v6661 = vpop.xlane.xlu0 %6660
  %6662 = vadd.xlane.f32.xlu0 %v6642
  %v6663 = vpop.xlane.xlu0 %6662
  %6664 = vadd.xlane.f32.xlu0 %v6643
  %v6665 = vpop.xlane.xlu0 %6664
  %6666 = vadd.xlane.f32.xlu0 %v6644
  %v6667 = vpop.xlane.xlu0 %6666
  %6668 = vadd.xlane.f32.xlu0 %v6645
  %v6669 = vpop.xlane.xlu0 %6668
  %6670 = vadd.xlane.f32.xlu0 %v6646
  %v6671 = vpop.xlane.xlu0 %6670
  %6672 = vadd.xlane.f32.xlu0 %v6647
  %v6673 = vpop.xlane.xlu0 %6672
  %6674 = vadd.xlane.f32.xlu0 %v6648
  %v6675 = vpop.xlane.xlu0 %6674
  %6676 = vadd.xlane.f32.xlu0 %v6649
  %v6677 = vpop.xlane.xlu0 %6676
  %6678 = vadd.xlane.f32.xlu0 %v6650
  %v6679 = vpop.xlane.xlu0 %6678
  %6680 = vadd.xlane.f32.xlu0 %v6651
  %v6681 = vpop.xlane.xlu0 %6680
  %6682 = vadd.xlane.f32.xlu0 %v6652
  %v6683 = vpop.xlane.xlu0 %6682
  %6684 = vadd.xlane.f32.xlu0 %v6653
  %v6685 = vpop.xlane.xlu0 %6684
  %vm6686 = vcmp.gt.f32.partialorder %v6655, 0.0
  %vm6687 = vcmp.gt.f32.partialorder %v6657, 0.0
  %vm6688 = vcmp.gt.f32.partialorder %v6659, 0.0
  %vm6689 = vcmp.gt.f32.partialorder %v6661, 0.0
  %vm6690 = vcmp.gt.f32.partialorder %v6663, 0.0
  %vm6691 = vcmp.gt.f32.partialorder %v6665, 0.0
  %vm6692 = vcmp.gt.f32.partialorder %v6667, 0.0
  %vm6693 = vcmp.gt.f32.partialorder %v6669, 0.0
  %vm6694 = vcmp.gt.f32.partialorder %v6671, 0.0
  %vm6695 = vcmp.gt.f32.partialorder %v6673, 0.0
  %vm6696 = vcmp.gt.f32.partialorder %v6675, 0.0
  %vm6697 = vcmp.gt.f32.partialorder %v6677, 0.0
  %vm6698 = vcmp.gt.f32.partialorder %v6679, 0.0
  %vm6699 = vcmp.gt.f32.partialorder %v6681, 0.0
  %vm6700 = vcmp.gt.f32.partialorder %v6683, 0.0
  %vm6701 = vcmp.gt.f32.partialorder %v6685, 0.0
  %v6702 = vsel %vm6686, %v6655, 1.0
  %v6703 = vsel %vm6687, %v6657, 1.0
  %v6704 = vsel %vm6688, %v6659, 1.0
  %v6705 = vsel %vm6689, %v6661, 1.0
  %v6706 = vsel %vm6690, %v6663, 1.0
  %v6707 = vsel %vm6691, %v6665, 1.0
  %v6708 = vsel %vm6692, %v6667, 1.0
  %v6709 = vsel %vm6693, %v6669, 1.0
  %v6710 = vsel %vm6694, %v6671, 1.0
  %v6711 = vsel %vm6695, %v6673, 1.0
  %v6712 = vsel %vm6696, %v6675, 1.0
  %v6713 = vsel %vm6697, %v6677, 1.0
  %v6714 = vsel %vm6698, %v6679, 1.0
  %v6715 = vsel %vm6699, %v6681, 1.0
  %v6716 = vsel %vm6700, %v6683, 1.0
  %v6717 = vsel %vm6701, %v6685, 1.0
  %v6718 = vrcp.pop %v6702
  %v6719 = vrcp.pop %v6703
  %v6720 = vrcp.pop %v6704
  %v6721 = vrcp.pop %v6705
  %v6722 = vrcp.pop %v6706
  %v6723 = vrcp.pop %v6707
  %v6724 = vrcp.pop %v6708
  %v6725 = vrcp.pop %v6709
  %v6726 = vrcp.pop %v6710
  %v6727 = vrcp.pop %v6711
  %v6728 = vrcp.pop %v6712
  %v6729 = vrcp.pop %v6713
  %v6730 = vrcp.pop %v6714
  %v6731 = vrcp.pop %v6715
  %v6732 = vrcp.pop %v6716
  %v6733 = vrcp.pop %v6717
  %v6734 = vmul.f32 %v6638, %v6718
  %v6735 = vmul.f32 %v6639, %v6719
  %v6736 = vmul.f32 %v6640, %v6720
  %v6737 = vmul.f32 %v6641, %v6721
  %v6738 = vmul.f32 %v6642, %v6722
  %v6739 = vmul.f32 %v6643, %v6723
  %v6740 = vmul.f32 %v6644, %v6724
  %v6741 = vmul.f32 %v6645, %v6725
  %v6742 = vmul.f32 %v6646, %v6726
  %v6743 = vmul.f32 %v6647, %v6727
  %v6744 = vmul.f32 %v6648, %v6728
  %v6745 = vmul.f32 %v6649, %v6729
  %v6746 = vmul.f32 %v6650, %v6730
  %v6747 = vmul.f32 %v6651, %v6731
  %v6748 = vmul.f32 %v6652, %v6732
  %v6749 = vmul.f32 %v6653, %v6733
  %6750 = vrot.lane.b32.xlu0 %v5210, 48
  %v6751 = vpop.permute.xlu0 %6750
  %6752 = vrot.lane.b32.xlu0 %v5213, 48
  %v6753 = vpop.permute.xlu0 %6752
  %6754 = vrot.lane.b32.xlu0 %v5216, 48
  %v6755 = vpop.permute.xlu0 %6754
  %6756 = vrot.lane.b32.xlu0 %v5219, 48
  %v6757 = vpop.permute.xlu0 %6756
  %6758 = vrot.lane.b32.xlu0 %v5222, 48
  %v6759 = vpop.permute.xlu0 %6758
  %6760 = vrot.lane.b32.xlu0 %v5225, 48
  %v6761 = vpop.permute.xlu0 %6760
  %6762 = vrot.lane.b32.xlu0 %v5228, 48
  %v6763 = vpop.permute.xlu0 %6762
  %6764 = vrot.lane.b32.xlu0 %v5231, 48
  %v6765 = vpop.permute.xlu0 %6764
  %6766 = vrot.lane.b32.xlu0 %v5234, 48
  %v6767 = vpop.permute.xlu0 %6766
  %6768 = vrot.lane.b32.xlu0 %v5237, 48
  %v6769 = vpop.permute.xlu0 %6768
  %6770 = vrot.lane.b32.xlu0 %v5240, 48
  %v6771 = vpop.permute.xlu0 %6770
  %6772 = vrot.lane.b32.xlu0 %v5243, 48
  %v6773 = vpop.permute.xlu0 %6772
  %6774 = vrot.lane.b32.xlu0 %v5246, 48
  %v6775 = vpop.permute.xlu0 %6774
  %6776 = vrot.lane.b32.xlu0 %v5249, 48
  %v6777 = vpop.permute.xlu0 %6776
  %6778 = vrot.lane.b32.xlu0 %v5252, 48
  %v6779 = vpop.permute.xlu0 %6778
  %6780 = vrot.lane.b32.xlu0 %v5255, 48
  %v6781 = vpop.permute.xlu0 %6780
  %6798 = vmatpush.msra.mxu0 %v6781
  %6799 = vmatpush.msra.mxu0 %v6779
  %6800 = vmatpush.msra.mxu0 %v6777
  %6801 = vmatpush.msra.mxu0 %v6775
  %6802 = vmatpush.msra.mxu0 %v6773
  %6803 = vmatpush.msra.mxu0 %v6771
  %6804 = vmatpush.msra.mxu0 %v6769
  %6805 = vmatpush.msra.mxu0 %v6767
  %6806 = vmatpush.msra.mxu0 %v6765
  %6807 = vmatpush.msra.mxu0 %v6763
  %6808 = vmatpush.msra.mxu0 %v6761
  %6809 = vmatpush.msra.mxu0 %v6759
  %6810 = vmatpush.msra.mxu0 %v6757
  %6811 = vmatpush.msra.mxu0 %v6755
  %6812 = vmatpush.msra.mxu0 %v6753
  %6813 = vmatpush.msra.mxu0 %v6751
  %6814 = vmatmul.f32.gmra.mxu0 %v6734
  %v6815 = vpop.f32.mrf.mxu0
  %v6816 = vadd.f32 0.0, %v6815
  %6817 = vmatmul.f32.gmra.mxu0 %v6735
  %v6818 = vpop.f32.mrf.mxu0
  %v6819 = vadd.f32 0.0, %v6818
  %6820 = vmatmul.f32.gmra.mxu0 %v6736
  %v6821 = vpop.f32.mrf.mxu0
  %v6822 = vadd.f32 0.0, %v6821
  %6823 = vmatmul.f32.gmra.mxu0 %v6737
  %v6824 = vpop.f32.mrf.mxu0
  %v6825 = vadd.f32 0.0, %v6824
  %6826 = vmatmul.f32.gmra.mxu0 %v6738
  %v6827 = vpop.f32.mrf.mxu0
  %v6828 = vadd.f32 0.0, %v6827
  %6829 = vmatmul.f32.gmra.mxu0 %v6739
  %v6830 = vpop.f32.mrf.mxu0
  %v6831 = vadd.f32 0.0, %v6830
  %6832 = vmatmul.f32.gmra.mxu0 %v6740
  %v6833 = vpop.f32.mrf.mxu0
  %v6834 = vadd.f32 0.0, %v6833
  %6835 = vmatmul.f32.gmra.mxu0 %v6741
  %v6836 = vpop.f32.mrf.mxu0
  %v6837 = vadd.f32 0.0, %v6836
  %6838 = vmatmul.f32.gmra.mxu0 %v6742
  %v6839 = vpop.f32.mrf.mxu0
  %v6840 = vadd.f32 0.0, %v6839
  %6841 = vmatmul.f32.gmra.mxu0 %v6743
  %v6842 = vpop.f32.mrf.mxu0
  %v6843 = vadd.f32 0.0, %v6842
  %6844 = vmatmul.f32.gmra.mxu0 %v6744
  %v6845 = vpop.f32.mrf.mxu0
  %v6846 = vadd.f32 0.0, %v6845
  %6847 = vmatmul.f32.gmra.mxu0 %v6745
  %v6848 = vpop.f32.mrf.mxu0
  %v6849 = vadd.f32 0.0, %v6848
  %6850 = vmatmul.f32.gmra.mxu0 %v6746
  %v6851 = vpop.f32.mrf.mxu0
  %v6852 = vadd.f32 0.0, %v6851
  %6853 = vmatmul.f32.gmra.mxu0 %v6747
  %v6854 = vpop.f32.mrf.mxu0
  %v6855 = vadd.f32 0.0, %v6854
  %6856 = vmatmul.f32.gmra.mxu0 %v6748
  %v6857 = vpop.f32.mrf.mxu0
  %v6858 = vadd.f32 0.0, %v6857
  %6859 = vmatmul.f32.gmra.mxu0 %v6749
  %v6860 = vpop.f32.mrf.mxu0
  %v6861 = vadd.f32 0.0, %v6860
  %6862 = vdwg.mxu0
  %6879 = vrot.lane.b32.xlu0 %v6816, 16
  %v6880 = vpop.permute.xlu0 %6879
  %6881 = vrot.lane.b32.xlu0 %v6819, 16
  %v6882 = vpop.permute.xlu0 %6881
  %6883 = vrot.lane.b32.xlu0 %v6822, 16
  %v6884 = vpop.permute.xlu0 %6883
  %6885 = vrot.lane.b32.xlu0 %v6825, 16
  %v6886 = vpop.permute.xlu0 %6885
  %6887 = vrot.lane.b32.xlu0 %v6828, 16
  %v6888 = vpop.permute.xlu0 %6887
  %6889 = vrot.lane.b32.xlu0 %v6831, 16
  %v6890 = vpop.permute.xlu0 %6889
  %6891 = vrot.lane.b32.xlu0 %v6834, 16
  %v6892 = vpop.permute.xlu0 %6891
  %6893 = vrot.lane.b32.xlu0 %v6837, 16
  %v6894 = vpop.permute.xlu0 %6893
  %6895 = vrot.lane.b32.xlu0 %v6840, 16
  %v6896 = vpop.permute.xlu0 %6895
  %6897 = vrot.lane.b32.xlu0 %v6843, 16
  %v6898 = vpop.permute.xlu0 %6897
  %6899 = vrot.lane.b32.xlu0 %v6846, 16
  %v6900 = vpop.permute.xlu0 %6899
  %6901 = vrot.lane.b32.xlu0 %v6849, 16
  %v6902 = vpop.permute.xlu0 %6901
  %6903 = vrot.lane.b32.xlu0 %v6852, 16
  %v6904 = vpop.permute.xlu0 %6903
  %6905 = vrot.lane.b32.xlu0 %v6855, 16
  %v6906 = vpop.permute.xlu0 %6905
  %6907 = vrot.lane.b32.xlu0 %v6858, 16
  %v6908 = vpop.permute.xlu0 %6907
  %6909 = vrot.lane.b32.xlu0 %v6861, 16
  %v6910 = vpop.permute.xlu0 %6909
  %6927 = vst.msk [vmem:[#allocation2] sm:$0xff] %vm1962, %v6880
  %6928 = vst.msk [vmem:[#allocation2 + $0x8] sm:$0xff] %vm1962, %v6882
  %6929 = vst.msk [vmem:[#allocation2 + $0x10] sm:$0xff] %vm1962, %v6884
  %6930 = vst.msk [vmem:[#allocation2 + $0x18] sm:$0xff] %vm1962, %v6886
  %6931 = vst.msk [vmem:[#allocation2 + $0x20] sm:$0xff] %vm1962, %v6888
  %6932 = vst.msk [vmem:[#allocation2 + $0x28] sm:$0xff] %vm1962, %v6890
  %6933 = vst.msk [vmem:[#allocation2 + $0x30] sm:$0xff] %vm1962, %v6892
  %6934 = vst.msk [vmem:[#allocation2 + $0x38] sm:$0xff] %vm1962, %v6894
  %6935 = vst.msk [vmem:[#allocation2 + $0x40] sm:$0xff] %vm1962, %v6896
  %6936 = vst.msk [vmem:[#allocation2 + $0x48] sm:$0xff] %vm1962, %v6898
  %6937 = vst.msk [vmem:[#allocation2 + $0x50] sm:$0xff] %vm1962, %v6900
  %6938 = vst.msk [vmem:[#allocation2 + $0x58] sm:$0xff] %vm1962, %v6902
  %6939 = vst.msk [vmem:[#allocation2 + $0x60] sm:$0xff] %vm1962, %v6904
  %6940 = vst.msk [vmem:[#allocation2 + $0x68] sm:$0xff] %vm1962, %v6906
  %6941 = vst.msk [vmem:[#allocation2 + $0x70] sm:$0xff] %vm1962, %v6908
  %6942 = vst.msk [vmem:[#allocation2 + $0x78] sm:$0xff] %vm1962, %v6910
  %6943 = vrot.lane.b32.xlu0 %v5257, 104
  %v6944 = vpop.permute.xlu0 %6943
  %6945 = vrot.lane.b32.xlu0 %v5258, 104
  %v6946 = vpop.permute.xlu0 %6945
  %6947 = vrot.lane.b32.xlu0 %v5259, 104
  %v6948 = vpop.permute.xlu0 %6947
  %6949 = vrot.lane.b32.xlu0 %v5260, 104
  %v6950 = vpop.permute.xlu0 %6949
  %6951 = vrot.lane.b32.xlu0 %v5261, 104
  %v6952 = vpop.permute.xlu0 %6951
  %6953 = vrot.lane.b32.xlu0 %v5262, 104
  %v6954 = vpop.permute.xlu0 %6953
  %6955 = vrot.lane.b32.xlu0 %v5263, 104
  %v6956 = vpop.permute.xlu0 %6955
  %6957 = vrot.lane.b32.xlu0 %v5264, 104
  %v6958 = vpop.permute.xlu0 %6957
  %6959 = vrot.lane.b32.xlu0 %v5265, 104
  %v6960 = vpop.permute.xlu0 %6959
  %6961 = vrot.lane.b32.xlu0 %v5266, 104
  %v6962 = vpop.permute.xlu0 %6961
  %6963 = vrot.lane.b32.xlu0 %v5267, 104
  %v6964 = vpop.permute.xlu0 %6963
  %6965 = vrot.lane.b32.xlu0 %v5268, 104
  %v6966 = vpop.permute.xlu0 %6965
  %6967 = vrot.lane.b32.xlu0 %v5269, 104
  %v6968 = vpop.permute.xlu0 %6967
  %6969 = vrot.lane.b32.xlu0 %v5270, 104
  %v6970 = vpop.permute.xlu0 %6969
  %6971 = vrot.lane.b32.xlu0 %v5271, 104
  %v6972 = vpop.permute.xlu0 %6971
  %6973 = vrot.lane.b32.xlu0 %v5272, 104
  %v6974 = vpop.permute.xlu0 %6973
  %6975 = vrot.lane.b32.xlu0 %v5210, 72
  %v6976 = vpop.permute.xlu0 %6975
  %6977 = vrot.lane.b32.xlu0 %v5213, 72
  %v6978 = vpop.permute.xlu0 %6977
  %6979 = vrot.lane.b32.xlu0 %v5216, 72
  %v6980 = vpop.permute.xlu0 %6979
  %6981 = vrot.lane.b32.xlu0 %v5219, 72
  %v6982 = vpop.permute.xlu0 %6981
  %6983 = vrot.lane.b32.xlu0 %v5222, 72
  %v6984 = vpop.permute.xlu0 %6983
  %6985 = vrot.lane.b32.xlu0 %v5225, 72
  %v6986 = vpop.permute.xlu0 %6985
  %6987 = vrot.lane.b32.xlu0 %v5228, 72
  %v6988 = vpop.permute.xlu0 %6987
  %6989 = vrot.lane.b32.xlu0 %v5231, 72
  %v6990 = vpop.permute.xlu0 %6989
  %6991 = vrot.lane.b32.xlu0 %v5234, 72
  %v6992 = vpop.permute.xlu0 %6991
  %6993 = vrot.lane.b32.xlu0 %v5237, 72
  %v6994 = vpop.permute.xlu0 %6993
  %6995 = vrot.lane.b32.xlu0 %v5240, 72
  %v6996 = vpop.permute.xlu0 %6995
  %6997 = vrot.lane.b32.xlu0 %v5243, 72
  %v6998 = vpop.permute.xlu0 %6997
  %6999 = vrot.lane.b32.xlu0 %v5246, 72
  %v7000 = vpop.permute.xlu0 %6999
  %7001 = vrot.lane.b32.xlu0 %v5249, 72
  %v7002 = vpop.permute.xlu0 %7001
  %7003 = vrot.lane.b32.xlu0 %v5252, 72
  %v7004 = vpop.permute.xlu0 %7003
  %7005 = vrot.lane.b32.xlu0 %v5255, 72
  %v7006 = vpop.permute.xlu0 %7005
  %v7007 = vsel %vm354, %v6944, 0
  %v7009 = vsel %vm354, %v6946, 0
  %v7011 = vsel %vm354, %v6948, 0
  %v7013 = vsel %vm354, %v6950, 0
  %v7015 = vsel %vm354, %v6952, 0
  %v7017 = vsel %vm354, %v6954, 0
  %v7019 = vsel %vm354, %v6956, 0
  %v7021 = vsel %vm354, %v6958, 0
  %v7023 = vsel %vm354, %v6960, 0
  %v7025 = vsel %vm354, %v6962, 0
  %v7027 = vsel %vm354, %v6964, 0
  %v7029 = vsel %vm354, %v6966, 0
  %v7031 = vsel %vm354, %v6968, 0
  %v7033 = vsel %vm354, %v6970, 0
  %v7035 = vsel %vm354, %v6972, 0
  %v7037 = vsel %vm354, %v6974, 0
  %v7039 = vsel %vm354, %v6976, 0
  %v7041 = vsel %vm354, %v6978, 0
  %v7043 = vsel %vm354, %v6980, 0
  %v7045 = vsel %vm354, %v6982, 0
  %v7047 = vsel %vm354, %v6984, 0
  %v7049 = vsel %vm354, %v6986, 0
  %v7051 = vsel %vm354, %v6988, 0
  %v7053 = vsel %vm354, %v6990, 0
  %v7055 = vsel %vm354, %v6992, 0
  %v7057 = vsel %vm354, %v6994, 0
  %v7059 = vsel %vm354, %v6996, 0
  %v7061 = vsel %vm354, %v6998, 0
  %v7063 = vsel %vm354, %v7000, 0
  %v7065 = vsel %vm354, %v7002, 0
  %v7067 = vsel %vm354, %v7004, 0
  %v7069 = vsel %vm354, %v7006, 0
  %7071 = vmatpush.xpose.msra.mxu0 %v7069
  %7072 = vmatpush.xpose.msra.mxu0 %v7067
  %7073 = vmatpush.xpose.msra.mxu0 %v7065
  %7074 = vmatpush.xpose.msra.mxu0 %v7063
  %7075 = vmatpush.xpose.msra.mxu0 %v7061
  %7076 = vmatpush.xpose.msra.mxu0 %v7059
  %7077 = vmatpush.xpose.msra.mxu0 %v7057
  %7078 = vmatpush.xpose.msra.mxu0 %v7055
  %7079 = vmatpush.xpose.msra.mxu0 %v7053
  %7080 = vmatpush.xpose.msra.mxu0 %v7051
  %7081 = vmatpush.xpose.msra.mxu0 %v7049
  %7082 = vmatpush.xpose.msra.mxu0 %v7047
  %7083 = vmatpush.xpose.msra.mxu0 %v7045
  %7084 = vmatpush.xpose.msra.mxu0 %v7043
  %7085 = vmatpush.xpose.msra.mxu0 %v7041
  %7086 = vmatpush.xpose.msra.mxu0 %v7039
  %7087 = vmatmul.f32.gmra.mxu0 %v7007
  %v7088 = vpop.f32.mrf.mxu0
  %v7089 = vadd.f32 %v138, %v7088
  %7090 = vmatmul.f32.gmra.mxu0 %v7009
  %v7091 = vpop.f32.mrf.mxu0
  %v7092 = vadd.f32 %v139, %v7091
  %7093 = vmatmul.f32.gmra.mxu0 %v7011
  %v7094 = vpop.f32.mrf.mxu0
  %v7095 = vadd.f32 %v140, %v7094
  %7096 = vmatmul.f32.gmra.mxu0 %v7013
  %v7097 = vpop.f32.mrf.mxu0
  %v7098 = vadd.f32 %v141, %v7097
  %7099 = vmatmul.f32.gmra.mxu0 %v7015
  %v7100 = vpop.f32.mrf.mxu0
  %v7101 = vadd.f32 %v142, %v7100
  %7102 = vmatmul.f32.gmra.mxu0 %v7017
  %v7103 = vpop.f32.mrf.mxu0
  %v7104 = vadd.f32 %v143, %v7103
  %7105 = vmatmul.f32.gmra.mxu0 %v7019
  %v7106 = vpop.f32.mrf.mxu0
  %v7107 = vadd.f32 %v144, %v7106
  %7108 = vmatmul.f32.gmra.mxu0 %v7021
  %v7109 = vpop.f32.mrf.mxu0
  %v7110 = vadd.f32 %v145, %v7109
  %7111 = vmatmul.f32.gmra.mxu0 %v7023
  %v7112 = vpop.f32.mrf.mxu0
  %v7113 = vadd.f32 %v146, %v7112
  %7114 = vmatmul.f32.gmra.mxu0 %v7025
  %v7115 = vpop.f32.mrf.mxu0
  %v7116 = vadd.f32 %v147, %v7115
  %7117 = vmatmul.f32.gmra.mxu0 %v7027
  %v7118 = vpop.f32.mrf.mxu0
  %v7119 = vadd.f32 %v148, %v7118
  %7120 = vmatmul.f32.gmra.mxu0 %v7029
  %v7121 = vpop.f32.mrf.mxu0
  %v7122 = vadd.f32 %v149, %v7121
  %7123 = vmatmul.f32.gmra.mxu0 %v7031
  %v7124 = vpop.f32.mrf.mxu0
  %v7125 = vadd.f32 %v150, %v7124
  %7126 = vmatmul.f32.gmra.mxu0 %v7033
  %v7127 = vpop.f32.mrf.mxu0
  %v7128 = vadd.f32 %v151, %v7127
  %7129 = vmatmul.f32.gmra.mxu0 %v7035
  %v7130 = vpop.f32.mrf.mxu0
  %v7131 = vadd.f32 %v152, %v7130
  %7132 = vmatmul.f32.gmra.mxu0 %v7037
  %v7133 = vpop.f32.mrf.mxu0
  %v7134 = vadd.f32 %v153, %v7133
  %7135 = vdwg.mxu0
  %7136 = vmax.xlane.f32.xlu0 %v7089
  %v7137 = vpop.xlane.xlu0 %7136
  %7138 = vmax.xlane.f32.xlu0 %v7092
  %v7139 = vpop.xlane.xlu0 %7138
  %7140 = vmax.xlane.f32.xlu0 %v7095
  %v7141 = vpop.xlane.xlu0 %7140
  %7142 = vmax.xlane.f32.xlu0 %v7098
  %v7143 = vpop.xlane.xlu0 %7142
  %7144 = vmax.xlane.f32.xlu0 %v7101
  %v7145 = vpop.xlane.xlu0 %7144
  %7146 = vmax.xlane.f32.xlu0 %v7104
  %v7147 = vpop.xlane.xlu0 %7146
  %7148 = vmax.xlane.f32.xlu0 %v7107
  %v7149 = vpop.xlane.xlu0 %7148
  %7150 = vmax.xlane.f32.xlu0 %v7110
  %v7151 = vpop.xlane.xlu0 %7150
  %7152 = vmax.xlane.f32.xlu0 %v7113
  %v7153 = vpop.xlane.xlu0 %7152
  %7154 = vmax.xlane.f32.xlu0 %v7116
  %v7155 = vpop.xlane.xlu0 %7154
  %7156 = vmax.xlane.f32.xlu0 %v7119
  %v7157 = vpop.xlane.xlu0 %7156
  %7158 = vmax.xlane.f32.xlu0 %v7122
  %v7159 = vpop.xlane.xlu0 %7158
  %7160 = vmax.xlane.f32.xlu0 %v7125
  %v7161 = vpop.xlane.xlu0 %7160
  %7162 = vmax.xlane.f32.xlu0 %v7128
  %v7163 = vpop.xlane.xlu0 %7162
  %7164 = vmax.xlane.f32.xlu0 %v7131
  %v7165 = vpop.xlane.xlu0 %7164
  %7166 = vmax.xlane.f32.xlu0 %v7134
  %v7167 = vpop.xlane.xlu0 %7166
  %v7168 = vsub.f32 %v7089, %v7137
  %v7169 = vsub.f32 %v7092, %v7139
  %v7170 = vsub.f32 %v7095, %v7141
  %v7171 = vsub.f32 %v7098, %v7143
  %v7172 = vsub.f32 %v7101, %v7145
  %v7173 = vsub.f32 %v7104, %v7147
  %v7174 = vsub.f32 %v7107, %v7149
  %v7175 = vsub.f32 %v7110, %v7151
  %v7176 = vsub.f32 %v7113, %v7153
  %v7177 = vsub.f32 %v7116, %v7155
  %v7178 = vsub.f32 %v7119, %v7157
  %v7179 = vsub.f32 %v7122, %v7159
  %v7180 = vsub.f32 %v7125, %v7161
  %v7181 = vsub.f32 %v7128, %v7163
  %v7182 = vsub.f32 %v7131, %v7165
  %v7183 = vsub.f32 %v7134, %v7167
  %v7184 = vmul.f32 %v7168, 1.442695
  %v7185 = vpow.pop %v7184
  %v7186 = vmul.f32 %v7169, 1.442695
  %v7187 = vpow.pop %v7186
  %v7188 = vmul.f32 %v7170, 1.442695
  %v7189 = vpow.pop %v7188
  %v7190 = vmul.f32 %v7171, 1.442695
  %v7191 = vpow.pop %v7190
  %v7192 = vmul.f32 %v7172, 1.442695
  %v7193 = vpow.pop %v7192
  %v7194 = vmul.f32 %v7173, 1.442695
  %v7195 = vpow.pop %v7194
  %v7196 = vmul.f32 %v7174, 1.442695
  %v7197 = vpow.pop %v7196
  %v7198 = vmul.f32 %v7175, 1.442695
  %v7199 = vpow.pop %v7198
  %v7200 = vmul.f32 %v7176, 1.442695
  %v7201 = vpow.pop %v7200
  %v7202 = vmul.f32 %v7177, 1.442695
  %v7203 = vpow.pop %v7202
  %v7204 = vmul.f32 %v7178, 1.442695
  %v7205 = vpow.pop %v7204
  %v7206 = vmul.f32 %v7179, 1.442695
  %v7207 = vpow.pop %v7206
  %v7208 = vmul.f32 %v7180, 1.442695
  %v7209 = vpow.pop %v7208
  %v7210 = vmul.f32 %v7181, 1.442695
  %v7211 = vpow.pop %v7210
  %v7212 = vmul.f32 %v7182, 1.442695
  %v7213 = vpow.pop %v7212
  %v7214 = vmul.f32 %v7183, 1.442695
  %v7215 = vpow.pop %v7214
  %v7216 = vmul.f32 %v7185, %v106
  %v7217 = vmul.f32 %v7187, %v107
  %v7218 = vmul.f32 %v7189, %v108
  %v7219 = vmul.f32 %v7191, %v109
  %v7220 = vmul.f32 %v7193, %v110
  %v7221 = vmul.f32 %v7195, %v111
  %v7222 = vmul.f32 %v7197, %v112
  %v7223 = vmul.f32 %v7199, %v113
  %v7224 = vmul.f32 %v7201, %v114
  %v7225 = vmul.f32 %v7203, %v115
  %v7226 = vmul.f32 %v7205, %v116
  %v7227 = vmul.f32 %v7207, %v117
  %v7228 = vmul.f32 %v7209, %v118
  %v7229 = vmul.f32 %v7211, %v119
  %v7230 = vmul.f32 %v7213, %v120
  %v7231 = vmul.f32 %v7215, %v121
  %7232 = vadd.xlane.f32.xlu0 %v7216
  %v7233 = vpop.xlane.xlu0 %7232
  %7234 = vadd.xlane.f32.xlu0 %v7217
  %v7235 = vpop.xlane.xlu0 %7234
  %7236 = vadd.xlane.f32.xlu0 %v7218
  %v7237 = vpop.xlane.xlu0 %7236
  %7238 = vadd.xlane.f32.xlu0 %v7219
  %v7239 = vpop.xlane.xlu0 %7238
  %7240 = vadd.xlane.f32.xlu0 %v7220
  %v7241 = vpop.xlane.xlu0 %7240
  %7242 = vadd.xlane.f32.xlu0 %v7221
  %v7243 = vpop.xlane.xlu0 %7242
  %7244 = vadd.xlane.f32.xlu0 %v7222
  %v7245 = vpop.xlane.xlu0 %7244
  %7246 = vadd.xlane.f32.xlu0 %v7223
  %v7247 = vpop.xlane.xlu0 %7246
  %7248 = vadd.xlane.f32.xlu0 %v7224
  %v7249 = vpop.xlane.xlu0 %7248
  %7250 = vadd.xlane.f32.xlu0 %v7225
  %v7251 = vpop.xlane.xlu0 %7250
  %7252 = vadd.xlane.f32.xlu0 %v7226
  %v7253 = vpop.xlane.xlu0 %7252
  %7254 = vadd.xlane.f32.xlu0 %v7227
  %v7255 = vpop.xlane.xlu0 %7254
  %7256 = vadd.xlane.f32.xlu0 %v7228
  %v7257 = vpop.xlane.xlu0 %7256
  %7258 = vadd.xlane.f32.xlu0 %v7229
  %v7259 = vpop.xlane.xlu0 %7258
  %7260 = vadd.xlane.f32.xlu0 %v7230
  %v7261 = vpop.xlane.xlu0 %7260
  %7262 = vadd.xlane.f32.xlu0 %v7231
  %v7263 = vpop.xlane.xlu0 %7262
  %vm7264 = vcmp.gt.f32.partialorder %v7233, 0.0
  %vm7265 = vcmp.gt.f32.partialorder %v7235, 0.0
  %vm7266 = vcmp.gt.f32.partialorder %v7237, 0.0
  %vm7267 = vcmp.gt.f32.partialorder %v7239, 0.0
  %vm7268 = vcmp.gt.f32.partialorder %v7241, 0.0
  %vm7269 = vcmp.gt.f32.partialorder %v7243, 0.0
  %vm7270 = vcmp.gt.f32.partialorder %v7245, 0.0
  %vm7271 = vcmp.gt.f32.partialorder %v7247, 0.0
  %vm7272 = vcmp.gt.f32.partialorder %v7249, 0.0
  %vm7273 = vcmp.gt.f32.partialorder %v7251, 0.0
  %vm7274 = vcmp.gt.f32.partialorder %v7253, 0.0
  %vm7275 = vcmp.gt.f32.partialorder %v7255, 0.0
  %vm7276 = vcmp.gt.f32.partialorder %v7257, 0.0
  %vm7277 = vcmp.gt.f32.partialorder %v7259, 0.0
  %vm7278 = vcmp.gt.f32.partialorder %v7261, 0.0
  %vm7279 = vcmp.gt.f32.partialorder %v7263, 0.0
  %v7280 = vsel %vm7264, %v7233, 1.0
  %v7281 = vsel %vm7265, %v7235, 1.0
  %v7282 = vsel %vm7266, %v7237, 1.0
  %v7283 = vsel %vm7267, %v7239, 1.0
  %v7284 = vsel %vm7268, %v7241, 1.0
  %v7285 = vsel %vm7269, %v7243, 1.0
  %v7286 = vsel %vm7270, %v7245, 1.0
  %v7287 = vsel %vm7271, %v7247, 1.0
  %v7288 = vsel %vm7272, %v7249, 1.0
  %v7289 = vsel %vm7273, %v7251, 1.0
  %v7290 = vsel %vm7274, %v7253, 1.0
  %v7291 = vsel %vm7275, %v7255, 1.0
  %v7292 = vsel %vm7276, %v7257, 1.0
  %v7293 = vsel %vm7277, %v7259, 1.0
  %v7294 = vsel %vm7278, %v7261, 1.0
  %v7295 = vsel %vm7279, %v7263, 1.0
  %v7296 = vrcp.pop %v7280
  %v7297 = vrcp.pop %v7281
  %v7298 = vrcp.pop %v7282
  %v7299 = vrcp.pop %v7283
  %v7300 = vrcp.pop %v7284
  %v7301 = vrcp.pop %v7285
  %v7302 = vrcp.pop %v7286
  %v7303 = vrcp.pop %v7287
  %v7304 = vrcp.pop %v7288
  %v7305 = vrcp.pop %v7289
  %v7306 = vrcp.pop %v7290
  %v7307 = vrcp.pop %v7291
  %v7308 = vrcp.pop %v7292
  %v7309 = vrcp.pop %v7293
  %v7310 = vrcp.pop %v7294
  %v7311 = vrcp.pop %v7295
  %v7312 = vmul.f32 %v7216, %v7296
  %v7313 = vmul.f32 %v7217, %v7297
  %v7314 = vmul.f32 %v7218, %v7298
  %v7315 = vmul.f32 %v7219, %v7299
  %v7316 = vmul.f32 %v7220, %v7300
  %v7317 = vmul.f32 %v7221, %v7301
  %v7318 = vmul.f32 %v7222, %v7302
  %v7319 = vmul.f32 %v7223, %v7303
  %v7320 = vmul.f32 %v7224, %v7304
  %v7321 = vmul.f32 %v7225, %v7305
  %v7322 = vmul.f32 %v7226, %v7306
  %v7323 = vmul.f32 %v7227, %v7307
  %v7324 = vmul.f32 %v7228, %v7308
  %v7325 = vmul.f32 %v7229, %v7309
  %v7326 = vmul.f32 %v7230, %v7310
  %v7327 = vmul.f32 %v7231, %v7311
  %7328 = vrot.lane.b32.xlu0 %v5210, 40
  %v7329 = vpop.permute.xlu0 %7328
  %7330 = vrot.lane.b32.xlu0 %v5213, 40
  %v7331 = vpop.permute.xlu0 %7330
  %7332 = vrot.lane.b32.xlu0 %v5216, 40
  %v7333 = vpop.permute.xlu0 %7332
  %7334 = vrot.lane.b32.xlu0 %v5219, 40
  %v7335 = vpop.permute.xlu0 %7334
  %7336 = vrot.lane.b32.xlu0 %v5222, 40
  %v7337 = vpop.permute.xlu0 %7336
  %7338 = vrot.lane.b32.xlu0 %v5225, 40
  %v7339 = vpop.permute.xlu0 %7338
  %7340 = vrot.lane.b32.xlu0 %v5228, 40
  %v7341 = vpop.permute.xlu0 %7340
  %7342 = vrot.lane.b32.xlu0 %v5231, 40
  %v7343 = vpop.permute.xlu0 %7342
  %7344 = vrot.lane.b32.xlu0 %v5234, 40
  %v7345 = vpop.permute.xlu0 %7344
  %7346 = vrot.lane.b32.xlu0 %v5237, 40
  %v7347 = vpop.permute.xlu0 %7346
  %7348 = vrot.lane.b32.xlu0 %v5240, 40
  %v7349 = vpop.permute.xlu0 %7348
  %7350 = vrot.lane.b32.xlu0 %v5243, 40
  %v7351 = vpop.permute.xlu0 %7350
  %7352 = vrot.lane.b32.xlu0 %v5246, 40
  %v7353 = vpop.permute.xlu0 %7352
  %7354 = vrot.lane.b32.xlu0 %v5249, 40
  %v7355 = vpop.permute.xlu0 %7354
  %7356 = vrot.lane.b32.xlu0 %v5252, 40
  %v7357 = vpop.permute.xlu0 %7356
  %7358 = vrot.lane.b32.xlu0 %v5255, 40
  %v7359 = vpop.permute.xlu0 %7358
  %7376 = vmatpush.msra.mxu0 %v7359
  %7377 = vmatpush.msra.mxu0 %v7357
  %7378 = vmatpush.msra.mxu0 %v7355
  %7379 = vmatpush.msra.mxu0 %v7353
  %7380 = vmatpush.msra.mxu0 %v7351
  %7381 = vmatpush.msra.mxu0 %v7349
  %7382 = vmatpush.msra.mxu0 %v7347
  %7383 = vmatpush.msra.mxu0 %v7345
  %7384 = vmatpush.msra.mxu0 %v7343
  %7385 = vmatpush.msra.mxu0 %v7341
  %7386 = vmatpush.msra.mxu0 %v7339
  %7387 = vmatpush.msra.mxu0 %v7337
  %7388 = vmatpush.msra.mxu0 %v7335
  %7389 = vmatpush.msra.mxu0 %v7333
  %7390 = vmatpush.msra.mxu0 %v7331
  %7391 = vmatpush.msra.mxu0 %v7329
  %7392 = vmatmul.f32.gmra.mxu0 %v7312
  %v7393 = vpop.f32.mrf.mxu0
  %v7394 = vadd.f32 0.0, %v7393
  %7395 = vmatmul.f32.gmra.mxu0 %v7313
  %v7396 = vpop.f32.mrf.mxu0
  %v7397 = vadd.f32 0.0, %v7396
  %7398 = vmatmul.f32.gmra.mxu0 %v7314
  %v7399 = vpop.f32.mrf.mxu0
  %v7400 = vadd.f32 0.0, %v7399
  %7401 = vmatmul.f32.gmra.mxu0 %v7315
  %v7402 = vpop.f32.mrf.mxu0
  %v7403 = vadd.f32 0.0, %v7402
  %7404 = vmatmul.f32.gmra.mxu0 %v7316
  %v7405 = vpop.f32.mrf.mxu0
  %v7406 = vadd.f32 0.0, %v7405
  %7407 = vmatmul.f32.gmra.mxu0 %v7317
  %v7408 = vpop.f32.mrf.mxu0
  %v7409 = vadd.f32 0.0, %v7408
  %7410 = vmatmul.f32.gmra.mxu0 %v7318
  %v7411 = vpop.f32.mrf.mxu0
  %v7412 = vadd.f32 0.0, %v7411
  %7413 = vmatmul.f32.gmra.mxu0 %v7319
  %v7414 = vpop.f32.mrf.mxu0
  %v7415 = vadd.f32 0.0, %v7414
  %7416 = vmatmul.f32.gmra.mxu0 %v7320
  %v7417 = vpop.f32.mrf.mxu0
  %v7418 = vadd.f32 0.0, %v7417
  %7419 = vmatmul.f32.gmra.mxu0 %v7321
  %v7420 = vpop.f32.mrf.mxu0
  %v7421 = vadd.f32 0.0, %v7420
  %7422 = vmatmul.f32.gmra.mxu0 %v7322
  %v7423 = vpop.f32.mrf.mxu0
  %v7424 = vadd.f32 0.0, %v7423
  %7425 = vmatmul.f32.gmra.mxu0 %v7323
  %v7426 = vpop.f32.mrf.mxu0
  %v7427 = vadd.f32 0.0, %v7426
  %7428 = vmatmul.f32.gmra.mxu0 %v7324
  %v7429 = vpop.f32.mrf.mxu0
  %v7430 = vadd.f32 0.0, %v7429
  %7431 = vmatmul.f32.gmra.mxu0 %v7325
  %v7432 = vpop.f32.mrf.mxu0
  %v7433 = vadd.f32 0.0, %v7432
  %7434 = vmatmul.f32.gmra.mxu0 %v7326
  %v7435 = vpop.f32.mrf.mxu0
  %v7436 = vadd.f32 0.0, %v7435
  %7437 = vmatmul.f32.gmra.mxu0 %v7327
  %v7438 = vpop.f32.mrf.mxu0
  %v7439 = vadd.f32 0.0, %v7438
  %7440 = vdwg.mxu0
  %7457 = vrot.lane.b32.xlu0 %v7394, 24
  %v7458 = vpop.permute.xlu0 %7457
  %7459 = vrot.lane.b32.xlu0 %v7397, 24
  %v7460 = vpop.permute.xlu0 %7459
  %7461 = vrot.lane.b32.xlu0 %v7400, 24
  %v7462 = vpop.permute.xlu0 %7461
  %7463 = vrot.lane.b32.xlu0 %v7403, 24
  %v7464 = vpop.permute.xlu0 %7463
  %7465 = vrot.lane.b32.xlu0 %v7406, 24
  %v7466 = vpop.permute.xlu0 %7465
  %7467 = vrot.lane.b32.xlu0 %v7409, 24
  %v7468 = vpop.permute.xlu0 %7467
  %7469 = vrot.lane.b32.xlu0 %v7412, 24
  %v7470 = vpop.permute.xlu0 %7469
  %7471 = vrot.lane.b32.xlu0 %v7415, 24
  %v7472 = vpop.permute.xlu0 %7471
  %7473 = vrot.lane.b32.xlu0 %v7418, 24
  %v7474 = vpop.permute.xlu0 %7473
  %7475 = vrot.lane.b32.xlu0 %v7421, 24
  %v7476 = vpop.permute.xlu0 %7475
  %7477 = vrot.lane.b32.xlu0 %v7424, 24
  %v7478 = vpop.permute.xlu0 %7477
  %7479 = vrot.lane.b32.xlu0 %v7427, 24
  %v7480 = vpop.permute.xlu0 %7479
  %7481 = vrot.lane.b32.xlu0 %v7430, 24
  %v7482 = vpop.permute.xlu0 %7481
  %7483 = vrot.lane.b32.xlu0 %v7433, 24
  %v7484 = vpop.permute.xlu0 %7483
  %7485 = vrot.lane.b32.xlu0 %v7436, 24
  %v7486 = vpop.permute.xlu0 %7485
  %7487 = vrot.lane.b32.xlu0 %v7439, 24
  %v7488 = vpop.permute.xlu0 %7487
  %7505 = vst.msk [vmem:[#allocation2] sm:$0xff] %vm2541, %v7458
  %7506 = vst.msk [vmem:[#allocation2 + $0x8] sm:$0xff] %vm2541, %v7460
  %7507 = vst.msk [vmem:[#allocation2 + $0x10] sm:$0xff] %vm2541, %v7462
  %7508 = vst.msk [vmem:[#allocation2 + $0x18] sm:$0xff] %vm2541, %v7464
  %7509 = vst.msk [vmem:[#allocation2 + $0x20] sm:$0xff] %vm2541, %v7466
  %7510 = vst.msk [vmem:[#allocation2 + $0x28] sm:$0xff] %vm2541, %v7468
  %7511 = vst.msk [vmem:[#allocation2 + $0x30] sm:$0xff] %vm2541, %v7470
  %7512 = vst.msk [vmem:[#allocation2 + $0x38] sm:$0xff] %vm2541, %v7472
  %7513 = vst.msk [vmem:[#allocation2 + $0x40] sm:$0xff] %vm2541, %v7474
  %7514 = vst.msk [vmem:[#allocation2 + $0x48] sm:$0xff] %vm2541, %v7476
  %7515 = vst.msk [vmem:[#allocation2 + $0x50] sm:$0xff] %vm2541, %v7478
  %7516 = vst.msk [vmem:[#allocation2 + $0x58] sm:$0xff] %vm2541, %v7480
  %7517 = vst.msk [vmem:[#allocation2 + $0x60] sm:$0xff] %vm2541, %v7482
  %7518 = vst.msk [vmem:[#allocation2 + $0x68] sm:$0xff] %vm2541, %v7484
  %7519 = vst.msk [vmem:[#allocation2 + $0x70] sm:$0xff] %vm2541, %v7486
  %7520 = vst.msk [vmem:[#allocation2 + $0x78] sm:$0xff] %vm2541, %v7488
  %v7521 = vld [vmem:[#allocation2] sm:$0xff]
  %v7522 = vld [vmem:[#allocation2 + $0x8] sm:$0xff]
  %v7523 = vld [vmem:[#allocation2 + $0x10] sm:$0xff]
  %v7524 = vld [vmem:[#allocation2 + $0x18] sm:$0xff]
  %v7525 = vld [vmem:[#allocation2 + $0x20] sm:$0xff]
  %v7526 = vld [vmem:[#allocation2 + $0x28] sm:$0xff]
  %v7527 = vld [vmem:[#allocation2 + $0x30] sm:$0xff]
  %v7528 = vld [vmem:[#allocation2 + $0x38] sm:$0xff]
  %v7529 = vld [vmem:[#allocation2 + $0x40] sm:$0xff]
  %v7530 = vld [vmem:[#allocation2 + $0x48] sm:$0xff]
  %v7531 = vld [vmem:[#allocation2 + $0x50] sm:$0xff]
  %v7532 = vld [vmem:[#allocation2 + $0x58] sm:$0xff]
  %v7533 = vld [vmem:[#allocation2 + $0x60] sm:$0xff]
  %v7534 = vld [vmem:[#allocation2 + $0x68] sm:$0xff]
  %v7535 = vld [vmem:[#allocation2 + $0x70] sm:$0xff]
  %v7536 = vld [vmem:[#allocation2 + $0x78] sm:$0xff]
  %7537 = vrot.lane.b32.xlu0 %v5210, 32
  %v7538 = vpop.permute.xlu0 %7537
  %7539 = vrot.lane.b32.xlu0 %v5213, 32
  %v7540 = vpop.permute.xlu0 %7539
  %7541 = vrot.lane.b32.xlu0 %v5216, 32
  %v7542 = vpop.permute.xlu0 %7541
  %7543 = vrot.lane.b32.xlu0 %v5219, 32
  %v7544 = vpop.permute.xlu0 %7543
  %7545 = vrot.lane.b32.xlu0 %v5222, 32
  %v7546 = vpop.permute.xlu0 %7545
  %7547 = vrot.lane.b32.xlu0 %v5225, 32
  %v7548 = vpop.permute.xlu0 %7547
  %7549 = vrot.lane.b32.xlu0 %v5228, 32
  %v7550 = vpop.permute.xlu0 %7549
  %7551 = vrot.lane.b32.xlu0 %v5231, 32
  %v7552 = vpop.permute.xlu0 %7551
  %7553 = vrot.lane.b32.xlu0 %v5234, 32
  %v7554 = vpop.permute.xlu0 %7553
  %7555 = vrot.lane.b32.xlu0 %v5237, 32
  %v7556 = vpop.permute.xlu0 %7555
  %7557 = vrot.lane.b32.xlu0 %v5240, 32
  %v7558 = vpop.permute.xlu0 %7557
  %7559 = vrot.lane.b32.xlu0 %v5243, 32
  %v7560 = vpop.permute.xlu0 %7559
  %7561 = vrot.lane.b32.xlu0 %v5246, 32
  %v7562 = vpop.permute.xlu0 %7561
  %7563 = vrot.lane.b32.xlu0 %v5249, 32
  %v7564 = vpop.permute.xlu0 %7563
  %7565 = vrot.lane.b32.xlu0 %v5252, 32
  %v7566 = vpop.permute.xlu0 %7565
  %7567 = vrot.lane.b32.xlu0 %v5255, 32
  %v7568 = vpop.permute.xlu0 %7567
  %v7585 = vadd.f32 %v7521, %v7538
  %v7586 = vadd.f32 %v7522, %v7540
  %v7587 = vadd.f32 %v7523, %v7542
  %v7588 = vadd.f32 %v7524, %v7544
  %v7589 = vadd.f32 %v7525, %v7546
  %v7590 = vadd.f32 %v7526, %v7548
  %v7591 = vadd.f32 %v7527, %v7550
  %v7592 = vadd.f32 %v7528, %v7552
  %v7593 = vadd.f32 %v7529, %v7554
  %v7594 = vadd.f32 %v7530, %v7556
  %v7595 = vadd.f32 %v7531, %v7558
  %v7596 = vadd.f32 %v7532, %v7560
  %v7597 = vadd.f32 %v7533, %v7562
  %v7598 = vadd.f32 %v7534, %v7564
  %v7599 = vadd.f32 %v7535, %v7566
  %v7600 = vadd.f32 %v7536, %v7568
  %v7601 = vmax.f32 %v7585, 0.0
  %v7602 = vmax.f32 %v7586, 0.0
  %v7603 = vmax.f32 %v7587, 0.0
  %v7604 = vmax.f32 %v7588, 0.0
  %v7605 = vmax.f32 %v7589, 0.0
  %v7606 = vmax.f32 %v7590, 0.0
  %v7607 = vmax.f32 %v7591, 0.0
  %v7608 = vmax.f32 %v7592, 0.0
  %v7609 = vmax.f32 %v7593, 0.0
  %v7610 = vmax.f32 %v7594, 0.0
  %v7611 = vmax.f32 %v7595, 0.0
  %v7612 = vmax.f32 %v7596, 0.0
  %v7613 = vmax.f32 %v7597, 0.0
  %v7614 = vmax.f32 %v7598, 0.0
  %v7615 = vmax.f32 %v7599, 0.0
  %v7616 = vmax.f32 %v7600, 0.0
  %v7617 = vld [vmem:[%s2] sm:$0xff]
  %7618 = vmatpush.msra.mxu0 %v7616
  %7619 = vmatpush.msra.mxu0 %v7615
  %7620 = vmatpush.msra.mxu0 %v7614
  %7621 = vmatpush.msra.mxu0 %v7613
  %7622 = vmatpush.msra.mxu0 %v7612
  %7623 = vmatpush.msra.mxu0 %v7611
  %7624 = vmatpush.msra.mxu0 %v7610
  %7625 = vmatpush.msra.mxu0 %v7609
  %7626 = vmatpush.msra.mxu0 %v7608
  %7627 = vmatpush.msra.mxu0 %v7607
  %7628 = vmatpush.msra.mxu0 %v7606
  %7629 = vmatpush.msra.mxu0 %v7605
  %7630 = vmatpush.msra.mxu0 %v7604
  %7631 = vmatpush.msra.mxu0 %v7603
  %7632 = vmatpush.msra.mxu0 %v7602
  %7633 = vmatpush.msra.mxu0 %v7601
  %7634 = vmatmul.f32.gmra.mxu0 %v7617
  %v7635 = vpop.f32.mrf.mxu0
  %v7636 = vadd.f32 0.0, %v7635
  %7637 = vdwg.mxu0
  %v7638 = vld [vmem:[%s9] sm:$0xff]
  %v7639 = vld [vmem:[%s9 + $0x8] sm:$0xff]
  %v7640 = vld [vmem:[%s9 + $0x10] sm:$0xff]
  %v7641 = vld [vmem:[%s9 + $0x18] sm:$0xff]
  %v7642 = vld [vmem:[%s10] sm:$0x1]
  %v7644 = vperm.slane %v7642, 0
  %v7647 = vsel %vm2662, %v7636, 0
  %7649 = vmatpush.msra.mxu0 0.0
  %7650 = vmatpush.msra.mxu0 0.0
  %7651 = vmatpush.msra.mxu0 0.0
  %7652 = vmatpush.msra.mxu0 0.0
  %7653 = vmatpush.msra.mxu0 0.0
  %7654 = vmatpush.msra.mxu0 0.0
  %7655 = vmatpush.msra.mxu0 0.0
  %7656 = vmatpush.msra.mxu0 0.0
  %7657 = vmatpush.msra.mxu0 0.0
  %7658 = vmatpush.msra.mxu0 0.0
  %7659 = vmatpush.msra.mxu0 0.0
  %7660 = vmatpush.msra.mxu0 0.0
  %7661 = vmatpush.msra.mxu0 %v7641
  %7662 = vmatpush.msra.mxu0 %v7640
  %7663 = vmatpush.msra.mxu0 %v7639
  %7664 = vmatpush.msra.mxu0 %v7638
  %7665 = vmatmul.f32.gmra.mxu0 %v7647
  %v7666 = vpop.f32.mrf.mxu0
  %v7667 = vadd.f32 %v7644, %v7666
  %7668 = vdwg.mxu0
  %vm7669 = vcmask 31744
  %7670 = vst.msk [vmem:[%s11] sm:$0xff] %vm7669, %v7667
  // Predicated region
  $region46: #{tpu_custom_call.1} parent=0 // pred_check
    _
  $region47: #{tpu_custom_call.1} parent=0 // pred_check_branch
    %7672 = sbr.rel (0) target = $region49
  $region48: #{tpu_custom_call.1} parent=0 // pred_region
    _
  $region49: #{tpu_custom_call.1} parent=0 // pred_fallthru
    _
  // Predicated region
  $region50: #{tpu_custom_call.1} parent=0 // pred_check
    _
  $region51: #{tpu_custom_call.1} parent=0 // pred_check_branch
    %7674 = sbr.rel (0) target = $region53
  $region52: #{tpu_custom_call.1} parent=0 // pred_region
    _
  $region53: #{tpu_custom_call.1} parent=0 // pred_fallthru
    _

</llo_original>
